<compile_context>
chip_gen: v7x
topology: tpu7x:2x2x1
jax: 0.10.0
libtpu: 0.0.40
codegen_flags: <defaults>
</compile_context>

<pallas_src>
import math

import numpy as np

import jax
import jax.numpy as jnp
from jax.experimental import pallas as pl
from jax.experimental.pallas import tpu as pltpu


# ---------------------------------------------------------------------------
# Model hyper-parameters (match the PyTorch defaults)
# ---------------------------------------------------------------------------
GRID_SIZE = 5
SPLINE_ORDER = 3
GRID_RANGE = (-1.0, 1.0)
N_COEFF = GRID_SIZE + SPLINE_ORDER          # 8 basis functions per input feature
BN_EPS = 1e-5
N_CONST_ROWS = (SPLINE_ORDER + 2) + 4 * (SPLINE_ORDER * (SPLINE_ORDER + 1) // 2)  # 29
OUT_PAD = 128                               # lane-dense final store; sliced outside
# MXU operand dtype (review): bf16 operands + f32 accumulation on all generations.
# Elementwise spline math stays f32 (portable to v5e; exact knot thresholds).
MXU_DTYPE = jnp.bfloat16


def make_grid_pts():
    h = (GRID_RANGE[1] - GRID_RANGE[0]) / GRID_SIZE
    return [(j - SPLINE_ORDER) * h + GRID_RANGE[0]
            for j in range(GRID_SIZE + 2 * SPLINE_ORDER + 1)]       # 12 knots


def build_spline_consts(grid_pts, in_f):
    """Per-layer constant table, shape (N_CONST_ROWS, N_COEFF*in_f), f32.

    Packed layout: column c*in_f + i corresponds to basis slab c, feature i.
    Row order (must match the kernel's read order exactly):
      rows 0 .. SPLINE_ORDER+1 : order-0 thresholds  thr_s[col] = g[c+s]
      then for k = 1..SPLINE_ORDER, s = 0..SPLINE_ORDER-k:
        4 rows: g[c+s], 1/(g[c+s+k]-g[c+s]), g[c+s+k+1], 1/(g[c+s+k+1]-g[c+s+1])
    """
    g = grid_pts

    def slab_vec(vals):                      # one value per slab, repeated in_f times
        return np.repeat(np.asarray(vals, np.float32), in_f)

    rows = []
    for s in range(SPLINE_ORDER + 2):
        rows.append(slab_vec([g[j + s] for j in range(N_COEFF)]))
    for k in range(1, SPLINE_ORDER + 1):
        for s in range(SPLINE_ORDER - k + 1):
            rows.append(slab_vec([g[j + s] for j in range(N_COEFF)]))
            rows.append(slab_vec([1.0 / (g[j + s + k] - g[j + s])
                                  for j in range(N_COEFF)]))
            rows.append(slab_vec([g[j + s + k + 1] for j in range(N_COEFF)]))
            rows.append(slab_vec([1.0 / (g[j + s + k + 1] - g[j + s + 1])
                                  for j in range(N_COEFF)]))
    consts = np.stack(rows)
    assert consts.shape == (N_CONST_ROWS, N_COEFF * in_f)
    return jnp.asarray(consts)


# ---------------------------------------------------------------------------
# Fused Pallas kernel
# ---------------------------------------------------------------------------
def _kan_layer(x, wpack, shift, C):
    """One KANLinear (+ folded eval-mode BN, + optionally folded trailing Linear)
    on a (TB, in_f) tile.

    Packed layout: column c*in_f + i of every (TB, N_COEFF*in_f) array holds the
    quantity for basis slab c, input feature i.
    """
    in_f = x.shape[-1]
    # Replicate x across the N_COEFF slabs (lane-dim concat, once per layer).
    xp = jnp.concatenate([x] * N_COEFF, axis=-1)                   # (TB, W)

    # Order-0 bases. Thresholds are monotone per column, so the half-open
    # indicator is a difference of >= compares: B0^(s) = [x>=g[c+s]] - [x>=g[c+s+1]].
    ge = [(xp >= C[s:s + 1, :]).astype(jnp.float32)
          for s in range(SPLINE_ORDER + 2)]
    b = [ge[s] - ge[s + 1] for s in range(SPLINE_ORDER + 1)]       # B^(s), s=0..3

    # Cox-de Boor recursion in packed layout on shifted copies:
    #   B_k^(s)[col c] = (x-g[c+s])/(g[c+s+k]-g[c+s]) * B_{k-1}^(s)[c]
    #                  + (g[c+s+k+1]-x)/(g[c+s+k+1]-g[c+s+1]) * B_{k-1}^(s+1)[c]
    row = SPLINE_ORDER + 2
    for k in range(1, SPLINE_ORDER + 1):
        nb = []
        for s in range(SPLINE_ORDER - k + 1):
            gA = C[row:row + 1, :]
            iA = C[row + 1:row + 2, :]
            gB = C[row + 2:row + 3, :]
            iB = C[row + 3:row + 4, :]
            row += 4
            nb.append((xp - gA) * iA * b[s] + (gB - xp) * iB * b[s + 1])
        b = nb
    bases = b[0]                                                   # (TB, W)

    # Base branch: SiLU(x). approx reciprocal runs on the EUP (same unit as the
    # exp), keeping the saturated VALU slots free (review item).
    silu_x = x * pl.reciprocal(1.0 + jnp.exp(-x), approx=True)
    op = jnp.concatenate([bases, silu_x], axis=-1)                 # (TB, W + in_f)

    # Single MXU matmul per layer; eval-mode BN scale (and, for the last layer,
    # the final Linear) is folded into wpack at pack time.
    y = jnp.dot(op.astype(MXU_DTYPE), wpack.astype(MXU_DTYPE),
                preferred_element_type=jnp.float32)
    return y + shift


def fused_kernel(x_ref, wp1_ref, sh1_ref, c1_ref, wpo_ref, sho_ref, c2_ref,
                 o_ref):
    x = x_ref[...].astype(jnp.float32)
    h = _kan_layer(x, wp1_ref[...], sh1_ref[...], c1_ref[...])
    # Dropout after each KANLinear is identity in eval mode.
    # Layer 2 has BN *and* the final Linear folded in: emits (TB, OUT_PAD) directly.
    y = _kan_layer(h, wpo_ref[...], sho_ref[...], c2_ref[...])
    o_ref[...] = y.astype(o_ref.dtype)


# ---------------------------------------------------------------------------
# Wrapper
# ---------------------------------------------------------------------------
def kan_mlp_forward(x, kp, block_b=256):
    n, in1 = x.shape
    out_f = kp['out_f']

    n_blocks = -(-n // block_b)          # host-pad ragged batches, slice back below
    n_pad = n_blocks * block_b
    if n_pad != n:
        x = jnp.pad(x, ((0, n_pad - n), (0, 0)))

    # Grid-invariant operands use full-array blocks with a constant index_map:
    # Pallas skips re-DMA when the block index does not change across steps.
    def full(a):
        return pl.BlockSpec(a.shape, lambda i: (0,) * a.ndim)

    out = pl.pallas_call(
        fused_kernel,
        out_shape=jax.ShapeDtypeStruct((n_pad, OUT_PAD), jnp.float32),
        grid_spec=pltpu.PrefetchScalarGridSpec(
            num_scalar_prefetch=0,
            grid=(n_blocks,),
            in_specs=[
                pl.BlockSpec((block_b, in1), lambda i: (i, 0)),
                full(kp['wp1']), full(kp['sh1']), full(kp['c1']),
                full(kp['wpo']), full(kp['sho']), full(kp['c2']),
            ],
            out_specs=pl.BlockSpec((block_b, OUT_PAD), lambda i: (i, 0)),
        ),
        compiler_params=pltpu.CompilerParams(
            dimension_semantics=("parallel",)),
    )(x, kp['wp1'], kp['sh1'], kp['c1'], kp['wpo'], kp['sho'], kp['c2'])
    return out[:n, :out_f]


# ---------------------------------------------------------------------------
# Parameter construction (deterministic, synthetic) and kernel-layout packing
# ---------------------------------------------------------------------------
def init_kan_layer(key, in_f, out_f):
    k = jax.random.split(key, 7)
    bound = 1.0 / math.sqrt(in_f)
    base_w = jax.random.uniform(k[0], (out_f, in_f), jnp.float32, -bound, bound)
    spline_w = jax.random.uniform(k[1], (out_f, in_f, N_COEFF), jnp.float32,
                                  -0.1, 0.1)
    scaler = jax.random.uniform(k[2], (out_f, in_f), jnp.float32, -bound, bound)
    ssw = spline_w * scaler[..., None]                  # scaled_spline_weight

    # BatchNorm1d (eval mode) parameters.
    gamma = 1.0 + 0.1 * jax.random.normal(k[3], (out_f,), jnp.float32)
    beta = 0.1 * jax.random.normal(k[4], (out_f,), jnp.float32)
    run_mean = 0.1 * jax.random.normal(k[5], (out_f,), jnp.float32)
    run_var = jnp.abs(jax.random.normal(k[6], (out_f,), jnp.float32)) + 0.5
    bn_scale = gamma / jnp.sqrt(run_var + BN_EPS)
    bn_shift = beta - run_mean * bn_scale
    return dict(base_w=base_w, ssw=ssw, bn_scale=bn_scale, bn_shift=bn_shift)


def init_linear(key, in_f, out_f):
    k1, k2 = jax.random.split(key)
    bound = 1.0 / math.sqrt(in_f)
    w = jax.random.uniform(k1, (out_f, in_f), jnp.float32, -bound, bound)
    b = jax.random.uniform(k2, (out_f,), jnp.float32, -bound, bound)
    return dict(w=w, b=b)


def pack_params(kan_layers, lin, grid_pts):
    """Repack raw (torch-layout) parameters into the fused-kernel layout.

    All folding (BN scale/shift, and the final Linear into the last KAN layer's
    packed weight) is done here in f32; MXU weight operands are stored as bf16.
    """
    packed = []
    for p in kan_layers:
        out_f, in_f = p['base_w'].shape
        # spline rows: row c*in_f + i = scaled_spline_weight[o, i, c]
        w_sp = p['ssw'].transpose(2, 1, 0).reshape(N_COEFF * in_f, out_f)
        w_b = p['base_w'].T                                     # (in, out)
        wp = jnp.concatenate([w_sp, w_b], axis=0) * p['bn_scale'][None, :]
        sh = p['bn_shift'][None, :]
        packed.append((wp, sh, build_spline_consts(grid_pts, in_f)))

    (wp1, sh1, c1), (wp2, sh2, c2) = packed
    out_f, in_f2 = lin['w'].shape
    w3_pad = jnp.zeros((in_f2, OUT_PAD), jnp.float32).at[:, :out_f].set(lin['w'].T)
    b3_pad = jnp.zeros((1, OUT_PAD), jnp.float32).at[0, :out_f].set(lin['b'])

    kp = {
        'wp1': wp1.astype(MXU_DTYPE),              # (144, 32)
        'sh1': sh1,                                # (1, 32)   f32
        'c1': c1,                                  # (29, 128) f32
        # Review: fold the final Linear into layer 2 (exact in eval mode).
        'wpo': (wp2 @ w3_pad).astype(MXU_DTYPE),   # (288, 128)
        'sho': sh2 @ w3_pad + b3_pad,              # (1, 128)  f32
        'c2': c2,                                  # (29, 256) f32
        'out_f': int(out_f),
    }
    return kp


# ---------------------------------------------------------------------------
# Pure-JAX reference (torch-style formulation, for correctness check only)
# ---------------------------------------------------------------------------
def b_splines_ref(x, grid_pts):
    g = jnp.asarray(grid_pts, jnp.float32)
    xg = x[..., None]
    bases = ((xg >= g[:-1]) & (xg < g[1:])).astype(x.dtype)
    for k in range(1, SPLINE_ORDER + 1):
        bases = ((xg - g[:-(k + 1)]) / (g[k:-1] - g[:-(k + 1)]) * bases[..., :-1]
                 + (g[k + 1:] - xg) / (g[k + 1:] - g[1:-k]) * bases[..., 1:])
    return bases                                   # (n, in, N_COEFF)


def kan_mlp_ref(x, kan_layers, lin, grid_pts):
    h = x
    for p in kan_layers:
        bs = b_splines_ref(h, grid_pts)
        spline_out = jnp.einsum('nic,oic->no', bs, p['ssw'])
        base_out = jax.nn.silu(h) @ p['base_w'].T
        h = (base_out + spline_out) * p['bn_scale'] + p['bn_shift']
        # dropout = identity (eval mode)
    return h @ lin['w'].T + lin['b']


# ---------------------------------------------------------------------------
if __name__ == "__main__":
    # KAN_MLP(layers_hidden=[16, 32, 32, 8]):
    #   KAN over [16, 32, 32] -> KANLinear(16,32), KANLinear(32,32)
    #   MLP over [32, 8]      -> Linear(32, 8)
    layers_hidden = [16, 32, 32, 8]
    batch = 512
    block_b = 256        # 2 even grid steps: both v7x TensorCores get work.
                         # On single-core v5e/v6e prefer block_b=512..2048 to
                         # amortize per-step overhead (fits VMEM easily here).

    key = jax.random.PRNGKey(0)
    kx, k1, k2, k3 = jax.random.split(key, 4)

    x = jax.random.uniform(kx, (batch, layers_hidden[0]), jnp.float32,
                           minval=-1.0, maxval=1.0)

    grid_pts = make_grid_pts()
    kan_layers = [
        init_kan_layer(k1, layers_hidden[0], layers_hidden[1]),
        init_kan_layer(k2, layers_hidden[1], layers_hidden[2]),
    ]
    lin = init_linear(k3, layers_hidden[2], layers_hidden[3])
    kp = pack_params(kan_layers, lin, grid_pts)

    out = kan_mlp_forward(x, kp, block_b=block_b)
    out = jax.block_until_ready(out)

    ref = kan_mlp_ref(x, kan_layers, lin, grid_pts)
    assert out.shape == (batch, layers_hidden[-1]), out.shape
    assert bool(jnp.all(jnp.isfinite(out))), "non-finite output"
    # Tolerance covers bf16 MXU operand rounding (weights + packed activations),
    # the EUP approx-reciprocal SiLU, and matmul-path differences vs the unfused
    # f32 XLA reference (typical max-abs error observed ~1e-2 at these scales).
    max_err = float(jnp.max(jnp.abs(out - ref)))
    assert jnp.allclose(out, ref, atol=5e-2, rtol=5e-2), max_err

    print("KERNEL_OK")
</pallas_src>

<mosaic_0001>
module attributes {stable_mosaic.version = 11 : i64} {
  func.func @fused_kernel(%arg0: i32, %arg1: memref<256x16xf32, #tpu.memory_space<vmem>>, %arg2: memref<144x32xbf16, #tpu.memory_space<vmem>>, %arg3: memref<1x32xf32, #tpu.memory_space<vmem>>, %arg4: memref<29x128xf32, #tpu.memory_space<vmem>>, %arg5: memref<288x128xbf16, #tpu.memory_space<vmem>>, %arg6: memref<1x128xf32, #tpu.memory_space<vmem>>, %arg7: memref<29x256xf32, #tpu.memory_space<vmem>>, %arg8: memref<256x128xf32, #tpu.memory_space<vmem>>) attributes {dimension_semantics = [#tpu.dimension_semantics<parallel>], iteration_bounds = array<i64: 2>, scalar_prefetch = 0 : i64, scratch_operands = 0 : i64, tpu.core_type = #tpu.core_type<tc>, window_params = [{transform_indices = @transform_0, window_bounds = array<i64: 256, 16>}, {pipeline_mode = #tpu.pipeline_mode<synchronous>, transform_indices = @transform_1, window_bounds = array<i64: 144, 32>}, {pipeline_mode = #tpu.pipeline_mode<synchronous>, transform_indices = @transform_2, window_bounds = array<i64: 1, 32>}, {pipeline_mode = #tpu.pipeline_mode<synchronous>, transform_indices = @transform_3, window_bounds = array<i64: 29, 128>}, {pipeline_mode = #tpu.pipeline_mode<synchronous>, transform_indices = @transform_4, window_bounds = array<i64: 288, 128>}, {pipeline_mode = #tpu.pipeline_mode<synchronous>, transform_indices = @transform_5, window_bounds = array<i64: 1, 128>}, {pipeline_mode = #tpu.pipeline_mode<synchronous>, transform_indices = @transform_6, window_bounds = array<i64: 29, 256>}, {transform_indices = @transform_7, window_bounds = array<i64: 256, 128>}]} {
    %c0 = arith.constant 0 : index
    %c0_0 = arith.constant 0 : index
    %0 = vector.load %arg1[%c0, %c0_0] : memref<256x16xf32, #tpu.memory_space<vmem>>, vector<256x16xf32>
    %c0_1 = arith.constant 0 : index
    %c0_2 = arith.constant 0 : index
    %1 = vector.load %arg2[%c0_1, %c0_2] : memref<144x32xbf16, #tpu.memory_space<vmem>>, vector<144x32xbf16>
    %c0_3 = arith.constant 0 : index
    %c0_4 = arith.constant 0 : index
    %2 = vector.load %arg3[%c0_3, %c0_4] : memref<1x32xf32, #tpu.memory_space<vmem>>, vector<1x32xf32>
    %c0_5 = arith.constant 0 : index
    %c0_6 = arith.constant 0 : index
    %3 = vector.load %arg4[%c0_5, %c0_6] : memref<29x128xf32, #tpu.memory_space<vmem>>, vector<29x128xf32>
    %4 = tpu.concatenate %0, %0, %0, %0, %0, %0, %0, %0 in 1 : vector<256x16xf32>, vector<256x16xf32>, vector<256x16xf32>, vector<256x16xf32>, vector<256x16xf32>, vector<256x16xf32>, vector<256x16xf32>, vector<256x16xf32> -> vector<256x128xf32>
    %5 = vector.extract_strided_slice %3 {offsets = [0, 0], sizes = [1, 128], strides = [1, 1]} : vector<29x128xf32> to vector<1x128xf32>
    %6 = vector.broadcast %5 : vector<1x128xf32> to vector<256x128xf32>
    %7 = arith.cmpf oge, %4, %6 : vector<256x128xf32>
    %8 = arith.extui %7 : vector<256x128xi1> to vector<256x128xi32>
    %9 = arith.sitofp %8 : vector<256x128xi32> to vector<256x128xf32>
    %10 = vector.extract_strided_slice %3 {offsets = [1, 0], sizes = [1, 128], strides = [1, 1]} : vector<29x128xf32> to vector<1x128xf32>
    %11 = vector.broadcast %10 : vector<1x128xf32> to vector<256x128xf32>
    %12 = arith.cmpf oge, %4, %11 : vector<256x128xf32>
    %13 = arith.extui %12 : vector<256x128xi1> to vector<256x128xi32>
    %14 = arith.sitofp %13 : vector<256x128xi32> to vector<256x128xf32>
    %15 = vector.extract_strided_slice %3 {offsets = [2, 0], sizes = [1, 128], strides = [1, 1]} : vector<29x128xf32> to vector<1x128xf32>
    %16 = vector.broadcast %15 : vector<1x128xf32> to vector<256x128xf32>
    %17 = arith.cmpf oge, %4, %16 : vector<256x128xf32>
    %18 = arith.extui %17 : vector<256x128xi1> to vector<256x128xi32>
    %19 = arith.sitofp %18 : vector<256x128xi32> to vector<256x128xf32>
    %20 = vector.extract_strided_slice %3 {offsets = [3, 0], sizes = [1, 128], strides = [1, 1]} : vector<29x128xf32> to vector<1x128xf32>
    %21 = vector.broadcast %20 : vector<1x128xf32> to vector<256x128xf32>
    %22 = arith.cmpf oge, %4, %21 : vector<256x128xf32>
    %23 = arith.extui %22 : vector<256x128xi1> to vector<256x128xi32>
    %24 = arith.sitofp %23 : vector<256x128xi32> to vector<256x128xf32>
    %25 = vector.extract_strided_slice %3 {offsets = [4, 0], sizes = [1, 128], strides = [1, 1]} : vector<29x128xf32> to vector<1x128xf32>
    %26 = vector.broadcast %25 : vector<1x128xf32> to vector<256x128xf32>
    %27 = arith.cmpf oge, %4, %26 : vector<256x128xf32>
    %28 = arith.extui %27 : vector<256x128xi1> to vector<256x128xi32>
    %29 = arith.sitofp %28 : vector<256x128xi32> to vector<256x128xf32>
    %30 = arith.subf %9, %14 : vector<256x128xf32>
    %31 = arith.subf %14, %19 : vector<256x128xf32>
    %32 = arith.subf %19, %24 : vector<256x128xf32>
    %33 = arith.subf %24, %29 : vector<256x128xf32>
    %34 = vector.extract_strided_slice %3 {offsets = [5, 0], sizes = [1, 128], strides = [1, 1]} : vector<29x128xf32> to vector<1x128xf32>
    %35 = vector.extract_strided_slice %3 {offsets = [6, 0], sizes = [1, 128], strides = [1, 1]} : vector<29x128xf32> to vector<1x128xf32>
    %36 = vector.extract_strided_slice %3 {offsets = [7, 0], sizes = [1, 128], strides = [1, 1]} : vector<29x128xf32> to vector<1x128xf32>
    %37 = vector.extract_strided_slice %3 {offsets = [8, 0], sizes = [1, 128], strides = [1, 1]} : vector<29x128xf32> to vector<1x128xf32>
    %38 = vector.broadcast %34 : vector<1x128xf32> to vector<256x128xf32>
    %39 = arith.subf %4, %38 : vector<256x128xf32>
    %40 = vector.broadcast %35 : vector<1x128xf32> to vector<256x128xf32>
    %41 = arith.mulf %39, %40 : vector<256x128xf32>
    %42 = arith.mulf %41, %30 : vector<256x128xf32>
    %43 = vector.broadcast %36 : vector<1x128xf32> to vector<256x128xf32>
    %44 = arith.subf %43, %4 : vector<256x128xf32>
    %45 = vector.broadcast %37 : vector<1x128xf32> to vector<256x128xf32>
    %46 = arith.mulf %44, %45 : vector<256x128xf32>
    %47 = arith.mulf %46, %31 : vector<256x128xf32>
    %48 = arith.addf %42, %47 : vector<256x128xf32>
    %49 = vector.extract_strided_slice %3 {offsets = [9, 0], sizes = [1, 128], strides = [1, 1]} : vector<29x128xf32> to vector<1x128xf32>
    %50 = vector.extract_strided_slice %3 {offsets = [10, 0], sizes = [1, 128], strides = [1, 1]} : vector<29x128xf32> to vector<1x128xf32>
    %51 = vector.extract_strided_slice %3 {offsets = [11, 0], sizes = [1, 128], strides = [1, 1]} : vector<29x128xf32> to vector<1x128xf32>
    %52 = vector.extract_strided_slice %3 {offsets = [12, 0], sizes = [1, 128], strides = [1, 1]} : vector<29x128xf32> to vector<1x128xf32>
    %53 = vector.broadcast %49 : vector<1x128xf32> to vector<256x128xf32>
    %54 = arith.subf %4, %53 : vector<256x128xf32>
    %55 = vector.broadcast %50 : vector<1x128xf32> to vector<256x128xf32>
    %56 = arith.mulf %54, %55 : vector<256x128xf32>
    %57 = arith.mulf %56, %31 : vector<256x128xf32>
    %58 = vector.broadcast %51 : vector<1x128xf32> to vector<256x128xf32>
    %59 = arith.subf %58, %4 : vector<256x128xf32>
    %60 = vector.broadcast %52 : vector<1x128xf32> to vector<256x128xf32>
    %61 = arith.mulf %59, %60 : vector<256x128xf32>
    %62 = arith.mulf %61, %32 : vector<256x128xf32>
    %63 = arith.addf %57, %62 : vector<256x128xf32>
    %64 = vector.extract_strided_slice %3 {offsets = [13, 0], sizes = [1, 128], strides = [1, 1]} : vector<29x128xf32> to vector<1x128xf32>
    %65 = vector.extract_strided_slice %3 {offsets = [14, 0], sizes = [1, 128], strides = [1, 1]} : vector<29x128xf32> to vector<1x128xf32>
    %66 = vector.extract_strided_slice %3 {offsets = [15, 0], sizes = [1, 128], strides = [1, 1]} : vector<29x128xf32> to vector<1x128xf32>
    %67 = vector.extract_strided_slice %3 {offsets = [16, 0], sizes = [1, 128], strides = [1, 1]} : vector<29x128xf32> to vector<1x128xf32>
    %68 = vector.broadcast %64 : vector<1x128xf32> to vector<256x128xf32>
    %69 = arith.subf %4, %68 : vector<256x128xf32>
    %70 = vector.broadcast %65 : vector<1x128xf32> to vector<256x128xf32>
    %71 = arith.mulf %69, %70 : vector<256x128xf32>
    %72 = arith.mulf %71, %32 : vector<256x128xf32>
    %73 = vector.broadcast %66 : vector<1x128xf32> to vector<256x128xf32>
    %74 = arith.subf %73, %4 : vector<256x128xf32>
    %75 = vector.broadcast %67 : vector<1x128xf32> to vector<256x128xf32>
    %76 = arith.mulf %74, %75 : vector<256x128xf32>
    %77 = arith.mulf %76, %33 : vector<256x128xf32>
    %78 = arith.addf %72, %77 : vector<256x128xf32>
    %79 = vector.extract_strided_slice %3 {offsets = [17, 0], sizes = [1, 128], strides = [1, 1]} : vector<29x128xf32> to vector<1x128xf32>
    %80 = vector.extract_strided_slice %3 {offsets = [18, 0], sizes = [1, 128], strides = [1, 1]} : vector<29x128xf32> to vector<1x128xf32>
    %81 = vector.extract_strided_slice %3 {offsets = [19, 0], sizes = [1, 128], strides = [1, 1]} : vector<29x128xf32> to vector<1x128xf32>
    %82 = vector.extract_strided_slice %3 {offsets = [20, 0], sizes = [1, 128], strides = [1, 1]} : vector<29x128xf32> to vector<1x128xf32>
    %83 = vector.broadcast %79 : vector<1x128xf32> to vector<256x128xf32>
    %84 = arith.subf %4, %83 : vector<256x128xf32>
    %85 = vector.broadcast %80 : vector<1x128xf32> to vector<256x128xf32>
    %86 = arith.mulf %84, %85 : vector<256x128xf32>
    %87 = arith.mulf %86, %48 : vector<256x128xf32>
    %88 = vector.broadcast %81 : vector<1x128xf32> to vector<256x128xf32>
    %89 = arith.subf %88, %4 : vector<256x128xf32>
    %90 = vector.broadcast %82 : vector<1x128xf32> to vector<256x128xf32>
    %91 = arith.mulf %89, %90 : vector<256x128xf32>
    %92 = arith.mulf %91, %63 : vector<256x128xf32>
    %93 = arith.addf %87, %92 : vector<256x128xf32>
    %94 = vector.extract_strided_slice %3 {offsets = [21, 0], sizes = [1, 128], strides = [1, 1]} : vector<29x128xf32> to vector<1x128xf32>
    %95 = vector.extract_strided_slice %3 {offsets = [22, 0], sizes = [1, 128], strides = [1, 1]} : vector<29x128xf32> to vector<1x128xf32>
    %96 = vector.extract_strided_slice %3 {offsets = [23, 0], sizes = [1, 128], strides = [1, 1]} : vector<29x128xf32> to vector<1x128xf32>
    %97 = vector.extract_strided_slice %3 {offsets = [24, 0], sizes = [1, 128], strides = [1, 1]} : vector<29x128xf32> to vector<1x128xf32>
    %98 = vector.broadcast %94 : vector<1x128xf32> to vector<256x128xf32>
    %99 = arith.subf %4, %98 : vector<256x128xf32>
    %100 = vector.broadcast %95 : vector<1x128xf32> to vector<256x128xf32>
    %101 = arith.mulf %99, %100 : vector<256x128xf32>
    %102 = arith.mulf %101, %63 : vector<256x128xf32>
    %103 = vector.broadcast %96 : vector<1x128xf32> to vector<256x128xf32>
    %104 = arith.subf %103, %4 : vector<256x128xf32>
    %105 = vector.broadcast %97 : vector<1x128xf32> to vector<256x128xf32>
    %106 = arith.mulf %104, %105 : vector<256x128xf32>
    %107 = arith.mulf %106, %78 : vector<256x128xf32>
    %108 = arith.addf %102, %107 : vector<256x128xf32>
    %109 = vector.extract_strided_slice %3 {offsets = [25, 0], sizes = [1, 128], strides = [1, 1]} : vector<29x128xf32> to vector<1x128xf32>
    %110 = vector.extract_strided_slice %3 {offsets = [26, 0], sizes = [1, 128], strides = [1, 1]} : vector<29x128xf32> to vector<1x128xf32>
    %111 = vector.extract_strided_slice %3 {offsets = [27, 0], sizes = [1, 128], strides = [1, 1]} : vector<29x128xf32> to vector<1x128xf32>
    %112 = vector.extract_strided_slice %3 {offsets = [28, 0], sizes = [1, 128], strides = [1, 1]} : vector<29x128xf32> to vector<1x128xf32>
    %113 = vector.broadcast %109 : vector<1x128xf32> to vector<256x128xf32>
    %114 = arith.subf %4, %113 : vector<256x128xf32>
    %115 = vector.broadcast %110 : vector<1x128xf32> to vector<256x128xf32>
    %116 = arith.mulf %114, %115 : vector<256x128xf32>
    %117 = arith.mulf %116, %93 : vector<256x128xf32>
    %118 = vector.broadcast %111 : vector<1x128xf32> to vector<256x128xf32>
    %119 = arith.subf %118, %4 : vector<256x128xf32>
    %120 = vector.broadcast %112 : vector<1x128xf32> to vector<256x128xf32>
    %121 = arith.mulf %119, %120 : vector<256x128xf32>
    %122 = arith.mulf %121, %108 : vector<256x128xf32>
    %123 = arith.addf %117, %122 : vector<256x128xf32>
    %cst = arith.constant 0.000000e+00 : f32
    %124 = vector.broadcast %cst : f32 to vector<256x16xf32>
    %125 = arith.subf %124, %0 : vector<256x16xf32>
    %126 = math.exp %125 : vector<256x16xf32>
    %cst_7 = arith.constant 1.000000e+00 : f32
    %127 = vector.broadcast %cst_7 : f32 to vector<256x16xf32>
    %128 = arith.addf %127, %126 : vector<256x16xf32>
    %129 = tpu.reciprocal %128 {approx = true} : vector<256x16xf32> -> vector<256x16xf32>
    %130 = arith.mulf %0, %129 : vector<256x16xf32>
    %131 = tpu.concatenate %123, %130 in 1 : vector<256x128xf32>, vector<256x16xf32> -> vector<256x144xf32>
    %132 = arith.truncf %131 : vector<256x144xf32> to vector<256x144xbf16>
    %cst_8 = arith.constant dense<0.000000e+00> : vector<256x32xf32>
    %133 = tpu.matmul %132, %1, %cst_8 {dimension_numbers = #tpu.dot_dimension_numbers<[1], [0], [0], [1], [0, 0, 1, 1], [], []>} : vector<256x144xbf16>, vector<144x32xbf16>, vector<256x32xf32> -> vector<256x32xf32>
    %134 = vector.broadcast %2 : vector<1x32xf32> to vector<256x32xf32>
    %135 = arith.addf %133, %134 : vector<256x32xf32>
    %c0_9 = arith.constant 0 : index
    %c0_10 = arith.constant 0 : index
    %136 = vector.load %arg5[%c0_9, %c0_10] : memref<288x128xbf16, #tpu.memory_space<vmem>>, vector<288x128xbf16>
    %c0_11 = arith.constant 0 : index
    %c0_12 = arith.constant 0 : index
    %137 = vector.load %arg6[%c0_11, %c0_12] : memref<1x128xf32, #tpu.memory_space<vmem>>, vector<1x128xf32>
    %c0_13 = arith.constant 0 : index
    %c0_14 = arith.constant 0 : index
    %138 = vector.load %arg7[%c0_13, %c0_14] : memref<29x256xf32, #tpu.memory_space<vmem>>, vector<29x256xf32>
    %139 = tpu.concatenate %135, %135, %135, %135, %135, %135, %135, %135 in 1 : vector<256x32xf32>, vector<256x32xf32>, vector<256x32xf32>, vector<256x32xf32>, vector<256x32xf32>, vector<256x32xf32>, vector<256x32xf32>, vector<256x32xf32> -> vector<256x256xf32>
    %140 = vector.extract_strided_slice %138 {offsets = [0, 0], sizes = [1, 256], strides = [1, 1]} : vector<29x256xf32> to vector<1x256xf32>
    %141 = vector.broadcast %140 : vector<1x256xf32> to vector<256x256xf32>
    %142 = arith.cmpf oge, %139, %141 : vector<256x256xf32>
    %143 = arith.extui %142 : vector<256x256xi1> to vector<256x256xi32>
    %144 = arith.sitofp %143 : vector<256x256xi32> to vector<256x256xf32>
    %145 = vector.extract_strided_slice %138 {offsets = [1, 0], sizes = [1, 256], strides = [1, 1]} : vector<29x256xf32> to vector<1x256xf32>
    %146 = vector.broadcast %145 : vector<1x256xf32> to vector<256x256xf32>
    %147 = arith.cmpf oge, %139, %146 : vector<256x256xf32>
    %148 = arith.extui %147 : vector<256x256xi1> to vector<256x256xi32>
    %149 = arith.sitofp %148 : vector<256x256xi32> to vector<256x256xf32>
    %150 = vector.extract_strided_slice %138 {offsets = [2, 0], sizes = [1, 256], strides = [1, 1]} : vector<29x256xf32> to vector<1x256xf32>
    %151 = vector.broadcast %150 : vector<1x256xf32> to vector<256x256xf32>
    %152 = arith.cmpf oge, %139, %151 : vector<256x256xf32>
    %153 = arith.extui %152 : vector<256x256xi1> to vector<256x256xi32>
    %154 = arith.sitofp %153 : vector<256x256xi32> to vector<256x256xf32>
    %155 = vector.extract_strided_slice %138 {offsets = [3, 0], sizes = [1, 256], strides = [1, 1]} : vector<29x256xf32> to vector<1x256xf32>
    %156 = vector.broadcast %155 : vector<1x256xf32> to vector<256x256xf32>
    %157 = arith.cmpf oge, %139, %156 : vector<256x256xf32>
    %158 = arith.extui %157 : vector<256x256xi1> to vector<256x256xi32>
    %159 = arith.sitofp %158 : vector<256x256xi32> to vector<256x256xf32>
    %160 = vector.extract_strided_slice %138 {offsets = [4, 0], sizes = [1, 256], strides = [1, 1]} : vector<29x256xf32> to vector<1x256xf32>
    %161 = vector.broadcast %160 : vector<1x256xf32> to vector<256x256xf32>
    %162 = arith.cmpf oge, %139, %161 : vector<256x256xf32>
    %163 = arith.extui %162 : vector<256x256xi1> to vector<256x256xi32>
    %164 = arith.sitofp %163 : vector<256x256xi32> to vector<256x256xf32>
    %165 = arith.subf %144, %149 : vector<256x256xf32>
    %166 = arith.subf %149, %154 : vector<256x256xf32>
    %167 = arith.subf %154, %159 : vector<256x256xf32>
    %168 = arith.subf %159, %164 : vector<256x256xf32>
    %169 = vector.extract_strided_slice %138 {offsets = [5, 0], sizes = [1, 256], strides = [1, 1]} : vector<29x256xf32> to vector<1x256xf32>
    %170 = vector.extract_strided_slice %138 {offsets = [6, 0], sizes = [1, 256], strides = [1, 1]} : vector<29x256xf32> to vector<1x256xf32>
    %171 = vector.extract_strided_slice %138 {offsets = [7, 0], sizes = [1, 256], strides = [1, 1]} : vector<29x256xf32> to vector<1x256xf32>
    %172 = vector.extract_strided_slice %138 {offsets = [8, 0], sizes = [1, 256], strides = [1, 1]} : vector<29x256xf32> to vector<1x256xf32>
    %173 = vector.broadcast %169 : vector<1x256xf32> to vector<256x256xf32>
    %174 = arith.subf %139, %173 : vector<256x256xf32>
    %175 = vector.broadcast %170 : vector<1x256xf32> to vector<256x256xf32>
    %176 = arith.mulf %174, %175 : vector<256x256xf32>
    %177 = arith.mulf %176, %165 : vector<256x256xf32>
    %178 = vector.broadcast %171 : vector<1x256xf32> to vector<256x256xf32>
    %179 = arith.subf %178, %139 : vector<256x256xf32>
    %180 = vector.broadcast %172 : vector<1x256xf32> to vector<256x256xf32>
    %181 = arith.mulf %179, %180 : vector<256x256xf32>
    %182 = arith.mulf %181, %166 : vector<256x256xf32>
    %183 = arith.addf %177, %182 : vector<256x256xf32>
    %184 = vector.extract_strided_slice %138 {offsets = [9, 0], sizes = [1, 256], strides = [1, 1]} : vector<29x256xf32> to vector<1x256xf32>
    %185 = vector.extract_strided_slice %138 {offsets = [10, 0], sizes = [1, 256], strides = [1, 1]} : vector<29x256xf32> to vector<1x256xf32>
    %186 = vector.extract_strided_slice %138 {offsets = [11, 0], sizes = [1, 256], strides = [1, 1]} : vector<29x256xf32> to vector<1x256xf32>
    %187 = vector.extract_strided_slice %138 {offsets = [12, 0], sizes = [1, 256], strides = [1, 1]} : vector<29x256xf32> to vector<1x256xf32>
    %188 = vector.broadcast %184 : vector<1x256xf32> to vector<256x256xf32>
    %189 = arith.subf %139, %188 : vector<256x256xf32>
    %190 = vector.broadcast %185 : vector<1x256xf32> to vector<256x256xf32>
    %191 = arith.mulf %189, %190 : vector<256x256xf32>
    %192 = arith.mulf %191, %166 : vector<256x256xf32>
    %193 = vector.broadcast %186 : vector<1x256xf32> to vector<256x256xf32>
    %194 = arith.subf %193, %139 : vector<256x256xf32>
    %195 = vector.broadcast %187 : vector<1x256xf32> to vector<256x256xf32>
    %196 = arith.mulf %194, %195 : vector<256x256xf32>
    %197 = arith.mulf %196, %167 : vector<256x256xf32>
    %198 = arith.addf %192, %197 : vector<256x256xf32>
    %199 = vector.extract_strided_slice %138 {offsets = [13, 0], sizes = [1, 256], strides = [1, 1]} : vector<29x256xf32> to vector<1x256xf32>
    %200 = vector.extract_strided_slice %138 {offsets = [14, 0], sizes = [1, 256], strides = [1, 1]} : vector<29x256xf32> to vector<1x256xf32>
    %201 = vector.extract_strided_slice %138 {offsets = [15, 0], sizes = [1, 256], strides = [1, 1]} : vector<29x256xf32> to vector<1x256xf32>
    %202 = vector.extract_strided_slice %138 {offsets = [16, 0], sizes = [1, 256], strides = [1, 1]} : vector<29x256xf32> to vector<1x256xf32>
    %203 = vector.broadcast %199 : vector<1x256xf32> to vector<256x256xf32>
    %204 = arith.subf %139, %203 : vector<256x256xf32>
    %205 = vector.broadcast %200 : vector<1x256xf32> to vector<256x256xf32>
    %206 = arith.mulf %204, %205 : vector<256x256xf32>
    %207 = arith.mulf %206, %167 : vector<256x256xf32>
    %208 = vector.broadcast %201 : vector<1x256xf32> to vector<256x256xf32>
    %209 = arith.subf %208, %139 : vector<256x256xf32>
    %210 = vector.broadcast %202 : vector<1x256xf32> to vector<256x256xf32>
    %211 = arith.mulf %209, %210 : vector<256x256xf32>
    %212 = arith.mulf %211, %168 : vector<256x256xf32>
    %213 = arith.addf %207, %212 : vector<256x256xf32>
    %214 = vector.extract_strided_slice %138 {offsets = [17, 0], sizes = [1, 256], strides = [1, 1]} : vector<29x256xf32> to vector<1x256xf32>
    %215 = vector.extract_strided_slice %138 {offsets = [18, 0], sizes = [1, 256], strides = [1, 1]} : vector<29x256xf32> to vector<1x256xf32>
    %216 = vector.extract_strided_slice %138 {offsets = [19, 0], sizes = [1, 256], strides = [1, 1]} : vector<29x256xf32> to vector<1x256xf32>
    %217 = vector.extract_strided_slice %138 {offsets = [20, 0], sizes = [1, 256], strides = [1, 1]} : vector<29x256xf32> to vector<1x256xf32>
    %218 = vector.broadcast %214 : vector<1x256xf32> to vector<256x256xf32>
    %219 = arith.subf %139, %218 : vector<256x256xf32>
    %220 = vector.broadcast %215 : vector<1x256xf32> to vector<256x256xf32>
    %221 = arith.mulf %219, %220 : vector<256x256xf32>
    %222 = arith.mulf %221, %183 : vector<256x256xf32>
    %223 = vector.broadcast %216 : vector<1x256xf32> to vector<256x256xf32>
    %224 = arith.subf %223, %139 : vector<256x256xf32>
    %225 = vector.broadcast %217 : vector<1x256xf32> to vector<256x256xf32>
    %226 = arith.mulf %224, %225 : vector<256x256xf32>
    %227 = arith.mulf %226, %198 : vector<256x256xf32>
    %228 = arith.addf %222, %227 : vector<256x256xf32>
    %229 = vector.extract_strided_slice %138 {offsets = [21, 0], sizes = [1, 256], strides = [1, 1]} : vector<29x256xf32> to vector<1x256xf32>
    %230 = vector.extract_strided_slice %138 {offsets = [22, 0], sizes = [1, 256], strides = [1, 1]} : vector<29x256xf32> to vector<1x256xf32>
    %231 = vector.extract_strided_slice %138 {offsets = [23, 0], sizes = [1, 256], strides = [1, 1]} : vector<29x256xf32> to vector<1x256xf32>
    %232 = vector.extract_strided_slice %138 {offsets = [24, 0], sizes = [1, 256], strides = [1, 1]} : vector<29x256xf32> to vector<1x256xf32>
    %233 = vector.broadcast %229 : vector<1x256xf32> to vector<256x256xf32>
    %234 = arith.subf %139, %233 : vector<256x256xf32>
    %235 = vector.broadcast %230 : vector<1x256xf32> to vector<256x256xf32>
    %236 = arith.mulf %234, %235 : vector<256x256xf32>
    %237 = arith.mulf %236, %198 : vector<256x256xf32>
    %238 = vector.broadcast %231 : vector<1x256xf32> to vector<256x256xf32>
    %239 = arith.subf %238, %139 : vector<256x256xf32>
    %240 = vector.broadcast %232 : vector<1x256xf32> to vector<256x256xf32>
    %241 = arith.mulf %239, %240 : vector<256x256xf32>
    %242 = arith.mulf %241, %213 : vector<256x256xf32>
    %243 = arith.addf %237, %242 : vector<256x256xf32>
    %244 = vector.extract_strided_slice %138 {offsets = [25, 0], sizes = [1, 256], strides = [1, 1]} : vector<29x256xf32> to vector<1x256xf32>
    %245 = vector.extract_strided_slice %138 {offsets = [26, 0], sizes = [1, 256], strides = [1, 1]} : vector<29x256xf32> to vector<1x256xf32>
    %246 = vector.extract_strided_slice %138 {offsets = [27, 0], sizes = [1, 256], strides = [1, 1]} : vector<29x256xf32> to vector<1x256xf32>
    %247 = vector.extract_strided_slice %138 {offsets = [28, 0], sizes = [1, 256], strides = [1, 1]} : vector<29x256xf32> to vector<1x256xf32>
    %248 = vector.broadcast %244 : vector<1x256xf32> to vector<256x256xf32>
    %249 = arith.subf %139, %248 : vector<256x256xf32>
    %250 = vector.broadcast %245 : vector<1x256xf32> to vector<256x256xf32>
    %251 = arith.mulf %249, %250 : vector<256x256xf32>
    %252 = arith.mulf %251, %228 : vector<256x256xf32>
    %253 = vector.broadcast %246 : vector<1x256xf32> to vector<256x256xf32>
    %254 = arith.subf %253, %139 : vector<256x256xf32>
    %255 = vector.broadcast %247 : vector<1x256xf32> to vector<256x256xf32>
    %256 = arith.mulf %254, %255 : vector<256x256xf32>
    %257 = arith.mulf %256, %243 : vector<256x256xf32>
    %258 = arith.addf %252, %257 : vector<256x256xf32>
    %cst_15 = arith.constant 0.000000e+00 : f32
    %259 = vector.broadcast %cst_15 : f32 to vector<256x32xf32>
    %260 = arith.subf %259, %135 : vector<256x32xf32>
    %261 = math.exp %260 : vector<256x32xf32>
    %cst_16 = arith.constant 1.000000e+00 : f32
    %262 = vector.broadcast %cst_16 : f32 to vector<256x32xf32>
    %263 = arith.addf %262, %261 : vector<256x32xf32>
    %264 = tpu.reciprocal %263 {approx = true} : vector<256x32xf32> -> vector<256x32xf32>
    %265 = arith.mulf %135, %264 : vector<256x32xf32>
    %266 = tpu.concatenate %258, %265 in 1 : vector<256x256xf32>, vector<256x32xf32> -> vector<256x288xf32>
    %267 = arith.truncf %266 : vector<256x288xf32> to vector<256x288xbf16>
    %cst_17 = arith.constant dense<0.000000e+00> : vector<256x128xf32>
    %268 = tpu.matmul %267, %136, %cst_17 {dimension_numbers = #tpu.dot_dimension_numbers<[1], [0], [0], [1], [0, 0, 1, 1], [], []>} : vector<256x288xbf16>, vector<288x128xbf16>, vector<256x128xf32> -> vector<256x128xf32>
    %269 = vector.broadcast %137 : vector<1x128xf32> to vector<256x128xf32>
    %270 = arith.addf %268, %269 : vector<256x128xf32>
    %c0_18 = arith.constant 0 : index
    %c0_19 = arith.constant 0 : index
    %271 = vector.load %arg8[%c0_18, %c0_19] : memref<256x128xf32, #tpu.memory_space<vmem>>, vector<256x128xf32>
    tpu.vector_store %arg8[%c0_18, %c0_19], %270 {strides = array<i32>} : memref<256x128xf32, #tpu.memory_space<vmem>>, vector<256x128xf32>,
    return
  }
  func.func @transform_0(%arg0: i32) -> (i32, i32) {
    %c0_i32 = arith.constant 0 : i32
    %c0_i32_0 = arith.constant 0 : i32
    return %arg0, %c0_i32 : i32, i32
  }
  func.func @transform_1(%arg0: i32) -> (i32, i32) {
    %c0_i32 = arith.constant 0 : i32
    %c0_i32_0 = arith.constant 0 : i32
    %c0_i32_1 = arith.constant 0 : i32
    return %c0_i32, %c0_i32_0 : i32, i32
  }
  func.func @transform_2(%arg0: i32) -> (i32, i32) {
    %c0_i32 = arith.constant 0 : i32
    %c0_i32_0 = arith.constant 0 : i32
    %c0_i32_1 = arith.constant 0 : i32
    return %c0_i32, %c0_i32_0 : i32, i32
  }
  func.func @transform_3(%arg0: i32) -> (i32, i32) {
    %c0_i32 = arith.constant 0 : i32
    %c0_i32_0 = arith.constant 0 : i32
    %c0_i32_1 = arith.constant 0 : i32
    return %c0_i32, %c0_i32_0 : i32, i32
  }
  func.func @transform_4(%arg0: i32) -> (i32, i32) {
    %c0_i32 = arith.constant 0 : i32
    %c0_i32_0 = arith.constant 0 : i32
    %c0_i32_1 = arith.constant 0 : i32
    return %c0_i32, %c0_i32_0 : i32, i32
  }
  func.func @transform_5(%arg0: i32) -> (i32, i32) {
    %c0_i32 = arith.constant 0 : i32
    %c0_i32_0 = arith.constant 0 : i32
    %c0_i32_1 = arith.constant 0 : i32
    return %c0_i32, %c0_i32_0 : i32, i32
  }
  func.func @transform_6(%arg0: i32) -> (i32, i32) {
    %c0_i32 = arith.constant 0 : i32
    %c0_i32_0 = arith.constant 0 : i32
    %c0_i32_1 = arith.constant 0 : i32
    return %c0_i32, %c0_i32_0 : i32, i32
  }
  func.func @transform_7(%arg0: i32) -> (i32, i32) {
    %c0_i32 = arith.constant 0 : i32
    %c0_i32_0 = arith.constant 0 : i32
    return %arg0, %c0_i32 : i32, i32
  }
}

</mosaic_0001>

<llo_original>
// kernel: tpu_custom_call.1
$region0: #{tpu_custom_call.1}
  #allocation0 [shape = 'u32[]', space=smem, size = 0x4, offset = 0x4, fixed_abs, tag = 'smem constant byte address 0x4 - core index']
  #allocation1 [shape = 'u32[144,128]{1,0:T(1,128)}', space=vmem, size = 0x12000, scoped, tag = 'internal scratch']
  %s0 = inlined_call_operand.vmem [shape: f32[512,16], index: 0, kind: input, shape index: {}]
  %s1 = inlined_call_operand.vmem [shape: bf16[144,32], index: 1, kind: input, shape index: {}]
  %s2 = inlined_call_operand.vmem [shape: f32[1,32], index: 2, kind: input, shape index: {}]
  %s3 = inlined_call_operand.vmem [shape: f32[29,128], index: 3, kind: input, shape index: {}]
  %s4 = inlined_call_operand.vmem [shape: bf16[288,128], index: 4, kind: input, shape index: {}]
  %s5 = inlined_call_operand.vmem [shape: f32[1,128], index: 5, kind: input, shape index: {}]
  %s6 = inlined_call_operand.vmem [shape: f32[29,256], index: 6, kind: input, shape index: {}]
  %s7 = inlined_call_operand.hbm [shape: f32[512,128], index: 7, kind: output, shape index: {}]
  %s8 = sld [smem:[#allocation0]]
  $region61: #{tpu_custom_call.1} parent=0
    _
  %s10 = ssub.s32 1, %s8
  %s11 = scalar_select 0, %s10, %s8
  $region1: #{tpu_custom_call.1} parent=0
    #allocation2 [shape = 'u8[262144]{0}', space=vmem, size = 0x40000, scoped, tag = 'output window, operand 0']
    #allocation3 [shape = 's32[2]{0}', space=sflag, size = 0x8, scoped, tag = 'scoped memory for tpu_custom_call.1']
    %12 = vsyncpa [#allocation3], 0
    %s13 = scalar_lea.sflag [#allocation3], 1
    %14 = vsyncpa %s13, 0
    loop: start=0, step=1, limit=4
    $region2: #{tpu_custom_call.1} parent=1 // loop_pre_header
      _
    $region3: #{tpu_custom_call.1} parent=1 // loop_header
      %s16 = sphi 0, %s20
      %p17 = scmp.ge.s32.totalorder %s16, 4
      %s26 = sphi 0, %s28
      %s29 = sphi 0, %s26
      %s30 = sphi 0, %s29
      %s46 = sphi 0, %s30
      %s50 = sphi 0, %s50
      %s52 = sphi 0, %s50
      %s53 = sphi 0, %s52
      %s67 = sphi 0, %s53
      %s71 = sphi 0, %s71
      %s73 = sphi 0, %s71
      %s74 = sphi 0, %s73
      %s88 = sphi 0, %s74
      %s92 = sphi 0, %s92
      %s94 = sphi 0, %s92
      %s95 = sphi 0, %s94
      %s109 = sphi 0, %s95
      %s113 = sphi 0, %s113
      %s115 = sphi 0, %s113
      %s116 = sphi 0, %s115
      %s130 = sphi 0, %s116
      %s134 = sphi 0, %s134
      %s136 = sphi 0, %s134
      %s137 = sphi 0, %s136
      %s151 = sphi 0, %s137
      %s155 = sphi 0, %s155
      %s157 = sphi 0, %s155
      %s158 = sphi 0, %s157
      %s172 = sphi 0, %s158
      %s178 = sphi 0, %s180
      %s181 = sphi 0, %s178
      %s182 = sphi 0, %s181
      %s198 = sphi 0, %s182
    $region4: #{tpu_custom_call.1} parent=1 // loop_header_branch
      %19 = sbr.rel (%p17) target = $region8
    $region5: #{tpu_custom_call.1} parent=1 // loop_body
      %s21 = ssub.s32 %s16, 1
      %s22 = ssub.s32 %s16, 2
      %s23 = sadd.s32 %s16, 1
      %s24 = ssub.s32 %s16, %s23
      %p25 = scmp.eq.s32.totalorder %s24, 0
      %s27 = sadd.s32 %s26, 1
      %s28 = scalar_select %p25, %s26, %s27
      %p31 = pneg %p25
      %p32 = scmp.eq.s32.totalorder %s16, 1
      %p33 = por %p31, %p32
      %p34 = scmp.ne.s32.totalorder %s26, %s29
      %p35 = scmp.eq.s32.totalorder %s16, 0
      %p36 = por %p34, %p35
      %p37 = scmp.ne.s32.totalorder %s26, %s29
      %p38 = scmp.eq.s32.totalorder %s21, 1
      %p39 = por %p37, %p38
      %p40 = scmp.ne.s32.totalorder %s29, %s30
      %p41 = scmp.eq.s32.totalorder %s21, 0
      %p42 = por %p40, %p41
      %p43 = scmp.ne.s32.totalorder %s29, %s30
      %p44 = scmp.eq.s32.totalorder %s22, 1
      %p45 = por %p43, %p44
      %p47 = scmp.ne.s32.totalorder %s30, %s46
      %p48 = scmp.eq.s32.totalorder %s22, 0
      %p49 = por %p47, %p48
      %s51 = sadd.s32 %s50, 1
      %p54 = scmp.eq.s32.totalorder %s16, 1
      %p55 = scmp.ne.s32.totalorder %s50, %s52
      %p56 = scmp.eq.s32.totalorder %s16, 0
      %p57 = por %p55, %p56
      %p58 = scmp.ne.s32.totalorder %s50, %s52
      %p59 = scmp.eq.s32.totalorder %s21, 1
      %p60 = por %p58, %p59
      %p61 = scmp.ne.s32.totalorder %s52, %s53
      %p62 = scmp.eq.s32.totalorder %s21, 0
      %p63 = por %p61, %p62
      %p64 = scmp.ne.s32.totalorder %s52, %s53
      %p65 = scmp.eq.s32.totalorder %s22, 1
      %p66 = por %p64, %p65
      %p68 = scmp.ne.s32.totalorder %s53, %s67
      %p69 = scmp.eq.s32.totalorder %s22, 0
      %p70 = por %p68, %p69
      %s72 = sadd.s32 %s71, 1
      %p75 = scmp.eq.s32.totalorder %s16, 1
      %p76 = scmp.ne.s32.totalorder %s71, %s73
      %p77 = scmp.eq.s32.totalorder %s16, 0
      %p78 = por %p76, %p77
      %p79 = scmp.ne.s32.totalorder %s71, %s73
      %p80 = scmp.eq.s32.totalorder %s21, 1
      %p81 = por %p79, %p80
      %p82 = scmp.ne.s32.totalorder %s73, %s74
      %p83 = scmp.eq.s32.totalorder %s21, 0
      %p84 = por %p82, %p83
      %p85 = scmp.ne.s32.totalorder %s73, %s74
      %p86 = scmp.eq.s32.totalorder %s22, 1
      %p87 = por %p85, %p86
      %p89 = scmp.ne.s32.totalorder %s74, %s88
      %p90 = scmp.eq.s32.totalorder %s22, 0
      %p91 = por %p89, %p90
      %s93 = sadd.s32 %s92, 1
      %p96 = scmp.eq.s32.totalorder %s16, 1
      %p97 = scmp.ne.s32.totalorder %s92, %s94
      %p98 = scmp.eq.s32.totalorder %s16, 0
      %p99 = por %p97, %p98
      %p100 = scmp.ne.s32.totalorder %s92, %s94
      %p101 = scmp.eq.s32.totalorder %s21, 1
      %p102 = por %p100, %p101
      %p103 = scmp.ne.s32.totalorder %s94, %s95
      %p104 = scmp.eq.s32.totalorder %s21, 0
      %p105 = por %p103, %p104
      %p106 = scmp.ne.s32.totalorder %s94, %s95
      %p107 = scmp.eq.s32.totalorder %s22, 1
      %p108 = por %p106, %p107
      %p110 = scmp.ne.s32.totalorder %s95, %s109
      %p111 = scmp.eq.s32.totalorder %s22, 0
      %p112 = por %p110, %p111
      %s114 = sadd.s32 %s113, 1
      %p117 = scmp.eq.s32.totalorder %s16, 1
      %p118 = scmp.ne.s32.totalorder %s113, %s115
      %p119 = scmp.eq.s32.totalorder %s16, 0
      %p120 = por %p118, %p119
      %p121 = scmp.ne.s32.totalorder %s113, %s115
      %p122 = scmp.eq.s32.totalorder %s21, 1
      %p123 = por %p121, %p122
      %p124 = scmp.ne.s32.totalorder %s115, %s116
      %p125 = scmp.eq.s32.totalorder %s21, 0
      %p126 = por %p124, %p125
      %p127 = scmp.ne.s32.totalorder %s115, %s116
      %p128 = scmp.eq.s32.totalorder %s22, 1
      %p129 = por %p127, %p128
      %p131 = scmp.ne.s32.totalorder %s116, %s130
      %p132 = scmp.eq.s32.totalorder %s22, 0
      %p133 = por %p131, %p132
      %s135 = sadd.s32 %s134, 1
      %p138 = scmp.eq.s32.totalorder %s16, 1
      %p139 = scmp.ne.s32.totalorder %s134, %s136
      %p140 = scmp.eq.s32.totalorder %s16, 0
      %p141 = por %p139, %p140
      %p142 = scmp.ne.s32.totalorder %s134, %s136
      %p143 = scmp.eq.s32.totalorder %s21, 1
      %p144 = por %p142, %p143
      %p145 = scmp.ne.s32.totalorder %s136, %s137
      %p146 = scmp.eq.s32.totalorder %s21, 0
      %p147 = por %p145, %p146
      %p148 = scmp.ne.s32.totalorder %s136, %s137
      %p149 = scmp.eq.s32.totalorder %s22, 1
      %p150 = por %p148, %p149
      %p152 = scmp.ne.s32.totalorder %s137, %s151
      %p153 = scmp.eq.s32.totalorder %s22, 0
      %p154 = por %p152, %p153
      %s156 = sadd.s32 %s155, 1
      %p159 = scmp.eq.s32.totalorder %s16, 1
      %p160 = scmp.ne.s32.totalorder %s155, %s157
      %p161 = scmp.eq.s32.totalorder %s16, 0
      %p162 = por %p160, %p161
      %p163 = scmp.ne.s32.totalorder %s155, %s157
      %p164 = scmp.eq.s32.totalorder %s21, 1
      %p165 = por %p163, %p164
      %p166 = scmp.ne.s32.totalorder %s157, %s158
      %p167 = scmp.eq.s32.totalorder %s21, 0
      %p168 = por %p166, %p167
      %p169 = scmp.ne.s32.totalorder %s157, %s158
      %p170 = scmp.eq.s32.totalorder %s22, 1
      %p171 = por %p169, %p170
      %p173 = scmp.ne.s32.totalorder %s158, %s172
      %p174 = scmp.eq.s32.totalorder %s22, 0
      %p175 = por %p173, %p174
      %s176 = ssub.s32 %s16, %s23
      %p177 = scmp.eq.s32.totalorder %s176, 0
      %s179 = sadd.s32 %s178, 1
      %s180 = scalar_select %p177, %s178, %s179
      %p183 = pneg %p177
      %p184 = scmp.eq.s32.totalorder %s16, 1
      %p185 = por %p183, %p184
      %p186 = scmp.ne.s32.totalorder %s178, %s181
      %p187 = scmp.eq.s32.totalorder %s16, 0
      %p188 = por %p186, %p187
      %p189 = scmp.ne.s32.totalorder %s178, %s181
      %p190 = scmp.eq.s32.totalorder %s21, 1
      %p191 = por %p189, %p190
      %p192 = scmp.ne.s32.totalorder %s181, %s182
      %p193 = scmp.eq.s32.totalorder %s21, 0
      %p194 = por %p192, %p193
      %p195 = scmp.ne.s32.totalorder %s181, %s182
      %p196 = scmp.eq.s32.totalorder %s22, 1
      %p197 = por %p195, %p196
      %p199 = scmp.ne.s32.totalorder %s182, %s198
      %p200 = scmp.eq.s32.totalorder %s22, 0
      %p201 = por %p199, %p200
      %p202 = scmp.le.s32.totalorder 1, %s16
      %p203 = scmp.lt.s32.totalorder %s16, 3
      %p204 = pnand %p202, %p203
      %p205 = pneg %p204
      // Predicated region
      $region9: #{tpu_custom_call.1} parent=5 // pred_check
        _
      $region10: #{tpu_custom_call.1} parent=5 // pred_check_branch
        %207 = sbr.rel (%p204) target = $region12
      $region11: #{tpu_custom_call.1} parent=5 // pred_region
        %s208 = ssub.s32 %s16, 1
        // Predicated region
        $region13: #{tpu_custom_call.1} parent=11 // pred_check
          %p209 = pneg %p63
        $region14: #{tpu_custom_call.1} parent=11 // pred_check_branch
          %211 = sbr.rel (%p209) target = $region16
        $region15: #{tpu_custom_call.1} parent=11 // pred_region
          _
        $region16: #{tpu_custom_call.1} parent=11 // pred_fallthru
          _
        // Predicated region
        $region17: #{tpu_custom_call.1} parent=11 // pred_check
          %p212 = pneg %p84
        $region18: #{tpu_custom_call.1} parent=11 // pred_check_branch
          %214 = sbr.rel (%p212) target = $region20
        $region19: #{tpu_custom_call.1} parent=11 // pred_region
          _
        $region20: #{tpu_custom_call.1} parent=11 // pred_fallthru
          _
        // Predicated region
        $region21: #{tpu_custom_call.1} parent=11 // pred_check
          %p215 = pneg %p105
        $region22: #{tpu_custom_call.1} parent=11 // pred_check_branch
          %217 = sbr.rel (%p215) target = $region24
        $region23: #{tpu_custom_call.1} parent=11 // pred_region
          _
        $region24: #{tpu_custom_call.1} parent=11 // pred_fallthru
          _
        // Predicated region
        $region25: #{tpu_custom_call.1} parent=11 // pred_check
          %p218 = pneg %p126
        $region26: #{tpu_custom_call.1} parent=11 // pred_check_branch
          %220 = sbr.rel (%p218) target = $region28
        $region27: #{tpu_custom_call.1} parent=11 // pred_region
          _
        $region28: #{tpu_custom_call.1} parent=11 // pred_fallthru
          _
        // Predicated region
        $region29: #{tpu_custom_call.1} parent=11 // pred_check
          %p221 = pneg %p147
        $region30: #{tpu_custom_call.1} parent=11 // pred_check_branch
          %223 = sbr.rel (%p221) target = $region32
        $region31: #{tpu_custom_call.1} parent=11 // pred_region
          _
        $region32: #{tpu_custom_call.1} parent=11 // pred_fallthru
          _
        // Predicated region
        $region33: #{tpu_custom_call.1} parent=11 // pred_check
          %p224 = pneg %p168
        $region34: #{tpu_custom_call.1} parent=11 // pred_check_branch
          %226 = sbr.rel (%p224) target = $region36
        $region35: #{tpu_custom_call.1} parent=11 // pred_region
          _
        $region36: #{tpu_custom_call.1} parent=11 // pred_fallthru
          _
      $region12: #{tpu_custom_call.1} parent=5 // pred_fallthru
        _
      %p227 = scmp.lt.s32.totalorder %s16, 2
      // Predicated region
      $region37: #{tpu_custom_call.1} parent=5 // pred_check
        %p228 = pneg %p227
      $region38: #{tpu_custom_call.1} parent=5 // pred_check_branch
        %230 = sbr.rel (%p228) target = $region40
      $region39: #{tpu_custom_call.1} parent=5 // pred_region
        // Predicated region
        $region41: #{tpu_custom_call.1} parent=39 // pred_check
          %p231 = pneg %p36
        $region42: #{tpu_custom_call.1} parent=39 // pred_check_branch
          %233 = sbr.rel (%p231) target = $region44
        $region43: #{tpu_custom_call.1} parent=39 // pred_region
          %s234 = smul.u32 32, %s16
          %p235 = scmp.lt.s32.totalorder %s234, 63
          %s236 = scalar_select %p235, %s234, 63
          %s237 = smul.addr %s236, 8
          %s238 = scalar_lea.vmem %s0, %s237
          %s239 = smul.u32 32, %s16
        $region44: #{tpu_custom_call.1} parent=39 // pred_fallthru
          _
      $region40: #{tpu_custom_call.1} parent=5 // pred_fallthru
        _
      %p240 = scmp.le.s32.totalorder 1, %s16
      %p241 = scmp.lt.s32.totalorder %s16, 3
      %p242 = pnand %p240, %p241
      %p243 = pneg %p242
      // Predicated region
      $region45: #{tpu_custom_call.1} parent=5 // pred_check
        _
      $region46: #{tpu_custom_call.1} parent=5 // pred_check_branch
        %245 = sbr.rel (%p242) target = $region48
      $region47: #{tpu_custom_call.1} parent=5 // pred_region
        %s246 = ssub.s32 %s16, 1
        %s247 = smul.u32 32, %s21
        %p248 = scmp.lt.s32.totalorder %s247, 63
        %s249 = scalar_select %p248, %s247, 63
        %s250 = smul.addr %s249, 8
        %s251 = scalar_lea.vmem %s0, %s250
        %p252 = pneg %p42
        %p253 = pneg %p39
        %p254 = pneg %p63
        %p255 = pneg %p60
        %p256 = pneg %p84
        %p257 = pneg %p81
        %p258 = pneg %p105
        %p259 = pneg %p102
        %p260 = pneg %p126
        %p261 = pneg %p123
        %p262 = pneg %p147
        %p263 = pneg %p144
        %p264 = pneg %p168
        %p265 = pneg %p165
        %p266 = pneg %p194
        %p267 = pneg %p191
        %s268 = sand.u32 %s181, 1
        %s269 = scalar_lea.sflag [#allocation3], %s268
        %s270 = sand.u32 %s181, 1
        %s271 = smul.addr %s270, 256
        %s272 = scalar_lea.vmem [#allocation2], %s271
        %s273 = smul.u32 32, %s21
        %p274 = scmp.lt.s32.totalorder %s273, 63
        %s275 = scalar_select %p274, %s273, 63
        %s276 = smul.addr %s275, 8
        %s277 = scalar_lea.vmem %s0, %s276
        %s278 = smul.u32 32, %s21
        %s279 = smul.u32 32, %s21
        %v281 = vld [vmem:[%s277] sm:$0xff]
        %v282 = vld [vmem:[%s277 + $0x8] sm:$0xff]
        %v283 = vld [vmem:[%s277 + $0x10] sm:$0xff]
        %v284 = vld [vmem:[%s277 + $0x18] sm:$0xff]
        %v285 = vld [vmem:[%s277 + $0x20] sm:$0xff]
        %v286 = vld [vmem:[%s277 + $0x28] sm:$0xff]
        %v287 = vld [vmem:[%s277 + $0x30] sm:$0xff]
        %v288 = vld [vmem:[%s277 + $0x38] sm:$0xff]
        %v289 = vld [vmem:[%s277 + $0x40] sm:$0xff]
        %v290 = vld [vmem:[%s277 + $0x48] sm:$0xff]
        %v291 = vld [vmem:[%s277 + $0x50] sm:$0xff]
        %v292 = vld [vmem:[%s277 + $0x58] sm:$0xff]
        %v293 = vld [vmem:[%s277 + $0x60] sm:$0xff]
        %v294 = vld [vmem:[%s277 + $0x68] sm:$0xff]
        %v295 = vld [vmem:[%s277 + $0x70] sm:$0xff]
        %v296 = vld [vmem:[%s277 + $0x78] sm:$0xff]
        %v297 = vld [vmem:[%s277 + $0x80] sm:$0xff]
        %v298 = vld [vmem:[%s277 + $0x88] sm:$0xff]
        %v299 = vld [vmem:[%s277 + $0x90] sm:$0xff]
        %v300 = vld [vmem:[%s277 + $0x98] sm:$0xff]
        %v301 = vld [vmem:[%s277 + $0xa0] sm:$0xff]
        %v302 = vld [vmem:[%s277 + $0xa8] sm:$0xff]
        %v303 = vld [vmem:[%s277 + $0xb0] sm:$0xff]
        %v304 = vld [vmem:[%s277 + $0xb8] sm:$0xff]
        %v305 = vld [vmem:[%s277 + $0xc0] sm:$0xff]
        %v306 = vld [vmem:[%s277 + $0xc8] sm:$0xff]
        %v307 = vld [vmem:[%s277 + $0xd0] sm:$0xff]
        %v308 = vld [vmem:[%s277 + $0xd8] sm:$0xff]
        %v309 = vld [vmem:[%s277 + $0xe0] sm:$0xff]
        %v310 = vld [vmem:[%s277 + $0xe8] sm:$0xff]
        %v311 = vld [vmem:[%s277 + $0xf0] sm:$0xff]
        %v312 = vld [vmem:[%s277 + $0xf8] sm:$0xff]
        %v313 = vld [vmem:[%s1] sm:$0xf]
        %v314 = vld [vmem:[%s1 + $0x4] sm:$0xf]
        %v315 = vld [vmem:[%s1 + $0x8] sm:$0xf]
        %v316 = vld [vmem:[%s1 + $0xc] sm:$0xf]
        %v317 = vld [vmem:[%s1 + $0x10] sm:$0xf]
        %v318 = vld [vmem:[%s1 + $0x14] sm:$0xf]
        %v319 = vld [vmem:[%s1 + $0x18] sm:$0xf]
        %v320 = vld [vmem:[%s1 + $0x1c] sm:$0xf]
        %v321 = vld [vmem:[%s1 + $0x20] sm:$0xf]
        %v322 = vld [vmem:[%s1 + $0x24] sm:$0xf]
        %v323 = vld [vmem:[%s1 + $0x28] sm:$0xf]
        %v324 = vld [vmem:[%s1 + $0x2c] sm:$0xf]
        %v325 = vld [vmem:[%s1 + $0x30] sm:$0xf]
        %v326 = vld [vmem:[%s1 + $0x34] sm:$0xf]
        %v327 = vld [vmem:[%s1 + $0x38] sm:$0xf]
        %v328 = vld [vmem:[%s1 + $0x3c] sm:$0xf]
        %v329 = vld [vmem:[%s1 + $0x40] sm:$0xf]
        %v330 = vld [vmem:[%s1 + $0x44] sm:$0xf]
        %v331 = vld [vmem:[%s2] sm:$0x1]
        %v332 = vld [vmem:[%s3] sm:$0xff]
        %v333 = vld [vmem:[%s3 + $0x8] sm:$0xff]
        %v334 = vld [vmem:[%s3 + $0x10] sm:$0xff]
        %v335 = vld [vmem:[%s3 + $0x18] sm:$0x1f]
        %368 = vrot.lane.b32.xlu0 %v281, 16
        %v369 = vpop.permute.xlu0 %368
        %370 = vrot.lane.b32.xlu0 %v282, 16
        %v371 = vpop.permute.xlu0 %370
        %372 = vrot.lane.b32.xlu0 %v283, 16
        %v373 = vpop.permute.xlu0 %372
        %374 = vrot.lane.b32.xlu0 %v284, 16
        %v375 = vpop.permute.xlu0 %374
        %376 = vrot.lane.b32.xlu0 %v285, 16
        %v377 = vpop.permute.xlu0 %376
        %378 = vrot.lane.b32.xlu0 %v286, 16
        %v379 = vpop.permute.xlu0 %378
        %380 = vrot.lane.b32.xlu0 %v287, 16
        %v381 = vpop.permute.xlu0 %380
        %382 = vrot.lane.b32.xlu0 %v288, 16
        %v383 = vpop.permute.xlu0 %382
        %384 = vrot.lane.b32.xlu0 %v289, 16
        %v385 = vpop.permute.xlu0 %384
        %386 = vrot.lane.b32.xlu0 %v290, 16
        %v387 = vpop.permute.xlu0 %386
        %388 = vrot.lane.b32.xlu0 %v291, 16
        %v389 = vpop.permute.xlu0 %388
        %390 = vrot.lane.b32.xlu0 %v292, 16
        %v391 = vpop.permute.xlu0 %390
        %392 = vrot.lane.b32.xlu0 %v293, 16
        %v393 = vpop.permute.xlu0 %392
        %394 = vrot.lane.b32.xlu0 %v294, 16
        %v395 = vpop.permute.xlu0 %394
        %396 = vrot.lane.b32.xlu0 %v295, 16
        %v397 = vpop.permute.xlu0 %396
        %398 = vrot.lane.b32.xlu0 %v296, 16
        %v399 = vpop.permute.xlu0 %398
        %400 = vrot.lane.b32.xlu0 %v297, 16
        %v401 = vpop.permute.xlu0 %400
        %402 = vrot.lane.b32.xlu0 %v298, 16
        %v403 = vpop.permute.xlu0 %402
        %404 = vrot.lane.b32.xlu0 %v299, 16
        %v405 = vpop.permute.xlu0 %404
        %406 = vrot.lane.b32.xlu0 %v300, 16
        %v407 = vpop.permute.xlu0 %406
        %408 = vrot.lane.b32.xlu0 %v301, 16
        %v409 = vpop.permute.xlu0 %408
        %410 = vrot.lane.b32.xlu0 %v302, 16
        %v411 = vpop.permute.xlu0 %410
        %412 = vrot.lane.b32.xlu0 %v303, 16
        %v413 = vpop.permute.xlu0 %412
        %414 = vrot.lane.b32.xlu0 %v304, 16
        %v415 = vpop.permute.xlu0 %414
        %416 = vrot.lane.b32.xlu0 %v305, 16
        %v417 = vpop.permute.xlu0 %416
        %418 = vrot.lane.b32.xlu0 %v306, 16
        %v419 = vpop.permute.xlu0 %418
        %420 = vrot.lane.b32.xlu0 %v307, 16
        %v421 = vpop.permute.xlu0 %420
        %422 = vrot.lane.b32.xlu0 %v308, 16
        %v423 = vpop.permute.xlu0 %422
        %424 = vrot.lane.b32.xlu0 %v309, 16
        %v425 = vpop.permute.xlu0 %424
        %426 = vrot.lane.b32.xlu0 %v310, 16
        %v427 = vpop.permute.xlu0 %426
        %428 = vrot.lane.b32.xlu0 %v311, 16
        %v429 = vpop.permute.xlu0 %428
        %430 = vrot.lane.b32.xlu0 %v312, 16
        %v431 = vpop.permute.xlu0 %430
        %464 = vrot.lane.b32.xlu0 %v281, 32
        %v465 = vpop.permute.xlu0 %464
        %466 = vrot.lane.b32.xlu0 %v282, 32
        %v467 = vpop.permute.xlu0 %466
        %468 = vrot.lane.b32.xlu0 %v283, 32
        %v469 = vpop.permute.xlu0 %468
        %470 = vrot.lane.b32.xlu0 %v284, 32
        %v471 = vpop.permute.xlu0 %470
        %472 = vrot.lane.b32.xlu0 %v285, 32
        %v473 = vpop.permute.xlu0 %472
        %474 = vrot.lane.b32.xlu0 %v286, 32
        %v475 = vpop.permute.xlu0 %474
        %476 = vrot.lane.b32.xlu0 %v287, 32
        %v477 = vpop.permute.xlu0 %476
        %478 = vrot.lane.b32.xlu0 %v288, 32
        %v479 = vpop.permute.xlu0 %478
        %480 = vrot.lane.b32.xlu0 %v289, 32
        %v481 = vpop.permute.xlu0 %480
        %482 = vrot.lane.b32.xlu0 %v290, 32
        %v483 = vpop.permute.xlu0 %482
        %484 = vrot.lane.b32.xlu0 %v291, 32
        %v485 = vpop.permute.xlu0 %484
        %486 = vrot.lane.b32.xlu0 %v292, 32
        %v487 = vpop.permute.xlu0 %486
        %488 = vrot.lane.b32.xlu0 %v293, 32
        %v489 = vpop.permute.xlu0 %488
        %490 = vrot.lane.b32.xlu0 %v294, 32
        %v491 = vpop.permute.xlu0 %490
        %492 = vrot.lane.b32.xlu0 %v295, 32
        %v493 = vpop.permute.xlu0 %492
        %494 = vrot.lane.b32.xlu0 %v296, 32
        %v495 = vpop.permute.xlu0 %494
        %496 = vrot.lane.b32.xlu0 %v297, 32
        %v497 = vpop.permute.xlu0 %496
        %498 = vrot.lane.b32.xlu0 %v298, 32
        %v499 = vpop.permute.xlu0 %498
        %500 = vrot.lane.b32.xlu0 %v299, 32
        %v501 = vpop.permute.xlu0 %500
        %502 = vrot.lane.b32.xlu0 %v300, 32
        %v503 = vpop.permute.xlu0 %502
        %504 = vrot.lane.b32.xlu0 %v301, 32
        %v505 = vpop.permute.xlu0 %504
        %506 = vrot.lane.b32.xlu0 %v302, 32
        %v507 = vpop.permute.xlu0 %506
        %508 = vrot.lane.b32.xlu0 %v303, 32
        %v509 = vpop.permute.xlu0 %508
        %510 = vrot.lane.b32.xlu0 %v304, 32
        %v511 = vpop.permute.xlu0 %510
        %512 = vrot.lane.b32.xlu0 %v305, 32
        %v513 = vpop.permute.xlu0 %512
        %514 = vrot.lane.b32.xlu0 %v306, 32
        %v515 = vpop.permute.xlu0 %514
        %516 = vrot.lane.b32.xlu0 %v307, 32
        %v517 = vpop.permute.xlu0 %516
        %518 = vrot.lane.b32.xlu0 %v308, 32
        %v519 = vpop.permute.xlu0 %518
        %520 = vrot.lane.b32.xlu0 %v309, 32
        %v521 = vpop.permute.xlu0 %520
        %522 = vrot.lane.b32.xlu0 %v310, 32
        %v523 = vpop.permute.xlu0 %522
        %524 = vrot.lane.b32.xlu0 %v311, 32
        %v525 = vpop.permute.xlu0 %524
        %526 = vrot.lane.b32.xlu0 %v312, 32
        %v527 = vpop.permute.xlu0 %526
        %560 = vrot.lane.b32.xlu0 %v281, 48
        %v561 = vpop.permute.xlu0 %560
        %562 = vrot.lane.b32.xlu0 %v282, 48
        %v563 = vpop.permute.xlu0 %562
        %564 = vrot.lane.b32.xlu0 %v283, 48
        %v565 = vpop.permute.xlu0 %564
        %566 = vrot.lane.b32.xlu0 %v284, 48
        %v567 = vpop.permute.xlu0 %566
        %568 = vrot.lane.b32.xlu0 %v285, 48
        %v569 = vpop.permute.xlu0 %568
        %570 = vrot.lane.b32.xlu0 %v286, 48
        %v571 = vpop.permute.xlu0 %570
        %572 = vrot.lane.b32.xlu0 %v287, 48
        %v573 = vpop.permute.xlu0 %572
        %574 = vrot.lane.b32.xlu0 %v288, 48
        %v575 = vpop.permute.xlu0 %574
        %576 = vrot.lane.b32.xlu0 %v289, 48
        %v577 = vpop.permute.xlu0 %576
        %578 = vrot.lane.b32.xlu0 %v290, 48
        %v579 = vpop.permute.xlu0 %578
        %580 = vrot.lane.b32.xlu0 %v291, 48
        %v581 = vpop.permute.xlu0 %580
        %582 = vrot.lane.b32.xlu0 %v292, 48
        %v583 = vpop.permute.xlu0 %582
        %584 = vrot.lane.b32.xlu0 %v293, 48
        %v585 = vpop.permute.xlu0 %584
        %586 = vrot.lane.b32.xlu0 %v294, 48
        %v587 = vpop.permute.xlu0 %586
        %588 = vrot.lane.b32.xlu0 %v295, 48
        %v589 = vpop.permute.xlu0 %588
        %590 = vrot.lane.b32.xlu0 %v296, 48
        %v591 = vpop.permute.xlu0 %590
        %592 = vrot.lane.b32.xlu0 %v297, 48
        %v593 = vpop.permute.xlu0 %592
        %594 = vrot.lane.b32.xlu0 %v298, 48
        %v595 = vpop.permute.xlu0 %594
        %596 = vrot.lane.b32.xlu0 %v299, 48
        %v597 = vpop.permute.xlu0 %596
        %598 = vrot.lane.b32.xlu0 %v300, 48
        %v599 = vpop.permute.xlu0 %598
        %600 = vrot.lane.b32.xlu0 %v301, 48
        %v601 = vpop.permute.xlu0 %600
        %602 = vrot.lane.b32.xlu0 %v302, 48
        %v603 = vpop.permute.xlu0 %602
        %604 = vrot.lane.b32.xlu0 %v303, 48
        %v605 = vpop.permute.xlu0 %604
        %606 = vrot.lane.b32.xlu0 %v304, 48
        %v607 = vpop.permute.xlu0 %606
        %608 = vrot.lane.b32.xlu0 %v305, 48
        %v609 = vpop.permute.xlu0 %608
        %610 = vrot.lane.b32.xlu0 %v306, 48
        %v611 = vpop.permute.xlu0 %610
        %612 = vrot.lane.b32.xlu0 %v307, 48
        %v613 = vpop.permute.xlu0 %612
        %614 = vrot.lane.b32.xlu0 %v308, 48
        %v615 = vpop.permute.xlu0 %614
        %616 = vrot.lane.b32.xlu0 %v309, 48
        %v617 = vpop.permute.xlu0 %616
        %618 = vrot.lane.b32.xlu0 %v310, 48
        %v619 = vpop.permute.xlu0 %618
        %620 = vrot.lane.b32.xlu0 %v311, 48
        %v621 = vpop.permute.xlu0 %620
        %622 = vrot.lane.b32.xlu0 %v312, 48
        %v623 = vpop.permute.xlu0 %622
        %656 = vrot.lane.b32.xlu0 %v281, 64
        %v657 = vpop.permute.xlu0 %656
        %658 = vrot.lane.b32.xlu0 %v282, 64
        %v659 = vpop.permute.xlu0 %658
        %660 = vrot.lane.b32.xlu0 %v283, 64
        %v661 = vpop.permute.xlu0 %660
        %662 = vrot.lane.b32.xlu0 %v284, 64
        %v663 = vpop.permute.xlu0 %662
        %664 = vrot.lane.b32.xlu0 %v285, 64
        %v665 = vpop.permute.xlu0 %664
        %666 = vrot.lane.b32.xlu0 %v286, 64
        %v667 = vpop.permute.xlu0 %666
        %668 = vrot.lane.b32.xlu0 %v287, 64
        %v669 = vpop.permute.xlu0 %668
        %670 = vrot.lane.b32.xlu0 %v288, 64
        %v671 = vpop.permute.xlu0 %670
        %672 = vrot.lane.b32.xlu0 %v289, 64
        %v673 = vpop.permute.xlu0 %672
        %674 = vrot.lane.b32.xlu0 %v290, 64
        %v675 = vpop.permute.xlu0 %674
        %676 = vrot.lane.b32.xlu0 %v291, 64
        %v677 = vpop.permute.xlu0 %676
        %678 = vrot.lane.b32.xlu0 %v292, 64
        %v679 = vpop.permute.xlu0 %678
        %680 = vrot.lane.b32.xlu0 %v293, 64
        %v681 = vpop.permute.xlu0 %680
        %682 = vrot.lane.b32.xlu0 %v294, 64
        %v683 = vpop.permute.xlu0 %682
        %684 = vrot.lane.b32.xlu0 %v295, 64
        %v685 = vpop.permute.xlu0 %684
        %686 = vrot.lane.b32.xlu0 %v296, 64
        %v687 = vpop.permute.xlu0 %686
        %688 = vrot.lane.b32.xlu0 %v297, 64
        %v689 = vpop.permute.xlu0 %688
        %690 = vrot.lane.b32.xlu0 %v298, 64
        %v691 = vpop.permute.xlu0 %690
        %692 = vrot.lane.b32.xlu0 %v299, 64
        %v693 = vpop.permute.xlu0 %692
        %694 = vrot.lane.b32.xlu0 %v300, 64
        %v695 = vpop.permute.xlu0 %694
        %696 = vrot.lane.b32.xlu0 %v301, 64
        %v697 = vpop.permute.xlu0 %696
        %698 = vrot.lane.b32.xlu0 %v302, 64
        %v699 = vpop.permute.xlu0 %698
        %700 = vrot.lane.b32.xlu0 %v303, 64
        %v701 = vpop.permute.xlu0 %700
        %702 = vrot.lane.b32.xlu0 %v304, 64
        %v703 = vpop.permute.xlu0 %702
        %704 = vrot.lane.b32.xlu0 %v305, 64
        %v705 = vpop.permute.xlu0 %704
        %706 = vrot.lane.b32.xlu0 %v306, 64
        %v707 = vpop.permute.xlu0 %706
        %708 = vrot.lane.b32.xlu0 %v307, 64
        %v709 = vpop.permute.xlu0 %708
        %710 = vrot.lane.b32.xlu0 %v308, 64
        %v711 = vpop.permute.xlu0 %710
        %712 = vrot.lane.b32.xlu0 %v309, 64
        %v713 = vpop.permute.xlu0 %712
        %714 = vrot.lane.b32.xlu0 %v310, 64
        %v715 = vpop.permute.xlu0 %714
        %716 = vrot.lane.b32.xlu0 %v311, 64
        %v717 = vpop.permute.xlu0 %716
        %718 = vrot.lane.b32.xlu0 %v312, 64
        %v719 = vpop.permute.xlu0 %718
        %752 = vrot.lane.b32.xlu0 %v281, 80
        %v753 = vpop.permute.xlu0 %752
        %754 = vrot.lane.b32.xlu0 %v282, 80
        %v755 = vpop.permute.xlu0 %754
        %756 = vrot.lane.b32.xlu0 %v283, 80
        %v757 = vpop.permute.xlu0 %756
        %758 = vrot.lane.b32.xlu0 %v284, 80
        %v759 = vpop.permute.xlu0 %758
        %760 = vrot.lane.b32.xlu0 %v285, 80
        %v761 = vpop.permute.xlu0 %760
        %762 = vrot.lane.b32.xlu0 %v286, 80
        %v763 = vpop.permute.xlu0 %762
        %764 = vrot.lane.b32.xlu0 %v287, 80
        %v765 = vpop.permute.xlu0 %764
        %766 = vrot.lane.b32.xlu0 %v288, 80
        %v767 = vpop.permute.xlu0 %766
        %768 = vrot.lane.b32.xlu0 %v289, 80
        %v769 = vpop.permute.xlu0 %768
        %770 = vrot.lane.b32.xlu0 %v290, 80
        %v771 = vpop.permute.xlu0 %770
        %772 = vrot.lane.b32.xlu0 %v291, 80
        %v773 = vpop.permute.xlu0 %772
        %774 = vrot.lane.b32.xlu0 %v292, 80
        %v775 = vpop.permute.xlu0 %774
        %776 = vrot.lane.b32.xlu0 %v293, 80
        %v777 = vpop.permute.xlu0 %776
        %778 = vrot.lane.b32.xlu0 %v294, 80
        %v779 = vpop.permute.xlu0 %778
        %780 = vrot.lane.b32.xlu0 %v295, 80
        %v781 = vpop.permute.xlu0 %780
        %782 = vrot.lane.b32.xlu0 %v296, 80
        %v783 = vpop.permute.xlu0 %782
        %784 = vrot.lane.b32.xlu0 %v297, 80
        %v785 = vpop.permute.xlu0 %784
        %786 = vrot.lane.b32.xlu0 %v298, 80
        %v787 = vpop.permute.xlu0 %786
        %788 = vrot.lane.b32.xlu0 %v299, 80
        %v789 = vpop.permute.xlu0 %788
        %790 = vrot.lane.b32.xlu0 %v300, 80
        %v791 = vpop.permute.xlu0 %790
        %792 = vrot.lane.b32.xlu0 %v301, 80
        %v793 = vpop.permute.xlu0 %792
        %794 = vrot.lane.b32.xlu0 %v302, 80
        %v795 = vpop.permute.xlu0 %794
        %796 = vrot.lane.b32.xlu0 %v303, 80
        %v797 = vpop.permute.xlu0 %796
        %798 = vrot.lane.b32.xlu0 %v304, 80
        %v799 = vpop.permute.xlu0 %798
        %800 = vrot.lane.b32.xlu0 %v305, 80
        %v801 = vpop.permute.xlu0 %800
        %802 = vrot.lane.b32.xlu0 %v306, 80
        %v803 = vpop.permute.xlu0 %802
        %804 = vrot.lane.b32.xlu0 %v307, 80
        %v805 = vpop.permute.xlu0 %804
        %806 = vrot.lane.b32.xlu0 %v308, 80
        %v807 = vpop.permute.xlu0 %806
        %808 = vrot.lane.b32.xlu0 %v309, 80
        %v809 = vpop.permute.xlu0 %808
        %810 = vrot.lane.b32.xlu0 %v310, 80
        %v811 = vpop.permute.xlu0 %810
        %812 = vrot.lane.b32.xlu0 %v311, 80
        %v813 = vpop.permute.xlu0 %812
        %814 = vrot.lane.b32.xlu0 %v312, 80
        %v815 = vpop.permute.xlu0 %814
        %848 = vrot.lane.b32.xlu0 %v281, 96
        %v849 = vpop.permute.xlu0 %848
        %850 = vrot.lane.b32.xlu0 %v282, 96
        %v851 = vpop.permute.xlu0 %850
        %852 = vrot.lane.b32.xlu0 %v283, 96
        %v853 = vpop.permute.xlu0 %852
        %854 = vrot.lane.b32.xlu0 %v284, 96
        %v855 = vpop.permute.xlu0 %854
        %856 = vrot.lane.b32.xlu0 %v285, 96
        %v857 = vpop.permute.xlu0 %856
        %858 = vrot.lane.b32.xlu0 %v286, 96
        %v859 = vpop.permute.xlu0 %858
        %860 = vrot.lane.b32.xlu0 %v287, 96
        %v861 = vpop.permute.xlu0 %860
        %862 = vrot.lane.b32.xlu0 %v288, 96
        %v863 = vpop.permute.xlu0 %862
        %864 = vrot.lane.b32.xlu0 %v289, 96
        %v865 = vpop.permute.xlu0 %864
        %866 = vrot.lane.b32.xlu0 %v290, 96
        %v867 = vpop.permute.xlu0 %866
        %868 = vrot.lane.b32.xlu0 %v291, 96
        %v869 = vpop.permute.xlu0 %868
        %870 = vrot.lane.b32.xlu0 %v292, 96
        %v871 = vpop.permute.xlu0 %870
        %872 = vrot.lane.b32.xlu0 %v293, 96
        %v873 = vpop.permute.xlu0 %872
        %874 = vrot.lane.b32.xlu0 %v294, 96
        %v875 = vpop.permute.xlu0 %874
        %876 = vrot.lane.b32.xlu0 %v295, 96
        %v877 = vpop.permute.xlu0 %876
        %878 = vrot.lane.b32.xlu0 %v296, 96
        %v879 = vpop.permute.xlu0 %878
        %880 = vrot.lane.b32.xlu0 %v297, 96
        %v881 = vpop.permute.xlu0 %880
        %882 = vrot.lane.b32.xlu0 %v298, 96
        %v883 = vpop.permute.xlu0 %882
        %884 = vrot.lane.b32.xlu0 %v299, 96
        %v885 = vpop.permute.xlu0 %884
        %886 = vrot.lane.b32.xlu0 %v300, 96
        %v887 = vpop.permute.xlu0 %886
        %888 = vrot.lane.b32.xlu0 %v301, 96
        %v889 = vpop.permute.xlu0 %888
        %890 = vrot.lane.b32.xlu0 %v302, 96
        %v891 = vpop.permute.xlu0 %890
        %892 = vrot.lane.b32.xlu0 %v303, 96
        %v893 = vpop.permute.xlu0 %892
        %894 = vrot.lane.b32.xlu0 %v304, 96
        %v895 = vpop.permute.xlu0 %894
        %896 = vrot.lane.b32.xlu0 %v305, 96
        %v897 = vpop.permute.xlu0 %896
        %898 = vrot.lane.b32.xlu0 %v306, 96
        %v899 = vpop.permute.xlu0 %898
        %900 = vrot.lane.b32.xlu0 %v307, 96
        %v901 = vpop.permute.xlu0 %900
        %902 = vrot.lane.b32.xlu0 %v308, 96
        %v903 = vpop.permute.xlu0 %902
        %904 = vrot.lane.b32.xlu0 %v309, 96
        %v905 = vpop.permute.xlu0 %904
        %906 = vrot.lane.b32.xlu0 %v310, 96
        %v907 = vpop.permute.xlu0 %906
        %908 = vrot.lane.b32.xlu0 %v311, 96
        %v909 = vpop.permute.xlu0 %908
        %910 = vrot.lane.b32.xlu0 %v312, 96
        %v911 = vpop.permute.xlu0 %910
        %944 = vrot.lane.b32.xlu0 %v281, 112
        %v945 = vpop.permute.xlu0 %944
        %946 = vrot.lane.b32.xlu0 %v282, 112
        %v947 = vpop.permute.xlu0 %946
        %948 = vrot.lane.b32.xlu0 %v283, 112
        %v949 = vpop.permute.xlu0 %948
        %950 = vrot.lane.b32.xlu0 %v284, 112
        %v951 = vpop.permute.xlu0 %950
        %952 = vrot.lane.b32.xlu0 %v285, 112
        %v953 = vpop.permute.xlu0 %952
        %954 = vrot.lane.b32.xlu0 %v286, 112
        %v955 = vpop.permute.xlu0 %954
        %956 = vrot.lane.b32.xlu0 %v287, 112
        %v957 = vpop.permute.xlu0 %956
        %958 = vrot.lane.b32.xlu0 %v288, 112
        %v959 = vpop.permute.xlu0 %958
        %960 = vrot.lane.b32.xlu0 %v289, 112
        %v961 = vpop.permute.xlu0 %960
        %962 = vrot.lane.b32.xlu0 %v290, 112
        %v963 = vpop.permute.xlu0 %962
        %964 = vrot.lane.b32.xlu0 %v291, 112
        %v965 = vpop.permute.xlu0 %964
        %966 = vrot.lane.b32.xlu0 %v292, 112
        %v967 = vpop.permute.xlu0 %966
        %968 = vrot.lane.b32.xlu0 %v293, 112
        %v969 = vpop.permute.xlu0 %968
        %970 = vrot.lane.b32.xlu0 %v294, 112
        %v971 = vpop.permute.xlu0 %970
        %972 = vrot.lane.b32.xlu0 %v295, 112
        %v973 = vpop.permute.xlu0 %972
        %974 = vrot.lane.b32.xlu0 %v296, 112
        %v975 = vpop.permute.xlu0 %974
        %976 = vrot.lane.b32.xlu0 %v297, 112
        %v977 = vpop.permute.xlu0 %976
        %978 = vrot.lane.b32.xlu0 %v298, 112
        %v979 = vpop.permute.xlu0 %978
        %980 = vrot.lane.b32.xlu0 %v299, 112
        %v981 = vpop.permute.xlu0 %980
        %982 = vrot.lane.b32.xlu0 %v300, 112
        %v983 = vpop.permute.xlu0 %982
        %984 = vrot.lane.b32.xlu0 %v301, 112
        %v985 = vpop.permute.xlu0 %984
        %986 = vrot.lane.b32.xlu0 %v302, 112
        %v987 = vpop.permute.xlu0 %986
        %988 = vrot.lane.b32.xlu0 %v303, 112
        %v989 = vpop.permute.xlu0 %988
        %990 = vrot.lane.b32.xlu0 %v304, 112
        %v991 = vpop.permute.xlu0 %990
        %992 = vrot.lane.b32.xlu0 %v305, 112
        %v993 = vpop.permute.xlu0 %992
        %994 = vrot.lane.b32.xlu0 %v306, 112
        %v995 = vpop.permute.xlu0 %994
        %996 = vrot.lane.b32.xlu0 %v307, 112
        %v997 = vpop.permute.xlu0 %996
        %998 = vrot.lane.b32.xlu0 %v308, 112
        %v999 = vpop.permute.xlu0 %998
        %1000 = vrot.lane.b32.xlu0 %v309, 112
        %v1001 = vpop.permute.xlu0 %1000
        %1002 = vrot.lane.b32.xlu0 %v310, 112
        %v1003 = vpop.permute.xlu0 %1002
        %1004 = vrot.lane.b32.xlu0 %v311, 112
        %v1005 = vpop.permute.xlu0 %1004
        %1006 = vrot.lane.b32.xlu0 %v312, 112
        %v1007 = vpop.permute.xlu0 %1006
        %vm1040 = vcmask 130048
        %v1041 = vsel %vm1040, %v281, %v369
        %v1042 = vsel %vm1040, %v282, %v371
        %v1043 = vsel %vm1040, %v283, %v373
        %v1044 = vsel %vm1040, %v284, %v375
        %v1045 = vsel %vm1040, %v285, %v377
        %v1046 = vsel %vm1040, %v286, %v379
        %v1047 = vsel %vm1040, %v287, %v381
        %v1048 = vsel %vm1040, %v288, %v383
        %v1049 = vsel %vm1040, %v289, %v385
        %v1050 = vsel %vm1040, %v290, %v387
        %v1051 = vsel %vm1040, %v291, %v389
        %v1052 = vsel %vm1040, %v292, %v391
        %v1053 = vsel %vm1040, %v293, %v393
        %v1054 = vsel %vm1040, %v294, %v395
        %v1055 = vsel %vm1040, %v295, %v397
        %v1056 = vsel %vm1040, %v296, %v399
        %v1057 = vsel %vm1040, %v297, %v401
        %v1058 = vsel %vm1040, %v298, %v403
        %v1059 = vsel %vm1040, %v299, %v405
        %v1060 = vsel %vm1040, %v300, %v407
        %v1061 = vsel %vm1040, %v301, %v409
        %v1062 = vsel %vm1040, %v302, %v411
        %v1063 = vsel %vm1040, %v303, %v413
        %v1064 = vsel %vm1040, %v304, %v415
        %v1065 = vsel %vm1040, %v305, %v417
        %v1066 = vsel %vm1040, %v306, %v419
        %v1067 = vsel %vm1040, %v307, %v421
        %v1068 = vsel %vm1040, %v308, %v423
        %v1069 = vsel %vm1040, %v309, %v425
        %v1070 = vsel %vm1040, %v310, %v427
        %v1071 = vsel %vm1040, %v311, %v429
        %v1072 = vsel %vm1040, %v312, %v431
        %vm1073 = vcmask 261120
        %v1074 = vsel %vm1073, %v1041, %v465
        %v1075 = vsel %vm1073, %v1042, %v467
        %v1076 = vsel %vm1073, %v1043, %v469
        %v1077 = vsel %vm1073, %v1044, %v471
        %v1078 = vsel %vm1073, %v1045, %v473
        %v1079 = vsel %vm1073, %v1046, %v475
        %v1080 = vsel %vm1073, %v1047, %v477
        %v1081 = vsel %vm1073, %v1048, %v479
        %v1082 = vsel %vm1073, %v1049, %v481
        %v1083 = vsel %vm1073, %v1050, %v483
        %v1084 = vsel %vm1073, %v1051, %v485
        %v1085 = vsel %vm1073, %v1052, %v487
        %v1086 = vsel %vm1073, %v1053, %v489
        %v1087 = vsel %vm1073, %v1054, %v491
        %v1088 = vsel %vm1073, %v1055, %v493
        %v1089 = vsel %vm1073, %v1056, %v495
        %v1090 = vsel %vm1073, %v1057, %v497
        %v1091 = vsel %vm1073, %v1058, %v499
        %v1092 = vsel %vm1073, %v1059, %v501
        %v1093 = vsel %vm1073, %v1060, %v503
        %v1094 = vsel %vm1073, %v1061, %v505
        %v1095 = vsel %vm1073, %v1062, %v507
        %v1096 = vsel %vm1073, %v1063, %v509
        %v1097 = vsel %vm1073, %v1064, %v511
        %v1098 = vsel %vm1073, %v1065, %v513
        %v1099 = vsel %vm1073, %v1066, %v515
        %v1100 = vsel %vm1073, %v1067, %v517
        %v1101 = vsel %vm1073, %v1068, %v519
        %v1102 = vsel %vm1073, %v1069, %v521
        %v1103 = vsel %vm1073, %v1070, %v523
        %v1104 = vsel %vm1073, %v1071, %v525
        %v1105 = vsel %vm1073, %v1072, %v527
        %vm1106 = vcmask 392192
        %v1107 = vsel %vm1106, %v1074, %v561
        %v1108 = vsel %vm1106, %v1075, %v563
        %v1109 = vsel %vm1106, %v1076, %v565
        %v1110 = vsel %vm1106, %v1077, %v567
        %v1111 = vsel %vm1106, %v1078, %v569
        %v1112 = vsel %vm1106, %v1079, %v571
        %v1113 = vsel %vm1106, %v1080, %v573
        %v1114 = vsel %vm1106, %v1081, %v575
        %v1115 = vsel %vm1106, %v1082, %v577
        %v1116 = vsel %vm1106, %v1083, %v579
        %v1117 = vsel %vm1106, %v1084, %v581
        %v1118 = vsel %vm1106, %v1085, %v583
        %v1119 = vsel %vm1106, %v1086, %v585
        %v1120 = vsel %vm1106, %v1087, %v587
        %v1121 = vsel %vm1106, %v1088, %v589
        %v1122 = vsel %vm1106, %v1089, %v591
        %v1123 = vsel %vm1106, %v1090, %v593
        %v1124 = vsel %vm1106, %v1091, %v595
        %v1125 = vsel %vm1106, %v1092, %v597
        %v1126 = vsel %vm1106, %v1093, %v599
        %v1127 = vsel %vm1106, %v1094, %v601
        %v1128 = vsel %vm1106, %v1095, %v603
        %v1129 = vsel %vm1106, %v1096, %v605
        %v1130 = vsel %vm1106, %v1097, %v607
        %v1131 = vsel %vm1106, %v1098, %v609
        %v1132 = vsel %vm1106, %v1099, %v611
        %v1133 = vsel %vm1106, %v1100, %v613
        %v1134 = vsel %vm1106, %v1101, %v615
        %v1135 = vsel %vm1106, %v1102, %v617
        %v1136 = vsel %vm1106, %v1103, %v619
        %v1137 = vsel %vm1106, %v1104, %v621
        %v1138 = vsel %vm1106, %v1105, %v623
        %vm1139 = vcmask 523264
        %v1140 = vsel %vm1139, %v1107, %v657
        %v1141 = vsel %vm1139, %v1108, %v659
        %v1142 = vsel %vm1139, %v1109, %v661
        %v1143 = vsel %vm1139, %v1110, %v663
        %v1144 = vsel %vm1139, %v1111, %v665
        %v1145 = vsel %vm1139, %v1112, %v667
        %v1146 = vsel %vm1139, %v1113, %v669
        %v1147 = vsel %vm1139, %v1114, %v671
        %v1148 = vsel %vm1139, %v1115, %v673
        %v1149 = vsel %vm1139, %v1116, %v675
        %v1150 = vsel %vm1139, %v1117, %v677
        %v1151 = vsel %vm1139, %v1118, %v679
        %v1152 = vsel %vm1139, %v1119, %v681
        %v1153 = vsel %vm1139, %v1120, %v683
        %v1154 = vsel %vm1139, %v1121, %v685
        %v1155 = vsel %vm1139, %v1122, %v687
        %v1156 = vsel %vm1139, %v1123, %v689
        %v1157 = vsel %vm1139, %v1124, %v691
        %v1158 = vsel %vm1139, %v1125, %v693
        %v1159 = vsel %vm1139, %v1126, %v695
        %v1160 = vsel %vm1139, %v1127, %v697
        %v1161 = vsel %vm1139, %v1128, %v699
        %v1162 = vsel %vm1139, %v1129, %v701
        %v1163 = vsel %vm1139, %v1130, %v703
        %v1164 = vsel %vm1139, %v1131, %v705
        %v1165 = vsel %vm1139, %v1132, %v707
        %v1166 = vsel %vm1139, %v1133, %v709
        %v1167 = vsel %vm1139, %v1134, %v711
        %v1168 = vsel %vm1139, %v1135, %v713
        %v1169 = vsel %vm1139, %v1136, %v715
        %v1170 = vsel %vm1139, %v1137, %v717
        %v1171 = vsel %vm1139, %v1138, %v719
        %vm1172 = vcmask 654336
        %v1173 = vsel %vm1172, %v1140, %v753
        %v1174 = vsel %vm1172, %v1141, %v755
        %v1175 = vsel %vm1172, %v1142, %v757
        %v1176 = vsel %vm1172, %v1143, %v759
        %v1177 = vsel %vm1172, %v1144, %v761
        %v1178 = vsel %vm1172, %v1145, %v763
        %v1179 = vsel %vm1172, %v1146, %v765
        %v1180 = vsel %vm1172, %v1147, %v767
        %v1181 = vsel %vm1172, %v1148, %v769
        %v1182 = vsel %vm1172, %v1149, %v771
        %v1183 = vsel %vm1172, %v1150, %v773
        %v1184 = vsel %vm1172, %v1151, %v775
        %v1185 = vsel %vm1172, %v1152, %v777
        %v1186 = vsel %vm1172, %v1153, %v779
        %v1187 = vsel %vm1172, %v1154, %v781
        %v1188 = vsel %vm1172, %v1155, %v783
        %v1189 = vsel %vm1172, %v1156, %v785
        %v1190 = vsel %vm1172, %v1157, %v787
        %v1191 = vsel %vm1172, %v1158, %v789
        %v1192 = vsel %vm1172, %v1159, %v791
        %v1193 = vsel %vm1172, %v1160, %v793
        %v1194 = vsel %vm1172, %v1161, %v795
        %v1195 = vsel %vm1172, %v1162, %v797
        %v1196 = vsel %vm1172, %v1163, %v799
        %v1197 = vsel %vm1172, %v1164, %v801
        %v1198 = vsel %vm1172, %v1165, %v803
        %v1199 = vsel %vm1172, %v1166, %v805
        %v1200 = vsel %vm1172, %v1167, %v807
        %v1201 = vsel %vm1172, %v1168, %v809
        %v1202 = vsel %vm1172, %v1169, %v811
        %v1203 = vsel %vm1172, %v1170, %v813
        %v1204 = vsel %vm1172, %v1171, %v815
        %vm1205 = vcmask 785408
        %v1206 = vsel %vm1205, %v1173, %v849
        %v1207 = vsel %vm1205, %v1174, %v851
        %v1208 = vsel %vm1205, %v1175, %v853
        %v1209 = vsel %vm1205, %v1176, %v855
        %v1210 = vsel %vm1205, %v1177, %v857
        %v1211 = vsel %vm1205, %v1178, %v859
        %v1212 = vsel %vm1205, %v1179, %v861
        %v1213 = vsel %vm1205, %v1180, %v863
        %v1214 = vsel %vm1205, %v1181, %v865
        %v1215 = vsel %vm1205, %v1182, %v867
        %v1216 = vsel %vm1205, %v1183, %v869
        %v1217 = vsel %vm1205, %v1184, %v871
        %v1218 = vsel %vm1205, %v1185, %v873
        %v1219 = vsel %vm1205, %v1186, %v875
        %v1220 = vsel %vm1205, %v1187, %v877
        %v1221 = vsel %vm1205, %v1188, %v879
        %v1222 = vsel %vm1205, %v1189, %v881
        %v1223 = vsel %vm1205, %v1190, %v883
        %v1224 = vsel %vm1205, %v1191, %v885
        %v1225 = vsel %vm1205, %v1192, %v887
        %v1226 = vsel %vm1205, %v1193, %v889
        %v1227 = vsel %vm1205, %v1194, %v891
        %v1228 = vsel %vm1205, %v1195, %v893
        %v1229 = vsel %vm1205, %v1196, %v895
        %v1230 = vsel %vm1205, %v1197, %v897
        %v1231 = vsel %vm1205, %v1198, %v899
        %v1232 = vsel %vm1205, %v1199, %v901
        %v1233 = vsel %vm1205, %v1200, %v903
        %v1234 = vsel %vm1205, %v1201, %v905
        %v1235 = vsel %vm1205, %v1202, %v907
        %v1236 = vsel %vm1205, %v1203, %v909
        %v1237 = vsel %vm1205, %v1204, %v911
        %vm1238 = vcmask 916480
        %v1239 = vsel %vm1238, %v1206, %v945
        %v1240 = vsel %vm1238, %v1207, %v947
        %v1241 = vsel %vm1238, %v1208, %v949
        %v1242 = vsel %vm1238, %v1209, %v951
        %v1243 = vsel %vm1238, %v1210, %v953
        %v1244 = vsel %vm1238, %v1211, %v955
        %v1245 = vsel %vm1238, %v1212, %v957
        %v1246 = vsel %vm1238, %v1213, %v959
        %v1247 = vsel %vm1238, %v1214, %v961
        %v1248 = vsel %vm1238, %v1215, %v963
        %v1249 = vsel %vm1238, %v1216, %v965
        %v1250 = vsel %vm1238, %v1217, %v967
        %v1251 = vsel %vm1238, %v1218, %v969
        %v1252 = vsel %vm1238, %v1219, %v971
        %v1253 = vsel %vm1238, %v1220, %v973
        %v1254 = vsel %vm1238, %v1221, %v975
        %v1255 = vsel %vm1238, %v1222, %v977
        %v1256 = vsel %vm1238, %v1223, %v979
        %v1257 = vsel %vm1238, %v1224, %v981
        %v1258 = vsel %vm1238, %v1225, %v983
        %v1259 = vsel %vm1238, %v1226, %v985
        %v1260 = vsel %vm1238, %v1227, %v987
        %v1261 = vsel %vm1238, %v1228, %v989
        %v1262 = vsel %vm1238, %v1229, %v991
        %v1263 = vsel %vm1238, %v1230, %v993
        %v1264 = vsel %vm1238, %v1231, %v995
        %v1265 = vsel %vm1238, %v1232, %v997
        %v1266 = vsel %vm1238, %v1233, %v999
        %v1267 = vsel %vm1238, %v1234, %v1001
        %v1268 = vsel %vm1238, %v1235, %v1003
        %v1269 = vsel %vm1238, %v1236, %v1005
        %v1270 = vsel %vm1238, %v1237, %v1007
        %v1271 = vlaneseq
        %v1272 = vshrl.u32 %v1271, 7
        %v1273 = vsub.s32 0, %v1272
        %v1274 = vrot.slane %v332, %v1273
        %vm1275 = vcmp.ge.f32.partialorder %v1239, %v1274
        %vm1276 = vcmp.ge.f32.partialorder %v1240, %v1274
        %vm1277 = vcmp.ge.f32.partialorder %v1241, %v1274
        %vm1278 = vcmp.ge.f32.partialorder %v1242, %v1274
        %vm1279 = vcmp.ge.f32.partialorder %v1243, %v1274
        %vm1280 = vcmp.ge.f32.partialorder %v1244, %v1274
        %vm1281 = vcmp.ge.f32.partialorder %v1245, %v1274
        %vm1282 = vcmp.ge.f32.partialorder %v1246, %v1274
        %vm1283 = vcmp.ge.f32.partialorder %v1247, %v1274
        %vm1284 = vcmp.ge.f32.partialorder %v1248, %v1274
        %vm1285 = vcmp.ge.f32.partialorder %v1249, %v1274
        %vm1286 = vcmp.ge.f32.partialorder %v1250, %v1274
        %vm1287 = vcmp.ge.f32.partialorder %v1251, %v1274
        %vm1288 = vcmp.ge.f32.partialorder %v1252, %v1274
        %vm1289 = vcmp.ge.f32.partialorder %v1253, %v1274
        %vm1290 = vcmp.ge.f32.partialorder %v1254, %v1274
        %vm1291 = vcmp.ge.f32.partialorder %v1255, %v1274
        %vm1292 = vcmp.ge.f32.partialorder %v1256, %v1274
        %vm1293 = vcmp.ge.f32.partialorder %v1257, %v1274
        %vm1294 = vcmp.ge.f32.partialorder %v1258, %v1274
        %vm1295 = vcmp.ge.f32.partialorder %v1259, %v1274
        %vm1296 = vcmp.ge.f32.partialorder %v1260, %v1274
        %vm1297 = vcmp.ge.f32.partialorder %v1261, %v1274
        %vm1298 = vcmp.ge.f32.partialorder %v1262, %v1274
        %vm1299 = vcmp.ge.f32.partialorder %v1263, %v1274
        %vm1300 = vcmp.ge.f32.partialorder %v1264, %v1274
        %vm1301 = vcmp.ge.f32.partialorder %v1265, %v1274
        %vm1302 = vcmp.ge.f32.partialorder %v1266, %v1274
        %vm1303 = vcmp.ge.f32.partialorder %v1267, %v1274
        %vm1304 = vcmp.ge.f32.partialorder %v1268, %v1274
        %vm1305 = vcmp.ge.f32.partialorder %v1269, %v1274
        %vm1306 = vcmp.ge.f32.partialorder %v1270, %v1274
        %v1307 = vsel %vm1275, 1, 0
        %v1308 = vsel %vm1276, 1, 0
        %v1309 = vsel %vm1277, 1, 0
        %v1310 = vsel %vm1278, 1, 0
        %v1311 = vsel %vm1279, 1, 0
        %v1312 = vsel %vm1280, 1, 0
        %v1313 = vsel %vm1281, 1, 0
        %v1314 = vsel %vm1282, 1, 0
        %v1315 = vsel %vm1283, 1, 0
        %v1316 = vsel %vm1284, 1, 0
        %v1317 = vsel %vm1285, 1, 0
        %v1318 = vsel %vm1286, 1, 0
        %v1319 = vsel %vm1287, 1, 0
        %v1320 = vsel %vm1288, 1, 0
        %v1321 = vsel %vm1289, 1, 0
        %v1322 = vsel %vm1290, 1, 0
        %v1323 = vsel %vm1291, 1, 0
        %v1324 = vsel %vm1292, 1, 0
        %v1325 = vsel %vm1293, 1, 0
        %v1326 = vsel %vm1294, 1, 0
        %v1327 = vsel %vm1295, 1, 0
        %v1328 = vsel %vm1296, 1, 0
        %v1329 = vsel %vm1297, 1, 0
        %v1330 = vsel %vm1298, 1, 0
        %v1331 = vsel %vm1299, 1, 0
        %v1332 = vsel %vm1300, 1, 0
        %v1333 = vsel %vm1301, 1, 0
        %v1334 = vsel %vm1302, 1, 0
        %v1335 = vsel %vm1303, 1, 0
        %v1336 = vsel %vm1304, 1, 0
        %v1337 = vsel %vm1305, 1, 0
        %v1338 = vsel %vm1306, 1, 0
        %v1339 = vcvt.s32.f32 %v1307
        %v1340 = vcvt.s32.f32 %v1308
        %v1341 = vcvt.s32.f32 %v1309
        %v1342 = vcvt.s32.f32 %v1310
        %v1343 = vcvt.s32.f32 %v1311
        %v1344 = vcvt.s32.f32 %v1312
        %v1345 = vcvt.s32.f32 %v1313
        %v1346 = vcvt.s32.f32 %v1314
        %v1347 = vcvt.s32.f32 %v1315
        %v1348 = vcvt.s32.f32 %v1316
        %v1349 = vcvt.s32.f32 %v1317
        %v1350 = vcvt.s32.f32 %v1318
        %v1351 = vcvt.s32.f32 %v1319
        %v1352 = vcvt.s32.f32 %v1320
        %v1353 = vcvt.s32.f32 %v1321
        %v1354 = vcvt.s32.f32 %v1322
        %v1355 = vcvt.s32.f32 %v1323
        %v1356 = vcvt.s32.f32 %v1324
        %v1357 = vcvt.s32.f32 %v1325
        %v1358 = vcvt.s32.f32 %v1326
        %v1359 = vcvt.s32.f32 %v1327
        %v1360 = vcvt.s32.f32 %v1328
        %v1361 = vcvt.s32.f32 %v1329
        %v1362 = vcvt.s32.f32 %v1330
        %v1363 = vcvt.s32.f32 %v1331
        %v1364 = vcvt.s32.f32 %v1332
        %v1365 = vcvt.s32.f32 %v1333
        %v1366 = vcvt.s32.f32 %v1334
        %v1367 = vcvt.s32.f32 %v1335
        %v1368 = vcvt.s32.f32 %v1336
        %v1369 = vcvt.s32.f32 %v1337
        %v1370 = vcvt.s32.f32 %v1338
        %v1371 = vlaneseq
        %v1372 = vshrl.u32 %v1371, 7
        %v1373 = vsub.s32 1, %v1372
        %v1374 = vrot.slane %v332, %v1373
        %vm1375 = vcmp.ge.f32.partialorder %v1239, %v1374
        %vm1376 = vcmp.ge.f32.partialorder %v1240, %v1374
        %vm1377 = vcmp.ge.f32.partialorder %v1241, %v1374
        %vm1378 = vcmp.ge.f32.partialorder %v1242, %v1374
        %vm1379 = vcmp.ge.f32.partialorder %v1243, %v1374
        %vm1380 = vcmp.ge.f32.partialorder %v1244, %v1374
        %vm1381 = vcmp.ge.f32.partialorder %v1245, %v1374
        %vm1382 = vcmp.ge.f32.partialorder %v1246, %v1374
        %vm1383 = vcmp.ge.f32.partialorder %v1247, %v1374
        %vm1384 = vcmp.ge.f32.partialorder %v1248, %v1374
        %vm1385 = vcmp.ge.f32.partialorder %v1249, %v1374
        %vm1386 = vcmp.ge.f32.partialorder %v1250, %v1374
        %vm1387 = vcmp.ge.f32.partialorder %v1251, %v1374
        %vm1388 = vcmp.ge.f32.partialorder %v1252, %v1374
        %vm1389 = vcmp.ge.f32.partialorder %v1253, %v1374
        %vm1390 = vcmp.ge.f32.partialorder %v1254, %v1374
        %vm1391 = vcmp.ge.f32.partialorder %v1255, %v1374
        %vm1392 = vcmp.ge.f32.partialorder %v1256, %v1374
        %vm1393 = vcmp.ge.f32.partialorder %v1257, %v1374
        %vm1394 = vcmp.ge.f32.partialorder %v1258, %v1374
        %vm1395 = vcmp.ge.f32.partialorder %v1259, %v1374
        %vm1396 = vcmp.ge.f32.partialorder %v1260, %v1374
        %vm1397 = vcmp.ge.f32.partialorder %v1261, %v1374
        %vm1398 = vcmp.ge.f32.partialorder %v1262, %v1374
        %vm1399 = vcmp.ge.f32.partialorder %v1263, %v1374
        %vm1400 = vcmp.ge.f32.partialorder %v1264, %v1374
        %vm1401 = vcmp.ge.f32.partialorder %v1265, %v1374
        %vm1402 = vcmp.ge.f32.partialorder %v1266, %v1374
        %vm1403 = vcmp.ge.f32.partialorder %v1267, %v1374
        %vm1404 = vcmp.ge.f32.partialorder %v1268, %v1374
        %vm1405 = vcmp.ge.f32.partialorder %v1269, %v1374
        %vm1406 = vcmp.ge.f32.partialorder %v1270, %v1374
        %v1407 = vsel %vm1375, 1, 0
        %v1408 = vsel %vm1376, 1, 0
        %v1409 = vsel %vm1377, 1, 0
        %v1410 = vsel %vm1378, 1, 0
        %v1411 = vsel %vm1379, 1, 0
        %v1412 = vsel %vm1380, 1, 0
        %v1413 = vsel %vm1381, 1, 0
        %v1414 = vsel %vm1382, 1, 0
        %v1415 = vsel %vm1383, 1, 0
        %v1416 = vsel %vm1384, 1, 0
        %v1417 = vsel %vm1385, 1, 0
        %v1418 = vsel %vm1386, 1, 0
        %v1419 = vsel %vm1387, 1, 0
        %v1420 = vsel %vm1388, 1, 0
        %v1421 = vsel %vm1389, 1, 0
        %v1422 = vsel %vm1390, 1, 0
        %v1423 = vsel %vm1391, 1, 0
        %v1424 = vsel %vm1392, 1, 0
        %v1425 = vsel %vm1393, 1, 0
        %v1426 = vsel %vm1394, 1, 0
        %v1427 = vsel %vm1395, 1, 0
        %v1428 = vsel %vm1396, 1, 0
        %v1429 = vsel %vm1397, 1, 0
        %v1430 = vsel %vm1398, 1, 0
        %v1431 = vsel %vm1399, 1, 0
        %v1432 = vsel %vm1400, 1, 0
        %v1433 = vsel %vm1401, 1, 0
        %v1434 = vsel %vm1402, 1, 0
        %v1435 = vsel %vm1403, 1, 0
        %v1436 = vsel %vm1404, 1, 0
        %v1437 = vsel %vm1405, 1, 0
        %v1438 = vsel %vm1406, 1, 0
        %v1439 = vcvt.s32.f32 %v1407
        %v1440 = vcvt.s32.f32 %v1408
        %v1441 = vcvt.s32.f32 %v1409
        %v1442 = vcvt.s32.f32 %v1410
        %v1443 = vcvt.s32.f32 %v1411
        %v1444 = vcvt.s32.f32 %v1412
        %v1445 = vcvt.s32.f32 %v1413
        %v1446 = vcvt.s32.f32 %v1414
        %v1447 = vcvt.s32.f32 %v1415
        %v1448 = vcvt.s32.f32 %v1416
        %v1449 = vcvt.s32.f32 %v1417
        %v1450 = vcvt.s32.f32 %v1418
        %v1451 = vcvt.s32.f32 %v1419
        %v1452 = vcvt.s32.f32 %v1420
        %v1453 = vcvt.s32.f32 %v1421
        %v1454 = vcvt.s32.f32 %v1422
        %v1455 = vcvt.s32.f32 %v1423
        %v1456 = vcvt.s32.f32 %v1424
        %v1457 = vcvt.s32.f32 %v1425
        %v1458 = vcvt.s32.f32 %v1426
        %v1459 = vcvt.s32.f32 %v1427
        %v1460 = vcvt.s32.f32 %v1428
        %v1461 = vcvt.s32.f32 %v1429
        %v1462 = vcvt.s32.f32 %v1430
        %v1463 = vcvt.s32.f32 %v1431
        %v1464 = vcvt.s32.f32 %v1432
        %v1465 = vcvt.s32.f32 %v1433
        %v1466 = vcvt.s32.f32 %v1434
        %v1467 = vcvt.s32.f32 %v1435
        %v1468 = vcvt.s32.f32 %v1436
        %v1469 = vcvt.s32.f32 %v1437
        %v1470 = vcvt.s32.f32 %v1438
        %v1471 = vlaneseq
        %v1472 = vshrl.u32 %v1471, 7
        %v1473 = vsub.s32 2, %v1472
        %v1474 = vrot.slane %v332, %v1473
        %vm1475 = vcmp.ge.f32.partialorder %v1239, %v1474
        %vm1476 = vcmp.ge.f32.partialorder %v1240, %v1474
        %vm1477 = vcmp.ge.f32.partialorder %v1241, %v1474
        %vm1478 = vcmp.ge.f32.partialorder %v1242, %v1474
        %vm1479 = vcmp.ge.f32.partialorder %v1243, %v1474
        %vm1480 = vcmp.ge.f32.partialorder %v1244, %v1474
        %vm1481 = vcmp.ge.f32.partialorder %v1245, %v1474
        %vm1482 = vcmp.ge.f32.partialorder %v1246, %v1474
        %vm1483 = vcmp.ge.f32.partialorder %v1247, %v1474
        %vm1484 = vcmp.ge.f32.partialorder %v1248, %v1474
        %vm1485 = vcmp.ge.f32.partialorder %v1249, %v1474
        %vm1486 = vcmp.ge.f32.partialorder %v1250, %v1474
        %vm1487 = vcmp.ge.f32.partialorder %v1251, %v1474
        %vm1488 = vcmp.ge.f32.partialorder %v1252, %v1474
        %vm1489 = vcmp.ge.f32.partialorder %v1253, %v1474
        %vm1490 = vcmp.ge.f32.partialorder %v1254, %v1474
        %vm1491 = vcmp.ge.f32.partialorder %v1255, %v1474
        %vm1492 = vcmp.ge.f32.partialorder %v1256, %v1474
        %vm1493 = vcmp.ge.f32.partialorder %v1257, %v1474
        %vm1494 = vcmp.ge.f32.partialorder %v1258, %v1474
        %vm1495 = vcmp.ge.f32.partialorder %v1259, %v1474
        %vm1496 = vcmp.ge.f32.partialorder %v1260, %v1474
        %vm1497 = vcmp.ge.f32.partialorder %v1261, %v1474
        %vm1498 = vcmp.ge.f32.partialorder %v1262, %v1474
        %vm1499 = vcmp.ge.f32.partialorder %v1263, %v1474
        %vm1500 = vcmp.ge.f32.partialorder %v1264, %v1474
        %vm1501 = vcmp.ge.f32.partialorder %v1265, %v1474
        %vm1502 = vcmp.ge.f32.partialorder %v1266, %v1474
        %vm1503 = vcmp.ge.f32.partialorder %v1267, %v1474
        %vm1504 = vcmp.ge.f32.partialorder %v1268, %v1474
        %vm1505 = vcmp.ge.f32.partialorder %v1269, %v1474
        %vm1506 = vcmp.ge.f32.partialorder %v1270, %v1474
        %v1507 = vsel %vm1475, 1, 0
        %v1508 = vsel %vm1476, 1, 0
        %v1509 = vsel %vm1477, 1, 0
        %v1510 = vsel %vm1478, 1, 0
        %v1511 = vsel %vm1479, 1, 0
        %v1512 = vsel %vm1480, 1, 0
        %v1513 = vsel %vm1481, 1, 0
        %v1514 = vsel %vm1482, 1, 0
        %v1515 = vsel %vm1483, 1, 0
        %v1516 = vsel %vm1484, 1, 0
        %v1517 = vsel %vm1485, 1, 0
        %v1518 = vsel %vm1486, 1, 0
        %v1519 = vsel %vm1487, 1, 0
        %v1520 = vsel %vm1488, 1, 0
        %v1521 = vsel %vm1489, 1, 0
        %v1522 = vsel %vm1490, 1, 0
        %v1523 = vsel %vm1491, 1, 0
        %v1524 = vsel %vm1492, 1, 0
        %v1525 = vsel %vm1493, 1, 0
        %v1526 = vsel %vm1494, 1, 0
        %v1527 = vsel %vm1495, 1, 0
        %v1528 = vsel %vm1496, 1, 0
        %v1529 = vsel %vm1497, 1, 0
        %v1530 = vsel %vm1498, 1, 0
        %v1531 = vsel %vm1499, 1, 0
        %v1532 = vsel %vm1500, 1, 0
        %v1533 = vsel %vm1501, 1, 0
        %v1534 = vsel %vm1502, 1, 0
        %v1535 = vsel %vm1503, 1, 0
        %v1536 = vsel %vm1504, 1, 0
        %v1537 = vsel %vm1505, 1, 0
        %v1538 = vsel %vm1506, 1, 0
        %v1539 = vcvt.s32.f32 %v1507
        %v1540 = vcvt.s32.f32 %v1508
        %v1541 = vcvt.s32.f32 %v1509
        %v1542 = vcvt.s32.f32 %v1510
        %v1543 = vcvt.s32.f32 %v1511
        %v1544 = vcvt.s32.f32 %v1512
        %v1545 = vcvt.s32.f32 %v1513
        %v1546 = vcvt.s32.f32 %v1514
        %v1547 = vcvt.s32.f32 %v1515
        %v1548 = vcvt.s32.f32 %v1516
        %v1549 = vcvt.s32.f32 %v1517
        %v1550 = vcvt.s32.f32 %v1518
        %v1551 = vcvt.s32.f32 %v1519
        %v1552 = vcvt.s32.f32 %v1520
        %v1553 = vcvt.s32.f32 %v1521
        %v1554 = vcvt.s32.f32 %v1522
        %v1555 = vcvt.s32.f32 %v1523
        %v1556 = vcvt.s32.f32 %v1524
        %v1557 = vcvt.s32.f32 %v1525
        %v1558 = vcvt.s32.f32 %v1526
        %v1559 = vcvt.s32.f32 %v1527
        %v1560 = vcvt.s32.f32 %v1528
        %v1561 = vcvt.s32.f32 %v1529
        %v1562 = vcvt.s32.f32 %v1530
        %v1563 = vcvt.s32.f32 %v1531
        %v1564 = vcvt.s32.f32 %v1532
        %v1565 = vcvt.s32.f32 %v1533
        %v1566 = vcvt.s32.f32 %v1534
        %v1567 = vcvt.s32.f32 %v1535
        %v1568 = vcvt.s32.f32 %v1536
        %v1569 = vcvt.s32.f32 %v1537
        %v1570 = vcvt.s32.f32 %v1538
        %v1571 = vlaneseq
        %v1572 = vshrl.u32 %v1571, 7
        %v1573 = vsub.s32 3, %v1572
        %v1574 = vrot.slane %v332, %v1573
        %vm1575 = vcmp.ge.f32.partialorder %v1239, %v1574
        %vm1576 = vcmp.ge.f32.partialorder %v1240, %v1574
        %vm1577 = vcmp.ge.f32.partialorder %v1241, %v1574
        %vm1578 = vcmp.ge.f32.partialorder %v1242, %v1574
        %vm1579 = vcmp.ge.f32.partialorder %v1243, %v1574
        %vm1580 = vcmp.ge.f32.partialorder %v1244, %v1574
        %vm1581 = vcmp.ge.f32.partialorder %v1245, %v1574
        %vm1582 = vcmp.ge.f32.partialorder %v1246, %v1574
        %vm1583 = vcmp.ge.f32.partialorder %v1247, %v1574
        %vm1584 = vcmp.ge.f32.partialorder %v1248, %v1574
        %vm1585 = vcmp.ge.f32.partialorder %v1249, %v1574
        %vm1586 = vcmp.ge.f32.partialorder %v1250, %v1574
        %vm1587 = vcmp.ge.f32.partialorder %v1251, %v1574
        %vm1588 = vcmp.ge.f32.partialorder %v1252, %v1574
        %vm1589 = vcmp.ge.f32.partialorder %v1253, %v1574
        %vm1590 = vcmp.ge.f32.partialorder %v1254, %v1574
        %vm1591 = vcmp.ge.f32.partialorder %v1255, %v1574
        %vm1592 = vcmp.ge.f32.partialorder %v1256, %v1574
        %vm1593 = vcmp.ge.f32.partialorder %v1257, %v1574
        %vm1594 = vcmp.ge.f32.partialorder %v1258, %v1574
        %vm1595 = vcmp.ge.f32.partialorder %v1259, %v1574
        %vm1596 = vcmp.ge.f32.partialorder %v1260, %v1574
        %vm1597 = vcmp.ge.f32.partialorder %v1261, %v1574
        %vm1598 = vcmp.ge.f32.partialorder %v1262, %v1574
        %vm1599 = vcmp.ge.f32.partialorder %v1263, %v1574
        %vm1600 = vcmp.ge.f32.partialorder %v1264, %v1574
        %vm1601 = vcmp.ge.f32.partialorder %v1265, %v1574
        %vm1602 = vcmp.ge.f32.partialorder %v1266, %v1574
        %vm1603 = vcmp.ge.f32.partialorder %v1267, %v1574
        %vm1604 = vcmp.ge.f32.partialorder %v1268, %v1574
        %vm1605 = vcmp.ge.f32.partialorder %v1269, %v1574
        %vm1606 = vcmp.ge.f32.partialorder %v1270, %v1574
        %v1607 = vsel %vm1575, 1, 0
        %v1608 = vsel %vm1576, 1, 0
        %v1609 = vsel %vm1577, 1, 0
        %v1610 = vsel %vm1578, 1, 0
        %v1611 = vsel %vm1579, 1, 0
        %v1612 = vsel %vm1580, 1, 0
        %v1613 = vsel %vm1581, 1, 0
        %v1614 = vsel %vm1582, 1, 0
        %v1615 = vsel %vm1583, 1, 0
        %v1616 = vsel %vm1584, 1, 0
        %v1617 = vsel %vm1585, 1, 0
        %v1618 = vsel %vm1586, 1, 0
        %v1619 = vsel %vm1587, 1, 0
        %v1620 = vsel %vm1588, 1, 0
        %v1621 = vsel %vm1589, 1, 0
        %v1622 = vsel %vm1590, 1, 0
        %v1623 = vsel %vm1591, 1, 0
        %v1624 = vsel %vm1592, 1, 0
        %v1625 = vsel %vm1593, 1, 0
        %v1626 = vsel %vm1594, 1, 0
        %v1627 = vsel %vm1595, 1, 0
        %v1628 = vsel %vm1596, 1, 0
        %v1629 = vsel %vm1597, 1, 0
        %v1630 = vsel %vm1598, 1, 0
        %v1631 = vsel %vm1599, 1, 0
        %v1632 = vsel %vm1600, 1, 0
        %v1633 = vsel %vm1601, 1, 0
        %v1634 = vsel %vm1602, 1, 0
        %v1635 = vsel %vm1603, 1, 0
        %v1636 = vsel %vm1604, 1, 0
        %v1637 = vsel %vm1605, 1, 0
        %v1638 = vsel %vm1606, 1, 0
        %v1639 = vcvt.s32.f32 %v1607
        %v1640 = vcvt.s32.f32 %v1608
        %v1641 = vcvt.s32.f32 %v1609
        %v1642 = vcvt.s32.f32 %v1610
        %v1643 = vcvt.s32.f32 %v1611
        %v1644 = vcvt.s32.f32 %v1612
        %v1645 = vcvt.s32.f32 %v1613
        %v1646 = vcvt.s32.f32 %v1614
        %v1647 = vcvt.s32.f32 %v1615
        %v1648 = vcvt.s32.f32 %v1616
        %v1649 = vcvt.s32.f32 %v1617
        %v1650 = vcvt.s32.f32 %v1618
        %v1651 = vcvt.s32.f32 %v1619
        %v1652 = vcvt.s32.f32 %v1620
        %v1653 = vcvt.s32.f32 %v1621
        %v1654 = vcvt.s32.f32 %v1622
        %v1655 = vcvt.s32.f32 %v1623
        %v1656 = vcvt.s32.f32 %v1624
        %v1657 = vcvt.s32.f32 %v1625
        %v1658 = vcvt.s32.f32 %v1626
        %v1659 = vcvt.s32.f32 %v1627
        %v1660 = vcvt.s32.f32 %v1628
        %v1661 = vcvt.s32.f32 %v1629
        %v1662 = vcvt.s32.f32 %v1630
        %v1663 = vcvt.s32.f32 %v1631
        %v1664 = vcvt.s32.f32 %v1632
        %v1665 = vcvt.s32.f32 %v1633
        %v1666 = vcvt.s32.f32 %v1634
        %v1667 = vcvt.s32.f32 %v1635
        %v1668 = vcvt.s32.f32 %v1636
        %v1669 = vcvt.s32.f32 %v1637
        %v1670 = vcvt.s32.f32 %v1638
        %v1671 = vlaneseq
        %v1672 = vshrl.u32 %v1671, 7
        %v1673 = vsub.s32 4, %v1672
        %v1674 = vrot.slane %v332, %v1673
        %vm1675 = vcmp.ge.f32.partialorder %v1239, %v1674
        %vm1676 = vcmp.ge.f32.partialorder %v1240, %v1674
        %vm1677 = vcmp.ge.f32.partialorder %v1241, %v1674
        %vm1678 = vcmp.ge.f32.partialorder %v1242, %v1674
        %vm1679 = vcmp.ge.f32.partialorder %v1243, %v1674
        %vm1680 = vcmp.ge.f32.partialorder %v1244, %v1674
        %vm1681 = vcmp.ge.f32.partialorder %v1245, %v1674
        %vm1682 = vcmp.ge.f32.partialorder %v1246, %v1674
        %vm1683 = vcmp.ge.f32.partialorder %v1247, %v1674
        %vm1684 = vcmp.ge.f32.partialorder %v1248, %v1674
        %vm1685 = vcmp.ge.f32.partialorder %v1249, %v1674
        %vm1686 = vcmp.ge.f32.partialorder %v1250, %v1674
        %vm1687 = vcmp.ge.f32.partialorder %v1251, %v1674
        %vm1688 = vcmp.ge.f32.partialorder %v1252, %v1674
        %vm1689 = vcmp.ge.f32.partialorder %v1253, %v1674
        %vm1690 = vcmp.ge.f32.partialorder %v1254, %v1674
        %vm1691 = vcmp.ge.f32.partialorder %v1255, %v1674
        %vm1692 = vcmp.ge.f32.partialorder %v1256, %v1674
        %vm1693 = vcmp.ge.f32.partialorder %v1257, %v1674
        %vm1694 = vcmp.ge.f32.partialorder %v1258, %v1674
        %vm1695 = vcmp.ge.f32.partialorder %v1259, %v1674
        %vm1696 = vcmp.ge.f32.partialorder %v1260, %v1674
        %vm1697 = vcmp.ge.f32.partialorder %v1261, %v1674
        %vm1698 = vcmp.ge.f32.partialorder %v1262, %v1674
        %vm1699 = vcmp.ge.f32.partialorder %v1263, %v1674
        %vm1700 = vcmp.ge.f32.partialorder %v1264, %v1674
        %vm1701 = vcmp.ge.f32.partialorder %v1265, %v1674
        %vm1702 = vcmp.ge.f32.partialorder %v1266, %v1674
        %vm1703 = vcmp.ge.f32.partialorder %v1267, %v1674
        %vm1704 = vcmp.ge.f32.partialorder %v1268, %v1674
        %vm1705 = vcmp.ge.f32.partialorder %v1269, %v1674
        %vm1706 = vcmp.ge.f32.partialorder %v1270, %v1674
        %v1707 = vsel %vm1675, 1, 0
        %v1708 = vsel %vm1676, 1, 0
        %v1709 = vsel %vm1677, 1, 0
        %v1710 = vsel %vm1678, 1, 0
        %v1711 = vsel %vm1679, 1, 0
        %v1712 = vsel %vm1680, 1, 0
        %v1713 = vsel %vm1681, 1, 0
        %v1714 = vsel %vm1682, 1, 0
        %v1715 = vsel %vm1683, 1, 0
        %v1716 = vsel %vm1684, 1, 0
        %v1717 = vsel %vm1685, 1, 0
        %v1718 = vsel %vm1686, 1, 0
        %v1719 = vsel %vm1687, 1, 0
        %v1720 = vsel %vm1688, 1, 0
        %v1721 = vsel %vm1689, 1, 0
        %v1722 = vsel %vm1690, 1, 0
        %v1723 = vsel %vm1691, 1, 0
        %v1724 = vsel %vm1692, 1, 0
        %v1725 = vsel %vm1693, 1, 0
        %v1726 = vsel %vm1694, 1, 0
        %v1727 = vsel %vm1695, 1, 0
        %v1728 = vsel %vm1696, 1, 0
        %v1729 = vsel %vm1697, 1, 0
        %v1730 = vsel %vm1698, 1, 0
        %v1731 = vsel %vm1699, 1, 0
        %v1732 = vsel %vm1700, 1, 0
        %v1733 = vsel %vm1701, 1, 0
        %v1734 = vsel %vm1702, 1, 0
        %v1735 = vsel %vm1703, 1, 0
        %v1736 = vsel %vm1704, 1, 0
        %v1737 = vsel %vm1705, 1, 0
        %v1738 = vsel %vm1706, 1, 0
        %v1739 = vcvt.s32.f32 %v1707
        %v1740 = vcvt.s32.f32 %v1708
        %v1741 = vcvt.s32.f32 %v1709
        %v1742 = vcvt.s32.f32 %v1710
        %v1743 = vcvt.s32.f32 %v1711
        %v1744 = vcvt.s32.f32 %v1712
        %v1745 = vcvt.s32.f32 %v1713
        %v1746 = vcvt.s32.f32 %v1714
        %v1747 = vcvt.s32.f32 %v1715
        %v1748 = vcvt.s32.f32 %v1716
        %v1749 = vcvt.s32.f32 %v1717
        %v1750 = vcvt.s32.f32 %v1718
        %v1751 = vcvt.s32.f32 %v1719
        %v1752 = vcvt.s32.f32 %v1720
        %v1753 = vcvt.s32.f32 %v1721
        %v1754 = vcvt.s32.f32 %v1722
        %v1755 = vcvt.s32.f32 %v1723
        %v1756 = vcvt.s32.f32 %v1724
        %v1757 = vcvt.s32.f32 %v1725
        %v1758 = vcvt.s32.f32 %v1726
        %v1759 = vcvt.s32.f32 %v1727
        %v1760 = vcvt.s32.f32 %v1728
        %v1761 = vcvt.s32.f32 %v1729
        %v1762 = vcvt.s32.f32 %v1730
        %v1763 = vcvt.s32.f32 %v1731
        %v1764 = vcvt.s32.f32 %v1732
        %v1765 = vcvt.s32.f32 %v1733
        %v1766 = vcvt.s32.f32 %v1734
        %v1767 = vcvt.s32.f32 %v1735
        %v1768 = vcvt.s32.f32 %v1736
        %v1769 = vcvt.s32.f32 %v1737
        %v1770 = vcvt.s32.f32 %v1738
        %v1771 = vsub.f32 %v1339, %v1439
        %v1772 = vsub.f32 %v1340, %v1440
        %v1773 = vsub.f32 %v1341, %v1441
        %v1774 = vsub.f32 %v1342, %v1442
        %v1775 = vsub.f32 %v1343, %v1443
        %v1776 = vsub.f32 %v1344, %v1444
        %v1777 = vsub.f32 %v1345, %v1445
        %v1778 = vsub.f32 %v1346, %v1446
        %v1779 = vsub.f32 %v1347, %v1447
        %v1780 = vsub.f32 %v1348, %v1448
        %v1781 = vsub.f32 %v1349, %v1449
        %v1782 = vsub.f32 %v1350, %v1450
        %v1783 = vsub.f32 %v1351, %v1451
        %v1784 = vsub.f32 %v1352, %v1452
        %v1785 = vsub.f32 %v1353, %v1453
        %v1786 = vsub.f32 %v1354, %v1454
        %v1787 = vsub.f32 %v1355, %v1455
        %v1788 = vsub.f32 %v1356, %v1456
        %v1789 = vsub.f32 %v1357, %v1457
        %v1790 = vsub.f32 %v1358, %v1458
        %v1791 = vsub.f32 %v1359, %v1459
        %v1792 = vsub.f32 %v1360, %v1460
        %v1793 = vsub.f32 %v1361, %v1461
        %v1794 = vsub.f32 %v1362, %v1462
        %v1795 = vsub.f32 %v1363, %v1463
        %v1796 = vsub.f32 %v1364, %v1464
        %v1797 = vsub.f32 %v1365, %v1465
        %v1798 = vsub.f32 %v1366, %v1466
        %v1799 = vsub.f32 %v1367, %v1467
        %v1800 = vsub.f32 %v1368, %v1468
        %v1801 = vsub.f32 %v1369, %v1469
        %v1802 = vsub.f32 %v1370, %v1470
        %v1803 = vsub.f32 %v1439, %v1539
        %v1804 = vsub.f32 %v1440, %v1540
        %v1805 = vsub.f32 %v1441, %v1541
        %v1806 = vsub.f32 %v1442, %v1542
        %v1807 = vsub.f32 %v1443, %v1543
        %v1808 = vsub.f32 %v1444, %v1544
        %v1809 = vsub.f32 %v1445, %v1545
        %v1810 = vsub.f32 %v1446, %v1546
        %v1811 = vsub.f32 %v1447, %v1547
        %v1812 = vsub.f32 %v1448, %v1548
        %v1813 = vsub.f32 %v1449, %v1549
        %v1814 = vsub.f32 %v1450, %v1550
        %v1815 = vsub.f32 %v1451, %v1551
        %v1816 = vsub.f32 %v1452, %v1552
        %v1817 = vsub.f32 %v1453, %v1553
        %v1818 = vsub.f32 %v1454, %v1554
        %v1819 = vsub.f32 %v1455, %v1555
        %v1820 = vsub.f32 %v1456, %v1556
        %v1821 = vsub.f32 %v1457, %v1557
        %v1822 = vsub.f32 %v1458, %v1558
        %v1823 = vsub.f32 %v1459, %v1559
        %v1824 = vsub.f32 %v1460, %v1560
        %v1825 = vsub.f32 %v1461, %v1561
        %v1826 = vsub.f32 %v1462, %v1562
        %v1827 = vsub.f32 %v1463, %v1563
        %v1828 = vsub.f32 %v1464, %v1564
        %v1829 = vsub.f32 %v1465, %v1565
        %v1830 = vsub.f32 %v1466, %v1566
        %v1831 = vsub.f32 %v1467, %v1567
        %v1832 = vsub.f32 %v1468, %v1568
        %v1833 = vsub.f32 %v1469, %v1569
        %v1834 = vsub.f32 %v1470, %v1570
        %v1835 = vsub.f32 %v1539, %v1639
        %v1836 = vsub.f32 %v1540, %v1640
        %v1837 = vsub.f32 %v1541, %v1641
        %v1838 = vsub.f32 %v1542, %v1642
        %v1839 = vsub.f32 %v1543, %v1643
        %v1840 = vsub.f32 %v1544, %v1644
        %v1841 = vsub.f32 %v1545, %v1645
        %v1842 = vsub.f32 %v1546, %v1646
        %v1843 = vsub.f32 %v1547, %v1647
        %v1844 = vsub.f32 %v1548, %v1648
        %v1845 = vsub.f32 %v1549, %v1649
        %v1846 = vsub.f32 %v1550, %v1650
        %v1847 = vsub.f32 %v1551, %v1651
        %v1848 = vsub.f32 %v1552, %v1652
        %v1849 = vsub.f32 %v1553, %v1653
        %v1850 = vsub.f32 %v1554, %v1654
        %v1851 = vsub.f32 %v1555, %v1655
        %v1852 = vsub.f32 %v1556, %v1656
        %v1853 = vsub.f32 %v1557, %v1657
        %v1854 = vsub.f32 %v1558, %v1658
        %v1855 = vsub.f32 %v1559, %v1659
        %v1856 = vsub.f32 %v1560, %v1660
        %v1857 = vsub.f32 %v1561, %v1661
        %v1858 = vsub.f32 %v1562, %v1662
        %v1859 = vsub.f32 %v1563, %v1663
        %v1860 = vsub.f32 %v1564, %v1664
        %v1861 = vsub.f32 %v1565, %v1665
        %v1862 = vsub.f32 %v1566, %v1666
        %v1863 = vsub.f32 %v1567, %v1667
        %v1864 = vsub.f32 %v1568, %v1668
        %v1865 = vsub.f32 %v1569, %v1669
        %v1866 = vsub.f32 %v1570, %v1670
        %v1867 = vsub.f32 %v1639, %v1739
        %v1868 = vsub.f32 %v1640, %v1740
        %v1869 = vsub.f32 %v1641, %v1741
        %v1870 = vsub.f32 %v1642, %v1742
        %v1871 = vsub.f32 %v1643, %v1743
        %v1872 = vsub.f32 %v1644, %v1744
        %v1873 = vsub.f32 %v1645, %v1745
        %v1874 = vsub.f32 %v1646, %v1746
        %v1875 = vsub.f32 %v1647, %v1747
        %v1876 = vsub.f32 %v1648, %v1748
        %v1877 = vsub.f32 %v1649, %v1749
        %v1878 = vsub.f32 %v1650, %v1750
        %v1879 = vsub.f32 %v1651, %v1751
        %v1880 = vsub.f32 %v1652, %v1752
        %v1881 = vsub.f32 %v1653, %v1753
        %v1882 = vsub.f32 %v1654, %v1754
        %v1883 = vsub.f32 %v1655, %v1755
        %v1884 = vsub.f32 %v1656, %v1756
        %v1885 = vsub.f32 %v1657, %v1757
        %v1886 = vsub.f32 %v1658, %v1758
        %v1887 = vsub.f32 %v1659, %v1759
        %v1888 = vsub.f32 %v1660, %v1760
        %v1889 = vsub.f32 %v1661, %v1761
        %v1890 = vsub.f32 %v1662, %v1762
        %v1891 = vsub.f32 %v1663, %v1763
        %v1892 = vsub.f32 %v1664, %v1764
        %v1893 = vsub.f32 %v1665, %v1765
        %v1894 = vsub.f32 %v1666, %v1766
        %v1895 = vsub.f32 %v1667, %v1767
        %v1896 = vsub.f32 %v1668, %v1768
        %v1897 = vsub.f32 %v1669, %v1769
        %v1898 = vsub.f32 %v1670, %v1770
        %v1899 = vlaneseq
        %v1900 = vshrl.u32 %v1899, 7
        %v1901 = vsub.s32 5, %v1900
        %v1902 = vrot.slane %v332, %v1901
        %v1903 = vsub.f32 %v1239, %v1902
        %v1904 = vsub.f32 %v1240, %v1902
        %v1905 = vsub.f32 %v1241, %v1902
        %v1906 = vsub.f32 %v1242, %v1902
        %v1907 = vsub.f32 %v1243, %v1902
        %v1908 = vsub.f32 %v1244, %v1902
        %v1909 = vsub.f32 %v1245, %v1902
        %v1910 = vsub.f32 %v1246, %v1902
        %v1911 = vsub.f32 %v1247, %v1902
        %v1912 = vsub.f32 %v1248, %v1902
        %v1913 = vsub.f32 %v1249, %v1902
        %v1914 = vsub.f32 %v1250, %v1902
        %v1915 = vsub.f32 %v1251, %v1902
        %v1916 = vsub.f32 %v1252, %v1902
        %v1917 = vsub.f32 %v1253, %v1902
        %v1918 = vsub.f32 %v1254, %v1902
        %v1919 = vsub.f32 %v1255, %v1902
        %v1920 = vsub.f32 %v1256, %v1902
        %v1921 = vsub.f32 %v1257, %v1902
        %v1922 = vsub.f32 %v1258, %v1902
        %v1923 = vsub.f32 %v1259, %v1902
        %v1924 = vsub.f32 %v1260, %v1902
        %v1925 = vsub.f32 %v1261, %v1902
        %v1926 = vsub.f32 %v1262, %v1902
        %v1927 = vsub.f32 %v1263, %v1902
        %v1928 = vsub.f32 %v1264, %v1902
        %v1929 = vsub.f32 %v1265, %v1902
        %v1930 = vsub.f32 %v1266, %v1902
        %v1931 = vsub.f32 %v1267, %v1902
        %v1932 = vsub.f32 %v1268, %v1902
        %v1933 = vsub.f32 %v1269, %v1902
        %v1934 = vsub.f32 %v1270, %v1902
        %v1935 = vlaneseq
        %v1936 = vshrl.u32 %v1935, 7
        %v1937 = vsub.s32 6, %v1936
        %v1938 = vrot.slane %v332, %v1937
        %v1939 = vmul.f32 %v1903, %v1938
        %v1940 = vmul.f32 %v1904, %v1938
        %v1941 = vmul.f32 %v1905, %v1938
        %v1942 = vmul.f32 %v1906, %v1938
        %v1943 = vmul.f32 %v1907, %v1938
        %v1944 = vmul.f32 %v1908, %v1938
        %v1945 = vmul.f32 %v1909, %v1938
        %v1946 = vmul.f32 %v1910, %v1938
        %v1947 = vmul.f32 %v1911, %v1938
        %v1948 = vmul.f32 %v1912, %v1938
        %v1949 = vmul.f32 %v1913, %v1938
        %v1950 = vmul.f32 %v1914, %v1938
        %v1951 = vmul.f32 %v1915, %v1938
        %v1952 = vmul.f32 %v1916, %v1938
        %v1953 = vmul.f32 %v1917, %v1938
        %v1954 = vmul.f32 %v1918, %v1938
        %v1955 = vmul.f32 %v1919, %v1938
        %v1956 = vmul.f32 %v1920, %v1938
        %v1957 = vmul.f32 %v1921, %v1938
        %v1958 = vmul.f32 %v1922, %v1938
        %v1959 = vmul.f32 %v1923, %v1938
        %v1960 = vmul.f32 %v1924, %v1938
        %v1961 = vmul.f32 %v1925, %v1938
        %v1962 = vmul.f32 %v1926, %v1938
        %v1963 = vmul.f32 %v1927, %v1938
        %v1964 = vmul.f32 %v1928, %v1938
        %v1965 = vmul.f32 %v1929, %v1938
        %v1966 = vmul.f32 %v1930, %v1938
        %v1967 = vmul.f32 %v1931, %v1938
        %v1968 = vmul.f32 %v1932, %v1938
        %v1969 = vmul.f32 %v1933, %v1938
        %v1970 = vmul.f32 %v1934, %v1938
        %v1971 = vmul.f32 %v1939, %v1771
        %v1972 = vmul.f32 %v1940, %v1772
        %v1973 = vmul.f32 %v1941, %v1773
        %v1974 = vmul.f32 %v1942, %v1774
        %v1975 = vmul.f32 %v1943, %v1775
        %v1976 = vmul.f32 %v1944, %v1776
        %v1977 = vmul.f32 %v1945, %v1777
        %v1978 = vmul.f32 %v1946, %v1778
        %v1979 = vmul.f32 %v1947, %v1779
        %v1980 = vmul.f32 %v1948, %v1780
        %v1981 = vmul.f32 %v1949, %v1781
        %v1982 = vmul.f32 %v1950, %v1782
        %v1983 = vmul.f32 %v1951, %v1783
        %v1984 = vmul.f32 %v1952, %v1784
        %v1985 = vmul.f32 %v1953, %v1785
        %v1986 = vmul.f32 %v1954, %v1786
        %v1987 = vmul.f32 %v1955, %v1787
        %v1988 = vmul.f32 %v1956, %v1788
        %v1989 = vmul.f32 %v1957, %v1789
        %v1990 = vmul.f32 %v1958, %v1790
        %v1991 = vmul.f32 %v1959, %v1791
        %v1992 = vmul.f32 %v1960, %v1792
        %v1993 = vmul.f32 %v1961, %v1793
        %v1994 = vmul.f32 %v1962, %v1794
        %v1995 = vmul.f32 %v1963, %v1795
        %v1996 = vmul.f32 %v1964, %v1796
        %v1997 = vmul.f32 %v1965, %v1797
        %v1998 = vmul.f32 %v1966, %v1798
        %v1999 = vmul.f32 %v1967, %v1799
        %v2000 = vmul.f32 %v1968, %v1800
        %v2001 = vmul.f32 %v1969, %v1801
        %v2002 = vmul.f32 %v1970, %v1802
        %v2003 = vlaneseq
        %v2004 = vshrl.u32 %v2003, 7
        %v2005 = vsub.s32 7, %v2004
        %v2006 = vrot.slane %v332, %v2005
        %v2007 = vsub.f32 %v2006, %v1239
        %v2008 = vsub.f32 %v2006, %v1240
        %v2009 = vsub.f32 %v2006, %v1241
        %v2010 = vsub.f32 %v2006, %v1242
        %v2011 = vsub.f32 %v2006, %v1243
        %v2012 = vsub.f32 %v2006, %v1244
        %v2013 = vsub.f32 %v2006, %v1245
        %v2014 = vsub.f32 %v2006, %v1246
        %v2015 = vsub.f32 %v2006, %v1247
        %v2016 = vsub.f32 %v2006, %v1248
        %v2017 = vsub.f32 %v2006, %v1249
        %v2018 = vsub.f32 %v2006, %v1250
        %v2019 = vsub.f32 %v2006, %v1251
        %v2020 = vsub.f32 %v2006, %v1252
        %v2021 = vsub.f32 %v2006, %v1253
        %v2022 = vsub.f32 %v2006, %v1254
        %v2023 = vsub.f32 %v2006, %v1255
        %v2024 = vsub.f32 %v2006, %v1256
        %v2025 = vsub.f32 %v2006, %v1257
        %v2026 = vsub.f32 %v2006, %v1258
        %v2027 = vsub.f32 %v2006, %v1259
        %v2028 = vsub.f32 %v2006, %v1260
        %v2029 = vsub.f32 %v2006, %v1261
        %v2030 = vsub.f32 %v2006, %v1262
        %v2031 = vsub.f32 %v2006, %v1263
        %v2032 = vsub.f32 %v2006, %v1264
        %v2033 = vsub.f32 %v2006, %v1265
        %v2034 = vsub.f32 %v2006, %v1266
        %v2035 = vsub.f32 %v2006, %v1267
        %v2036 = vsub.f32 %v2006, %v1268
        %v2037 = vsub.f32 %v2006, %v1269
        %v2038 = vsub.f32 %v2006, %v1270
        %v2039 = vlaneseq
        %v2040 = vshrl.u32 %v2039, 7
        %v2041 = vsub.s32 0, %v2040
        %v2042 = vrot.slane %v333, %v2041
        %v2043 = vmul.f32 %v2007, %v2042
        %v2044 = vmul.f32 %v2008, %v2042
        %v2045 = vmul.f32 %v2009, %v2042
        %v2046 = vmul.f32 %v2010, %v2042
        %v2047 = vmul.f32 %v2011, %v2042
        %v2048 = vmul.f32 %v2012, %v2042
        %v2049 = vmul.f32 %v2013, %v2042
        %v2050 = vmul.f32 %v2014, %v2042
        %v2051 = vmul.f32 %v2015, %v2042
        %v2052 = vmul.f32 %v2016, %v2042
        %v2053 = vmul.f32 %v2017, %v2042
        %v2054 = vmul.f32 %v2018, %v2042
        %v2055 = vmul.f32 %v2019, %v2042
        %v2056 = vmul.f32 %v2020, %v2042
        %v2057 = vmul.f32 %v2021, %v2042
        %v2058 = vmul.f32 %v2022, %v2042
        %v2059 = vmul.f32 %v2023, %v2042
        %v2060 = vmul.f32 %v2024, %v2042
        %v2061 = vmul.f32 %v2025, %v2042
        %v2062 = vmul.f32 %v2026, %v2042
        %v2063 = vmul.f32 %v2027, %v2042
        %v2064 = vmul.f32 %v2028, %v2042
        %v2065 = vmul.f32 %v2029, %v2042
        %v2066 = vmul.f32 %v2030, %v2042
        %v2067 = vmul.f32 %v2031, %v2042
        %v2068 = vmul.f32 %v2032, %v2042
        %v2069 = vmul.f32 %v2033, %v2042
        %v2070 = vmul.f32 %v2034, %v2042
        %v2071 = vmul.f32 %v2035, %v2042
        %v2072 = vmul.f32 %v2036, %v2042
        %v2073 = vmul.f32 %v2037, %v2042
        %v2074 = vmul.f32 %v2038, %v2042
        %v2075 = vmul.f32 %v2043, %v1803
        %v2076 = vmul.f32 %v2044, %v1804
        %v2077 = vmul.f32 %v2045, %v1805
        %v2078 = vmul.f32 %v2046, %v1806
        %v2079 = vmul.f32 %v2047, %v1807
        %v2080 = vmul.f32 %v2048, %v1808
        %v2081 = vmul.f32 %v2049, %v1809
        %v2082 = vmul.f32 %v2050, %v1810
        %v2083 = vmul.f32 %v2051, %v1811
        %v2084 = vmul.f32 %v2052, %v1812
        %v2085 = vmul.f32 %v2053, %v1813
        %v2086 = vmul.f32 %v2054, %v1814
        %v2087 = vmul.f32 %v2055, %v1815
        %v2088 = vmul.f32 %v2056, %v1816
        %v2089 = vmul.f32 %v2057, %v1817
        %v2090 = vmul.f32 %v2058, %v1818
        %v2091 = vmul.f32 %v2059, %v1819
        %v2092 = vmul.f32 %v2060, %v1820
        %v2093 = vmul.f32 %v2061, %v1821
        %v2094 = vmul.f32 %v2062, %v1822
        %v2095 = vmul.f32 %v2063, %v1823
        %v2096 = vmul.f32 %v2064, %v1824
        %v2097 = vmul.f32 %v2065, %v1825
        %v2098 = vmul.f32 %v2066, %v1826
        %v2099 = vmul.f32 %v2067, %v1827
        %v2100 = vmul.f32 %v2068, %v1828
        %v2101 = vmul.f32 %v2069, %v1829
        %v2102 = vmul.f32 %v2070, %v1830
        %v2103 = vmul.f32 %v2071, %v1831
        %v2104 = vmul.f32 %v2072, %v1832
        %v2105 = vmul.f32 %v2073, %v1833
        %v2106 = vmul.f32 %v2074, %v1834
        %v2107 = vadd.f32 %v1971, %v2075
        %v2108 = vadd.f32 %v1972, %v2076
        %v2109 = vadd.f32 %v1973, %v2077
        %v2110 = vadd.f32 %v1974, %v2078
        %v2111 = vadd.f32 %v1975, %v2079
        %v2112 = vadd.f32 %v1976, %v2080
        %v2113 = vadd.f32 %v1977, %v2081
        %v2114 = vadd.f32 %v1978, %v2082
        %v2115 = vadd.f32 %v1979, %v2083
        %v2116 = vadd.f32 %v1980, %v2084
        %v2117 = vadd.f32 %v1981, %v2085
        %v2118 = vadd.f32 %v1982, %v2086
        %v2119 = vadd.f32 %v1983, %v2087
        %v2120 = vadd.f32 %v1984, %v2088
        %v2121 = vadd.f32 %v1985, %v2089
        %v2122 = vadd.f32 %v1986, %v2090
        %v2123 = vadd.f32 %v1987, %v2091
        %v2124 = vadd.f32 %v1988, %v2092
        %v2125 = vadd.f32 %v1989, %v2093
        %v2126 = vadd.f32 %v1990, %v2094
        %v2127 = vadd.f32 %v1991, %v2095
        %v2128 = vadd.f32 %v1992, %v2096
        %v2129 = vadd.f32 %v1993, %v2097
        %v2130 = vadd.f32 %v1994, %v2098
        %v2131 = vadd.f32 %v1995, %v2099
        %v2132 = vadd.f32 %v1996, %v2100
        %v2133 = vadd.f32 %v1997, %v2101
        %v2134 = vadd.f32 %v1998, %v2102
        %v2135 = vadd.f32 %v1999, %v2103
        %v2136 = vadd.f32 %v2000, %v2104
        %v2137 = vadd.f32 %v2001, %v2105
        %v2138 = vadd.f32 %v2002, %v2106
        %v2139 = vlaneseq
        %v2140 = vshrl.u32 %v2139, 7
        %v2141 = vsub.s32 1, %v2140
        %v2142 = vrot.slane %v333, %v2141
        %v2143 = vsub.f32 %v1239, %v2142
        %v2144 = vsub.f32 %v1240, %v2142
        %v2145 = vsub.f32 %v1241, %v2142
        %v2146 = vsub.f32 %v1242, %v2142
        %v2147 = vsub.f32 %v1243, %v2142
        %v2148 = vsub.f32 %v1244, %v2142
        %v2149 = vsub.f32 %v1245, %v2142
        %v2150 = vsub.f32 %v1246, %v2142
        %v2151 = vsub.f32 %v1247, %v2142
        %v2152 = vsub.f32 %v1248, %v2142
        %v2153 = vsub.f32 %v1249, %v2142
        %v2154 = vsub.f32 %v1250, %v2142
        %v2155 = vsub.f32 %v1251, %v2142
        %v2156 = vsub.f32 %v1252, %v2142
        %v2157 = vsub.f32 %v1253, %v2142
        %v2158 = vsub.f32 %v1254, %v2142
        %v2159 = vsub.f32 %v1255, %v2142
        %v2160 = vsub.f32 %v1256, %v2142
        %v2161 = vsub.f32 %v1257, %v2142
        %v2162 = vsub.f32 %v1258, %v2142
        %v2163 = vsub.f32 %v1259, %v2142
        %v2164 = vsub.f32 %v1260, %v2142
        %v2165 = vsub.f32 %v1261, %v2142
        %v2166 = vsub.f32 %v1262, %v2142
        %v2167 = vsub.f32 %v1263, %v2142
        %v2168 = vsub.f32 %v1264, %v2142
        %v2169 = vsub.f32 %v1265, %v2142
        %v2170 = vsub.f32 %v1266, %v2142
        %v2171 = vsub.f32 %v1267, %v2142
        %v2172 = vsub.f32 %v1268, %v2142
        %v2173 = vsub.f32 %v1269, %v2142
        %v2174 = vsub.f32 %v1270, %v2142
        %v2175 = vlaneseq
        %v2176 = vshrl.u32 %v2175, 7
        %v2177 = vsub.s32 2, %v2176
        %v2178 = vrot.slane %v333, %v2177
        %v2179 = vmul.f32 %v2143, %v2178
        %v2180 = vmul.f32 %v2144, %v2178
        %v2181 = vmul.f32 %v2145, %v2178
        %v2182 = vmul.f32 %v2146, %v2178
        %v2183 = vmul.f32 %v2147, %v2178
        %v2184 = vmul.f32 %v2148, %v2178
        %v2185 = vmul.f32 %v2149, %v2178
        %v2186 = vmul.f32 %v2150, %v2178
        %v2187 = vmul.f32 %v2151, %v2178
        %v2188 = vmul.f32 %v2152, %v2178
        %v2189 = vmul.f32 %v2153, %v2178
        %v2190 = vmul.f32 %v2154, %v2178
        %v2191 = vmul.f32 %v2155, %v2178
        %v2192 = vmul.f32 %v2156, %v2178
        %v2193 = vmul.f32 %v2157, %v2178
        %v2194 = vmul.f32 %v2158, %v2178
        %v2195 = vmul.f32 %v2159, %v2178
        %v2196 = vmul.f32 %v2160, %v2178
        %v2197 = vmul.f32 %v2161, %v2178
        %v2198 = vmul.f32 %v2162, %v2178
        %v2199 = vmul.f32 %v2163, %v2178
        %v2200 = vmul.f32 %v2164, %v2178
        %v2201 = vmul.f32 %v2165, %v2178
        %v2202 = vmul.f32 %v2166, %v2178
        %v2203 = vmul.f32 %v2167, %v2178
        %v2204 = vmul.f32 %v2168, %v2178
        %v2205 = vmul.f32 %v2169, %v2178
        %v2206 = vmul.f32 %v2170, %v2178
        %v2207 = vmul.f32 %v2171, %v2178
        %v2208 = vmul.f32 %v2172, %v2178
        %v2209 = vmul.f32 %v2173, %v2178
        %v2210 = vmul.f32 %v2174, %v2178
        %v2211 = vmul.f32 %v2179, %v1803
        %v2212 = vmul.f32 %v2180, %v1804
        %v2213 = vmul.f32 %v2181, %v1805
        %v2214 = vmul.f32 %v2182, %v1806
        %v2215 = vmul.f32 %v2183, %v1807
        %v2216 = vmul.f32 %v2184, %v1808
        %v2217 = vmul.f32 %v2185, %v1809
        %v2218 = vmul.f32 %v2186, %v1810
        %v2219 = vmul.f32 %v2187, %v1811
        %v2220 = vmul.f32 %v2188, %v1812
        %v2221 = vmul.f32 %v2189, %v1813
        %v2222 = vmul.f32 %v2190, %v1814
        %v2223 = vmul.f32 %v2191, %v1815
        %v2224 = vmul.f32 %v2192, %v1816
        %v2225 = vmul.f32 %v2193, %v1817
        %v2226 = vmul.f32 %v2194, %v1818
        %v2227 = vmul.f32 %v2195, %v1819
        %v2228 = vmul.f32 %v2196, %v1820
        %v2229 = vmul.f32 %v2197, %v1821
        %v2230 = vmul.f32 %v2198, %v1822
        %v2231 = vmul.f32 %v2199, %v1823
        %v2232 = vmul.f32 %v2200, %v1824
        %v2233 = vmul.f32 %v2201, %v1825
        %v2234 = vmul.f32 %v2202, %v1826
        %v2235 = vmul.f32 %v2203, %v1827
        %v2236 = vmul.f32 %v2204, %v1828
        %v2237 = vmul.f32 %v2205, %v1829
        %v2238 = vmul.f32 %v2206, %v1830
        %v2239 = vmul.f32 %v2207, %v1831
        %v2240 = vmul.f32 %v2208, %v1832
        %v2241 = vmul.f32 %v2209, %v1833
        %v2242 = vmul.f32 %v2210, %v1834
        %v2243 = vlaneseq
        %v2244 = vshrl.u32 %v2243, 7
        %v2245 = vsub.s32 3, %v2244
        %v2246 = vrot.slane %v333, %v2245
        %v2247 = vsub.f32 %v2246, %v1239
        %v2248 = vsub.f32 %v2246, %v1240
        %v2249 = vsub.f32 %v2246, %v1241
        %v2250 = vsub.f32 %v2246, %v1242
        %v2251 = vsub.f32 %v2246, %v1243
        %v2252 = vsub.f32 %v2246, %v1244
        %v2253 = vsub.f32 %v2246, %v1245
        %v2254 = vsub.f32 %v2246, %v1246
        %v2255 = vsub.f32 %v2246, %v1247
        %v2256 = vsub.f32 %v2246, %v1248
        %v2257 = vsub.f32 %v2246, %v1249
        %v2258 = vsub.f32 %v2246, %v1250
        %v2259 = vsub.f32 %v2246, %v1251
        %v2260 = vsub.f32 %v2246, %v1252
        %v2261 = vsub.f32 %v2246, %v1253
        %v2262 = vsub.f32 %v2246, %v1254
        %v2263 = vsub.f32 %v2246, %v1255
        %v2264 = vsub.f32 %v2246, %v1256
        %v2265 = vsub.f32 %v2246, %v1257
        %v2266 = vsub.f32 %v2246, %v1258
        %v2267 = vsub.f32 %v2246, %v1259
        %v2268 = vsub.f32 %v2246, %v1260
        %v2269 = vsub.f32 %v2246, %v1261
        %v2270 = vsub.f32 %v2246, %v1262
        %v2271 = vsub.f32 %v2246, %v1263
        %v2272 = vsub.f32 %v2246, %v1264
        %v2273 = vsub.f32 %v2246, %v1265
        %v2274 = vsub.f32 %v2246, %v1266
        %v2275 = vsub.f32 %v2246, %v1267
        %v2276 = vsub.f32 %v2246, %v1268
        %v2277 = vsub.f32 %v2246, %v1269
        %v2278 = vsub.f32 %v2246, %v1270
        %v2279 = vlaneseq
        %v2280 = vshrl.u32 %v2279, 7
        %v2281 = vsub.s32 4, %v2280
        %v2282 = vrot.slane %v333, %v2281
        %v2283 = vmul.f32 %v2247, %v2282
        %v2284 = vmul.f32 %v2248, %v2282
        %v2285 = vmul.f32 %v2249, %v2282
        %v2286 = vmul.f32 %v2250, %v2282
        %v2287 = vmul.f32 %v2251, %v2282
        %v2288 = vmul.f32 %v2252, %v2282
        %v2289 = vmul.f32 %v2253, %v2282
        %v2290 = vmul.f32 %v2254, %v2282
        %v2291 = vmul.f32 %v2255, %v2282
        %v2292 = vmul.f32 %v2256, %v2282
        %v2293 = vmul.f32 %v2257, %v2282
        %v2294 = vmul.f32 %v2258, %v2282
        %v2295 = vmul.f32 %v2259, %v2282
        %v2296 = vmul.f32 %v2260, %v2282
        %v2297 = vmul.f32 %v2261, %v2282
        %v2298 = vmul.f32 %v2262, %v2282
        %v2299 = vmul.f32 %v2263, %v2282
        %v2300 = vmul.f32 %v2264, %v2282
        %v2301 = vmul.f32 %v2265, %v2282
        %v2302 = vmul.f32 %v2266, %v2282
        %v2303 = vmul.f32 %v2267, %v2282
        %v2304 = vmul.f32 %v2268, %v2282
        %v2305 = vmul.f32 %v2269, %v2282
        %v2306 = vmul.f32 %v2270, %v2282
        %v2307 = vmul.f32 %v2271, %v2282
        %v2308 = vmul.f32 %v2272, %v2282
        %v2309 = vmul.f32 %v2273, %v2282
        %v2310 = vmul.f32 %v2274, %v2282
        %v2311 = vmul.f32 %v2275, %v2282
        %v2312 = vmul.f32 %v2276, %v2282
        %v2313 = vmul.f32 %v2277, %v2282
        %v2314 = vmul.f32 %v2278, %v2282
        %v2315 = vmul.f32 %v2283, %v1835
        %v2316 = vmul.f32 %v2284, %v1836
        %v2317 = vmul.f32 %v2285, %v1837
        %v2318 = vmul.f32 %v2286, %v1838
        %v2319 = vmul.f32 %v2287, %v1839
        %v2320 = vmul.f32 %v2288, %v1840
        %v2321 = vmul.f32 %v2289, %v1841
        %v2322 = vmul.f32 %v2290, %v1842
        %v2323 = vmul.f32 %v2291, %v1843
        %v2324 = vmul.f32 %v2292, %v1844
        %v2325 = vmul.f32 %v2293, %v1845
        %v2326 = vmul.f32 %v2294, %v1846
        %v2327 = vmul.f32 %v2295, %v1847
        %v2328 = vmul.f32 %v2296, %v1848
        %v2329 = vmul.f32 %v2297, %v1849
        %v2330 = vmul.f32 %v2298, %v1850
        %v2331 = vmul.f32 %v2299, %v1851
        %v2332 = vmul.f32 %v2300, %v1852
        %v2333 = vmul.f32 %v2301, %v1853
        %v2334 = vmul.f32 %v2302, %v1854
        %v2335 = vmul.f32 %v2303, %v1855
        %v2336 = vmul.f32 %v2304, %v1856
        %v2337 = vmul.f32 %v2305, %v1857
        %v2338 = vmul.f32 %v2306, %v1858
        %v2339 = vmul.f32 %v2307, %v1859
        %v2340 = vmul.f32 %v2308, %v1860
        %v2341 = vmul.f32 %v2309, %v1861
        %v2342 = vmul.f32 %v2310, %v1862
        %v2343 = vmul.f32 %v2311, %v1863
        %v2344 = vmul.f32 %v2312, %v1864
        %v2345 = vmul.f32 %v2313, %v1865
        %v2346 = vmul.f32 %v2314, %v1866
        %v2347 = vadd.f32 %v2211, %v2315
        %v2348 = vadd.f32 %v2212, %v2316
        %v2349 = vadd.f32 %v2213, %v2317
        %v2350 = vadd.f32 %v2214, %v2318
        %v2351 = vadd.f32 %v2215, %v2319
        %v2352 = vadd.f32 %v2216, %v2320
        %v2353 = vadd.f32 %v2217, %v2321
        %v2354 = vadd.f32 %v2218, %v2322
        %v2355 = vadd.f32 %v2219, %v2323
        %v2356 = vadd.f32 %v2220, %v2324
        %v2357 = vadd.f32 %v2221, %v2325
        %v2358 = vadd.f32 %v2222, %v2326
        %v2359 = vadd.f32 %v2223, %v2327
        %v2360 = vadd.f32 %v2224, %v2328
        %v2361 = vadd.f32 %v2225, %v2329
        %v2362 = vadd.f32 %v2226, %v2330
        %v2363 = vadd.f32 %v2227, %v2331
        %v2364 = vadd.f32 %v2228, %v2332
        %v2365 = vadd.f32 %v2229, %v2333
        %v2366 = vadd.f32 %v2230, %v2334
        %v2367 = vadd.f32 %v2231, %v2335
        %v2368 = vadd.f32 %v2232, %v2336
        %v2369 = vadd.f32 %v2233, %v2337
        %v2370 = vadd.f32 %v2234, %v2338
        %v2371 = vadd.f32 %v2235, %v2339
        %v2372 = vadd.f32 %v2236, %v2340
        %v2373 = vadd.f32 %v2237, %v2341
        %v2374 = vadd.f32 %v2238, %v2342
        %v2375 = vadd.f32 %v2239, %v2343
        %v2376 = vadd.f32 %v2240, %v2344
        %v2377 = vadd.f32 %v2241, %v2345
        %v2378 = vadd.f32 %v2242, %v2346
        %v2379 = vlaneseq
        %v2380 = vshrl.u32 %v2379, 7
        %v2381 = vsub.s32 5, %v2380
        %v2382 = vrot.slane %v333, %v2381
        %v2383 = vsub.f32 %v1239, %v2382
        %v2384 = vsub.f32 %v1240, %v2382
        %v2385 = vsub.f32 %v1241, %v2382
        %v2386 = vsub.f32 %v1242, %v2382
        %v2387 = vsub.f32 %v1243, %v2382
        %v2388 = vsub.f32 %v1244, %v2382
        %v2389 = vsub.f32 %v1245, %v2382
        %v2390 = vsub.f32 %v1246, %v2382
        %v2391 = vsub.f32 %v1247, %v2382
        %v2392 = vsub.f32 %v1248, %v2382
        %v2393 = vsub.f32 %v1249, %v2382
        %v2394 = vsub.f32 %v1250, %v2382
        %v2395 = vsub.f32 %v1251, %v2382
        %v2396 = vsub.f32 %v1252, %v2382
        %v2397 = vsub.f32 %v1253, %v2382
        %v2398 = vsub.f32 %v1254, %v2382
        %v2399 = vsub.f32 %v1255, %v2382
        %v2400 = vsub.f32 %v1256, %v2382
        %v2401 = vsub.f32 %v1257, %v2382
        %v2402 = vsub.f32 %v1258, %v2382
        %v2403 = vsub.f32 %v1259, %v2382
        %v2404 = vsub.f32 %v1260, %v2382
        %v2405 = vsub.f32 %v1261, %v2382
        %v2406 = vsub.f32 %v1262, %v2382
        %v2407 = vsub.f32 %v1263, %v2382
        %v2408 = vsub.f32 %v1264, %v2382
        %v2409 = vsub.f32 %v1265, %v2382
        %v2410 = vsub.f32 %v1266, %v2382
        %v2411 = vsub.f32 %v1267, %v2382
        %v2412 = vsub.f32 %v1268, %v2382
        %v2413 = vsub.f32 %v1269, %v2382
        %v2414 = vsub.f32 %v1270, %v2382
        %v2415 = vlaneseq
        %v2416 = vshrl.u32 %v2415, 7
        %v2417 = vsub.s32 6, %v2416
        %v2418 = vrot.slane %v333, %v2417
        %v2419 = vmul.f32 %v2383, %v2418
        %v2420 = vmul.f32 %v2384, %v2418
        %v2421 = vmul.f32 %v2385, %v2418
        %v2422 = vmul.f32 %v2386, %v2418
        %v2423 = vmul.f32 %v2387, %v2418
        %v2424 = vmul.f32 %v2388, %v2418
        %v2425 = vmul.f32 %v2389, %v2418
        %v2426 = vmul.f32 %v2390, %v2418
        %v2427 = vmul.f32 %v2391, %v2418
        %v2428 = vmul.f32 %v2392, %v2418
        %v2429 = vmul.f32 %v2393, %v2418
        %v2430 = vmul.f32 %v2394, %v2418
        %v2431 = vmul.f32 %v2395, %v2418
        %v2432 = vmul.f32 %v2396, %v2418
        %v2433 = vmul.f32 %v2397, %v2418
        %v2434 = vmul.f32 %v2398, %v2418
        %v2435 = vmul.f32 %v2399, %v2418
        %v2436 = vmul.f32 %v2400, %v2418
        %v2437 = vmul.f32 %v2401, %v2418
        %v2438 = vmul.f32 %v2402, %v2418
        %v2439 = vmul.f32 %v2403, %v2418
        %v2440 = vmul.f32 %v2404, %v2418
        %v2441 = vmul.f32 %v2405, %v2418
        %v2442 = vmul.f32 %v2406, %v2418
        %v2443 = vmul.f32 %v2407, %v2418
        %v2444 = vmul.f32 %v2408, %v2418
        %v2445 = vmul.f32 %v2409, %v2418
        %v2446 = vmul.f32 %v2410, %v2418
        %v2447 = vmul.f32 %v2411, %v2418
        %v2448 = vmul.f32 %v2412, %v2418
        %v2449 = vmul.f32 %v2413, %v2418
        %v2450 = vmul.f32 %v2414, %v2418
        %v2451 = vmul.f32 %v2419, %v1835
        %v2452 = vmul.f32 %v2420, %v1836
        %v2453 = vmul.f32 %v2421, %v1837
        %v2454 = vmul.f32 %v2422, %v1838
        %v2455 = vmul.f32 %v2423, %v1839
        %v2456 = vmul.f32 %v2424, %v1840
        %v2457 = vmul.f32 %v2425, %v1841
        %v2458 = vmul.f32 %v2426, %v1842
        %v2459 = vmul.f32 %v2427, %v1843
        %v2460 = vmul.f32 %v2428, %v1844
        %v2461 = vmul.f32 %v2429, %v1845
        %v2462 = vmul.f32 %v2430, %v1846
        %v2463 = vmul.f32 %v2431, %v1847
        %v2464 = vmul.f32 %v2432, %v1848
        %v2465 = vmul.f32 %v2433, %v1849
        %v2466 = vmul.f32 %v2434, %v1850
        %v2467 = vmul.f32 %v2435, %v1851
        %v2468 = vmul.f32 %v2436, %v1852
        %v2469 = vmul.f32 %v2437, %v1853
        %v2470 = vmul.f32 %v2438, %v1854
        %v2471 = vmul.f32 %v2439, %v1855
        %v2472 = vmul.f32 %v2440, %v1856
        %v2473 = vmul.f32 %v2441, %v1857
        %v2474 = vmul.f32 %v2442, %v1858
        %v2475 = vmul.f32 %v2443, %v1859
        %v2476 = vmul.f32 %v2444, %v1860
        %v2477 = vmul.f32 %v2445, %v1861
        %v2478 = vmul.f32 %v2446, %v1862
        %v2479 = vmul.f32 %v2447, %v1863
        %v2480 = vmul.f32 %v2448, %v1864
        %v2481 = vmul.f32 %v2449, %v1865
        %v2482 = vmul.f32 %v2450, %v1866
        %v2483 = vlaneseq
        %v2484 = vshrl.u32 %v2483, 7
        %v2485 = vsub.s32 7, %v2484
        %v2486 = vrot.slane %v333, %v2485
        %v2487 = vsub.f32 %v2486, %v1239
        %v2488 = vsub.f32 %v2486, %v1240
        %v2489 = vsub.f32 %v2486, %v1241
        %v2490 = vsub.f32 %v2486, %v1242
        %v2491 = vsub.f32 %v2486, %v1243
        %v2492 = vsub.f32 %v2486, %v1244
        %v2493 = vsub.f32 %v2486, %v1245
        %v2494 = vsub.f32 %v2486, %v1246
        %v2495 = vsub.f32 %v2486, %v1247
        %v2496 = vsub.f32 %v2486, %v1248
        %v2497 = vsub.f32 %v2486, %v1249
        %v2498 = vsub.f32 %v2486, %v1250
        %v2499 = vsub.f32 %v2486, %v1251
        %v2500 = vsub.f32 %v2486, %v1252
        %v2501 = vsub.f32 %v2486, %v1253
        %v2502 = vsub.f32 %v2486, %v1254
        %v2503 = vsub.f32 %v2486, %v1255
        %v2504 = vsub.f32 %v2486, %v1256
        %v2505 = vsub.f32 %v2486, %v1257
        %v2506 = vsub.f32 %v2486, %v1258
        %v2507 = vsub.f32 %v2486, %v1259
        %v2508 = vsub.f32 %v2486, %v1260
        %v2509 = vsub.f32 %v2486, %v1261
        %v2510 = vsub.f32 %v2486, %v1262
        %v2511 = vsub.f32 %v2486, %v1263
        %v2512 = vsub.f32 %v2486, %v1264
        %v2513 = vsub.f32 %v2486, %v1265
        %v2514 = vsub.f32 %v2486, %v1266
        %v2515 = vsub.f32 %v2486, %v1267
        %v2516 = vsub.f32 %v2486, %v1268
        %v2517 = vsub.f32 %v2486, %v1269
        %v2518 = vsub.f32 %v2486, %v1270
        %v2519 = vlaneseq
        %v2520 = vshrl.u32 %v2519, 7
        %v2521 = vsub.s32 0, %v2520
        %v2522 = vrot.slane %v334, %v2521
        %v2523 = vmul.f32 %v2487, %v2522
        %v2524 = vmul.f32 %v2488, %v2522
        %v2525 = vmul.f32 %v2489, %v2522
        %v2526 = vmul.f32 %v2490, %v2522
        %v2527 = vmul.f32 %v2491, %v2522
        %v2528 = vmul.f32 %v2492, %v2522
        %v2529 = vmul.f32 %v2493, %v2522
        %v2530 = vmul.f32 %v2494, %v2522
        %v2531 = vmul.f32 %v2495, %v2522
        %v2532 = vmul.f32 %v2496, %v2522
        %v2533 = vmul.f32 %v2497, %v2522
        %v2534 = vmul.f32 %v2498, %v2522
        %v2535 = vmul.f32 %v2499, %v2522
        %v2536 = vmul.f32 %v2500, %v2522
        %v2537 = vmul.f32 %v2501, %v2522
        %v2538 = vmul.f32 %v2502, %v2522
        %v2539 = vmul.f32 %v2503, %v2522
        %v2540 = vmul.f32 %v2504, %v2522
        %v2541 = vmul.f32 %v2505, %v2522
        %v2542 = vmul.f32 %v2506, %v2522
        %v2543 = vmul.f32 %v2507, %v2522
        %v2544 = vmul.f32 %v2508, %v2522
        %v2545 = vmul.f32 %v2509, %v2522
        %v2546 = vmul.f32 %v2510, %v2522
        %v2547 = vmul.f32 %v2511, %v2522
        %v2548 = vmul.f32 %v2512, %v2522
        %v2549 = vmul.f32 %v2513, %v2522
        %v2550 = vmul.f32 %v2514, %v2522
        %v2551 = vmul.f32 %v2515, %v2522
        %v2552 = vmul.f32 %v2516, %v2522
        %v2553 = vmul.f32 %v2517, %v2522
        %v2554 = vmul.f32 %v2518, %v2522
        %v2555 = vmul.f32 %v2523, %v1867
        %v2556 = vmul.f32 %v2524, %v1868
        %v2557 = vmul.f32 %v2525, %v1869
        %v2558 = vmul.f32 %v2526, %v1870
        %v2559 = vmul.f32 %v2527, %v1871
        %v2560 = vmul.f32 %v2528, %v1872
        %v2561 = vmul.f32 %v2529, %v1873
        %v2562 = vmul.f32 %v2530, %v1874
        %v2563 = vmul.f32 %v2531, %v1875
        %v2564 = vmul.f32 %v2532, %v1876
        %v2565 = vmul.f32 %v2533, %v1877
        %v2566 = vmul.f32 %v2534, %v1878
        %v2567 = vmul.f32 %v2535, %v1879
        %v2568 = vmul.f32 %v2536, %v1880
        %v2569 = vmul.f32 %v2537, %v1881
        %v2570 = vmul.f32 %v2538, %v1882
        %v2571 = vmul.f32 %v2539, %v1883
        %v2572 = vmul.f32 %v2540, %v1884
        %v2573 = vmul.f32 %v2541, %v1885
        %v2574 = vmul.f32 %v2542, %v1886
        %v2575 = vmul.f32 %v2543, %v1887
        %v2576 = vmul.f32 %v2544, %v1888
        %v2577 = vmul.f32 %v2545, %v1889
        %v2578 = vmul.f32 %v2546, %v1890
        %v2579 = vmul.f32 %v2547, %v1891
        %v2580 = vmul.f32 %v2548, %v1892
        %v2581 = vmul.f32 %v2549, %v1893
        %v2582 = vmul.f32 %v2550, %v1894
        %v2583 = vmul.f32 %v2551, %v1895
        %v2584 = vmul.f32 %v2552, %v1896
        %v2585 = vmul.f32 %v2553, %v1897
        %v2586 = vmul.f32 %v2554, %v1898
        %v2587 = vadd.f32 %v2451, %v2555
        %v2588 = vadd.f32 %v2452, %v2556
        %v2589 = vadd.f32 %v2453, %v2557
        %v2590 = vadd.f32 %v2454, %v2558
        %v2591 = vadd.f32 %v2455, %v2559
        %v2592 = vadd.f32 %v2456, %v2560
        %v2593 = vadd.f32 %v2457, %v2561
        %v2594 = vadd.f32 %v2458, %v2562
        %v2595 = vadd.f32 %v2459, %v2563
        %v2596 = vadd.f32 %v2460, %v2564
        %v2597 = vadd.f32 %v2461, %v2565
        %v2598 = vadd.f32 %v2462, %v2566
        %v2599 = vadd.f32 %v2463, %v2567
        %v2600 = vadd.f32 %v2464, %v2568
        %v2601 = vadd.f32 %v2465, %v2569
        %v2602 = vadd.f32 %v2466, %v2570
        %v2603 = vadd.f32 %v2467, %v2571
        %v2604 = vadd.f32 %v2468, %v2572
        %v2605 = vadd.f32 %v2469, %v2573
        %v2606 = vadd.f32 %v2470, %v2574
        %v2607 = vadd.f32 %v2471, %v2575
        %v2608 = vadd.f32 %v2472, %v2576
        %v2609 = vadd.f32 %v2473, %v2577
        %v2610 = vadd.f32 %v2474, %v2578
        %v2611 = vadd.f32 %v2475, %v2579
        %v2612 = vadd.f32 %v2476, %v2580
        %v2613 = vadd.f32 %v2477, %v2581
        %v2614 = vadd.f32 %v2478, %v2582
        %v2615 = vadd.f32 %v2479, %v2583
        %v2616 = vadd.f32 %v2480, %v2584
        %v2617 = vadd.f32 %v2481, %v2585
        %v2618 = vadd.f32 %v2482, %v2586
        %v2619 = vlaneseq
        %v2620 = vshrl.u32 %v2619, 7
        %v2621 = vsub.s32 1, %v2620
        %v2622 = vrot.slane %v334, %v2621
        %v2623 = vsub.f32 %v1239, %v2622
        %v2624 = vsub.f32 %v1240, %v2622
        %v2625 = vsub.f32 %v1241, %v2622
        %v2626 = vsub.f32 %v1242, %v2622
        %v2627 = vsub.f32 %v1243, %v2622
        %v2628 = vsub.f32 %v1244, %v2622
        %v2629 = vsub.f32 %v1245, %v2622
        %v2630 = vsub.f32 %v1246, %v2622
        %v2631 = vsub.f32 %v1247, %v2622
        %v2632 = vsub.f32 %v1248, %v2622
        %v2633 = vsub.f32 %v1249, %v2622
        %v2634 = vsub.f32 %v1250, %v2622
        %v2635 = vsub.f32 %v1251, %v2622
        %v2636 = vsub.f32 %v1252, %v2622
        %v2637 = vsub.f32 %v1253, %v2622
        %v2638 = vsub.f32 %v1254, %v2622
        %v2639 = vsub.f32 %v1255, %v2622
        %v2640 = vsub.f32 %v1256, %v2622
        %v2641 = vsub.f32 %v1257, %v2622
        %v2642 = vsub.f32 %v1258, %v2622
        %v2643 = vsub.f32 %v1259, %v2622
        %v2644 = vsub.f32 %v1260, %v2622
        %v2645 = vsub.f32 %v1261, %v2622
        %v2646 = vsub.f32 %v1262, %v2622
        %v2647 = vsub.f32 %v1263, %v2622
        %v2648 = vsub.f32 %v1264, %v2622
        %v2649 = vsub.f32 %v1265, %v2622
        %v2650 = vsub.f32 %v1266, %v2622
        %v2651 = vsub.f32 %v1267, %v2622
        %v2652 = vsub.f32 %v1268, %v2622
        %v2653 = vsub.f32 %v1269, %v2622
        %v2654 = vsub.f32 %v1270, %v2622
        %v2655 = vlaneseq
        %v2656 = vshrl.u32 %v2655, 7
        %v2657 = vsub.s32 2, %v2656
        %v2658 = vrot.slane %v334, %v2657
        %v2659 = vmul.f32 %v2623, %v2658
        %v2660 = vmul.f32 %v2624, %v2658
        %v2661 = vmul.f32 %v2625, %v2658
        %v2662 = vmul.f32 %v2626, %v2658
        %v2663 = vmul.f32 %v2627, %v2658
        %v2664 = vmul.f32 %v2628, %v2658
        %v2665 = vmul.f32 %v2629, %v2658
        %v2666 = vmul.f32 %v2630, %v2658
        %v2667 = vmul.f32 %v2631, %v2658
        %v2668 = vmul.f32 %v2632, %v2658
        %v2669 = vmul.f32 %v2633, %v2658
        %v2670 = vmul.f32 %v2634, %v2658
        %v2671 = vmul.f32 %v2635, %v2658
        %v2672 = vmul.f32 %v2636, %v2658
        %v2673 = vmul.f32 %v2637, %v2658
        %v2674 = vmul.f32 %v2638, %v2658
        %v2675 = vmul.f32 %v2639, %v2658
        %v2676 = vmul.f32 %v2640, %v2658
        %v2677 = vmul.f32 %v2641, %v2658
        %v2678 = vmul.f32 %v2642, %v2658
        %v2679 = vmul.f32 %v2643, %v2658
        %v2680 = vmul.f32 %v2644, %v2658
        %v2681 = vmul.f32 %v2645, %v2658
        %v2682 = vmul.f32 %v2646, %v2658
        %v2683 = vmul.f32 %v2647, %v2658
        %v2684 = vmul.f32 %v2648, %v2658
        %v2685 = vmul.f32 %v2649, %v2658
        %v2686 = vmul.f32 %v2650, %v2658
        %v2687 = vmul.f32 %v2651, %v2658
        %v2688 = vmul.f32 %v2652, %v2658
        %v2689 = vmul.f32 %v2653, %v2658
        %v2690 = vmul.f32 %v2654, %v2658
        %v2691 = vmul.f32 %v2659, %v2107
        %v2692 = vmul.f32 %v2660, %v2108
        %v2693 = vmul.f32 %v2661, %v2109
        %v2694 = vmul.f32 %v2662, %v2110
        %v2695 = vmul.f32 %v2663, %v2111
        %v2696 = vmul.f32 %v2664, %v2112
        %v2697 = vmul.f32 %v2665, %v2113
        %v2698 = vmul.f32 %v2666, %v2114
        %v2699 = vmul.f32 %v2667, %v2115
        %v2700 = vmul.f32 %v2668, %v2116
        %v2701 = vmul.f32 %v2669, %v2117
        %v2702 = vmul.f32 %v2670, %v2118
        %v2703 = vmul.f32 %v2671, %v2119
        %v2704 = vmul.f32 %v2672, %v2120
        %v2705 = vmul.f32 %v2673, %v2121
        %v2706 = vmul.f32 %v2674, %v2122
        %v2707 = vmul.f32 %v2675, %v2123
        %v2708 = vmul.f32 %v2676, %v2124
        %v2709 = vmul.f32 %v2677, %v2125
        %v2710 = vmul.f32 %v2678, %v2126
        %v2711 = vmul.f32 %v2679, %v2127
        %v2712 = vmul.f32 %v2680, %v2128
        %v2713 = vmul.f32 %v2681, %v2129
        %v2714 = vmul.f32 %v2682, %v2130
        %v2715 = vmul.f32 %v2683, %v2131
        %v2716 = vmul.f32 %v2684, %v2132
        %v2717 = vmul.f32 %v2685, %v2133
        %v2718 = vmul.f32 %v2686, %v2134
        %v2719 = vmul.f32 %v2687, %v2135
        %v2720 = vmul.f32 %v2688, %v2136
        %v2721 = vmul.f32 %v2689, %v2137
        %v2722 = vmul.f32 %v2690, %v2138
        %v2723 = vlaneseq
        %v2724 = vshrl.u32 %v2723, 7
        %v2725 = vsub.s32 3, %v2724
        %v2726 = vrot.slane %v334, %v2725
        %v2727 = vsub.f32 %v2726, %v1239
        %v2728 = vsub.f32 %v2726, %v1240
        %v2729 = vsub.f32 %v2726, %v1241
        %v2730 = vsub.f32 %v2726, %v1242
        %v2731 = vsub.f32 %v2726, %v1243
        %v2732 = vsub.f32 %v2726, %v1244
        %v2733 = vsub.f32 %v2726, %v1245
        %v2734 = vsub.f32 %v2726, %v1246
        %v2735 = vsub.f32 %v2726, %v1247
        %v2736 = vsub.f32 %v2726, %v1248
        %v2737 = vsub.f32 %v2726, %v1249
        %v2738 = vsub.f32 %v2726, %v1250
        %v2739 = vsub.f32 %v2726, %v1251
        %v2740 = vsub.f32 %v2726, %v1252
        %v2741 = vsub.f32 %v2726, %v1253
        %v2742 = vsub.f32 %v2726, %v1254
        %v2743 = vsub.f32 %v2726, %v1255
        %v2744 = vsub.f32 %v2726, %v1256
        %v2745 = vsub.f32 %v2726, %v1257
        %v2746 = vsub.f32 %v2726, %v1258
        %v2747 = vsub.f32 %v2726, %v1259
        %v2748 = vsub.f32 %v2726, %v1260
        %v2749 = vsub.f32 %v2726, %v1261
        %v2750 = vsub.f32 %v2726, %v1262
        %v2751 = vsub.f32 %v2726, %v1263
        %v2752 = vsub.f32 %v2726, %v1264
        %v2753 = vsub.f32 %v2726, %v1265
        %v2754 = vsub.f32 %v2726, %v1266
        %v2755 = vsub.f32 %v2726, %v1267
        %v2756 = vsub.f32 %v2726, %v1268
        %v2757 = vsub.f32 %v2726, %v1269
        %v2758 = vsub.f32 %v2726, %v1270
        %v2759 = vlaneseq
        %v2760 = vshrl.u32 %v2759, 7
        %v2761 = vsub.s32 4, %v2760
        %v2762 = vrot.slane %v334, %v2761
        %v2763 = vmul.f32 %v2727, %v2762
        %v2764 = vmul.f32 %v2728, %v2762
        %v2765 = vmul.f32 %v2729, %v2762
        %v2766 = vmul.f32 %v2730, %v2762
        %v2767 = vmul.f32 %v2731, %v2762
        %v2768 = vmul.f32 %v2732, %v2762
        %v2769 = vmul.f32 %v2733, %v2762
        %v2770 = vmul.f32 %v2734, %v2762
        %v2771 = vmul.f32 %v2735, %v2762
        %v2772 = vmul.f32 %v2736, %v2762
        %v2773 = vmul.f32 %v2737, %v2762
        %v2774 = vmul.f32 %v2738, %v2762
        %v2775 = vmul.f32 %v2739, %v2762
        %v2776 = vmul.f32 %v2740, %v2762
        %v2777 = vmul.f32 %v2741, %v2762
        %v2778 = vmul.f32 %v2742, %v2762
        %v2779 = vmul.f32 %v2743, %v2762
        %v2780 = vmul.f32 %v2744, %v2762
        %v2781 = vmul.f32 %v2745, %v2762
        %v2782 = vmul.f32 %v2746, %v2762
        %v2783 = vmul.f32 %v2747, %v2762
        %v2784 = vmul.f32 %v2748, %v2762
        %v2785 = vmul.f32 %v2749, %v2762
        %v2786 = vmul.f32 %v2750, %v2762
        %v2787 = vmul.f32 %v2751, %v2762
        %v2788 = vmul.f32 %v2752, %v2762
        %v2789 = vmul.f32 %v2753, %v2762
        %v2790 = vmul.f32 %v2754, %v2762
        %v2791 = vmul.f32 %v2755, %v2762
        %v2792 = vmul.f32 %v2756, %v2762
        %v2793 = vmul.f32 %v2757, %v2762
        %v2794 = vmul.f32 %v2758, %v2762
        %v2795 = vmul.f32 %v2763, %v2347
        %v2796 = vmul.f32 %v2764, %v2348
        %v2797 = vmul.f32 %v2765, %v2349
        %v2798 = vmul.f32 %v2766, %v2350
        %v2799 = vmul.f32 %v2767, %v2351
        %v2800 = vmul.f32 %v2768, %v2352
        %v2801 = vmul.f32 %v2769, %v2353
        %v2802 = vmul.f32 %v2770, %v2354
        %v2803 = vmul.f32 %v2771, %v2355
        %v2804 = vmul.f32 %v2772, %v2356
        %v2805 = vmul.f32 %v2773, %v2357
        %v2806 = vmul.f32 %v2774, %v2358
        %v2807 = vmul.f32 %v2775, %v2359
        %v2808 = vmul.f32 %v2776, %v2360
        %v2809 = vmul.f32 %v2777, %v2361
        %v2810 = vmul.f32 %v2778, %v2362
        %v2811 = vmul.f32 %v2779, %v2363
        %v2812 = vmul.f32 %v2780, %v2364
        %v2813 = vmul.f32 %v2781, %v2365
        %v2814 = vmul.f32 %v2782, %v2366
        %v2815 = vmul.f32 %v2783, %v2367
        %v2816 = vmul.f32 %v2784, %v2368
        %v2817 = vmul.f32 %v2785, %v2369
        %v2818 = vmul.f32 %v2786, %v2370
        %v2819 = vmul.f32 %v2787, %v2371
        %v2820 = vmul.f32 %v2788, %v2372
        %v2821 = vmul.f32 %v2789, %v2373
        %v2822 = vmul.f32 %v2790, %v2374
        %v2823 = vmul.f32 %v2791, %v2375
        %v2824 = vmul.f32 %v2792, %v2376
        %v2825 = vmul.f32 %v2793, %v2377
        %v2826 = vmul.f32 %v2794, %v2378
        %v2827 = vadd.f32 %v2691, %v2795
        %v2828 = vadd.f32 %v2692, %v2796
        %v2829 = vadd.f32 %v2693, %v2797
        %v2830 = vadd.f32 %v2694, %v2798
        %v2831 = vadd.f32 %v2695, %v2799
        %v2832 = vadd.f32 %v2696, %v2800
        %v2833 = vadd.f32 %v2697, %v2801
        %v2834 = vadd.f32 %v2698, %v2802
        %v2835 = vadd.f32 %v2699, %v2803
        %v2836 = vadd.f32 %v2700, %v2804
        %v2837 = vadd.f32 %v2701, %v2805
        %v2838 = vadd.f32 %v2702, %v2806
        %v2839 = vadd.f32 %v2703, %v2807
        %v2840 = vadd.f32 %v2704, %v2808
        %v2841 = vadd.f32 %v2705, %v2809
        %v2842 = vadd.f32 %v2706, %v2810
        %v2843 = vadd.f32 %v2707, %v2811
        %v2844 = vadd.f32 %v2708, %v2812
        %v2845 = vadd.f32 %v2709, %v2813
        %v2846 = vadd.f32 %v2710, %v2814
        %v2847 = vadd.f32 %v2711, %v2815
        %v2848 = vadd.f32 %v2712, %v2816
        %v2849 = vadd.f32 %v2713, %v2817
        %v2850 = vadd.f32 %v2714, %v2818
        %v2851 = vadd.f32 %v2715, %v2819
        %v2852 = vadd.f32 %v2716, %v2820
        %v2853 = vadd.f32 %v2717, %v2821
        %v2854 = vadd.f32 %v2718, %v2822
        %v2855 = vadd.f32 %v2719, %v2823
        %v2856 = vadd.f32 %v2720, %v2824
        %v2857 = vadd.f32 %v2721, %v2825
        %v2858 = vadd.f32 %v2722, %v2826
        %v2859 = vlaneseq
        %v2860 = vshrl.u32 %v2859, 7
        %v2861 = vsub.s32 5, %v2860
        %v2862 = vrot.slane %v334, %v2861
        %v2863 = vsub.f32 %v1239, %v2862
        %v2864 = vsub.f32 %v1240, %v2862
        %v2865 = vsub.f32 %v1241, %v2862
        %v2866 = vsub.f32 %v1242, %v2862
        %v2867 = vsub.f32 %v1243, %v2862
        %v2868 = vsub.f32 %v1244, %v2862
        %v2869 = vsub.f32 %v1245, %v2862
        %v2870 = vsub.f32 %v1246, %v2862
        %v2871 = vsub.f32 %v1247, %v2862
        %v2872 = vsub.f32 %v1248, %v2862
        %v2873 = vsub.f32 %v1249, %v2862
        %v2874 = vsub.f32 %v1250, %v2862
        %v2875 = vsub.f32 %v1251, %v2862
        %v2876 = vsub.f32 %v1252, %v2862
        %v2877 = vsub.f32 %v1253, %v2862
        %v2878 = vsub.f32 %v1254, %v2862
        %v2879 = vsub.f32 %v1255, %v2862
        %v2880 = vsub.f32 %v1256, %v2862
        %v2881 = vsub.f32 %v1257, %v2862
        %v2882 = vsub.f32 %v1258, %v2862
        %v2883 = vsub.f32 %v1259, %v2862
        %v2884 = vsub.f32 %v1260, %v2862
        %v2885 = vsub.f32 %v1261, %v2862
        %v2886 = vsub.f32 %v1262, %v2862
        %v2887 = vsub.f32 %v1263, %v2862
        %v2888 = vsub.f32 %v1264, %v2862
        %v2889 = vsub.f32 %v1265, %v2862
        %v2890 = vsub.f32 %v1266, %v2862
        %v2891 = vsub.f32 %v1267, %v2862
        %v2892 = vsub.f32 %v1268, %v2862
        %v2893 = vsub.f32 %v1269, %v2862
        %v2894 = vsub.f32 %v1270, %v2862
        %v2895 = vlaneseq
        %v2896 = vshrl.u32 %v2895, 7
        %v2897 = vsub.s32 6, %v2896
        %v2898 = vrot.slane %v334, %v2897
        %v2899 = vmul.f32 %v2863, %v2898
        %v2900 = vmul.f32 %v2864, %v2898
        %v2901 = vmul.f32 %v2865, %v2898
        %v2902 = vmul.f32 %v2866, %v2898
        %v2903 = vmul.f32 %v2867, %v2898
        %v2904 = vmul.f32 %v2868, %v2898
        %v2905 = vmul.f32 %v2869, %v2898
        %v2906 = vmul.f32 %v2870, %v2898
        %v2907 = vmul.f32 %v2871, %v2898
        %v2908 = vmul.f32 %v2872, %v2898
        %v2909 = vmul.f32 %v2873, %v2898
        %v2910 = vmul.f32 %v2874, %v2898
        %v2911 = vmul.f32 %v2875, %v2898
        %v2912 = vmul.f32 %v2876, %v2898
        %v2913 = vmul.f32 %v2877, %v2898
        %v2914 = vmul.f32 %v2878, %v2898
        %v2915 = vmul.f32 %v2879, %v2898
        %v2916 = vmul.f32 %v2880, %v2898
        %v2917 = vmul.f32 %v2881, %v2898
        %v2918 = vmul.f32 %v2882, %v2898
        %v2919 = vmul.f32 %v2883, %v2898
        %v2920 = vmul.f32 %v2884, %v2898
        %v2921 = vmul.f32 %v2885, %v2898
        %v2922 = vmul.f32 %v2886, %v2898
        %v2923 = vmul.f32 %v2887, %v2898
        %v2924 = vmul.f32 %v2888, %v2898
        %v2925 = vmul.f32 %v2889, %v2898
        %v2926 = vmul.f32 %v2890, %v2898
        %v2927 = vmul.f32 %v2891, %v2898
        %v2928 = vmul.f32 %v2892, %v2898
        %v2929 = vmul.f32 %v2893, %v2898
        %v2930 = vmul.f32 %v2894, %v2898
        %v2931 = vmul.f32 %v2899, %v2347
        %v2932 = vmul.f32 %v2900, %v2348
        %v2933 = vmul.f32 %v2901, %v2349
        %v2934 = vmul.f32 %v2902, %v2350
        %v2935 = vmul.f32 %v2903, %v2351
        %v2936 = vmul.f32 %v2904, %v2352
        %v2937 = vmul.f32 %v2905, %v2353
        %v2938 = vmul.f32 %v2906, %v2354
        %v2939 = vmul.f32 %v2907, %v2355
        %v2940 = vmul.f32 %v2908, %v2356
        %v2941 = vmul.f32 %v2909, %v2357
        %v2942 = vmul.f32 %v2910, %v2358
        %v2943 = vmul.f32 %v2911, %v2359
        %v2944 = vmul.f32 %v2912, %v2360
        %v2945 = vmul.f32 %v2913, %v2361
        %v2946 = vmul.f32 %v2914, %v2362
        %v2947 = vmul.f32 %v2915, %v2363
        %v2948 = vmul.f32 %v2916, %v2364
        %v2949 = vmul.f32 %v2917, %v2365
        %v2950 = vmul.f32 %v2918, %v2366
        %v2951 = vmul.f32 %v2919, %v2367
        %v2952 = vmul.f32 %v2920, %v2368
        %v2953 = vmul.f32 %v2921, %v2369
        %v2954 = vmul.f32 %v2922, %v2370
        %v2955 = vmul.f32 %v2923, %v2371
        %v2956 = vmul.f32 %v2924, %v2372
        %v2957 = vmul.f32 %v2925, %v2373
        %v2958 = vmul.f32 %v2926, %v2374
        %v2959 = vmul.f32 %v2927, %v2375
        %v2960 = vmul.f32 %v2928, %v2376
        %v2961 = vmul.f32 %v2929, %v2377
        %v2962 = vmul.f32 %v2930, %v2378
        %v2963 = vlaneseq
        %v2964 = vshrl.u32 %v2963, 7
        %v2965 = vsub.s32 7, %v2964
        %v2966 = vrot.slane %v334, %v2965
        %v2967 = vsub.f32 %v2966, %v1239
        %v2968 = vsub.f32 %v2966, %v1240
        %v2969 = vsub.f32 %v2966, %v1241
        %v2970 = vsub.f32 %v2966, %v1242
        %v2971 = vsub.f32 %v2966, %v1243
        %v2972 = vsub.f32 %v2966, %v1244
        %v2973 = vsub.f32 %v2966, %v1245
        %v2974 = vsub.f32 %v2966, %v1246
        %v2975 = vsub.f32 %v2966, %v1247
        %v2976 = vsub.f32 %v2966, %v1248
        %v2977 = vsub.f32 %v2966, %v1249
        %v2978 = vsub.f32 %v2966, %v1250
        %v2979 = vsub.f32 %v2966, %v1251
        %v2980 = vsub.f32 %v2966, %v1252
        %v2981 = vsub.f32 %v2966, %v1253
        %v2982 = vsub.f32 %v2966, %v1254
        %v2983 = vsub.f32 %v2966, %v1255
        %v2984 = vsub.f32 %v2966, %v1256
        %v2985 = vsub.f32 %v2966, %v1257
        %v2986 = vsub.f32 %v2966, %v1258
        %v2987 = vsub.f32 %v2966, %v1259
        %v2988 = vsub.f32 %v2966, %v1260
        %v2989 = vsub.f32 %v2966, %v1261
        %v2990 = vsub.f32 %v2966, %v1262
        %v2991 = vsub.f32 %v2966, %v1263
        %v2992 = vsub.f32 %v2966, %v1264
        %v2993 = vsub.f32 %v2966, %v1265
        %v2994 = vsub.f32 %v2966, %v1266
        %v2995 = vsub.f32 %v2966, %v1267
        %v2996 = vsub.f32 %v2966, %v1268
        %v2997 = vsub.f32 %v2966, %v1269
        %v2998 = vsub.f32 %v2966, %v1270
        %v2999 = vlaneseq
        %v3000 = vshrl.u32 %v2999, 7
        %v3001 = vsub.s32 0, %v3000
        %v3002 = vrot.slane %v335, %v3001
        %v3003 = vmul.f32 %v2967, %v3002
        %v3004 = vmul.f32 %v2968, %v3002
        %v3005 = vmul.f32 %v2969, %v3002
        %v3006 = vmul.f32 %v2970, %v3002
        %v3007 = vmul.f32 %v2971, %v3002
        %v3008 = vmul.f32 %v2972, %v3002
        %v3009 = vmul.f32 %v2973, %v3002
        %v3010 = vmul.f32 %v2974, %v3002
        %v3011 = vmul.f32 %v2975, %v3002
        %v3012 = vmul.f32 %v2976, %v3002
        %v3013 = vmul.f32 %v2977, %v3002
        %v3014 = vmul.f32 %v2978, %v3002
        %v3015 = vmul.f32 %v2979, %v3002
        %v3016 = vmul.f32 %v2980, %v3002
        %v3017 = vmul.f32 %v2981, %v3002
        %v3018 = vmul.f32 %v2982, %v3002
        %v3019 = vmul.f32 %v2983, %v3002
        %v3020 = vmul.f32 %v2984, %v3002
        %v3021 = vmul.f32 %v2985, %v3002
        %v3022 = vmul.f32 %v2986, %v3002
        %v3023 = vmul.f32 %v2987, %v3002
        %v3024 = vmul.f32 %v2988, %v3002
        %v3025 = vmul.f32 %v2989, %v3002
        %v3026 = vmul.f32 %v2990, %v3002
        %v3027 = vmul.f32 %v2991, %v3002
        %v3028 = vmul.f32 %v2992, %v3002
        %v3029 = vmul.f32 %v2993, %v3002
        %v3030 = vmul.f32 %v2994, %v3002
        %v3031 = vmul.f32 %v2995, %v3002
        %v3032 = vmul.f32 %v2996, %v3002
        %v3033 = vmul.f32 %v2997, %v3002
        %v3034 = vmul.f32 %v2998, %v3002
        %v3035 = vmul.f32 %v3003, %v2587
        %v3036 = vmul.f32 %v3004, %v2588
        %v3037 = vmul.f32 %v3005, %v2589
        %v3038 = vmul.f32 %v3006, %v2590
        %v3039 = vmul.f32 %v3007, %v2591
        %v3040 = vmul.f32 %v3008, %v2592
        %v3041 = vmul.f32 %v3009, %v2593
        %v3042 = vmul.f32 %v3010, %v2594
        %v3043 = vmul.f32 %v3011, %v2595
        %v3044 = vmul.f32 %v3012, %v2596
        %v3045 = vmul.f32 %v3013, %v2597
        %v3046 = vmul.f32 %v3014, %v2598
        %v3047 = vmul.f32 %v3015, %v2599
        %v3048 = vmul.f32 %v3016, %v2600
        %v3049 = vmul.f32 %v3017, %v2601
        %v3050 = vmul.f32 %v3018, %v2602
        %v3051 = vmul.f32 %v3019, %v2603
        %v3052 = vmul.f32 %v3020, %v2604
        %v3053 = vmul.f32 %v3021, %v2605
        %v3054 = vmul.f32 %v3022, %v2606
        %v3055 = vmul.f32 %v3023, %v2607
        %v3056 = vmul.f32 %v3024, %v2608
        %v3057 = vmul.f32 %v3025, %v2609
        %v3058 = vmul.f32 %v3026, %v2610
        %v3059 = vmul.f32 %v3027, %v2611
        %v3060 = vmul.f32 %v3028, %v2612
        %v3061 = vmul.f32 %v3029, %v2613
        %v3062 = vmul.f32 %v3030, %v2614
        %v3063 = vmul.f32 %v3031, %v2615
        %v3064 = vmul.f32 %v3032, %v2616
        %v3065 = vmul.f32 %v3033, %v2617
        %v3066 = vmul.f32 %v3034, %v2618
        %v3067 = vadd.f32 %v2931, %v3035
        %v3068 = vadd.f32 %v2932, %v3036
        %v3069 = vadd.f32 %v2933, %v3037
        %v3070 = vadd.f32 %v2934, %v3038
        %v3071 = vadd.f32 %v2935, %v3039
        %v3072 = vadd.f32 %v2936, %v3040
        %v3073 = vadd.f32 %v2937, %v3041
        %v3074 = vadd.f32 %v2938, %v3042
        %v3075 = vadd.f32 %v2939, %v3043
        %v3076 = vadd.f32 %v2940, %v3044
        %v3077 = vadd.f32 %v2941, %v3045
        %v3078 = vadd.f32 %v2942, %v3046
        %v3079 = vadd.f32 %v2943, %v3047
        %v3080 = vadd.f32 %v2944, %v3048
        %v3081 = vadd.f32 %v2945, %v3049
        %v3082 = vadd.f32 %v2946, %v3050
        %v3083 = vadd.f32 %v2947, %v3051
        %v3084 = vadd.f32 %v2948, %v3052
        %v3085 = vadd.f32 %v2949, %v3053
        %v3086 = vadd.f32 %v2950, %v3054
        %v3087 = vadd.f32 %v2951, %v3055
        %v3088 = vadd.f32 %v2952, %v3056
        %v3089 = vadd.f32 %v2953, %v3057
        %v3090 = vadd.f32 %v2954, %v3058
        %v3091 = vadd.f32 %v2955, %v3059
        %v3092 = vadd.f32 %v2956, %v3060
        %v3093 = vadd.f32 %v2957, %v3061
        %v3094 = vadd.f32 %v2958, %v3062
        %v3095 = vadd.f32 %v2959, %v3063
        %v3096 = vadd.f32 %v2960, %v3064
        %v3097 = vadd.f32 %v2961, %v3065
        %v3098 = vadd.f32 %v2962, %v3066
        %v3099 = vlaneseq
        %v3100 = vshrl.u32 %v3099, 7
        %v3101 = vsub.s32 1, %v3100
        %v3102 = vrot.slane %v335, %v3101
        %v3103 = vsub.f32 %v1239, %v3102
        %v3104 = vsub.f32 %v1240, %v3102
        %v3105 = vsub.f32 %v1241, %v3102
        %v3106 = vsub.f32 %v1242, %v3102
        %v3107 = vsub.f32 %v1243, %v3102
        %v3108 = vsub.f32 %v1244, %v3102
        %v3109 = vsub.f32 %v1245, %v3102
        %v3110 = vsub.f32 %v1246, %v3102
        %v3111 = vsub.f32 %v1247, %v3102
        %v3112 = vsub.f32 %v1248, %v3102
        %v3113 = vsub.f32 %v1249, %v3102
        %v3114 = vsub.f32 %v1250, %v3102
        %v3115 = vsub.f32 %v1251, %v3102
        %v3116 = vsub.f32 %v1252, %v3102
        %v3117 = vsub.f32 %v1253, %v3102
        %v3118 = vsub.f32 %v1254, %v3102
        %v3119 = vsub.f32 %v1255, %v3102
        %v3120 = vsub.f32 %v1256, %v3102
        %v3121 = vsub.f32 %v1257, %v3102
        %v3122 = vsub.f32 %v1258, %v3102
        %v3123 = vsub.f32 %v1259, %v3102
        %v3124 = vsub.f32 %v1260, %v3102
        %v3125 = vsub.f32 %v1261, %v3102
        %v3126 = vsub.f32 %v1262, %v3102
        %v3127 = vsub.f32 %v1263, %v3102
        %v3128 = vsub.f32 %v1264, %v3102
        %v3129 = vsub.f32 %v1265, %v3102
        %v3130 = vsub.f32 %v1266, %v3102
        %v3131 = vsub.f32 %v1267, %v3102
        %v3132 = vsub.f32 %v1268, %v3102
        %v3133 = vsub.f32 %v1269, %v3102
        %v3134 = vsub.f32 %v1270, %v3102
        %v3135 = vlaneseq
        %v3136 = vshrl.u32 %v3135, 7
        %v3137 = vsub.s32 2, %v3136
        %v3138 = vrot.slane %v335, %v3137
        %v3139 = vmul.f32 %v3103, %v3138
        %v3140 = vmul.f32 %v3104, %v3138
        %v3141 = vmul.f32 %v3105, %v3138
        %v3142 = vmul.f32 %v3106, %v3138
        %v3143 = vmul.f32 %v3107, %v3138
        %v3144 = vmul.f32 %v3108, %v3138
        %v3145 = vmul.f32 %v3109, %v3138
        %v3146 = vmul.f32 %v3110, %v3138
        %v3147 = vmul.f32 %v3111, %v3138
        %v3148 = vmul.f32 %v3112, %v3138
        %v3149 = vmul.f32 %v3113, %v3138
        %v3150 = vmul.f32 %v3114, %v3138
        %v3151 = vmul.f32 %v3115, %v3138
        %v3152 = vmul.f32 %v3116, %v3138
        %v3153 = vmul.f32 %v3117, %v3138
        %v3154 = vmul.f32 %v3118, %v3138
        %v3155 = vmul.f32 %v3119, %v3138
        %v3156 = vmul.f32 %v3120, %v3138
        %v3157 = vmul.f32 %v3121, %v3138
        %v3158 = vmul.f32 %v3122, %v3138
        %v3159 = vmul.f32 %v3123, %v3138
        %v3160 = vmul.f32 %v3124, %v3138
        %v3161 = vmul.f32 %v3125, %v3138
        %v3162 = vmul.f32 %v3126, %v3138
        %v3163 = vmul.f32 %v3127, %v3138
        %v3164 = vmul.f32 %v3128, %v3138
        %v3165 = vmul.f32 %v3129, %v3138
        %v3166 = vmul.f32 %v3130, %v3138
        %v3167 = vmul.f32 %v3131, %v3138
        %v3168 = vmul.f32 %v3132, %v3138
        %v3169 = vmul.f32 %v3133, %v3138
        %v3170 = vmul.f32 %v3134, %v3138
        %v3171 = vmul.f32 %v3139, %v2827
        %v3172 = vmul.f32 %v3140, %v2828
        %v3173 = vmul.f32 %v3141, %v2829
        %v3174 = vmul.f32 %v3142, %v2830
        %v3175 = vmul.f32 %v3143, %v2831
        %v3176 = vmul.f32 %v3144, %v2832
        %v3177 = vmul.f32 %v3145, %v2833
        %v3178 = vmul.f32 %v3146, %v2834
        %v3179 = vmul.f32 %v3147, %v2835
        %v3180 = vmul.f32 %v3148, %v2836
        %v3181 = vmul.f32 %v3149, %v2837
        %v3182 = vmul.f32 %v3150, %v2838
        %v3183 = vmul.f32 %v3151, %v2839
        %v3184 = vmul.f32 %v3152, %v2840
        %v3185 = vmul.f32 %v3153, %v2841
        %v3186 = vmul.f32 %v3154, %v2842
        %v3187 = vmul.f32 %v3155, %v2843
        %v3188 = vmul.f32 %v3156, %v2844
        %v3189 = vmul.f32 %v3157, %v2845
        %v3190 = vmul.f32 %v3158, %v2846
        %v3191 = vmul.f32 %v3159, %v2847
        %v3192 = vmul.f32 %v3160, %v2848
        %v3193 = vmul.f32 %v3161, %v2849
        %v3194 = vmul.f32 %v3162, %v2850
        %v3195 = vmul.f32 %v3163, %v2851
        %v3196 = vmul.f32 %v3164, %v2852
        %v3197 = vmul.f32 %v3165, %v2853
        %v3198 = vmul.f32 %v3166, %v2854
        %v3199 = vmul.f32 %v3167, %v2855
        %v3200 = vmul.f32 %v3168, %v2856
        %v3201 = vmul.f32 %v3169, %v2857
        %v3202 = vmul.f32 %v3170, %v2858
        %v3203 = vlaneseq
        %v3204 = vshrl.u32 %v3203, 7
        %v3205 = vsub.s32 3, %v3204
        %v3206 = vrot.slane %v335, %v3205
        %v3207 = vsub.f32 %v3206, %v1239
        %v3208 = vsub.f32 %v3206, %v1240
        %v3209 = vsub.f32 %v3206, %v1241
        %v3210 = vsub.f32 %v3206, %v1242
        %v3211 = vsub.f32 %v3206, %v1243
        %v3212 = vsub.f32 %v3206, %v1244
        %v3213 = vsub.f32 %v3206, %v1245
        %v3214 = vsub.f32 %v3206, %v1246
        %v3215 = vsub.f32 %v3206, %v1247
        %v3216 = vsub.f32 %v3206, %v1248
        %v3217 = vsub.f32 %v3206, %v1249
        %v3218 = vsub.f32 %v3206, %v1250
        %v3219 = vsub.f32 %v3206, %v1251
        %v3220 = vsub.f32 %v3206, %v1252
        %v3221 = vsub.f32 %v3206, %v1253
        %v3222 = vsub.f32 %v3206, %v1254
        %v3223 = vsub.f32 %v3206, %v1255
        %v3224 = vsub.f32 %v3206, %v1256
        %v3225 = vsub.f32 %v3206, %v1257
        %v3226 = vsub.f32 %v3206, %v1258
        %v3227 = vsub.f32 %v3206, %v1259
        %v3228 = vsub.f32 %v3206, %v1260
        %v3229 = vsub.f32 %v3206, %v1261
        %v3230 = vsub.f32 %v3206, %v1262
        %v3231 = vsub.f32 %v3206, %v1263
        %v3232 = vsub.f32 %v3206, %v1264
        %v3233 = vsub.f32 %v3206, %v1265
        %v3234 = vsub.f32 %v3206, %v1266
        %v3235 = vsub.f32 %v3206, %v1267
        %v3236 = vsub.f32 %v3206, %v1268
        %v3237 = vsub.f32 %v3206, %v1269
        %v3238 = vsub.f32 %v3206, %v1270
        %v3239 = vlaneseq
        %v3240 = vshrl.u32 %v3239, 7
        %v3241 = vsub.s32 4, %v3240
        %v3242 = vrot.slane %v335, %v3241
        %v3243 = vmul.f32 %v3207, %v3242
        %v3244 = vmul.f32 %v3208, %v3242
        %v3245 = vmul.f32 %v3209, %v3242
        %v3246 = vmul.f32 %v3210, %v3242
        %v3247 = vmul.f32 %v3211, %v3242
        %v3248 = vmul.f32 %v3212, %v3242
        %v3249 = vmul.f32 %v3213, %v3242
        %v3250 = vmul.f32 %v3214, %v3242
        %v3251 = vmul.f32 %v3215, %v3242
        %v3252 = vmul.f32 %v3216, %v3242
        %v3253 = vmul.f32 %v3217, %v3242
        %v3254 = vmul.f32 %v3218, %v3242
        %v3255 = vmul.f32 %v3219, %v3242
        %v3256 = vmul.f32 %v3220, %v3242
        %v3257 = vmul.f32 %v3221, %v3242
        %v3258 = vmul.f32 %v3222, %v3242
        %v3259 = vmul.f32 %v3223, %v3242
        %v3260 = vmul.f32 %v3224, %v3242
        %v3261 = vmul.f32 %v3225, %v3242
        %v3262 = vmul.f32 %v3226, %v3242
        %v3263 = vmul.f32 %v3227, %v3242
        %v3264 = vmul.f32 %v3228, %v3242
        %v3265 = vmul.f32 %v3229, %v3242
        %v3266 = vmul.f32 %v3230, %v3242
        %v3267 = vmul.f32 %v3231, %v3242
        %v3268 = vmul.f32 %v3232, %v3242
        %v3269 = vmul.f32 %v3233, %v3242
        %v3270 = vmul.f32 %v3234, %v3242
        %v3271 = vmul.f32 %v3235, %v3242
        %v3272 = vmul.f32 %v3236, %v3242
        %v3273 = vmul.f32 %v3237, %v3242
        %v3274 = vmul.f32 %v3238, %v3242
        %v3275 = vmul.f32 %v3243, %v3067
        %v3276 = vmul.f32 %v3244, %v3068
        %v3277 = vmul.f32 %v3245, %v3069
        %v3278 = vmul.f32 %v3246, %v3070
        %v3279 = vmul.f32 %v3247, %v3071
        %v3280 = vmul.f32 %v3248, %v3072
        %v3281 = vmul.f32 %v3249, %v3073
        %v3282 = vmul.f32 %v3250, %v3074
        %v3283 = vmul.f32 %v3251, %v3075
        %v3284 = vmul.f32 %v3252, %v3076
        %v3285 = vmul.f32 %v3253, %v3077
        %v3286 = vmul.f32 %v3254, %v3078
        %v3287 = vmul.f32 %v3255, %v3079
        %v3288 = vmul.f32 %v3256, %v3080
        %v3289 = vmul.f32 %v3257, %v3081
        %v3290 = vmul.f32 %v3258, %v3082
        %v3291 = vmul.f32 %v3259, %v3083
        %v3292 = vmul.f32 %v3260, %v3084
        %v3293 = vmul.f32 %v3261, %v3085
        %v3294 = vmul.f32 %v3262, %v3086
        %v3295 = vmul.f32 %v3263, %v3087
        %v3296 = vmul.f32 %v3264, %v3088
        %v3297 = vmul.f32 %v3265, %v3089
        %v3298 = vmul.f32 %v3266, %v3090
        %v3299 = vmul.f32 %v3267, %v3091
        %v3300 = vmul.f32 %v3268, %v3092
        %v3301 = vmul.f32 %v3269, %v3093
        %v3302 = vmul.f32 %v3270, %v3094
        %v3303 = vmul.f32 %v3271, %v3095
        %v3304 = vmul.f32 %v3272, %v3096
        %v3305 = vmul.f32 %v3273, %v3097
        %v3306 = vmul.f32 %v3274, %v3098
        %v3307 = vadd.f32 %v3171, %v3275
        %v3308 = vadd.f32 %v3172, %v3276
        %v3309 = vadd.f32 %v3173, %v3277
        %v3310 = vadd.f32 %v3174, %v3278
        %v3311 = vadd.f32 %v3175, %v3279
        %v3312 = vadd.f32 %v3176, %v3280
        %v3313 = vadd.f32 %v3177, %v3281
        %v3314 = vadd.f32 %v3178, %v3282
        %v3315 = vadd.f32 %v3179, %v3283
        %v3316 = vadd.f32 %v3180, %v3284
        %v3317 = vadd.f32 %v3181, %v3285
        %v3318 = vadd.f32 %v3182, %v3286
        %v3319 = vadd.f32 %v3183, %v3287
        %v3320 = vadd.f32 %v3184, %v3288
        %v3321 = vadd.f32 %v3185, %v3289
        %v3322 = vadd.f32 %v3186, %v3290
        %v3323 = vadd.f32 %v3187, %v3291
        %v3324 = vadd.f32 %v3188, %v3292
        %v3325 = vadd.f32 %v3189, %v3293
        %v3326 = vadd.f32 %v3190, %v3294
        %v3327 = vadd.f32 %v3191, %v3295
        %v3328 = vadd.f32 %v3192, %v3296
        %v3329 = vadd.f32 %v3193, %v3297
        %v3330 = vadd.f32 %v3194, %v3298
        %v3331 = vadd.f32 %v3195, %v3299
        %v3332 = vadd.f32 %v3196, %v3300
        %v3333 = vadd.f32 %v3197, %v3301
        %v3334 = vadd.f32 %v3198, %v3302
        %v3335 = vadd.f32 %v3199, %v3303
        %v3336 = vadd.f32 %v3200, %v3304
        %v3337 = vadd.f32 %v3201, %v3305
        %v3338 = vadd.f32 %v3202, %v3306
        %v3339 = vsub.f32 0.0, %v281
        %v3340 = vsub.f32 0.0, %v282
        %v3341 = vsub.f32 0.0, %v283
        %v3342 = vsub.f32 0.0, %v284
        %v3343 = vsub.f32 0.0, %v285
        %v3344 = vsub.f32 0.0, %v286
        %v3345 = vsub.f32 0.0, %v287
        %v3346 = vsub.f32 0.0, %v288
        %v3347 = vsub.f32 0.0, %v289
        %v3348 = vsub.f32 0.0, %v290
        %v3349 = vsub.f32 0.0, %v291
        %v3350 = vsub.f32 0.0, %v292
        %v3351 = vsub.f32 0.0, %v293
        %v3352 = vsub.f32 0.0, %v294
        %v3353 = vsub.f32 0.0, %v295
        %v3354 = vsub.f32 0.0, %v296
        %v3355 = vsub.f32 0.0, %v297
        %v3356 = vsub.f32 0.0, %v298
        %v3357 = vsub.f32 0.0, %v299
        %v3358 = vsub.f32 0.0, %v300
        %v3359 = vsub.f32 0.0, %v301
        %v3360 = vsub.f32 0.0, %v302
        %v3361 = vsub.f32 0.0, %v303
        %v3362 = vsub.f32 0.0, %v304
        %v3363 = vsub.f32 0.0, %v305
        %v3364 = vsub.f32 0.0, %v306
        %v3365 = vsub.f32 0.0, %v307
        %v3366 = vsub.f32 0.0, %v308
        %v3367 = vsub.f32 0.0, %v309
        %v3368 = vsub.f32 0.0, %v310
        %v3369 = vsub.f32 0.0, %v311
        %v3370 = vsub.f32 0.0, %v312
        %v3371 = vmul.f32 %v3339, 1.442695
        %v3372 = vpow.pop %v3371
        %v3373 = vmul.f32 %v3340, 1.442695
        %v3374 = vpow.pop %v3373
        %v3375 = vmul.f32 %v3341, 1.442695
        %v3376 = vpow.pop %v3375
        %v3377 = vmul.f32 %v3342, 1.442695
        %v3378 = vpow.pop %v3377
        %v3379 = vmul.f32 %v3343, 1.442695
        %v3380 = vpow.pop %v3379
        %v3381 = vmul.f32 %v3344, 1.442695
        %v3382 = vpow.pop %v3381
        %v3383 = vmul.f32 %v3345, 1.442695
        %v3384 = vpow.pop %v3383
        %v3385 = vmul.f32 %v3346, 1.442695
        %v3386 = vpow.pop %v3385
        %v3387 = vmul.f32 %v3347, 1.442695
        %v3388 = vpow.pop %v3387
        %v3389 = vmul.f32 %v3348, 1.442695
        %v3390 = vpow.pop %v3389
        %v3391 = vmul.f32 %v3349, 1.442695
        %v3392 = vpow.pop %v3391
        %v3393 = vmul.f32 %v3350, 1.442695
        %v3394 = vpow.pop %v3393
        %v3395 = vmul.f32 %v3351, 1.442695
        %v3396 = vpow.pop %v3395
        %v3397 = vmul.f32 %v3352, 1.442695
        %v3398 = vpow.pop %v3397
        %v3399 = vmul.f32 %v3353, 1.442695
        %v3400 = vpow.pop %v3399
        %v3401 = vmul.f32 %v3354, 1.442695
        %v3402 = vpow.pop %v3401
        %v3403 = vmul.f32 %v3355, 1.442695
        %v3404 = vpow.pop %v3403
        %v3405 = vmul.f32 %v3356, 1.442695
        %v3406 = vpow.pop %v3405
        %v3407 = vmul.f32 %v3357, 1.442695
        %v3408 = vpow.pop %v3407
        %v3409 = vmul.f32 %v3358, 1.442695
        %v3410 = vpow.pop %v3409
        %v3411 = vmul.f32 %v3359, 1.442695
        %v3412 = vpow.pop %v3411
        %v3413 = vmul.f32 %v3360, 1.442695
        %v3414 = vpow.pop %v3413
        %v3415 = vmul.f32 %v3361, 1.442695
        %v3416 = vpow.pop %v3415
        %v3417 = vmul.f32 %v3362, 1.442695
        %v3418 = vpow.pop %v3417
        %v3419 = vmul.f32 %v3363, 1.442695
        %v3420 = vpow.pop %v3419
        %v3421 = vmul.f32 %v3364, 1.442695
        %v3422 = vpow.pop %v3421
        %v3423 = vmul.f32 %v3365, 1.442695
        %v3424 = vpow.pop %v3423
        %v3425 = vmul.f32 %v3366, 1.442695
        %v3426 = vpow.pop %v3425
        %v3427 = vmul.f32 %v3367, 1.442695
        %v3428 = vpow.pop %v3427
        %v3429 = vmul.f32 %v3368, 1.442695
        %v3430 = vpow.pop %v3429
        %v3431 = vmul.f32 %v3369, 1.442695
        %v3432 = vpow.pop %v3431
        %v3433 = vmul.f32 %v3370, 1.442695
        %v3434 = vpow.pop %v3433
        %v3435 = vadd.f32 %v3372, 1.0
        %v3436 = vadd.f32 %v3374, 1.0
        %v3437 = vadd.f32 %v3376, 1.0
        %v3438 = vadd.f32 %v3378, 1.0
        %v3439 = vadd.f32 %v3380, 1.0
        %v3440 = vadd.f32 %v3382, 1.0
        %v3441 = vadd.f32 %v3384, 1.0
        %v3442 = vadd.f32 %v3386, 1.0
        %v3443 = vadd.f32 %v3388, 1.0
        %v3444 = vadd.f32 %v3390, 1.0
        %v3445 = vadd.f32 %v3392, 1.0
        %v3446 = vadd.f32 %v3394, 1.0
        %v3447 = vadd.f32 %v3396, 1.0
        %v3448 = vadd.f32 %v3398, 1.0
        %v3449 = vadd.f32 %v3400, 1.0
        %v3450 = vadd.f32 %v3402, 1.0
        %v3451 = vadd.f32 %v3404, 1.0
        %v3452 = vadd.f32 %v3406, 1.0
        %v3453 = vadd.f32 %v3408, 1.0
        %v3454 = vadd.f32 %v3410, 1.0
        %v3455 = vadd.f32 %v3412, 1.0
        %v3456 = vadd.f32 %v3414, 1.0
        %v3457 = vadd.f32 %v3416, 1.0
        %v3458 = vadd.f32 %v3418, 1.0
        %v3459 = vadd.f32 %v3420, 1.0
        %v3460 = vadd.f32 %v3422, 1.0
        %v3461 = vadd.f32 %v3424, 1.0
        %v3462 = vadd.f32 %v3426, 1.0
        %v3463 = vadd.f32 %v3428, 1.0
        %v3464 = vadd.f32 %v3430, 1.0
        %v3465 = vadd.f32 %v3432, 1.0
        %v3466 = vadd.f32 %v3434, 1.0
        %v3467 = vrcp.pop %v3435
        %v3468 = vrcp.pop %v3436
        %v3469 = vrcp.pop %v3437
        %v3470 = vrcp.pop %v3438
        %v3471 = vrcp.pop %v3439
        %v3472 = vrcp.pop %v3440
        %v3473 = vrcp.pop %v3441
        %v3474 = vrcp.pop %v3442
        %v3475 = vrcp.pop %v3443
        %v3476 = vrcp.pop %v3444
        %v3477 = vrcp.pop %v3445
        %v3478 = vrcp.pop %v3446
        %v3479 = vrcp.pop %v3447
        %v3480 = vrcp.pop %v3448
        %v3481 = vrcp.pop %v3449
        %v3482 = vrcp.pop %v3450
        %v3483 = vrcp.pop %v3451
        %v3484 = vrcp.pop %v3452
        %v3485 = vrcp.pop %v3453
        %v3486 = vrcp.pop %v3454
        %v3487 = vrcp.pop %v3455
        %v3488 = vrcp.pop %v3456
        %v3489 = vrcp.pop %v3457
        %v3490 = vrcp.pop %v3458
        %v3491 = vrcp.pop %v3459
        %v3492 = vrcp.pop %v3460
        %v3493 = vrcp.pop %v3461
        %v3494 = vrcp.pop %v3462
        %v3495 = vrcp.pop %v3463
        %v3496 = vrcp.pop %v3464
        %v3497 = vrcp.pop %v3465
        %v3498 = vrcp.pop %v3466
        %v3499 = vmul.f32 %v281, %v3467
        %v3500 = vmul.f32 %v282, %v3468
        %v3501 = vmul.f32 %v283, %v3469
        %v3502 = vmul.f32 %v284, %v3470
        %v3503 = vmul.f32 %v285, %v3471
        %v3504 = vmul.f32 %v286, %v3472
        %v3505 = vmul.f32 %v287, %v3473
        %v3506 = vmul.f32 %v288, %v3474
        %v3507 = vmul.f32 %v289, %v3475
        %v3508 = vmul.f32 %v290, %v3476
        %v3509 = vmul.f32 %v291, %v3477
        %v3510 = vmul.f32 %v292, %v3478
        %v3511 = vmul.f32 %v293, %v3479
        %v3512 = vmul.f32 %v294, %v3480
        %v3513 = vmul.f32 %v295, %v3481
        %v3514 = vmul.f32 %v296, %v3482
        %v3515 = vmul.f32 %v297, %v3483
        %v3516 = vmul.f32 %v298, %v3484
        %v3517 = vmul.f32 %v299, %v3485
        %v3518 = vmul.f32 %v300, %v3486
        %v3519 = vmul.f32 %v301, %v3487
        %v3520 = vmul.f32 %v302, %v3488
        %v3521 = vmul.f32 %v303, %v3489
        %v3522 = vmul.f32 %v304, %v3490
        %v3523 = vmul.f32 %v305, %v3491
        %v3524 = vmul.f32 %v306, %v3492
        %v3525 = vmul.f32 %v307, %v3493
        %v3526 = vmul.f32 %v308, %v3494
        %v3527 = vmul.f32 %v309, %v3495
        %v3528 = vmul.f32 %v310, %v3496
        %v3529 = vmul.f32 %v311, %v3497
        %v3530 = vmul.f32 %v312, %v3498
        %v3531 = vpack.c.bf16 %v3308, %v3307
        %v3532 = vpack.c.bf16 %v3500, %v3499
        %v3533 = vpack.c.bf16 %v3310, %v3309
        %v3534 = vpack.c.bf16 %v3502, %v3501
        %v3535 = vpack.c.bf16 %v3312, %v3311
        %v3536 = vpack.c.bf16 %v3504, %v3503
        %v3537 = vpack.c.bf16 %v3314, %v3313
        %v3538 = vpack.c.bf16 %v3506, %v3505
        %v3539 = vpack.c.bf16 %v3316, %v3315
        %v3540 = vpack.c.bf16 %v3508, %v3507
        %v3541 = vpack.c.bf16 %v3318, %v3317
        %v3542 = vpack.c.bf16 %v3510, %v3509
        %v3543 = vpack.c.bf16 %v3320, %v3319
        %v3544 = vpack.c.bf16 %v3512, %v3511
        %v3545 = vpack.c.bf16 %v3322, %v3321
        %v3546 = vpack.c.bf16 %v3514, %v3513
        %v3547 = vpack.c.bf16 %v3324, %v3323
        %v3548 = vpack.c.bf16 %v3516, %v3515
        %v3549 = vpack.c.bf16 %v3326, %v3325
        %v3550 = vpack.c.bf16 %v3518, %v3517
        %v3551 = vpack.c.bf16 %v3328, %v3327
        %v3552 = vpack.c.bf16 %v3520, %v3519
        %v3553 = vpack.c.bf16 %v3330, %v3329
        %v3554 = vpack.c.bf16 %v3522, %v3521
        %v3555 = vpack.c.bf16 %v3332, %v3331
        %v3556 = vpack.c.bf16 %v3524, %v3523
        %v3557 = vpack.c.bf16 %v3334, %v3333
        %v3558 = vpack.c.bf16 %v3526, %v3525
        %v3559 = vpack.c.bf16 %v3336, %v3335
        %v3560 = vpack.c.bf16 %v3528, %v3527
        %v3561 = vpack.c.bf16 %v3338, %v3337
        %v3562 = vpack.c.bf16 %v3530, %v3529
        %v3564 = vlaneseq
        %v3565 = vshrl.u32 %v3564, 7
        %v3566 = vsub.s32 0, %v3565
        %v3567 = vrot.slane %v331, %v3566
        %v3587 = vunpack.c.l.b16 %v313
        %v3588 = vunpack.c.l.b16 %v314
        %v3589 = vunpack.c.l.b16 %v315
        %v3590 = vunpack.c.l.b16 %v316
        %v3591 = vunpack.c.l.b16 %v317
        %v3592 = vunpack.c.l.b16 %v318
        %v3593 = vunpack.c.l.b16 %v319
        %v3594 = vunpack.c.l.b16 %v320
        %v3595 = vunpack.c.l.b16 %v321
        %v3596 = vunpack.c.l.b16 %v322
        %v3597 = vunpack.c.l.b16 %v323
        %v3598 = vunpack.c.l.b16 %v324
        %v3599 = vunpack.c.l.b16 %v325
        %v3600 = vunpack.c.l.b16 %v326
        %v3601 = vunpack.c.l.b16 %v327
        %v3602 = vunpack.c.l.b16 %v328
        %v3603 = vunpack.c.l.b16 %v329
        %v3604 = vunpack.c.l.b16 %v330
        %v3605 = vpack.c.b16 %v3588, %v3587
        %v3606 = vpack.c.b16 %v3590, %v3589
        %v3607 = vpack.c.b16 %v3592, %v3591
        %v3608 = vpack.c.b16 %v3594, %v3593
        %v3609 = vpack.c.b16 %v3596, %v3595
        %v3610 = vpack.c.b16 %v3598, %v3597
        %v3611 = vpack.c.b16 %v3600, %v3599
        %v3612 = vpack.c.b16 %v3602, %v3601
        %v3613 = vpack.c.b16 %v3604, %v3603
        %v3624 = vsel %vm1040, %v3532, 0
        %v3627 = vsel %vm1040, %v3534, 0
        %v3630 = vsel %vm1040, %v3536, 0
        %v3633 = vsel %vm1040, %v3538, 0
        %v3636 = vsel %vm1040, %v3540, 0
        %v3639 = vsel %vm1040, %v3542, 0
        %v3642 = vsel %vm1040, %v3544, 0
        %v3645 = vsel %vm1040, %v3546, 0
        %v3648 = vsel %vm1040, %v3548, 0
        %v3651 = vsel %vm1040, %v3550, 0
        %v3654 = vsel %vm1040, %v3552, 0
        %v3657 = vsel %vm1040, %v3554, 0
        %v3660 = vsel %vm1040, %v3556, 0
        %v3663 = vsel %vm1040, %v3558, 0
        %v3666 = vsel %vm1040, %v3560, 0
        %v3669 = vsel %vm1040, %v3562, 0
        %3671 = vmatprep.subr.bf16.mxu0 0
        %3672 = vmatpush1.bf16.msra.mxu0 %v3605
        %3673 = vmatprep.subr.bf16.mxu0 0
        %3674 = vmatpush1.bf16.msra.mxu0 %v3606
        %3675 = vmatprep.subr.bf16.mxu0 0
        %3676 = vmatpush1.bf16.msra.mxu0 %v3607
        %3677 = vmatprep.subr.bf16.mxu0 0
        %3678 = vmatpush1.bf16.msra.mxu0 %v3608
        %3679 = vmatprep.subr.bf16.mxu0 0
        %3680 = vmatpush1.bf16.msra.mxu0 %v3609
        %3681 = vmatprep.subr.bf16.mxu0 0
        %3682 = vmatpush1.bf16.msra.mxu0 %v3610
        %3683 = vmatprep.subr.bf16.mxu0 0
        %3684 = vmatpush1.bf16.msra.mxu0 %v3611
        %3685 = vmatprep.subr.bf16.mxu0 0
        %3686 = vmatpush1.bf16.msra.mxu0 %v3612
        %3687 = vmatprep.subr.bf16.mxu0 0
        %3688 = vmatpush1.bf16.msra.mxu0 %v3613
        %3689 = vmatprep.subr.bf16.mxu0 0
        %3690 = vmatpush1.bf16.msra.mxu0 0
        %3691 = vmatprep.subr.bf16.mxu0 0
        %3692 = vmatpush1.bf16.msra.mxu0 0
        %3693 = vmatprep.subr.bf16.mxu0 0
        %3694 = vmatpush1.bf16.msra.mxu0 0
        %3695 = vmatprep.subr.bf16.mxu0 0
        %3696 = vmatpush1.bf16.msra.mxu0 0
        %3697 = vmatprep.subr.bf16.mxu0 0
        %3698 = vmatpush1.bf16.msra.mxu0 0
        %3699 = vmatprep.subr.bf16.mxu0 0
        %3700 = vmatpush1.bf16.msra.mxu0 0
        %3701 = vmatprep.subr.bf16.mxu0 0
        %3702 = vmatpush1.bf16.msra.mxu0 0
        %3703 = vmatprep.mubr.bf16.mxu0 %v3624
        %3704 = vmatmul.mubr.bf16.gmra.mrb[0].mxu0 %v3531
        %v3705 = vpop.f32.mrb[0].mxu0
        %v3706 = vadd.f32 %v3567, %v3705
        %v3707 = vpop.f32.mrb[0].mxu0
        %v3708 = vpop.f32.mrb[0].mxu0
        %v3709 = vadd.f32 %v3567, %v3708
        %v3710 = vpop.f32.mrb[0].mxu0
        %3711 = vmatprep.mubr.bf16.mxu0 %v3627
        %3712 = vmatmul.mubr.bf16.gmra.mrb[0].mxu0 %v3533
        %v3713 = vpop.f32.mrb[0].mxu0
        %v3714 = vadd.f32 %v3567, %v3713
        %v3715 = vpop.f32.mrb[0].mxu0
        %v3716 = vpop.f32.mrb[0].mxu0
        %v3717 = vadd.f32 %v3567, %v3716
        %v3718 = vpop.f32.mrb[0].mxu0
        %3719 = vmatprep.mubr.bf16.mxu0 %v3630
        %3720 = vmatmul.mubr.bf16.gmra.mrb[0].mxu0 %v3535
        %v3721 = vpop.f32.mrb[0].mxu0
        %v3722 = vadd.f32 %v3567, %v3721
        %v3723 = vpop.f32.mrb[0].mxu0
        %v3724 = vpop.f32.mrb[0].mxu0
        %v3725 = vadd.f32 %v3567, %v3724
        %v3726 = vpop.f32.mrb[0].mxu0
        %3727 = vmatprep.mubr.bf16.mxu0 %v3633
        %3728 = vmatmul.mubr.bf16.gmra.mrb[0].mxu0 %v3537
        %v3729 = vpop.f32.mrb[0].mxu0
        %v3730 = vadd.f32 %v3567, %v3729
        %v3731 = vpop.f32.mrb[0].mxu0
        %v3732 = vpop.f32.mrb[0].mxu0
        %v3733 = vadd.f32 %v3567, %v3732
        %v3734 = vpop.f32.mrb[0].mxu0
        %3735 = vmatprep.mubr.bf16.mxu0 %v3636
        %3736 = vmatmul.mubr.bf16.gmra.mrb[0].mxu0 %v3539
        %v3737 = vpop.f32.mrb[0].mxu0
        %v3738 = vadd.f32 %v3567, %v3737
        %v3739 = vpop.f32.mrb[0].mxu0
        %v3740 = vpop.f32.mrb[0].mxu0
        %v3741 = vadd.f32 %v3567, %v3740
        %v3742 = vpop.f32.mrb[0].mxu0
        %3743 = vmatprep.mubr.bf16.mxu0 %v3639
        %3744 = vmatmul.mubr.bf16.gmra.mrb[0].mxu0 %v3541
        %v3745 = vpop.f32.mrb[0].mxu0
        %v3746 = vadd.f32 %v3567, %v3745
        %v3747 = vpop.f32.mrb[0].mxu0
        %v3748 = vpop.f32.mrb[0].mxu0
        %v3749 = vadd.f32 %v3567, %v3748
        %v3750 = vpop.f32.mrb[0].mxu0
        %3751 = vmatprep.mubr.bf16.mxu0 %v3642
        %3752 = vmatmul.mubr.bf16.gmra.mrb[0].mxu0 %v3543
        %v3753 = vpop.f32.mrb[0].mxu0
        %v3754 = vadd.f32 %v3567, %v3753
        %v3755 = vpop.f32.mrb[0].mxu0
        %v3756 = vpop.f32.mrb[0].mxu0
        %v3757 = vadd.f32 %v3567, %v3756
        %v3758 = vpop.f32.mrb[0].mxu0
        %3759 = vmatprep.mubr.bf16.mxu0 %v3645
        %3760 = vmatmul.mubr.bf16.gmra.mrb[0].mxu0 %v3545
        %v3761 = vpop.f32.mrb[0].mxu0
        %v3762 = vadd.f32 %v3567, %v3761
        %v3763 = vpop.f32.mrb[0].mxu0
        %v3764 = vpop.f32.mrb[0].mxu0
        %v3765 = vadd.f32 %v3567, %v3764
        %v3766 = vpop.f32.mrb[0].mxu0
        %3767 = vmatprep.mubr.bf16.mxu0 %v3648
        %3768 = vmatmul.mubr.bf16.gmra.mrb[0].mxu0 %v3547
        %v3769 = vpop.f32.mrb[0].mxu0
        %v3770 = vadd.f32 %v3567, %v3769
        %v3771 = vpop.f32.mrb[0].mxu0
        %v3772 = vpop.f32.mrb[0].mxu0
        %v3773 = vadd.f32 %v3567, %v3772
        %v3774 = vpop.f32.mrb[0].mxu0
        %3775 = vmatprep.mubr.bf16.mxu0 %v3651
        %3776 = vmatmul.mubr.bf16.gmra.mrb[0].mxu0 %v3549
        %v3777 = vpop.f32.mrb[0].mxu0
        %v3778 = vadd.f32 %v3567, %v3777
        %v3779 = vpop.f32.mrb[0].mxu0
        %v3780 = vpop.f32.mrb[0].mxu0
        %v3781 = vadd.f32 %v3567, %v3780
        %v3782 = vpop.f32.mrb[0].mxu0
        %3783 = vmatprep.mubr.bf16.mxu0 %v3654
        %3784 = vmatmul.mubr.bf16.gmra.mrb[0].mxu0 %v3551
        %v3785 = vpop.f32.mrb[0].mxu0
        %v3786 = vadd.f32 %v3567, %v3785
        %v3787 = vpop.f32.mrb[0].mxu0
        %v3788 = vpop.f32.mrb[0].mxu0
        %v3789 = vadd.f32 %v3567, %v3788
        %v3790 = vpop.f32.mrb[0].mxu0
        %3791 = vmatprep.mubr.bf16.mxu0 %v3657
        %3792 = vmatmul.mubr.bf16.gmra.mrb[0].mxu0 %v3553
        %v3793 = vpop.f32.mrb[0].mxu0
        %v3794 = vadd.f32 %v3567, %v3793
        %v3795 = vpop.f32.mrb[0].mxu0
        %v3796 = vpop.f32.mrb[0].mxu0
        %v3797 = vadd.f32 %v3567, %v3796
        %v3798 = vpop.f32.mrb[0].mxu0
        %3799 = vmatprep.mubr.bf16.mxu0 %v3660
        %3800 = vmatmul.mubr.bf16.gmra.mrb[0].mxu0 %v3555
        %v3801 = vpop.f32.mrb[0].mxu0
        %v3802 = vadd.f32 %v3567, %v3801
        %v3803 = vpop.f32.mrb[0].mxu0
        %v3804 = vpop.f32.mrb[0].mxu0
        %v3805 = vadd.f32 %v3567, %v3804
        %v3806 = vpop.f32.mrb[0].mxu0
        %3807 = vmatprep.mubr.bf16.mxu0 %v3663
        %3808 = vmatmul.mubr.bf16.gmra.mrb[0].mxu0 %v3557
        %v3809 = vpop.f32.mrb[0].mxu0
        %v3810 = vadd.f32 %v3567, %v3809
        %v3811 = vpop.f32.mrb[0].mxu0
        %v3812 = vpop.f32.mrb[0].mxu0
        %v3813 = vadd.f32 %v3567, %v3812
        %v3814 = vpop.f32.mrb[0].mxu0
        %3815 = vmatprep.mubr.bf16.mxu0 %v3666
        %3816 = vmatmul.mubr.bf16.gmra.mrb[0].mxu0 %v3559
        %v3817 = vpop.f32.mrb[0].mxu0
        %v3818 = vadd.f32 %v3567, %v3817
        %v3819 = vpop.f32.mrb[0].mxu0
        %v3820 = vpop.f32.mrb[0].mxu0
        %v3821 = vadd.f32 %v3567, %v3820
        %v3822 = vpop.f32.mrb[0].mxu0
        %3823 = vmatprep.mubr.bf16.mxu0 %v3669
        %3824 = vmatmul.mubr.bf16.gmra.mrb[0].mxu0 %v3561
        %v3825 = vpop.f32.mrb[0].mxu0
        %v3826 = vadd.f32 %v3567, %v3825
        %v3827 = vpop.f32.mrb[0].mxu0
        %v3828 = vpop.f32.mrb[0].mxu0
        %v3829 = vadd.f32 %v3567, %v3828
        %v3830 = vpop.f32.mrb[0].mxu0
        %3831 = vdwg.mxu0
        %v3832 = vld [vmem:[%s4] sm:$0xf]
        %v3833 = vld [vmem:[%s4 + $0x4] sm:$0xf]
        %v3834 = vld [vmem:[%s4 + $0x8] sm:$0xf]
        %v3835 = vld [vmem:[%s4 + $0xc] sm:$0xf]
        %v3836 = vld [vmem:[%s4 + $0x10] sm:$0xf]
        %v3837 = vld [vmem:[%s4 + $0x14] sm:$0xf]
        %v3838 = vld [vmem:[%s4 + $0x18] sm:$0xf]
        %v3839 = vld [vmem:[%s4 + $0x1c] sm:$0xf]
        %v3840 = vld [vmem:[%s4 + $0x20] sm:$0xf]
        %v3841 = vld [vmem:[%s4 + $0x24] sm:$0xf]
        %v3842 = vld [vmem:[%s4 + $0x28] sm:$0xf]
        %v3843 = vld [vmem:[%s4 + $0x2c] sm:$0xf]
        %v3844 = vld [vmem:[%s4 + $0x30] sm:$0xf]
        %v3845 = vld [vmem:[%s4 + $0x34] sm:$0xf]
        %v3846 = vld [vmem:[%s4 + $0x38] sm:$0xf]
        %v3847 = vld [vmem:[%s4 + $0x3c] sm:$0xf]
        %v3848 = vld [vmem:[%s4 + $0x40] sm:$0xf]
        %v3849 = vld [vmem:[%s4 + $0x44] sm:$0xf]
        %v3850 = vld [vmem:[%s4 + $0x48] sm:$0xf]
        %v3851 = vld [vmem:[%s4 + $0x4c] sm:$0xf]
        %v3852 = vld [vmem:[%s4 + $0x50] sm:$0xf]
        %v3853 = vld [vmem:[%s4 + $0x54] sm:$0xf]
        %v3854 = vld [vmem:[%s4 + $0x58] sm:$0xf]
        %v3855 = vld [vmem:[%s4 + $0x5c] sm:$0xf]
        %v3856 = vld [vmem:[%s4 + $0x60] sm:$0xf]
        %v3857 = vld [vmem:[%s4 + $0x64] sm:$0xf]
        %v3858 = vld [vmem:[%s4 + $0x68] sm:$0xf]
        %v3859 = vld [vmem:[%s4 + $0x6c] sm:$0xf]
        %v3860 = vld [vmem:[%s4 + $0x70] sm:$0xf]
        %v3861 = vld [vmem:[%s4 + $0x74] sm:$0xf]
        %v3862 = vld [vmem:[%s4 + $0x78] sm:$0xf]
        %v3863 = vld [vmem:[%s4 + $0x7c] sm:$0xf]
        %v3864 = vld [vmem:[%s4 + $0x80] sm:$0xf]
        %v3865 = vld [vmem:[%s4 + $0x84] sm:$0xf]
        %v3866 = vld [vmem:[%s4 + $0x88] sm:$0xf]
        %v3867 = vld [vmem:[%s4 + $0x8c] sm:$0xf]
        %v3868 = vld [vmem:[%s5] sm:$0x1]
        %v3869 = vld [vmem:[%s6] sm:$0xff]
        %v3870 = vld [vmem:[%s6 + $0x8] sm:$0xff]
        %v3871 = vld [vmem:[%s6 + $0x10] sm:$0xff]
        %v3872 = vld [vmem:[%s6 + $0x18] sm:$0xff]
        %v3873 = vld [vmem:[%s6 + $0x20] sm:$0xff]
        %v3874 = vld [vmem:[%s6 + $0x28] sm:$0xff]
        %v3875 = vld [vmem:[%s6 + $0x30] sm:$0x1f]
        %v3876 = vld [vmem:[%s6 + $0x38] sm:$0x1f]
        %3909 = vrot.lane.b32.xlu0 %v3706, 32
        %v3910 = vpop.permute.xlu0 %3909
        %3911 = vrot.lane.b32.xlu0 %v3709, 32
        %v3912 = vpop.permute.xlu0 %3911
        %3913 = vrot.lane.b32.xlu0 %v3714, 32
        %v3914 = vpop.permute.xlu0 %3913
        %3915 = vrot.lane.b32.xlu0 %v3717, 32
        %v3916 = vpop.permute.xlu0 %3915
        %3917 = vrot.lane.b32.xlu0 %v3722, 32
        %v3918 = vpop.permute.xlu0 %3917
        %3919 = vrot.lane.b32.xlu0 %v3725, 32
        %v3920 = vpop.permute.xlu0 %3919
        %3921 = vrot.lane.b32.xlu0 %v3730, 32
        %v3922 = vpop.permute.xlu0 %3921
        %3923 = vrot.lane.b32.xlu0 %v3733, 32
        %v3924 = vpop.permute.xlu0 %3923
        %3925 = vrot.lane.b32.xlu0 %v3738, 32
        %v3926 = vpop.permute.xlu0 %3925
        %3927 = vrot.lane.b32.xlu0 %v3741, 32
        %v3928 = vpop.permute.xlu0 %3927
        %3929 = vrot.lane.b32.xlu0 %v3746, 32
        %v3930 = vpop.permute.xlu0 %3929
        %3931 = vrot.lane.b32.xlu0 %v3749, 32
        %v3932 = vpop.permute.xlu0 %3931
        %3933 = vrot.lane.b32.xlu0 %v3754, 32
        %v3934 = vpop.permute.xlu0 %3933
        %3935 = vrot.lane.b32.xlu0 %v3757, 32
        %v3936 = vpop.permute.xlu0 %3935
        %3937 = vrot.lane.b32.xlu0 %v3762, 32
        %v3938 = vpop.permute.xlu0 %3937
        %3939 = vrot.lane.b32.xlu0 %v3765, 32
        %v3940 = vpop.permute.xlu0 %3939
        %3941 = vrot.lane.b32.xlu0 %v3770, 32
        %v3942 = vpop.permute.xlu0 %3941
        %3943 = vrot.lane.b32.xlu0 %v3773, 32
        %v3944 = vpop.permute.xlu0 %3943
        %3945 = vrot.lane.b32.xlu0 %v3778, 32
        %v3946 = vpop.permute.xlu0 %3945
        %3947 = vrot.lane.b32.xlu0 %v3781, 32
        %v3948 = vpop.permute.xlu0 %3947
        %3949 = vrot.lane.b32.xlu0 %v3786, 32
        %v3950 = vpop.permute.xlu0 %3949
        %3951 = vrot.lane.b32.xlu0 %v3789, 32
        %v3952 = vpop.permute.xlu0 %3951
        %3953 = vrot.lane.b32.xlu0 %v3794, 32
        %v3954 = vpop.permute.xlu0 %3953
        %3955 = vrot.lane.b32.xlu0 %v3797, 32
        %v3956 = vpop.permute.xlu0 %3955
        %3957 = vrot.lane.b32.xlu0 %v3802, 32
        %v3958 = vpop.permute.xlu0 %3957
        %3959 = vrot.lane.b32.xlu0 %v3805, 32
        %v3960 = vpop.permute.xlu0 %3959
        %3961 = vrot.lane.b32.xlu0 %v3810, 32
        %v3962 = vpop.permute.xlu0 %3961
        %3963 = vrot.lane.b32.xlu0 %v3813, 32
        %v3964 = vpop.permute.xlu0 %3963
        %3965 = vrot.lane.b32.xlu0 %v3818, 32
        %v3966 = vpop.permute.xlu0 %3965
        %3967 = vrot.lane.b32.xlu0 %v3821, 32
        %v3968 = vpop.permute.xlu0 %3967
        %3969 = vrot.lane.b32.xlu0 %v3826, 32
        %v3970 = vpop.permute.xlu0 %3969
        %3971 = vrot.lane.b32.xlu0 %v3829, 32
        %v3972 = vpop.permute.xlu0 %3971
        %4005 = vrot.lane.b32.xlu0 %v3706, 64
        %v4006 = vpop.permute.xlu0 %4005
        %4007 = vrot.lane.b32.xlu0 %v3709, 64
        %v4008 = vpop.permute.xlu0 %4007
        %4009 = vrot.lane.b32.xlu0 %v3714, 64
        %v4010 = vpop.permute.xlu0 %4009
        %4011 = vrot.lane.b32.xlu0 %v3717, 64
        %v4012 = vpop.permute.xlu0 %4011
        %4013 = vrot.lane.b32.xlu0 %v3722, 64
        %v4014 = vpop.permute.xlu0 %4013
        %4015 = vrot.lane.b32.xlu0 %v3725, 64
        %v4016 = vpop.permute.xlu0 %4015
        %4017 = vrot.lane.b32.xlu0 %v3730, 64
        %v4018 = vpop.permute.xlu0 %4017
        %4019 = vrot.lane.b32.xlu0 %v3733, 64
        %v4020 = vpop.permute.xlu0 %4019
        %4021 = vrot.lane.b32.xlu0 %v3738, 64
        %v4022 = vpop.permute.xlu0 %4021
        %4023 = vrot.lane.b32.xlu0 %v3741, 64
        %v4024 = vpop.permute.xlu0 %4023
        %4025 = vrot.lane.b32.xlu0 %v3746, 64
        %v4026 = vpop.permute.xlu0 %4025
        %4027 = vrot.lane.b32.xlu0 %v3749, 64
        %v4028 = vpop.permute.xlu0 %4027
        %4029 = vrot.lane.b32.xlu0 %v3754, 64
        %v4030 = vpop.permute.xlu0 %4029
        %4031 = vrot.lane.b32.xlu0 %v3757, 64
        %v4032 = vpop.permute.xlu0 %4031
        %4033 = vrot.lane.b32.xlu0 %v3762, 64
        %v4034 = vpop.permute.xlu0 %4033
        %4035 = vrot.lane.b32.xlu0 %v3765, 64
        %v4036 = vpop.permute.xlu0 %4035
        %4037 = vrot.lane.b32.xlu0 %v3770, 64
        %v4038 = vpop.permute.xlu0 %4037
        %4039 = vrot.lane.b32.xlu0 %v3773, 64
        %v4040 = vpop.permute.xlu0 %4039
        %4041 = vrot.lane.b32.xlu0 %v3778, 64
        %v4042 = vpop.permute.xlu0 %4041
        %4043 = vrot.lane.b32.xlu0 %v3781, 64
        %v4044 = vpop.permute.xlu0 %4043
        %4045 = vrot.lane.b32.xlu0 %v3786, 64
        %v4046 = vpop.permute.xlu0 %4045
        %4047 = vrot.lane.b32.xlu0 %v3789, 64
        %v4048 = vpop.permute.xlu0 %4047
        %4049 = vrot.lane.b32.xlu0 %v3794, 64
        %v4050 = vpop.permute.xlu0 %4049
        %4051 = vrot.lane.b32.xlu0 %v3797, 64
        %v4052 = vpop.permute.xlu0 %4051
        %4053 = vrot.lane.b32.xlu0 %v3802, 64
        %v4054 = vpop.permute.xlu0 %4053
        %4055 = vrot.lane.b32.xlu0 %v3805, 64
        %v4056 = vpop.permute.xlu0 %4055
        %4057 = vrot.lane.b32.xlu0 %v3810, 64
        %v4058 = vpop.permute.xlu0 %4057
        %4059 = vrot.lane.b32.xlu0 %v3813, 64
        %v4060 = vpop.permute.xlu0 %4059
        %4061 = vrot.lane.b32.xlu0 %v3818, 64
        %v4062 = vpop.permute.xlu0 %4061
        %4063 = vrot.lane.b32.xlu0 %v3821, 64
        %v4064 = vpop.permute.xlu0 %4063
        %4065 = vrot.lane.b32.xlu0 %v3826, 64
        %v4066 = vpop.permute.xlu0 %4065
        %4067 = vrot.lane.b32.xlu0 %v3829, 64
        %v4068 = vpop.permute.xlu0 %4067
        %4101 = vrot.lane.b32.xlu0 %v3706, 96
        %v4102 = vpop.permute.xlu0 %4101
        %4103 = vrot.lane.b32.xlu0 %v3709, 96
        %v4104 = vpop.permute.xlu0 %4103
        %4105 = vrot.lane.b32.xlu0 %v3714, 96
        %v4106 = vpop.permute.xlu0 %4105
        %4107 = vrot.lane.b32.xlu0 %v3717, 96
        %v4108 = vpop.permute.xlu0 %4107
        %4109 = vrot.lane.b32.xlu0 %v3722, 96
        %v4110 = vpop.permute.xlu0 %4109
        %4111 = vrot.lane.b32.xlu0 %v3725, 96
        %v4112 = vpop.permute.xlu0 %4111
        %4113 = vrot.lane.b32.xlu0 %v3730, 96
        %v4114 = vpop.permute.xlu0 %4113
        %4115 = vrot.lane.b32.xlu0 %v3733, 96
        %v4116 = vpop.permute.xlu0 %4115
        %4117 = vrot.lane.b32.xlu0 %v3738, 96
        %v4118 = vpop.permute.xlu0 %4117
        %4119 = vrot.lane.b32.xlu0 %v3741, 96
        %v4120 = vpop.permute.xlu0 %4119
        %4121 = vrot.lane.b32.xlu0 %v3746, 96
        %v4122 = vpop.permute.xlu0 %4121
        %4123 = vrot.lane.b32.xlu0 %v3749, 96
        %v4124 = vpop.permute.xlu0 %4123
        %4125 = vrot.lane.b32.xlu0 %v3754, 96
        %v4126 = vpop.permute.xlu0 %4125
        %4127 = vrot.lane.b32.xlu0 %v3757, 96
        %v4128 = vpop.permute.xlu0 %4127
        %4129 = vrot.lane.b32.xlu0 %v3762, 96
        %v4130 = vpop.permute.xlu0 %4129
        %4131 = vrot.lane.b32.xlu0 %v3765, 96
        %v4132 = vpop.permute.xlu0 %4131
        %4133 = vrot.lane.b32.xlu0 %v3770, 96
        %v4134 = vpop.permute.xlu0 %4133
        %4135 = vrot.lane.b32.xlu0 %v3773, 96
        %v4136 = vpop.permute.xlu0 %4135
        %4137 = vrot.lane.b32.xlu0 %v3778, 96
        %v4138 = vpop.permute.xlu0 %4137
        %4139 = vrot.lane.b32.xlu0 %v3781, 96
        %v4140 = vpop.permute.xlu0 %4139
        %4141 = vrot.lane.b32.xlu0 %v3786, 96
        %v4142 = vpop.permute.xlu0 %4141
        %4143 = vrot.lane.b32.xlu0 %v3789, 96
        %v4144 = vpop.permute.xlu0 %4143
        %4145 = vrot.lane.b32.xlu0 %v3794, 96
        %v4146 = vpop.permute.xlu0 %4145
        %4147 = vrot.lane.b32.xlu0 %v3797, 96
        %v4148 = vpop.permute.xlu0 %4147
        %4149 = vrot.lane.b32.xlu0 %v3802, 96
        %v4150 = vpop.permute.xlu0 %4149
        %4151 = vrot.lane.b32.xlu0 %v3805, 96
        %v4152 = vpop.permute.xlu0 %4151
        %4153 = vrot.lane.b32.xlu0 %v3810, 96
        %v4154 = vpop.permute.xlu0 %4153
        %4155 = vrot.lane.b32.xlu0 %v3813, 96
        %v4156 = vpop.permute.xlu0 %4155
        %4157 = vrot.lane.b32.xlu0 %v3818, 96
        %v4158 = vpop.permute.xlu0 %4157
        %4159 = vrot.lane.b32.xlu0 %v3821, 96
        %v4160 = vpop.permute.xlu0 %4159
        %4161 = vrot.lane.b32.xlu0 %v3826, 96
        %v4162 = vpop.permute.xlu0 %4161
        %4163 = vrot.lane.b32.xlu0 %v3829, 96
        %v4164 = vpop.permute.xlu0 %4163
        %v4197 = vsel %vm1073, %v3706, %v3910
        %v4198 = vsel %vm1073, %v3709, %v3912
        %v4199 = vsel %vm1073, %v3714, %v3914
        %v4200 = vsel %vm1073, %v3717, %v3916
        %v4201 = vsel %vm1073, %v3722, %v3918
        %v4202 = vsel %vm1073, %v3725, %v3920
        %v4203 = vsel %vm1073, %v3730, %v3922
        %v4204 = vsel %vm1073, %v3733, %v3924
        %v4205 = vsel %vm1073, %v3738, %v3926
        %v4206 = vsel %vm1073, %v3741, %v3928
        %v4207 = vsel %vm1073, %v3746, %v3930
        %v4208 = vsel %vm1073, %v3749, %v3932
        %v4209 = vsel %vm1073, %v3754, %v3934
        %v4210 = vsel %vm1073, %v3757, %v3936
        %v4211 = vsel %vm1073, %v3762, %v3938
        %v4212 = vsel %vm1073, %v3765, %v3940
        %v4213 = vsel %vm1073, %v3770, %v3942
        %v4214 = vsel %vm1073, %v3773, %v3944
        %v4215 = vsel %vm1073, %v3778, %v3946
        %v4216 = vsel %vm1073, %v3781, %v3948
        %v4217 = vsel %vm1073, %v3786, %v3950
        %v4218 = vsel %vm1073, %v3789, %v3952
        %v4219 = vsel %vm1073, %v3794, %v3954
        %v4220 = vsel %vm1073, %v3797, %v3956
        %v4221 = vsel %vm1073, %v3802, %v3958
        %v4222 = vsel %vm1073, %v3805, %v3960
        %v4223 = vsel %vm1073, %v3810, %v3962
        %v4224 = vsel %vm1073, %v3813, %v3964
        %v4225 = vsel %vm1073, %v3818, %v3966
        %v4226 = vsel %vm1073, %v3821, %v3968
        %v4227 = vsel %vm1073, %v3826, %v3970
        %v4228 = vsel %vm1073, %v3829, %v3972
        %v4229 = vsel %vm1139, %v4197, %v4006
        %v4230 = vsel %vm1139, %v4198, %v4008
        %v4231 = vsel %vm1139, %v4199, %v4010
        %v4232 = vsel %vm1139, %v4200, %v4012
        %v4233 = vsel %vm1139, %v4201, %v4014
        %v4234 = vsel %vm1139, %v4202, %v4016
        %v4235 = vsel %vm1139, %v4203, %v4018
        %v4236 = vsel %vm1139, %v4204, %v4020
        %v4237 = vsel %vm1139, %v4205, %v4022
        %v4238 = vsel %vm1139, %v4206, %v4024
        %v4239 = vsel %vm1139, %v4207, %v4026
        %v4240 = vsel %vm1139, %v4208, %v4028
        %v4241 = vsel %vm1139, %v4209, %v4030
        %v4242 = vsel %vm1139, %v4210, %v4032
        %v4243 = vsel %vm1139, %v4211, %v4034
        %v4244 = vsel %vm1139, %v4212, %v4036
        %v4245 = vsel %vm1139, %v4213, %v4038
        %v4246 = vsel %vm1139, %v4214, %v4040
        %v4247 = vsel %vm1139, %v4215, %v4042
        %v4248 = vsel %vm1139, %v4216, %v4044
        %v4249 = vsel %vm1139, %v4217, %v4046
        %v4250 = vsel %vm1139, %v4218, %v4048
        %v4251 = vsel %vm1139, %v4219, %v4050
        %v4252 = vsel %vm1139, %v4220, %v4052
        %v4253 = vsel %vm1139, %v4221, %v4054
        %v4254 = vsel %vm1139, %v4222, %v4056
        %v4255 = vsel %vm1139, %v4223, %v4058
        %v4256 = vsel %vm1139, %v4224, %v4060
        %v4257 = vsel %vm1139, %v4225, %v4062
        %v4258 = vsel %vm1139, %v4226, %v4064
        %v4259 = vsel %vm1139, %v4227, %v4066
        %v4260 = vsel %vm1139, %v4228, %v4068
        %v4261 = vsel %vm1205, %v4229, %v4102
        %v4262 = vsel %vm1205, %v4230, %v4104
        %v4263 = vsel %vm1205, %v4231, %v4106
        %v4264 = vsel %vm1205, %v4232, %v4108
        %v4265 = vsel %vm1205, %v4233, %v4110
        %v4266 = vsel %vm1205, %v4234, %v4112
        %v4267 = vsel %vm1205, %v4235, %v4114
        %v4268 = vsel %vm1205, %v4236, %v4116
        %v4269 = vsel %vm1205, %v4237, %v4118
        %v4270 = vsel %vm1205, %v4238, %v4120
        %v4271 = vsel %vm1205, %v4239, %v4122
        %v4272 = vsel %vm1205, %v4240, %v4124
        %v4273 = vsel %vm1205, %v4241, %v4126
        %v4274 = vsel %vm1205, %v4242, %v4128
        %v4275 = vsel %vm1205, %v4243, %v4130
        %v4276 = vsel %vm1205, %v4244, %v4132
        %v4277 = vsel %vm1205, %v4245, %v4134
        %v4278 = vsel %vm1205, %v4246, %v4136
        %v4279 = vsel %vm1205, %v4247, %v4138
        %v4280 = vsel %vm1205, %v4248, %v4140
        %v4281 = vsel %vm1205, %v4249, %v4142
        %v4282 = vsel %vm1205, %v4250, %v4144
        %v4283 = vsel %vm1205, %v4251, %v4146
        %v4284 = vsel %vm1205, %v4252, %v4148
        %v4285 = vsel %vm1205, %v4253, %v4150
        %v4286 = vsel %vm1205, %v4254, %v4152
        %v4287 = vsel %vm1205, %v4255, %v4154
        %v4288 = vsel %vm1205, %v4256, %v4156
        %v4289 = vsel %vm1205, %v4257, %v4158
        %v4290 = vsel %vm1205, %v4258, %v4160
        %v4291 = vsel %vm1205, %v4259, %v4162
        %v4292 = vsel %vm1205, %v4260, %v4164
        %v4293 = vlaneseq
        %v4294 = vshrl.u32 %v4293, 7
        %v4295 = vsub.s32 0, %v4294
        %v4296 = vrot.slane %v3869, %v4295
        %v4297 = vlaneseq
        %v4298 = vshrl.u32 %v4297, 7
        %v4299 = vsub.s32 0, %v4298
        %v4300 = vrot.slane %v3870, %v4299
        %vm4301 = vcmp.ge.f32.partialorder %v4261, %v4296
        %vm4302 = vcmp.ge.f32.partialorder %v4261, %v4300
        %vm4303 = vcmp.ge.f32.partialorder %v4262, %v4296
        %vm4304 = vcmp.ge.f32.partialorder %v4262, %v4300
        %vm4305 = vcmp.ge.f32.partialorder %v4263, %v4296
        %vm4306 = vcmp.ge.f32.partialorder %v4263, %v4300
        %vm4307 = vcmp.ge.f32.partialorder %v4264, %v4296
        %vm4308 = vcmp.ge.f32.partialorder %v4264, %v4300
        %vm4309 = vcmp.ge.f32.partialorder %v4265, %v4296
        %vm4310 = vcmp.ge.f32.partialorder %v4265, %v4300
        %vm4311 = vcmp.ge.f32.partialorder %v4266, %v4296
        %vm4312 = vcmp.ge.f32.partialorder %v4266, %v4300
        %vm4313 = vcmp.ge.f32.partialorder %v4267, %v4296
        %vm4314 = vcmp.ge.f32.partialorder %v4267, %v4300
        %vm4315 = vcmp.ge.f32.partialorder %v4268, %v4296
        %vm4316 = vcmp.ge.f32.partialorder %v4268, %v4300
        %vm4317 = vcmp.ge.f32.partialorder %v4269, %v4296
        %vm4318 = vcmp.ge.f32.partialorder %v4269, %v4300
        %vm4319 = vcmp.ge.f32.partialorder %v4270, %v4296
        %vm4320 = vcmp.ge.f32.partialorder %v4270, %v4300
        %vm4321 = vcmp.ge.f32.partialorder %v4271, %v4296
        %vm4322 = vcmp.ge.f32.partialorder %v4271, %v4300
        %vm4323 = vcmp.ge.f32.partialorder %v4272, %v4296
        %vm4324 = vcmp.ge.f32.partialorder %v4272, %v4300
        %vm4325 = vcmp.ge.f32.partialorder %v4273, %v4296
        %vm4326 = vcmp.ge.f32.partialorder %v4273, %v4300
        %vm4327 = vcmp.ge.f32.partialorder %v4274, %v4296
        %vm4328 = vcmp.ge.f32.partialorder %v4274, %v4300
        %vm4329 = vcmp.ge.f32.partialorder %v4275, %v4296
        %vm4330 = vcmp.ge.f32.partialorder %v4275, %v4300
        %vm4331 = vcmp.ge.f32.partialorder %v4276, %v4296
        %vm4332 = vcmp.ge.f32.partialorder %v4276, %v4300
        %vm4333 = vcmp.ge.f32.partialorder %v4277, %v4296
        %vm4334 = vcmp.ge.f32.partialorder %v4277, %v4300
        %vm4335 = vcmp.ge.f32.partialorder %v4278, %v4296
        %vm4336 = vcmp.ge.f32.partialorder %v4278, %v4300
        %vm4337 = vcmp.ge.f32.partialorder %v4279, %v4296
        %vm4338 = vcmp.ge.f32.partialorder %v4279, %v4300
        %vm4339 = vcmp.ge.f32.partialorder %v4280, %v4296
        %vm4340 = vcmp.ge.f32.partialorder %v4280, %v4300
        %vm4341 = vcmp.ge.f32.partialorder %v4281, %v4296
        %vm4342 = vcmp.ge.f32.partialorder %v4281, %v4300
        %vm4343 = vcmp.ge.f32.partialorder %v4282, %v4296
        %vm4344 = vcmp.ge.f32.partialorder %v4282, %v4300
        %vm4345 = vcmp.ge.f32.partialorder %v4283, %v4296
        %vm4346 = vcmp.ge.f32.partialorder %v4283, %v4300
        %vm4347 = vcmp.ge.f32.partialorder %v4284, %v4296
        %vm4348 = vcmp.ge.f32.partialorder %v4284, %v4300
        %vm4349 = vcmp.ge.f32.partialorder %v4285, %v4296
        %vm4350 = vcmp.ge.f32.partialorder %v4285, %v4300
        %vm4351 = vcmp.ge.f32.partialorder %v4286, %v4296
        %vm4352 = vcmp.ge.f32.partialorder %v4286, %v4300
        %vm4353 = vcmp.ge.f32.partialorder %v4287, %v4296
        %vm4354 = vcmp.ge.f32.partialorder %v4287, %v4300
        %vm4355 = vcmp.ge.f32.partialorder %v4288, %v4296
        %vm4356 = vcmp.ge.f32.partialorder %v4288, %v4300
        %vm4357 = vcmp.ge.f32.partialorder %v4289, %v4296
        %vm4358 = vcmp.ge.f32.partialorder %v4289, %v4300
        %vm4359 = vcmp.ge.f32.partialorder %v4290, %v4296
        %vm4360 = vcmp.ge.f32.partialorder %v4290, %v4300
        %vm4361 = vcmp.ge.f32.partialorder %v4291, %v4296
        %vm4362 = vcmp.ge.f32.partialorder %v4291, %v4300
        %vm4363 = vcmp.ge.f32.partialorder %v4292, %v4296
        %vm4364 = vcmp.ge.f32.partialorder %v4292, %v4300
        %v4365 = vsel %vm4301, 1, 0
        %v4366 = vsel %vm4302, 1, 0
        %v4367 = vsel %vm4303, 1, 0
        %v4368 = vsel %vm4304, 1, 0
        %v4369 = vsel %vm4305, 1, 0
        %v4370 = vsel %vm4306, 1, 0
        %v4371 = vsel %vm4307, 1, 0
        %v4372 = vsel %vm4308, 1, 0
        %v4373 = vsel %vm4309, 1, 0
        %v4374 = vsel %vm4310, 1, 0
        %v4375 = vsel %vm4311, 1, 0
        %v4376 = vsel %vm4312, 1, 0
        %v4377 = vsel %vm4313, 1, 0
        %v4378 = vsel %vm4314, 1, 0
        %v4379 = vsel %vm4315, 1, 0
        %v4380 = vsel %vm4316, 1, 0
        %v4381 = vsel %vm4317, 1, 0
        %v4382 = vsel %vm4318, 1, 0
        %v4383 = vsel %vm4319, 1, 0
        %v4384 = vsel %vm4320, 1, 0
        %v4385 = vsel %vm4321, 1, 0
        %v4386 = vsel %vm4322, 1, 0
        %v4387 = vsel %vm4323, 1, 0
        %v4388 = vsel %vm4324, 1, 0
        %v4389 = vsel %vm4325, 1, 0
        %v4390 = vsel %vm4326, 1, 0
        %v4391 = vsel %vm4327, 1, 0
        %v4392 = vsel %vm4328, 1, 0
        %v4393 = vsel %vm4329, 1, 0
        %v4394 = vsel %vm4330, 1, 0
        %v4395 = vsel %vm4331, 1, 0
        %v4396 = vsel %vm4332, 1, 0
        %v4397 = vsel %vm4333, 1, 0
        %v4398 = vsel %vm4334, 1, 0
        %v4399 = vsel %vm4335, 1, 0
        %v4400 = vsel %vm4336, 1, 0
        %v4401 = vsel %vm4337, 1, 0
        %v4402 = vsel %vm4338, 1, 0
        %v4403 = vsel %vm4339, 1, 0
        %v4404 = vsel %vm4340, 1, 0
        %v4405 = vsel %vm4341, 1, 0
        %v4406 = vsel %vm4342, 1, 0
        %v4407 = vsel %vm4343, 1, 0
        %v4408 = vsel %vm4344, 1, 0
        %v4409 = vsel %vm4345, 1, 0
        %v4410 = vsel %vm4346, 1, 0
        %v4411 = vsel %vm4347, 1, 0
        %v4412 = vsel %vm4348, 1, 0
        %v4413 = vsel %vm4349, 1, 0
        %v4414 = vsel %vm4350, 1, 0
        %v4415 = vsel %vm4351, 1, 0
        %v4416 = vsel %vm4352, 1, 0
        %v4417 = vsel %vm4353, 1, 0
        %v4418 = vsel %vm4354, 1, 0
        %v4419 = vsel %vm4355, 1, 0
        %v4420 = vsel %vm4356, 1, 0
        %v4421 = vsel %vm4357, 1, 0
        %v4422 = vsel %vm4358, 1, 0
        %v4423 = vsel %vm4359, 1, 0
        %v4424 = vsel %vm4360, 1, 0
        %v4425 = vsel %vm4361, 1, 0
        %v4426 = vsel %vm4362, 1, 0
        %v4427 = vsel %vm4363, 1, 0
        %v4428 = vsel %vm4364, 1, 0
        %v4429 = vcvt.s32.f32 %v4365
        %v4430 = vcvt.s32.f32 %v4366
        %v4431 = vcvt.s32.f32 %v4367
        %v4432 = vcvt.s32.f32 %v4368
        %v4433 = vcvt.s32.f32 %v4369
        %v4434 = vcvt.s32.f32 %v4370
        %v4435 = vcvt.s32.f32 %v4371
        %v4436 = vcvt.s32.f32 %v4372
        %v4437 = vcvt.s32.f32 %v4373
        %v4438 = vcvt.s32.f32 %v4374
        %v4439 = vcvt.s32.f32 %v4375
        %v4440 = vcvt.s32.f32 %v4376
        %v4441 = vcvt.s32.f32 %v4377
        %v4442 = vcvt.s32.f32 %v4378
        %v4443 = vcvt.s32.f32 %v4379
        %v4444 = vcvt.s32.f32 %v4380
        %v4445 = vcvt.s32.f32 %v4381
        %v4446 = vcvt.s32.f32 %v4382
        %v4447 = vcvt.s32.f32 %v4383
        %v4448 = vcvt.s32.f32 %v4384
        %v4449 = vcvt.s32.f32 %v4385
        %v4450 = vcvt.s32.f32 %v4386
        %v4451 = vcvt.s32.f32 %v4387
        %v4452 = vcvt.s32.f32 %v4388
        %v4453 = vcvt.s32.f32 %v4389
        %v4454 = vcvt.s32.f32 %v4390
        %v4455 = vcvt.s32.f32 %v4391
        %v4456 = vcvt.s32.f32 %v4392
        %v4457 = vcvt.s32.f32 %v4393
        %v4458 = vcvt.s32.f32 %v4394
        %v4459 = vcvt.s32.f32 %v4395
        %v4460 = vcvt.s32.f32 %v4396
        %v4461 = vcvt.s32.f32 %v4397
        %v4462 = vcvt.s32.f32 %v4398
        %v4463 = vcvt.s32.f32 %v4399
        %v4464 = vcvt.s32.f32 %v4400
        %v4465 = vcvt.s32.f32 %v4401
        %v4466 = vcvt.s32.f32 %v4402
        %v4467 = vcvt.s32.f32 %v4403
        %v4468 = vcvt.s32.f32 %v4404
        %v4469 = vcvt.s32.f32 %v4405
        %v4470 = vcvt.s32.f32 %v4406
        %v4471 = vcvt.s32.f32 %v4407
        %v4472 = vcvt.s32.f32 %v4408
        %v4473 = vcvt.s32.f32 %v4409
        %v4474 = vcvt.s32.f32 %v4410
        %v4475 = vcvt.s32.f32 %v4411
        %v4476 = vcvt.s32.f32 %v4412
        %v4477 = vcvt.s32.f32 %v4413
        %v4478 = vcvt.s32.f32 %v4414
        %v4479 = vcvt.s32.f32 %v4415
        %v4480 = vcvt.s32.f32 %v4416
        %v4481 = vcvt.s32.f32 %v4417
        %v4482 = vcvt.s32.f32 %v4418
        %v4483 = vcvt.s32.f32 %v4419
        %v4484 = vcvt.s32.f32 %v4420
        %v4485 = vcvt.s32.f32 %v4421
        %v4486 = vcvt.s32.f32 %v4422
        %v4487 = vcvt.s32.f32 %v4423
        %v4488 = vcvt.s32.f32 %v4424
        %v4489 = vcvt.s32.f32 %v4425
        %v4490 = vcvt.s32.f32 %v4426
        %v4491 = vcvt.s32.f32 %v4427
        %v4492 = vcvt.s32.f32 %v4428
        %v4493 = vlaneseq
        %v4494 = vshrl.u32 %v4493, 7
        %v4495 = vsub.s32 1, %v4494
        %v4496 = vrot.slane %v3869, %v4495
        %v4497 = vlaneseq
        %v4498 = vshrl.u32 %v4497, 7
        %v4499 = vsub.s32 1, %v4498
        %v4500 = vrot.slane %v3870, %v4499
        %vm4501 = vcmp.ge.f32.partialorder %v4261, %v4496
        %vm4502 = vcmp.ge.f32.partialorder %v4261, %v4500
        %vm4503 = vcmp.ge.f32.partialorder %v4262, %v4496
        %vm4504 = vcmp.ge.f32.partialorder %v4262, %v4500
        %vm4505 = vcmp.ge.f32.partialorder %v4263, %v4496
        %vm4506 = vcmp.ge.f32.partialorder %v4263, %v4500
        %vm4507 = vcmp.ge.f32.partialorder %v4264, %v4496
        %vm4508 = vcmp.ge.f32.partialorder %v4264, %v4500
        %vm4509 = vcmp.ge.f32.partialorder %v4265, %v4496
        %vm4510 = vcmp.ge.f32.partialorder %v4265, %v4500
        %vm4511 = vcmp.ge.f32.partialorder %v4266, %v4496
        %vm4512 = vcmp.ge.f32.partialorder %v4266, %v4500
        %vm4513 = vcmp.ge.f32.partialorder %v4267, %v4496
        %vm4514 = vcmp.ge.f32.partialorder %v4267, %v4500
        %vm4515 = vcmp.ge.f32.partialorder %v4268, %v4496
        %vm4516 = vcmp.ge.f32.partialorder %v4268, %v4500
        %vm4517 = vcmp.ge.f32.partialorder %v4269, %v4496
        %vm4518 = vcmp.ge.f32.partialorder %v4269, %v4500
        %vm4519 = vcmp.ge.f32.partialorder %v4270, %v4496
        %vm4520 = vcmp.ge.f32.partialorder %v4270, %v4500
        %vm4521 = vcmp.ge.f32.partialorder %v4271, %v4496
        %vm4522 = vcmp.ge.f32.partialorder %v4271, %v4500
        %vm4523 = vcmp.ge.f32.partialorder %v4272, %v4496
        %vm4524 = vcmp.ge.f32.partialorder %v4272, %v4500
        %vm4525 = vcmp.ge.f32.partialorder %v4273, %v4496
        %vm4526 = vcmp.ge.f32.partialorder %v4273, %v4500
        %vm4527 = vcmp.ge.f32.partialorder %v4274, %v4496
        %vm4528 = vcmp.ge.f32.partialorder %v4274, %v4500
        %vm4529 = vcmp.ge.f32.partialorder %v4275, %v4496
        %vm4530 = vcmp.ge.f32.partialorder %v4275, %v4500
        %vm4531 = vcmp.ge.f32.partialorder %v4276, %v4496
        %vm4532 = vcmp.ge.f32.partialorder %v4276, %v4500
        %vm4533 = vcmp.ge.f32.partialorder %v4277, %v4496
        %vm4534 = vcmp.ge.f32.partialorder %v4277, %v4500
        %vm4535 = vcmp.ge.f32.partialorder %v4278, %v4496
        %vm4536 = vcmp.ge.f32.partialorder %v4278, %v4500
        %vm4537 = vcmp.ge.f32.partialorder %v4279, %v4496
        %vm4538 = vcmp.ge.f32.partialorder %v4279, %v4500
        %vm4539 = vcmp.ge.f32.partialorder %v4280, %v4496
        %vm4540 = vcmp.ge.f32.partialorder %v4280, %v4500
        %vm4541 = vcmp.ge.f32.partialorder %v4281, %v4496
        %vm4542 = vcmp.ge.f32.partialorder %v4281, %v4500
        %vm4543 = vcmp.ge.f32.partialorder %v4282, %v4496
        %vm4544 = vcmp.ge.f32.partialorder %v4282, %v4500
        %vm4545 = vcmp.ge.f32.partialorder %v4283, %v4496
        %vm4546 = vcmp.ge.f32.partialorder %v4283, %v4500
        %vm4547 = vcmp.ge.f32.partialorder %v4284, %v4496
        %vm4548 = vcmp.ge.f32.partialorder %v4284, %v4500
        %vm4549 = vcmp.ge.f32.partialorder %v4285, %v4496
        %vm4550 = vcmp.ge.f32.partialorder %v4285, %v4500
        %vm4551 = vcmp.ge.f32.partialorder %v4286, %v4496
        %vm4552 = vcmp.ge.f32.partialorder %v4286, %v4500
        %vm4553 = vcmp.ge.f32.partialorder %v4287, %v4496
        %vm4554 = vcmp.ge.f32.partialorder %v4287, %v4500
        %vm4555 = vcmp.ge.f32.partialorder %v4288, %v4496
        %vm4556 = vcmp.ge.f32.partialorder %v4288, %v4500
        %vm4557 = vcmp.ge.f32.partialorder %v4289, %v4496
        %vm4558 = vcmp.ge.f32.partialorder %v4289, %v4500
        %vm4559 = vcmp.ge.f32.partialorder %v4290, %v4496
        %vm4560 = vcmp.ge.f32.partialorder %v4290, %v4500
        %vm4561 = vcmp.ge.f32.partialorder %v4291, %v4496
        %vm4562 = vcmp.ge.f32.partialorder %v4291, %v4500
        %vm4563 = vcmp.ge.f32.partialorder %v4292, %v4496
        %vm4564 = vcmp.ge.f32.partialorder %v4292, %v4500
        %v4565 = vsel %vm4501, 1, 0
        %v4566 = vsel %vm4502, 1, 0
        %v4567 = vsel %vm4503, 1, 0
        %v4568 = vsel %vm4504, 1, 0
        %v4569 = vsel %vm4505, 1, 0
        %v4570 = vsel %vm4506, 1, 0
        %v4571 = vsel %vm4507, 1, 0
        %v4572 = vsel %vm4508, 1, 0
        %v4573 = vsel %vm4509, 1, 0
        %v4574 = vsel %vm4510, 1, 0
        %v4575 = vsel %vm4511, 1, 0
        %v4576 = vsel %vm4512, 1, 0
        %v4577 = vsel %vm4513, 1, 0
        %v4578 = vsel %vm4514, 1, 0
        %v4579 = vsel %vm4515, 1, 0
        %v4580 = vsel %vm4516, 1, 0
        %v4581 = vsel %vm4517, 1, 0
        %v4582 = vsel %vm4518, 1, 0
        %v4583 = vsel %vm4519, 1, 0
        %v4584 = vsel %vm4520, 1, 0
        %v4585 = vsel %vm4521, 1, 0
        %v4586 = vsel %vm4522, 1, 0
        %v4587 = vsel %vm4523, 1, 0
        %v4588 = vsel %vm4524, 1, 0
        %v4589 = vsel %vm4525, 1, 0
        %v4590 = vsel %vm4526, 1, 0
        %v4591 = vsel %vm4527, 1, 0
        %v4592 = vsel %vm4528, 1, 0
        %v4593 = vsel %vm4529, 1, 0
        %v4594 = vsel %vm4530, 1, 0
        %v4595 = vsel %vm4531, 1, 0
        %v4596 = vsel %vm4532, 1, 0
        %v4597 = vsel %vm4533, 1, 0
        %v4598 = vsel %vm4534, 1, 0
        %v4599 = vsel %vm4535, 1, 0
        %v4600 = vsel %vm4536, 1, 0
        %v4601 = vsel %vm4537, 1, 0
        %v4602 = vsel %vm4538, 1, 0
        %v4603 = vsel %vm4539, 1, 0
        %v4604 = vsel %vm4540, 1, 0
        %v4605 = vsel %vm4541, 1, 0
        %v4606 = vsel %vm4542, 1, 0
        %v4607 = vsel %vm4543, 1, 0
        %v4608 = vsel %vm4544, 1, 0
        %v4609 = vsel %vm4545, 1, 0
        %v4610 = vsel %vm4546, 1, 0
        %v4611 = vsel %vm4547, 1, 0
        %v4612 = vsel %vm4548, 1, 0
        %v4613 = vsel %vm4549, 1, 0
        %v4614 = vsel %vm4550, 1, 0
        %v4615 = vsel %vm4551, 1, 0
        %v4616 = vsel %vm4552, 1, 0
        %v4617 = vsel %vm4553, 1, 0
        %v4618 = vsel %vm4554, 1, 0
        %v4619 = vsel %vm4555, 1, 0
        %v4620 = vsel %vm4556, 1, 0
        %v4621 = vsel %vm4557, 1, 0
        %v4622 = vsel %vm4558, 1, 0
        %v4623 = vsel %vm4559, 1, 0
        %v4624 = vsel %vm4560, 1, 0
        %v4625 = vsel %vm4561, 1, 0
        %v4626 = vsel %vm4562, 1, 0
        %v4627 = vsel %vm4563, 1, 0
        %v4628 = vsel %vm4564, 1, 0
        %v4629 = vcvt.s32.f32 %v4565
        %v4630 = vcvt.s32.f32 %v4566
        %v4631 = vcvt.s32.f32 %v4567
        %v4632 = vcvt.s32.f32 %v4568
        %v4633 = vcvt.s32.f32 %v4569
        %v4634 = vcvt.s32.f32 %v4570
        %v4635 = vcvt.s32.f32 %v4571
        %v4636 = vcvt.s32.f32 %v4572
        %v4637 = vcvt.s32.f32 %v4573
        %v4638 = vcvt.s32.f32 %v4574
        %v4639 = vcvt.s32.f32 %v4575
        %v4640 = vcvt.s32.f32 %v4576
        %v4641 = vcvt.s32.f32 %v4577
        %v4642 = vcvt.s32.f32 %v4578
        %v4643 = vcvt.s32.f32 %v4579
        %v4644 = vcvt.s32.f32 %v4580
        %v4645 = vcvt.s32.f32 %v4581
        %v4646 = vcvt.s32.f32 %v4582
        %v4647 = vcvt.s32.f32 %v4583
        %v4648 = vcvt.s32.f32 %v4584
        %v4649 = vcvt.s32.f32 %v4585
        %v4650 = vcvt.s32.f32 %v4586
        %v4651 = vcvt.s32.f32 %v4587
        %v4652 = vcvt.s32.f32 %v4588
        %v4653 = vcvt.s32.f32 %v4589
        %v4654 = vcvt.s32.f32 %v4590
        %v4655 = vcvt.s32.f32 %v4591
        %v4656 = vcvt.s32.f32 %v4592
        %v4657 = vcvt.s32.f32 %v4593
        %v4658 = vcvt.s32.f32 %v4594
        %v4659 = vcvt.s32.f32 %v4595
        %v4660 = vcvt.s32.f32 %v4596
        %v4661 = vcvt.s32.f32 %v4597
        %v4662 = vcvt.s32.f32 %v4598
        %v4663 = vcvt.s32.f32 %v4599
        %v4664 = vcvt.s32.f32 %v4600
        %v4665 = vcvt.s32.f32 %v4601
        %v4666 = vcvt.s32.f32 %v4602
        %v4667 = vcvt.s32.f32 %v4603
        %v4668 = vcvt.s32.f32 %v4604
        %v4669 = vcvt.s32.f32 %v4605
        %v4670 = vcvt.s32.f32 %v4606
        %v4671 = vcvt.s32.f32 %v4607
        %v4672 = vcvt.s32.f32 %v4608
        %v4673 = vcvt.s32.f32 %v4609
        %v4674 = vcvt.s32.f32 %v4610
        %v4675 = vcvt.s32.f32 %v4611
        %v4676 = vcvt.s32.f32 %v4612
        %v4677 = vcvt.s32.f32 %v4613
        %v4678 = vcvt.s32.f32 %v4614
        %v4679 = vcvt.s32.f32 %v4615
        %v4680 = vcvt.s32.f32 %v4616
        %v4681 = vcvt.s32.f32 %v4617
        %v4682 = vcvt.s32.f32 %v4618
        %v4683 = vcvt.s32.f32 %v4619
        %v4684 = vcvt.s32.f32 %v4620
        %v4685 = vcvt.s32.f32 %v4621
        %v4686 = vcvt.s32.f32 %v4622
        %v4687 = vcvt.s32.f32 %v4623
        %v4688 = vcvt.s32.f32 %v4624
        %v4689 = vcvt.s32.f32 %v4625
        %v4690 = vcvt.s32.f32 %v4626
        %v4691 = vcvt.s32.f32 %v4627
        %v4692 = vcvt.s32.f32 %v4628
        %v4693 = vlaneseq
        %v4694 = vshrl.u32 %v4693, 7
        %v4695 = vsub.s32 2, %v4694
        %v4696 = vrot.slane %v3869, %v4695
        %v4697 = vlaneseq
        %v4698 = vshrl.u32 %v4697, 7
        %v4699 = vsub.s32 2, %v4698
        %v4700 = vrot.slane %v3870, %v4699
        %vm4701 = vcmp.ge.f32.partialorder %v4261, %v4696
        %vm4702 = vcmp.ge.f32.partialorder %v4261, %v4700
        %vm4703 = vcmp.ge.f32.partialorder %v4262, %v4696
        %vm4704 = vcmp.ge.f32.partialorder %v4262, %v4700
        %vm4705 = vcmp.ge.f32.partialorder %v4263, %v4696
        %vm4706 = vcmp.ge.f32.partialorder %v4263, %v4700
        %vm4707 = vcmp.ge.f32.partialorder %v4264, %v4696
        %vm4708 = vcmp.ge.f32.partialorder %v4264, %v4700
        %vm4709 = vcmp.ge.f32.partialorder %v4265, %v4696
        %vm4710 = vcmp.ge.f32.partialorder %v4265, %v4700
        %vm4711 = vcmp.ge.f32.partialorder %v4266, %v4696
        %vm4712 = vcmp.ge.f32.partialorder %v4266, %v4700
        %vm4713 = vcmp.ge.f32.partialorder %v4267, %v4696
        %vm4714 = vcmp.ge.f32.partialorder %v4267, %v4700
        %vm4715 = vcmp.ge.f32.partialorder %v4268, %v4696
        %vm4716 = vcmp.ge.f32.partialorder %v4268, %v4700
        %vm4717 = vcmp.ge.f32.partialorder %v4269, %v4696
        %vm4718 = vcmp.ge.f32.partialorder %v4269, %v4700
        %vm4719 = vcmp.ge.f32.partialorder %v4270, %v4696
        %vm4720 = vcmp.ge.f32.partialorder %v4270, %v4700
        %vm4721 = vcmp.ge.f32.partialorder %v4271, %v4696
        %vm4722 = vcmp.ge.f32.partialorder %v4271, %v4700
        %vm4723 = vcmp.ge.f32.partialorder %v4272, %v4696
        %vm4724 = vcmp.ge.f32.partialorder %v4272, %v4700
        %vm4725 = vcmp.ge.f32.partialorder %v4273, %v4696
        %vm4726 = vcmp.ge.f32.partialorder %v4273, %v4700
        %vm4727 = vcmp.ge.f32.partialorder %v4274, %v4696
        %vm4728 = vcmp.ge.f32.partialorder %v4274, %v4700
        %vm4729 = vcmp.ge.f32.partialorder %v4275, %v4696
        %vm4730 = vcmp.ge.f32.partialorder %v4275, %v4700
        %vm4731 = vcmp.ge.f32.partialorder %v4276, %v4696
        %vm4732 = vcmp.ge.f32.partialorder %v4276, %v4700
        %vm4733 = vcmp.ge.f32.partialorder %v4277, %v4696
        %vm4734 = vcmp.ge.f32.partialorder %v4277, %v4700
        %vm4735 = vcmp.ge.f32.partialorder %v4278, %v4696
        %vm4736 = vcmp.ge.f32.partialorder %v4278, %v4700
        %vm4737 = vcmp.ge.f32.partialorder %v4279, %v4696
        %vm4738 = vcmp.ge.f32.partialorder %v4279, %v4700
        %vm4739 = vcmp.ge.f32.partialorder %v4280, %v4696
        %vm4740 = vcmp.ge.f32.partialorder %v4280, %v4700
        %vm4741 = vcmp.ge.f32.partialorder %v4281, %v4696
        %vm4742 = vcmp.ge.f32.partialorder %v4281, %v4700
        %vm4743 = vcmp.ge.f32.partialorder %v4282, %v4696
        %vm4744 = vcmp.ge.f32.partialorder %v4282, %v4700
        %vm4745 = vcmp.ge.f32.partialorder %v4283, %v4696
        %vm4746 = vcmp.ge.f32.partialorder %v4283, %v4700
        %vm4747 = vcmp.ge.f32.partialorder %v4284, %v4696
        %vm4748 = vcmp.ge.f32.partialorder %v4284, %v4700
        %vm4749 = vcmp.ge.f32.partialorder %v4285, %v4696
        %vm4750 = vcmp.ge.f32.partialorder %v4285, %v4700
        %vm4751 = vcmp.ge.f32.partialorder %v4286, %v4696
        %vm4752 = vcmp.ge.f32.partialorder %v4286, %v4700
        %vm4753 = vcmp.ge.f32.partialorder %v4287, %v4696
        %vm4754 = vcmp.ge.f32.partialorder %v4287, %v4700
        %vm4755 = vcmp.ge.f32.partialorder %v4288, %v4696
        %vm4756 = vcmp.ge.f32.partialorder %v4288, %v4700
        %vm4757 = vcmp.ge.f32.partialorder %v4289, %v4696
        %vm4758 = vcmp.ge.f32.partialorder %v4289, %v4700
        %vm4759 = vcmp.ge.f32.partialorder %v4290, %v4696
        %vm4760 = vcmp.ge.f32.partialorder %v4290, %v4700
        %vm4761 = vcmp.ge.f32.partialorder %v4291, %v4696
        %vm4762 = vcmp.ge.f32.partialorder %v4291, %v4700
        %vm4763 = vcmp.ge.f32.partialorder %v4292, %v4696
        %vm4764 = vcmp.ge.f32.partialorder %v4292, %v4700
        %v4765 = vsel %vm4701, 1, 0
        %v4766 = vsel %vm4702, 1, 0
        %v4767 = vsel %vm4703, 1, 0
        %v4768 = vsel %vm4704, 1, 0
        %v4769 = vsel %vm4705, 1, 0
        %v4770 = vsel %vm4706, 1, 0
        %v4771 = vsel %vm4707, 1, 0
        %v4772 = vsel %vm4708, 1, 0
        %v4773 = vsel %vm4709, 1, 0
        %v4774 = vsel %vm4710, 1, 0
        %v4775 = vsel %vm4711, 1, 0
        %v4776 = vsel %vm4712, 1, 0
        %v4777 = vsel %vm4713, 1, 0
        %v4778 = vsel %vm4714, 1, 0
        %v4779 = vsel %vm4715, 1, 0
        %v4780 = vsel %vm4716, 1, 0
        %v4781 = vsel %vm4717, 1, 0
        %v4782 = vsel %vm4718, 1, 0
        %v4783 = vsel %vm4719, 1, 0
        %v4784 = vsel %vm4720, 1, 0
        %v4785 = vsel %vm4721, 1, 0
        %v4786 = vsel %vm4722, 1, 0
        %v4787 = vsel %vm4723, 1, 0
        %v4788 = vsel %vm4724, 1, 0
        %v4789 = vsel %vm4725, 1, 0
        %v4790 = vsel %vm4726, 1, 0
        %v4791 = vsel %vm4727, 1, 0
        %v4792 = vsel %vm4728, 1, 0
        %v4793 = vsel %vm4729, 1, 0
        %v4794 = vsel %vm4730, 1, 0
        %v4795 = vsel %vm4731, 1, 0
        %v4796 = vsel %vm4732, 1, 0
        %v4797 = vsel %vm4733, 1, 0
        %v4798 = vsel %vm4734, 1, 0
        %v4799 = vsel %vm4735, 1, 0
        %v4800 = vsel %vm4736, 1, 0
        %v4801 = vsel %vm4737, 1, 0
        %v4802 = vsel %vm4738, 1, 0
        %v4803 = vsel %vm4739, 1, 0
        %v4804 = vsel %vm4740, 1, 0
        %v4805 = vsel %vm4741, 1, 0
        %v4806 = vsel %vm4742, 1, 0
        %v4807 = vsel %vm4743, 1, 0
        %v4808 = vsel %vm4744, 1, 0
        %v4809 = vsel %vm4745, 1, 0
        %v4810 = vsel %vm4746, 1, 0
        %v4811 = vsel %vm4747, 1, 0
        %v4812 = vsel %vm4748, 1, 0
        %v4813 = vsel %vm4749, 1, 0
        %v4814 = vsel %vm4750, 1, 0
        %v4815 = vsel %vm4751, 1, 0
        %v4816 = vsel %vm4752, 1, 0
        %v4817 = vsel %vm4753, 1, 0
        %v4818 = vsel %vm4754, 1, 0
        %v4819 = vsel %vm4755, 1, 0
        %v4820 = vsel %vm4756, 1, 0
        %v4821 = vsel %vm4757, 1, 0
        %v4822 = vsel %vm4758, 1, 0
        %v4823 = vsel %vm4759, 1, 0
        %v4824 = vsel %vm4760, 1, 0
        %v4825 = vsel %vm4761, 1, 0
        %v4826 = vsel %vm4762, 1, 0
        %v4827 = vsel %vm4763, 1, 0
        %v4828 = vsel %vm4764, 1, 0
        %v4829 = vcvt.s32.f32 %v4765
        %v4830 = vcvt.s32.f32 %v4766
        %v4831 = vcvt.s32.f32 %v4767
        %v4832 = vcvt.s32.f32 %v4768
        %v4833 = vcvt.s32.f32 %v4769
        %v4834 = vcvt.s32.f32 %v4770
        %v4835 = vcvt.s32.f32 %v4771
        %v4836 = vcvt.s32.f32 %v4772
        %v4837 = vcvt.s32.f32 %v4773
        %v4838 = vcvt.s32.f32 %v4774
        %v4839 = vcvt.s32.f32 %v4775
        %v4840 = vcvt.s32.f32 %v4776
        %v4841 = vcvt.s32.f32 %v4777
        %v4842 = vcvt.s32.f32 %v4778
        %v4843 = vcvt.s32.f32 %v4779
        %v4844 = vcvt.s32.f32 %v4780
        %v4845 = vcvt.s32.f32 %v4781
        %v4846 = vcvt.s32.f32 %v4782
        %v4847 = vcvt.s32.f32 %v4783
        %v4848 = vcvt.s32.f32 %v4784
        %v4849 = vcvt.s32.f32 %v4785
        %v4850 = vcvt.s32.f32 %v4786
        %v4851 = vcvt.s32.f32 %v4787
        %v4852 = vcvt.s32.f32 %v4788
        %v4853 = vcvt.s32.f32 %v4789
        %v4854 = vcvt.s32.f32 %v4790
        %v4855 = vcvt.s32.f32 %v4791
        %v4856 = vcvt.s32.f32 %v4792
        %v4857 = vcvt.s32.f32 %v4793
        %v4858 = vcvt.s32.f32 %v4794
        %v4859 = vcvt.s32.f32 %v4795
        %v4860 = vcvt.s32.f32 %v4796
        %v4861 = vcvt.s32.f32 %v4797
        %v4862 = vcvt.s32.f32 %v4798
        %v4863 = vcvt.s32.f32 %v4799
        %v4864 = vcvt.s32.f32 %v4800
        %v4865 = vcvt.s32.f32 %v4801
        %v4866 = vcvt.s32.f32 %v4802
        %v4867 = vcvt.s32.f32 %v4803
        %v4868 = vcvt.s32.f32 %v4804
        %v4869 = vcvt.s32.f32 %v4805
        %v4870 = vcvt.s32.f32 %v4806
        %v4871 = vcvt.s32.f32 %v4807
        %v4872 = vcvt.s32.f32 %v4808
        %v4873 = vcvt.s32.f32 %v4809
        %v4874 = vcvt.s32.f32 %v4810
        %v4875 = vcvt.s32.f32 %v4811
        %v4876 = vcvt.s32.f32 %v4812
        %v4877 = vcvt.s32.f32 %v4813
        %v4878 = vcvt.s32.f32 %v4814
        %v4879 = vcvt.s32.f32 %v4815
        %v4880 = vcvt.s32.f32 %v4816
        %v4881 = vcvt.s32.f32 %v4817
        %v4882 = vcvt.s32.f32 %v4818
        %v4883 = vcvt.s32.f32 %v4819
        %v4884 = vcvt.s32.f32 %v4820
        %v4885 = vcvt.s32.f32 %v4821
        %v4886 = vcvt.s32.f32 %v4822
        %v4887 = vcvt.s32.f32 %v4823
        %v4888 = vcvt.s32.f32 %v4824
        %v4889 = vcvt.s32.f32 %v4825
        %v4890 = vcvt.s32.f32 %v4826
        %v4891 = vcvt.s32.f32 %v4827
        %v4892 = vcvt.s32.f32 %v4828
        %v4893 = vlaneseq
        %v4894 = vshrl.u32 %v4893, 7
        %v4895 = vsub.s32 3, %v4894
        %v4896 = vrot.slane %v3869, %v4895
        %v4897 = vlaneseq
        %v4898 = vshrl.u32 %v4897, 7
        %v4899 = vsub.s32 3, %v4898
        %v4900 = vrot.slane %v3870, %v4899
        %vm4901 = vcmp.ge.f32.partialorder %v4261, %v4896
        %vm4902 = vcmp.ge.f32.partialorder %v4261, %v4900
        %vm4903 = vcmp.ge.f32.partialorder %v4262, %v4896
        %vm4904 = vcmp.ge.f32.partialorder %v4262, %v4900
        %vm4905 = vcmp.ge.f32.partialorder %v4263, %v4896
        %vm4906 = vcmp.ge.f32.partialorder %v4263, %v4900
        %vm4907 = vcmp.ge.f32.partialorder %v4264, %v4896
        %vm4908 = vcmp.ge.f32.partialorder %v4264, %v4900
        %vm4909 = vcmp.ge.f32.partialorder %v4265, %v4896
        %vm4910 = vcmp.ge.f32.partialorder %v4265, %v4900
        %vm4911 = vcmp.ge.f32.partialorder %v4266, %v4896
        %vm4912 = vcmp.ge.f32.partialorder %v4266, %v4900
        %vm4913 = vcmp.ge.f32.partialorder %v4267, %v4896
        %vm4914 = vcmp.ge.f32.partialorder %v4267, %v4900
        %vm4915 = vcmp.ge.f32.partialorder %v4268, %v4896
        %vm4916 = vcmp.ge.f32.partialorder %v4268, %v4900
        %vm4917 = vcmp.ge.f32.partialorder %v4269, %v4896
        %vm4918 = vcmp.ge.f32.partialorder %v4269, %v4900
        %vm4919 = vcmp.ge.f32.partialorder %v4270, %v4896
        %vm4920 = vcmp.ge.f32.partialorder %v4270, %v4900
        %vm4921 = vcmp.ge.f32.partialorder %v4271, %v4896
        %vm4922 = vcmp.ge.f32.partialorder %v4271, %v4900
        %vm4923 = vcmp.ge.f32.partialorder %v4272, %v4896
        %vm4924 = vcmp.ge.f32.partialorder %v4272, %v4900
        %vm4925 = vcmp.ge.f32.partialorder %v4273, %v4896
        %vm4926 = vcmp.ge.f32.partialorder %v4273, %v4900
        %vm4927 = vcmp.ge.f32.partialorder %v4274, %v4896
        %vm4928 = vcmp.ge.f32.partialorder %v4274, %v4900
        %vm4929 = vcmp.ge.f32.partialorder %v4275, %v4896
        %vm4930 = vcmp.ge.f32.partialorder %v4275, %v4900
        %vm4931 = vcmp.ge.f32.partialorder %v4276, %v4896
        %vm4932 = vcmp.ge.f32.partialorder %v4276, %v4900
        %vm4933 = vcmp.ge.f32.partialorder %v4277, %v4896
        %vm4934 = vcmp.ge.f32.partialorder %v4277, %v4900
        %vm4935 = vcmp.ge.f32.partialorder %v4278, %v4896
        %vm4936 = vcmp.ge.f32.partialorder %v4278, %v4900
        %vm4937 = vcmp.ge.f32.partialorder %v4279, %v4896
        %vm4938 = vcmp.ge.f32.partialorder %v4279, %v4900
        %vm4939 = vcmp.ge.f32.partialorder %v4280, %v4896
        %vm4940 = vcmp.ge.f32.partialorder %v4280, %v4900
        %vm4941 = vcmp.ge.f32.partialorder %v4281, %v4896
        %vm4942 = vcmp.ge.f32.partialorder %v4281, %v4900
        %vm4943 = vcmp.ge.f32.partialorder %v4282, %v4896
        %vm4944 = vcmp.ge.f32.partialorder %v4282, %v4900
        %vm4945 = vcmp.ge.f32.partialorder %v4283, %v4896
        %vm4946 = vcmp.ge.f32.partialorder %v4283, %v4900
        %vm4947 = vcmp.ge.f32.partialorder %v4284, %v4896
        %vm4948 = vcmp.ge.f32.partialorder %v4284, %v4900
        %vm4949 = vcmp.ge.f32.partialorder %v4285, %v4896
        %vm4950 = vcmp.ge.f32.partialorder %v4285, %v4900
        %vm4951 = vcmp.ge.f32.partialorder %v4286, %v4896
        %vm4952 = vcmp.ge.f32.partialorder %v4286, %v4900
        %vm4953 = vcmp.ge.f32.partialorder %v4287, %v4896
        %vm4954 = vcmp.ge.f32.partialorder %v4287, %v4900
        %vm4955 = vcmp.ge.f32.partialorder %v4288, %v4896
        %vm4956 = vcmp.ge.f32.partialorder %v4288, %v4900
        %vm4957 = vcmp.ge.f32.partialorder %v4289, %v4896
        %vm4958 = vcmp.ge.f32.partialorder %v4289, %v4900
        %vm4959 = vcmp.ge.f32.partialorder %v4290, %v4896
        %vm4960 = vcmp.ge.f32.partialorder %v4290, %v4900
        %vm4961 = vcmp.ge.f32.partialorder %v4291, %v4896
        %vm4962 = vcmp.ge.f32.partialorder %v4291, %v4900
        %vm4963 = vcmp.ge.f32.partialorder %v4292, %v4896
        %vm4964 = vcmp.ge.f32.partialorder %v4292, %v4900
        %v4965 = vsel %vm4901, 1, 0
        %v4966 = vsel %vm4902, 1, 0
        %v4967 = vsel %vm4903, 1, 0
        %v4968 = vsel %vm4904, 1, 0
        %v4969 = vsel %vm4905, 1, 0
        %v4970 = vsel %vm4906, 1, 0
        %v4971 = vsel %vm4907, 1, 0
        %v4972 = vsel %vm4908, 1, 0
        %v4973 = vsel %vm4909, 1, 0
        %v4974 = vsel %vm4910, 1, 0
        %v4975 = vsel %vm4911, 1, 0
        %v4976 = vsel %vm4912, 1, 0
        %v4977 = vsel %vm4913, 1, 0
        %v4978 = vsel %vm4914, 1, 0
        %v4979 = vsel %vm4915, 1, 0
        %v4980 = vsel %vm4916, 1, 0
        %v4981 = vsel %vm4917, 1, 0
        %v4982 = vsel %vm4918, 1, 0
        %v4983 = vsel %vm4919, 1, 0
        %v4984 = vsel %vm4920, 1, 0
        %v4985 = vsel %vm4921, 1, 0
        %v4986 = vsel %vm4922, 1, 0
        %v4987 = vsel %vm4923, 1, 0
        %v4988 = vsel %vm4924, 1, 0
        %v4989 = vsel %vm4925, 1, 0
        %v4990 = vsel %vm4926, 1, 0
        %v4991 = vsel %vm4927, 1, 0
        %v4992 = vsel %vm4928, 1, 0
        %v4993 = vsel %vm4929, 1, 0
        %v4994 = vsel %vm4930, 1, 0
        %v4995 = vsel %vm4931, 1, 0
        %v4996 = vsel %vm4932, 1, 0
        %v4997 = vsel %vm4933, 1, 0
        %v4998 = vsel %vm4934, 1, 0
        %v4999 = vsel %vm4935, 1, 0
        %v5000 = vsel %vm4936, 1, 0
        %v5001 = vsel %vm4937, 1, 0
        %v5002 = vsel %vm4938, 1, 0
        %v5003 = vsel %vm4939, 1, 0
        %v5004 = vsel %vm4940, 1, 0
        %v5005 = vsel %vm4941, 1, 0
        %v5006 = vsel %vm4942, 1, 0
        %v5007 = vsel %vm4943, 1, 0
        %v5008 = vsel %vm4944, 1, 0
        %v5009 = vsel %vm4945, 1, 0
        %v5010 = vsel %vm4946, 1, 0
        %v5011 = vsel %vm4947, 1, 0
        %v5012 = vsel %vm4948, 1, 0
        %v5013 = vsel %vm4949, 1, 0
        %v5014 = vsel %vm4950, 1, 0
        %v5015 = vsel %vm4951, 1, 0
        %v5016 = vsel %vm4952, 1, 0
        %v5017 = vsel %vm4953, 1, 0
        %v5018 = vsel %vm4954, 1, 0
        %v5019 = vsel %vm4955, 1, 0
        %v5020 = vsel %vm4956, 1, 0
        %v5021 = vsel %vm4957, 1, 0
        %v5022 = vsel %vm4958, 1, 0
        %v5023 = vsel %vm4959, 1, 0
        %v5024 = vsel %vm4960, 1, 0
        %v5025 = vsel %vm4961, 1, 0
        %v5026 = vsel %vm4962, 1, 0
        %v5027 = vsel %vm4963, 1, 0
        %v5028 = vsel %vm4964, 1, 0
        %v5029 = vcvt.s32.f32 %v4965
        %v5030 = vcvt.s32.f32 %v4966
        %v5031 = vcvt.s32.f32 %v4967
        %v5032 = vcvt.s32.f32 %v4968
        %v5033 = vcvt.s32.f32 %v4969
        %v5034 = vcvt.s32.f32 %v4970
        %v5035 = vcvt.s32.f32 %v4971
        %v5036 = vcvt.s32.f32 %v4972
        %v5037 = vcvt.s32.f32 %v4973
        %v5038 = vcvt.s32.f32 %v4974
        %v5039 = vcvt.s32.f32 %v4975
        %v5040 = vcvt.s32.f32 %v4976
        %v5041 = vcvt.s32.f32 %v4977
        %v5042 = vcvt.s32.f32 %v4978
        %v5043 = vcvt.s32.f32 %v4979
        %v5044 = vcvt.s32.f32 %v4980
        %v5045 = vcvt.s32.f32 %v4981
        %v5046 = vcvt.s32.f32 %v4982
        %v5047 = vcvt.s32.f32 %v4983
        %v5048 = vcvt.s32.f32 %v4984
        %v5049 = vcvt.s32.f32 %v4985
        %v5050 = vcvt.s32.f32 %v4986
        %v5051 = vcvt.s32.f32 %v4987
        %v5052 = vcvt.s32.f32 %v4988
        %v5053 = vcvt.s32.f32 %v4989
        %v5054 = vcvt.s32.f32 %v4990
        %v5055 = vcvt.s32.f32 %v4991
        %v5056 = vcvt.s32.f32 %v4992
        %v5057 = vcvt.s32.f32 %v4993
        %v5058 = vcvt.s32.f32 %v4994
        %v5059 = vcvt.s32.f32 %v4995
        %v5060 = vcvt.s32.f32 %v4996
        %v5061 = vcvt.s32.f32 %v4997
        %v5062 = vcvt.s32.f32 %v4998
        %v5063 = vcvt.s32.f32 %v4999
        %v5064 = vcvt.s32.f32 %v5000
        %v5065 = vcvt.s32.f32 %v5001
        %v5066 = vcvt.s32.f32 %v5002
        %v5067 = vcvt.s32.f32 %v5003
        %v5068 = vcvt.s32.f32 %v5004
        %v5069 = vcvt.s32.f32 %v5005
        %v5070 = vcvt.s32.f32 %v5006
        %v5071 = vcvt.s32.f32 %v5007
        %v5072 = vcvt.s32.f32 %v5008
        %v5073 = vcvt.s32.f32 %v5009
        %v5074 = vcvt.s32.f32 %v5010
        %v5075 = vcvt.s32.f32 %v5011
        %v5076 = vcvt.s32.f32 %v5012
        %v5077 = vcvt.s32.f32 %v5013
        %v5078 = vcvt.s32.f32 %v5014
        %v5079 = vcvt.s32.f32 %v5015
        %v5080 = vcvt.s32.f32 %v5016
        %v5081 = vcvt.s32.f32 %v5017
        %v5082 = vcvt.s32.f32 %v5018
        %v5083 = vcvt.s32.f32 %v5019
        %v5084 = vcvt.s32.f32 %v5020
        %v5085 = vcvt.s32.f32 %v5021
        %v5086 = vcvt.s32.f32 %v5022
        %v5087 = vcvt.s32.f32 %v5023
        %v5088 = vcvt.s32.f32 %v5024
        %v5089 = vcvt.s32.f32 %v5025
        %v5090 = vcvt.s32.f32 %v5026
        %v5091 = vcvt.s32.f32 %v5027
        %v5092 = vcvt.s32.f32 %v5028
        %v5093 = vlaneseq
        %v5094 = vshrl.u32 %v5093, 7
        %v5095 = vsub.s32 4, %v5094
        %v5096 = vrot.slane %v3869, %v5095
        %v5097 = vlaneseq
        %v5098 = vshrl.u32 %v5097, 7
        %v5099 = vsub.s32 4, %v5098
        %v5100 = vrot.slane %v3870, %v5099
        %vm5101 = vcmp.ge.f32.partialorder %v4261, %v5096
        %vm5102 = vcmp.ge.f32.partialorder %v4261, %v5100
        %vm5103 = vcmp.ge.f32.partialorder %v4262, %v5096
        %vm5104 = vcmp.ge.f32.partialorder %v4262, %v5100
        %vm5105 = vcmp.ge.f32.partialorder %v4263, %v5096
        %vm5106 = vcmp.ge.f32.partialorder %v4263, %v5100
        %vm5107 = vcmp.ge.f32.partialorder %v4264, %v5096
        %vm5108 = vcmp.ge.f32.partialorder %v4264, %v5100
        %vm5109 = vcmp.ge.f32.partialorder %v4265, %v5096
        %vm5110 = vcmp.ge.f32.partialorder %v4265, %v5100
        %vm5111 = vcmp.ge.f32.partialorder %v4266, %v5096
        %vm5112 = vcmp.ge.f32.partialorder %v4266, %v5100
        %vm5113 = vcmp.ge.f32.partialorder %v4267, %v5096
        %vm5114 = vcmp.ge.f32.partialorder %v4267, %v5100
        %vm5115 = vcmp.ge.f32.partialorder %v4268, %v5096
        %vm5116 = vcmp.ge.f32.partialorder %v4268, %v5100
        %vm5117 = vcmp.ge.f32.partialorder %v4269, %v5096
        %vm5118 = vcmp.ge.f32.partialorder %v4269, %v5100
        %vm5119 = vcmp.ge.f32.partialorder %v4270, %v5096
        %vm5120 = vcmp.ge.f32.partialorder %v4270, %v5100
        %vm5121 = vcmp.ge.f32.partialorder %v4271, %v5096
        %vm5122 = vcmp.ge.f32.partialorder %v4271, %v5100
        %vm5123 = vcmp.ge.f32.partialorder %v4272, %v5096
        %vm5124 = vcmp.ge.f32.partialorder %v4272, %v5100
        %vm5125 = vcmp.ge.f32.partialorder %v4273, %v5096
        %vm5126 = vcmp.ge.f32.partialorder %v4273, %v5100
        %vm5127 = vcmp.ge.f32.partialorder %v4274, %v5096
        %vm5128 = vcmp.ge.f32.partialorder %v4274, %v5100
        %vm5129 = vcmp.ge.f32.partialorder %v4275, %v5096
        %vm5130 = vcmp.ge.f32.partialorder %v4275, %v5100
        %vm5131 = vcmp.ge.f32.partialorder %v4276, %v5096
        %vm5132 = vcmp.ge.f32.partialorder %v4276, %v5100
        %vm5133 = vcmp.ge.f32.partialorder %v4277, %v5096
        %vm5134 = vcmp.ge.f32.partialorder %v4277, %v5100
        %vm5135 = vcmp.ge.f32.partialorder %v4278, %v5096
        %vm5136 = vcmp.ge.f32.partialorder %v4278, %v5100
        %vm5137 = vcmp.ge.f32.partialorder %v4279, %v5096
        %vm5138 = vcmp.ge.f32.partialorder %v4279, %v5100
        %vm5139 = vcmp.ge.f32.partialorder %v4280, %v5096
        %vm5140 = vcmp.ge.f32.partialorder %v4280, %v5100
        %vm5141 = vcmp.ge.f32.partialorder %v4281, %v5096
        %vm5142 = vcmp.ge.f32.partialorder %v4281, %v5100
        %vm5143 = vcmp.ge.f32.partialorder %v4282, %v5096
        %vm5144 = vcmp.ge.f32.partialorder %v4282, %v5100
        %vm5145 = vcmp.ge.f32.partialorder %v4283, %v5096
        %vm5146 = vcmp.ge.f32.partialorder %v4283, %v5100
        %vm5147 = vcmp.ge.f32.partialorder %v4284, %v5096
        %vm5148 = vcmp.ge.f32.partialorder %v4284, %v5100
        %vm5149 = vcmp.ge.f32.partialorder %v4285, %v5096
        %vm5150 = vcmp.ge.f32.partialorder %v4285, %v5100
        %vm5151 = vcmp.ge.f32.partialorder %v4286, %v5096
        %vm5152 = vcmp.ge.f32.partialorder %v4286, %v5100
        %vm5153 = vcmp.ge.f32.partialorder %v4287, %v5096
        %vm5154 = vcmp.ge.f32.partialorder %v4287, %v5100
        %vm5155 = vcmp.ge.f32.partialorder %v4288, %v5096
        %vm5156 = vcmp.ge.f32.partialorder %v4288, %v5100
        %vm5157 = vcmp.ge.f32.partialorder %v4289, %v5096
        %vm5158 = vcmp.ge.f32.partialorder %v4289, %v5100
        %vm5159 = vcmp.ge.f32.partialorder %v4290, %v5096
        %vm5160 = vcmp.ge.f32.partialorder %v4290, %v5100
        %vm5161 = vcmp.ge.f32.partialorder %v4291, %v5096
        %vm5162 = vcmp.ge.f32.partialorder %v4291, %v5100
        %vm5163 = vcmp.ge.f32.partialorder %v4292, %v5096
        %vm5164 = vcmp.ge.f32.partialorder %v4292, %v5100
        %v5165 = vsel %vm5101, 1, 0
        %v5166 = vsel %vm5102, 1, 0
        %v5167 = vsel %vm5103, 1, 0
        %v5168 = vsel %vm5104, 1, 0
        %v5169 = vsel %vm5105, 1, 0
        %v5170 = vsel %vm5106, 1, 0
        %v5171 = vsel %vm5107, 1, 0
        %v5172 = vsel %vm5108, 1, 0
        %v5173 = vsel %vm5109, 1, 0
        %v5174 = vsel %vm5110, 1, 0
        %v5175 = vsel %vm5111, 1, 0
        %v5176 = vsel %vm5112, 1, 0
        %v5177 = vsel %vm5113, 1, 0
        %v5178 = vsel %vm5114, 1, 0
        %v5179 = vsel %vm5115, 1, 0
        %v5180 = vsel %vm5116, 1, 0
        %v5181 = vsel %vm5117, 1, 0
        %v5182 = vsel %vm5118, 1, 0
        %v5183 = vsel %vm5119, 1, 0
        %v5184 = vsel %vm5120, 1, 0
        %v5185 = vsel %vm5121, 1, 0
        %v5186 = vsel %vm5122, 1, 0
        %v5187 = vsel %vm5123, 1, 0
        %v5188 = vsel %vm5124, 1, 0
        %v5189 = vsel %vm5125, 1, 0
        %v5190 = vsel %vm5126, 1, 0
        %v5191 = vsel %vm5127, 1, 0
        %v5192 = vsel %vm5128, 1, 0
        %v5193 = vsel %vm5129, 1, 0
        %v5194 = vsel %vm5130, 1, 0
        %v5195 = vsel %vm5131, 1, 0
        %v5196 = vsel %vm5132, 1, 0
        %v5197 = vsel %vm5133, 1, 0
        %v5198 = vsel %vm5134, 1, 0
        %v5199 = vsel %vm5135, 1, 0
        %v5200 = vsel %vm5136, 1, 0
        %v5201 = vsel %vm5137, 1, 0
        %v5202 = vsel %vm5138, 1, 0
        %v5203 = vsel %vm5139, 1, 0
        %v5204 = vsel %vm5140, 1, 0
        %v5205 = vsel %vm5141, 1, 0
        %v5206 = vsel %vm5142, 1, 0
        %v5207 = vsel %vm5143, 1, 0
        %v5208 = vsel %vm5144, 1, 0
        %v5209 = vsel %vm5145, 1, 0
        %v5210 = vsel %vm5146, 1, 0
        %v5211 = vsel %vm5147, 1, 0
        %v5212 = vsel %vm5148, 1, 0
        %v5213 = vsel %vm5149, 1, 0
        %v5214 = vsel %vm5150, 1, 0
        %v5215 = vsel %vm5151, 1, 0
        %v5216 = vsel %vm5152, 1, 0
        %v5217 = vsel %vm5153, 1, 0
        %v5218 = vsel %vm5154, 1, 0
        %v5219 = vsel %vm5155, 1, 0
        %v5220 = vsel %vm5156, 1, 0
        %v5221 = vsel %vm5157, 1, 0
        %v5222 = vsel %vm5158, 1, 0
        %v5223 = vsel %vm5159, 1, 0
        %v5224 = vsel %vm5160, 1, 0
        %v5225 = vsel %vm5161, 1, 0
        %v5226 = vsel %vm5162, 1, 0
        %v5227 = vsel %vm5163, 1, 0
        %v5228 = vsel %vm5164, 1, 0
        %v5229 = vcvt.s32.f32 %v5165
        %v5230 = vcvt.s32.f32 %v5166
        %v5231 = vcvt.s32.f32 %v5167
        %v5232 = vcvt.s32.f32 %v5168
        %v5233 = vcvt.s32.f32 %v5169
        %v5234 = vcvt.s32.f32 %v5170
        %v5235 = vcvt.s32.f32 %v5171
        %v5236 = vcvt.s32.f32 %v5172
        %v5237 = vcvt.s32.f32 %v5173
        %v5238 = vcvt.s32.f32 %v5174
        %v5239 = vcvt.s32.f32 %v5175
        %v5240 = vcvt.s32.f32 %v5176
        %v5241 = vcvt.s32.f32 %v5177
        %v5242 = vcvt.s32.f32 %v5178
        %v5243 = vcvt.s32.f32 %v5179
        %v5244 = vcvt.s32.f32 %v5180
        %v5245 = vcvt.s32.f32 %v5181
        %v5246 = vcvt.s32.f32 %v5182
        %v5247 = vcvt.s32.f32 %v5183
        %v5248 = vcvt.s32.f32 %v5184
        %v5249 = vcvt.s32.f32 %v5185
        %v5250 = vcvt.s32.f32 %v5186
        %v5251 = vcvt.s32.f32 %v5187
        %v5252 = vcvt.s32.f32 %v5188
        %v5253 = vcvt.s32.f32 %v5189
        %v5254 = vcvt.s32.f32 %v5190
        %v5255 = vcvt.s32.f32 %v5191
        %v5256 = vcvt.s32.f32 %v5192
        %v5257 = vcvt.s32.f32 %v5193
        %v5258 = vcvt.s32.f32 %v5194
        %v5259 = vcvt.s32.f32 %v5195
        %v5260 = vcvt.s32.f32 %v5196
        %v5261 = vcvt.s32.f32 %v5197
        %v5262 = vcvt.s32.f32 %v5198
        %v5263 = vcvt.s32.f32 %v5199
        %v5264 = vcvt.s32.f32 %v5200
        %v5265 = vcvt.s32.f32 %v5201
        %v5266 = vcvt.s32.f32 %v5202
        %v5267 = vcvt.s32.f32 %v5203
        %v5268 = vcvt.s32.f32 %v5204
        %v5269 = vcvt.s32.f32 %v5205
        %v5270 = vcvt.s32.f32 %v5206
        %v5271 = vcvt.s32.f32 %v5207
        %v5272 = vcvt.s32.f32 %v5208
        %v5273 = vcvt.s32.f32 %v5209
        %v5274 = vcvt.s32.f32 %v5210
        %v5275 = vcvt.s32.f32 %v5211
        %v5276 = vcvt.s32.f32 %v5212
        %v5277 = vcvt.s32.f32 %v5213
        %v5278 = vcvt.s32.f32 %v5214
        %v5279 = vcvt.s32.f32 %v5215
        %v5280 = vcvt.s32.f32 %v5216
        %v5281 = vcvt.s32.f32 %v5217
        %v5282 = vcvt.s32.f32 %v5218
        %v5283 = vcvt.s32.f32 %v5219
        %v5284 = vcvt.s32.f32 %v5220
        %v5285 = vcvt.s32.f32 %v5221
        %v5286 = vcvt.s32.f32 %v5222
        %v5287 = vcvt.s32.f32 %v5223
        %v5288 = vcvt.s32.f32 %v5224
        %v5289 = vcvt.s32.f32 %v5225
        %v5290 = vcvt.s32.f32 %v5226
        %v5291 = vcvt.s32.f32 %v5227
        %v5292 = vcvt.s32.f32 %v5228
        %v5293 = vsub.f32 %v4429, %v4629
        %v5294 = vsub.f32 %v4430, %v4630
        %v5295 = vsub.f32 %v4431, %v4631
        %v5296 = vsub.f32 %v4432, %v4632
        %v5297 = vsub.f32 %v4433, %v4633
        %v5298 = vsub.f32 %v4434, %v4634
        %v5299 = vsub.f32 %v4435, %v4635
        %v5300 = vsub.f32 %v4436, %v4636
        %v5301 = vsub.f32 %v4437, %v4637
        %v5302 = vsub.f32 %v4438, %v4638
        %v5303 = vsub.f32 %v4439, %v4639
        %v5304 = vsub.f32 %v4440, %v4640
        %v5305 = vsub.f32 %v4441, %v4641
        %v5306 = vsub.f32 %v4442, %v4642
        %v5307 = vsub.f32 %v4443, %v4643
        %v5308 = vsub.f32 %v4444, %v4644
        %v5309 = vsub.f32 %v4445, %v4645
        %v5310 = vsub.f32 %v4446, %v4646
        %v5311 = vsub.f32 %v4447, %v4647
        %v5312 = vsub.f32 %v4448, %v4648
        %v5313 = vsub.f32 %v4449, %v4649
        %v5314 = vsub.f32 %v4450, %v4650
        %v5315 = vsub.f32 %v4451, %v4651
        %v5316 = vsub.f32 %v4452, %v4652
        %v5317 = vsub.f32 %v4453, %v4653
        %v5318 = vsub.f32 %v4454, %v4654
        %v5319 = vsub.f32 %v4455, %v4655
        %v5320 = vsub.f32 %v4456, %v4656
        %v5321 = vsub.f32 %v4457, %v4657
        %v5322 = vsub.f32 %v4458, %v4658
        %v5323 = vsub.f32 %v4459, %v4659
        %v5324 = vsub.f32 %v4460, %v4660
        %v5325 = vsub.f32 %v4461, %v4661
        %v5326 = vsub.f32 %v4462, %v4662
        %v5327 = vsub.f32 %v4463, %v4663
        %v5328 = vsub.f32 %v4464, %v4664
        %v5329 = vsub.f32 %v4465, %v4665
        %v5330 = vsub.f32 %v4466, %v4666
        %v5331 = vsub.f32 %v4467, %v4667
        %v5332 = vsub.f32 %v4468, %v4668
        %v5333 = vsub.f32 %v4469, %v4669
        %v5334 = vsub.f32 %v4470, %v4670
        %v5335 = vsub.f32 %v4471, %v4671
        %v5336 = vsub.f32 %v4472, %v4672
        %v5337 = vsub.f32 %v4473, %v4673
        %v5338 = vsub.f32 %v4474, %v4674
        %v5339 = vsub.f32 %v4475, %v4675
        %v5340 = vsub.f32 %v4476, %v4676
        %v5341 = vsub.f32 %v4477, %v4677
        %v5342 = vsub.f32 %v4478, %v4678
        %v5343 = vsub.f32 %v4479, %v4679
        %v5344 = vsub.f32 %v4480, %v4680
        %v5345 = vsub.f32 %v4481, %v4681
        %v5346 = vsub.f32 %v4482, %v4682
        %v5347 = vsub.f32 %v4483, %v4683
        %v5348 = vsub.f32 %v4484, %v4684
        %v5349 = vsub.f32 %v4485, %v4685
        %v5350 = vsub.f32 %v4486, %v4686
        %v5351 = vsub.f32 %v4487, %v4687
        %v5352 = vsub.f32 %v4488, %v4688
        %v5353 = vsub.f32 %v4489, %v4689
        %v5354 = vsub.f32 %v4490, %v4690
        %v5355 = vsub.f32 %v4491, %v4691
        %v5356 = vsub.f32 %v4492, %v4692
        %v5357 = vsub.f32 %v4629, %v4829
        %v5358 = vsub.f32 %v4630, %v4830
        %v5359 = vsub.f32 %v4631, %v4831
        %v5360 = vsub.f32 %v4632, %v4832
        %v5361 = vsub.f32 %v4633, %v4833
        %v5362 = vsub.f32 %v4634, %v4834
        %v5363 = vsub.f32 %v4635, %v4835
        %v5364 = vsub.f32 %v4636, %v4836
        %v5365 = vsub.f32 %v4637, %v4837
        %v5366 = vsub.f32 %v4638, %v4838
        %v5367 = vsub.f32 %v4639, %v4839
        %v5368 = vsub.f32 %v4640, %v4840
        %v5369 = vsub.f32 %v4641, %v4841
        %v5370 = vsub.f32 %v4642, %v4842
        %v5371 = vsub.f32 %v4643, %v4843
        %v5372 = vsub.f32 %v4644, %v4844
        %v5373 = vsub.f32 %v4645, %v4845
        %v5374 = vsub.f32 %v4646, %v4846
        %v5375 = vsub.f32 %v4647, %v4847
        %v5376 = vsub.f32 %v4648, %v4848
        %v5377 = vsub.f32 %v4649, %v4849
        %v5378 = vsub.f32 %v4650, %v4850
        %v5379 = vsub.f32 %v4651, %v4851
        %v5380 = vsub.f32 %v4652, %v4852
        %v5381 = vsub.f32 %v4653, %v4853
        %v5382 = vsub.f32 %v4654, %v4854
        %v5383 = vsub.f32 %v4655, %v4855
        %v5384 = vsub.f32 %v4656, %v4856
        %v5385 = vsub.f32 %v4657, %v4857
        %v5386 = vsub.f32 %v4658, %v4858
        %v5387 = vsub.f32 %v4659, %v4859
        %v5388 = vsub.f32 %v4660, %v4860
        %v5389 = vsub.f32 %v4661, %v4861
        %v5390 = vsub.f32 %v4662, %v4862
        %v5391 = vsub.f32 %v4663, %v4863
        %v5392 = vsub.f32 %v4664, %v4864
        %v5393 = vsub.f32 %v4665, %v4865
        %v5394 = vsub.f32 %v4666, %v4866
        %v5395 = vsub.f32 %v4667, %v4867
        %v5396 = vsub.f32 %v4668, %v4868
        %v5397 = vsub.f32 %v4669, %v4869
        %v5398 = vsub.f32 %v4670, %v4870
        %v5399 = vsub.f32 %v4671, %v4871
        %v5400 = vsub.f32 %v4672, %v4872
        %v5401 = vsub.f32 %v4673, %v4873
        %v5402 = vsub.f32 %v4674, %v4874
        %v5403 = vsub.f32 %v4675, %v4875
        %v5404 = vsub.f32 %v4676, %v4876
        %v5405 = vsub.f32 %v4677, %v4877
        %v5406 = vsub.f32 %v4678, %v4878
        %v5407 = vsub.f32 %v4679, %v4879
        %v5408 = vsub.f32 %v4680, %v4880
        %v5409 = vsub.f32 %v4681, %v4881
        %v5410 = vsub.f32 %v4682, %v4882
        %v5411 = vsub.f32 %v4683, %v4883
        %v5412 = vsub.f32 %v4684, %v4884
        %v5413 = vsub.f32 %v4685, %v4885
        %v5414 = vsub.f32 %v4686, %v4886
        %v5415 = vsub.f32 %v4687, %v4887
        %v5416 = vsub.f32 %v4688, %v4888
        %v5417 = vsub.f32 %v4689, %v4889
        %v5418 = vsub.f32 %v4690, %v4890
        %v5419 = vsub.f32 %v4691, %v4891
        %v5420 = vsub.f32 %v4692, %v4892
        %v5421 = vsub.f32 %v4829, %v5029
        %v5422 = vsub.f32 %v4830, %v5030
        %v5423 = vsub.f32 %v4831, %v5031
        %v5424 = vsub.f32 %v4832, %v5032
        %v5425 = vsub.f32 %v4833, %v5033
        %v5426 = vsub.f32 %v4834, %v5034
        %v5427 = vsub.f32 %v4835, %v5035
        %v5428 = vsub.f32 %v4836, %v5036
        %v5429 = vsub.f32 %v4837, %v5037
        %v5430 = vsub.f32 %v4838, %v5038
        %v5431 = vsub.f32 %v4839, %v5039
        %v5432 = vsub.f32 %v4840, %v5040
        %v5433 = vsub.f32 %v4841, %v5041
        %v5434 = vsub.f32 %v4842, %v5042
        %v5435 = vsub.f32 %v4843, %v5043
        %v5436 = vsub.f32 %v4844, %v5044
        %v5437 = vsub.f32 %v4845, %v5045
        %v5438 = vsub.f32 %v4846, %v5046
        %v5439 = vsub.f32 %v4847, %v5047
        %v5440 = vsub.f32 %v4848, %v5048
        %v5441 = vsub.f32 %v4849, %v5049
        %v5442 = vsub.f32 %v4850, %v5050
        %v5443 = vsub.f32 %v4851, %v5051
        %v5444 = vsub.f32 %v4852, %v5052
        %v5445 = vsub.f32 %v4853, %v5053
        %v5446 = vsub.f32 %v4854, %v5054
        %v5447 = vsub.f32 %v4855, %v5055
        %v5448 = vsub.f32 %v4856, %v5056
        %v5449 = vsub.f32 %v4857, %v5057
        %v5450 = vsub.f32 %v4858, %v5058
        %v5451 = vsub.f32 %v4859, %v5059
        %v5452 = vsub.f32 %v4860, %v5060
        %v5453 = vsub.f32 %v4861, %v5061
        %v5454 = vsub.f32 %v4862, %v5062
        %v5455 = vsub.f32 %v4863, %v5063
        %v5456 = vsub.f32 %v4864, %v5064
        %v5457 = vsub.f32 %v4865, %v5065
        %v5458 = vsub.f32 %v4866, %v5066
        %v5459 = vsub.f32 %v4867, %v5067
        %v5460 = vsub.f32 %v4868, %v5068
        %v5461 = vsub.f32 %v4869, %v5069
        %v5462 = vsub.f32 %v4870, %v5070
        %v5463 = vsub.f32 %v4871, %v5071
        %v5464 = vsub.f32 %v4872, %v5072
        %v5465 = vsub.f32 %v4873, %v5073
        %v5466 = vsub.f32 %v4874, %v5074
        %v5467 = vsub.f32 %v4875, %v5075
        %v5468 = vsub.f32 %v4876, %v5076
        %v5469 = vsub.f32 %v4877, %v5077
        %v5470 = vsub.f32 %v4878, %v5078
        %v5471 = vsub.f32 %v4879, %v5079
        %v5472 = vsub.f32 %v4880, %v5080
        %v5473 = vsub.f32 %v4881, %v5081
        %v5474 = vsub.f32 %v4882, %v5082
        %v5475 = vsub.f32 %v4883, %v5083
        %v5476 = vsub.f32 %v4884, %v5084
        %v5477 = vsub.f32 %v4885, %v5085
        %v5478 = vsub.f32 %v4886, %v5086
        %v5479 = vsub.f32 %v4887, %v5087
        %v5480 = vsub.f32 %v4888, %v5088
        %v5481 = vsub.f32 %v4889, %v5089
        %v5482 = vsub.f32 %v4890, %v5090
        %v5483 = vsub.f32 %v4891, %v5091
        %v5484 = vsub.f32 %v4892, %v5092
        %v5485 = vsub.f32 %v5029, %v5229
        %v5486 = vsub.f32 %v5030, %v5230
        %v5487 = vsub.f32 %v5031, %v5231
        %v5488 = vsub.f32 %v5032, %v5232
        %v5489 = vsub.f32 %v5033, %v5233
        %v5490 = vsub.f32 %v5034, %v5234
        %v5491 = vsub.f32 %v5035, %v5235
        %v5492 = vsub.f32 %v5036, %v5236
        %v5493 = vsub.f32 %v5037, %v5237
        %v5494 = vsub.f32 %v5038, %v5238
        %v5495 = vsub.f32 %v5039, %v5239
        %v5496 = vsub.f32 %v5040, %v5240
        %v5497 = vsub.f32 %v5041, %v5241
        %v5498 = vsub.f32 %v5042, %v5242
        %v5499 = vsub.f32 %v5043, %v5243
        %v5500 = vsub.f32 %v5044, %v5244
        %v5501 = vsub.f32 %v5045, %v5245
        %v5502 = vsub.f32 %v5046, %v5246
        %v5503 = vsub.f32 %v5047, %v5247
        %v5504 = vsub.f32 %v5048, %v5248
        %v5505 = vsub.f32 %v5049, %v5249
        %v5506 = vsub.f32 %v5050, %v5250
        %v5507 = vsub.f32 %v5051, %v5251
        %v5508 = vsub.f32 %v5052, %v5252
        %v5509 = vsub.f32 %v5053, %v5253
        %v5510 = vsub.f32 %v5054, %v5254
        %v5511 = vsub.f32 %v5055, %v5255
        %v5512 = vsub.f32 %v5056, %v5256
        %v5513 = vsub.f32 %v5057, %v5257
        %v5514 = vsub.f32 %v5058, %v5258
        %v5515 = vsub.f32 %v5059, %v5259
        %v5516 = vsub.f32 %v5060, %v5260
        %v5517 = vsub.f32 %v5061, %v5261
        %v5518 = vsub.f32 %v5062, %v5262
        %v5519 = vsub.f32 %v5063, %v5263
        %v5520 = vsub.f32 %v5064, %v5264
        %v5521 = vsub.f32 %v5065, %v5265
        %v5522 = vsub.f32 %v5066, %v5266
        %v5523 = vsub.f32 %v5067, %v5267
        %v5524 = vsub.f32 %v5068, %v5268
        %v5525 = vsub.f32 %v5069, %v5269
        %v5526 = vsub.f32 %v5070, %v5270
        %v5527 = vsub.f32 %v5071, %v5271
        %v5528 = vsub.f32 %v5072, %v5272
        %v5529 = vsub.f32 %v5073, %v5273
        %v5530 = vsub.f32 %v5074, %v5274
        %v5531 = vsub.f32 %v5075, %v5275
        %v5532 = vsub.f32 %v5076, %v5276
        %v5533 = vsub.f32 %v5077, %v5277
        %v5534 = vsub.f32 %v5078, %v5278
        %v5535 = vsub.f32 %v5079, %v5279
        %v5536 = vsub.f32 %v5080, %v5280
        %v5537 = vsub.f32 %v5081, %v5281
        %v5538 = vsub.f32 %v5082, %v5282
        %v5539 = vsub.f32 %v5083, %v5283
        %v5540 = vsub.f32 %v5084, %v5284
        %v5541 = vsub.f32 %v5085, %v5285
        %v5542 = vsub.f32 %v5086, %v5286
        %v5543 = vsub.f32 %v5087, %v5287
        %v5544 = vsub.f32 %v5088, %v5288
        %v5545 = vsub.f32 %v5089, %v5289
        %v5546 = vsub.f32 %v5090, %v5290
        %v5547 = vsub.f32 %v5091, %v5291
        %v5548 = vsub.f32 %v5092, %v5292
        %v5549 = vlaneseq
        %v5550 = vshrl.u32 %v5549, 7
        %v5551 = vsub.s32 5, %v5550
        %v5552 = vrot.slane %v3869, %v5551
        %v5553 = vlaneseq
        %v5554 = vshrl.u32 %v5553, 7
        %v5555 = vsub.s32 5, %v5554
        %v5556 = vrot.slane %v3870, %v5555
        %v5557 = vsub.f32 %v4261, %v5552
        %v5558 = vsub.f32 %v4261, %v5556
        %v5559 = vsub.f32 %v4262, %v5552
        %v5560 = vsub.f32 %v4262, %v5556
        %v5561 = vsub.f32 %v4263, %v5552
        %v5562 = vsub.f32 %v4263, %v5556
        %v5563 = vsub.f32 %v4264, %v5552
        %v5564 = vsub.f32 %v4264, %v5556
        %v5565 = vsub.f32 %v4265, %v5552
        %v5566 = vsub.f32 %v4265, %v5556
        %v5567 = vsub.f32 %v4266, %v5552
        %v5568 = vsub.f32 %v4266, %v5556
        %v5569 = vsub.f32 %v4267, %v5552
        %v5570 = vsub.f32 %v4267, %v5556
        %v5571 = vsub.f32 %v4268, %v5552
        %v5572 = vsub.f32 %v4268, %v5556
        %v5573 = vsub.f32 %v4269, %v5552
        %v5574 = vsub.f32 %v4269, %v5556
        %v5575 = vsub.f32 %v4270, %v5552
        %v5576 = vsub.f32 %v4270, %v5556
        %v5577 = vsub.f32 %v4271, %v5552
        %v5578 = vsub.f32 %v4271, %v5556
        %v5579 = vsub.f32 %v4272, %v5552
        %v5580 = vsub.f32 %v4272, %v5556
        %v5581 = vsub.f32 %v4273, %v5552
        %v5582 = vsub.f32 %v4273, %v5556
        %v5583 = vsub.f32 %v4274, %v5552
        %v5584 = vsub.f32 %v4274, %v5556
        %v5585 = vsub.f32 %v4275, %v5552
        %v5586 = vsub.f32 %v4275, %v5556
        %v5587 = vsub.f32 %v4276, %v5552
        %v5588 = vsub.f32 %v4276, %v5556
        %v5589 = vsub.f32 %v4277, %v5552
        %v5590 = vsub.f32 %v4277, %v5556
        %v5591 = vsub.f32 %v4278, %v5552
        %v5592 = vsub.f32 %v4278, %v5556
        %v5593 = vsub.f32 %v4279, %v5552
        %v5594 = vsub.f32 %v4279, %v5556
        %v5595 = vsub.f32 %v4280, %v5552
        %v5596 = vsub.f32 %v4280, %v5556
        %v5597 = vsub.f32 %v4281, %v5552
        %v5598 = vsub.f32 %v4281, %v5556
        %v5599 = vsub.f32 %v4282, %v5552
        %v5600 = vsub.f32 %v4282, %v5556
        %v5601 = vsub.f32 %v4283, %v5552
        %v5602 = vsub.f32 %v4283, %v5556
        %v5603 = vsub.f32 %v4284, %v5552
        %v5604 = vsub.f32 %v4284, %v5556
        %v5605 = vsub.f32 %v4285, %v5552
        %v5606 = vsub.f32 %v4285, %v5556
        %v5607 = vsub.f32 %v4286, %v5552
        %v5608 = vsub.f32 %v4286, %v5556
        %v5609 = vsub.f32 %v4287, %v5552
        %v5610 = vsub.f32 %v4287, %v5556
        %v5611 = vsub.f32 %v4288, %v5552
        %v5612 = vsub.f32 %v4288, %v5556
        %v5613 = vsub.f32 %v4289, %v5552
        %v5614 = vsub.f32 %v4289, %v5556
        %v5615 = vsub.f32 %v4290, %v5552
        %v5616 = vsub.f32 %v4290, %v5556
        %v5617 = vsub.f32 %v4291, %v5552
        %v5618 = vsub.f32 %v4291, %v5556
        %v5619 = vsub.f32 %v4292, %v5552
        %v5620 = vsub.f32 %v4292, %v5556
        %v5621 = vlaneseq
        %v5622 = vshrl.u32 %v5621, 7
        %v5623 = vsub.s32 6, %v5622
        %v5624 = vrot.slane %v3869, %v5623
        %v5625 = vlaneseq
        %v5626 = vshrl.u32 %v5625, 7
        %v5627 = vsub.s32 6, %v5626
        %v5628 = vrot.slane %v3870, %v5627
        %v5629 = vmul.f32 %v5557, %v5624
        %v5630 = vmul.f32 %v5558, %v5628
        %v5631 = vmul.f32 %v5559, %v5624
        %v5632 = vmul.f32 %v5560, %v5628
        %v5633 = vmul.f32 %v5561, %v5624
        %v5634 = vmul.f32 %v5562, %v5628
        %v5635 = vmul.f32 %v5563, %v5624
        %v5636 = vmul.f32 %v5564, %v5628
        %v5637 = vmul.f32 %v5565, %v5624
        %v5638 = vmul.f32 %v5566, %v5628
        %v5639 = vmul.f32 %v5567, %v5624
        %v5640 = vmul.f32 %v5568, %v5628
        %v5641 = vmul.f32 %v5569, %v5624
        %v5642 = vmul.f32 %v5570, %v5628
        %v5643 = vmul.f32 %v5571, %v5624
        %v5644 = vmul.f32 %v5572, %v5628
        %v5645 = vmul.f32 %v5573, %v5624
        %v5646 = vmul.f32 %v5574, %v5628
        %v5647 = vmul.f32 %v5575, %v5624
        %v5648 = vmul.f32 %v5576, %v5628
        %v5649 = vmul.f32 %v5577, %v5624
        %v5650 = vmul.f32 %v5578, %v5628
        %v5651 = vmul.f32 %v5579, %v5624
        %v5652 = vmul.f32 %v5580, %v5628
        %v5653 = vmul.f32 %v5581, %v5624
        %v5654 = vmul.f32 %v5582, %v5628
        %v5655 = vmul.f32 %v5583, %v5624
        %v5656 = vmul.f32 %v5584, %v5628
        %v5657 = vmul.f32 %v5585, %v5624
        %v5658 = vmul.f32 %v5586, %v5628
        %v5659 = vmul.f32 %v5587, %v5624
        %v5660 = vmul.f32 %v5588, %v5628
        %v5661 = vmul.f32 %v5589, %v5624
        %v5662 = vmul.f32 %v5590, %v5628
        %v5663 = vmul.f32 %v5591, %v5624
        %v5664 = vmul.f32 %v5592, %v5628
        %v5665 = vmul.f32 %v5593, %v5624
        %v5666 = vmul.f32 %v5594, %v5628
        %v5667 = vmul.f32 %v5595, %v5624
        %v5668 = vmul.f32 %v5596, %v5628
        %v5669 = vmul.f32 %v5597, %v5624
        %v5670 = vmul.f32 %v5598, %v5628
        %v5671 = vmul.f32 %v5599, %v5624
        %v5672 = vmul.f32 %v5600, %v5628
        %v5673 = vmul.f32 %v5601, %v5624
        %v5674 = vmul.f32 %v5602, %v5628
        %v5675 = vmul.f32 %v5603, %v5624
        %v5676 = vmul.f32 %v5604, %v5628
        %v5677 = vmul.f32 %v5605, %v5624
        %v5678 = vmul.f32 %v5606, %v5628
        %v5679 = vmul.f32 %v5607, %v5624
        %v5680 = vmul.f32 %v5608, %v5628
        %v5681 = vmul.f32 %v5609, %v5624
        %v5682 = vmul.f32 %v5610, %v5628
        %v5683 = vmul.f32 %v5611, %v5624
        %v5684 = vmul.f32 %v5612, %v5628
        %v5685 = vmul.f32 %v5613, %v5624
        %v5686 = vmul.f32 %v5614, %v5628
        %v5687 = vmul.f32 %v5615, %v5624
        %v5688 = vmul.f32 %v5616, %v5628
        %v5689 = vmul.f32 %v5617, %v5624
        %v5690 = vmul.f32 %v5618, %v5628
        %v5691 = vmul.f32 %v5619, %v5624
        %v5692 = vmul.f32 %v5620, %v5628
        %v5693 = vmul.f32 %v5629, %v5293
        %v5694 = vmul.f32 %v5630, %v5294
        %v5695 = vmul.f32 %v5631, %v5295
        %v5696 = vmul.f32 %v5632, %v5296
        %v5697 = vmul.f32 %v5633, %v5297
        %v5698 = vmul.f32 %v5634, %v5298
        %v5699 = vmul.f32 %v5635, %v5299
        %v5700 = vmul.f32 %v5636, %v5300
        %v5701 = vmul.f32 %v5637, %v5301
        %v5702 = vmul.f32 %v5638, %v5302
        %v5703 = vmul.f32 %v5639, %v5303
        %v5704 = vmul.f32 %v5640, %v5304
        %v5705 = vmul.f32 %v5641, %v5305
        %v5706 = vmul.f32 %v5642, %v5306
        %v5707 = vmul.f32 %v5643, %v5307
        %v5708 = vmul.f32 %v5644, %v5308
        %v5709 = vmul.f32 %v5645, %v5309
        %v5710 = vmul.f32 %v5646, %v5310
        %v5711 = vmul.f32 %v5647, %v5311
        %v5712 = vmul.f32 %v5648, %v5312
        %v5713 = vmul.f32 %v5649, %v5313
        %v5714 = vmul.f32 %v5650, %v5314
        %v5715 = vmul.f32 %v5651, %v5315
        %v5716 = vmul.f32 %v5652, %v5316
        %v5717 = vmul.f32 %v5653, %v5317
        %v5718 = vmul.f32 %v5654, %v5318
        %v5719 = vmul.f32 %v5655, %v5319
        %v5720 = vmul.f32 %v5656, %v5320
        %v5721 = vmul.f32 %v5657, %v5321
        %v5722 = vmul.f32 %v5658, %v5322
        %v5723 = vmul.f32 %v5659, %v5323
        %v5724 = vmul.f32 %v5660, %v5324
        %v5725 = vmul.f32 %v5661, %v5325
        %v5726 = vmul.f32 %v5662, %v5326
        %v5727 = vmul.f32 %v5663, %v5327
        %v5728 = vmul.f32 %v5664, %v5328
        %v5729 = vmul.f32 %v5665, %v5329
        %v5730 = vmul.f32 %v5666, %v5330
        %v5731 = vmul.f32 %v5667, %v5331
        %v5732 = vmul.f32 %v5668, %v5332
        %v5733 = vmul.f32 %v5669, %v5333
        %v5734 = vmul.f32 %v5670, %v5334
        %v5735 = vmul.f32 %v5671, %v5335
        %v5736 = vmul.f32 %v5672, %v5336
        %v5737 = vmul.f32 %v5673, %v5337
        %v5738 = vmul.f32 %v5674, %v5338
        %v5739 = vmul.f32 %v5675, %v5339
        %v5740 = vmul.f32 %v5676, %v5340
        %v5741 = vmul.f32 %v5677, %v5341
        %v5742 = vmul.f32 %v5678, %v5342
        %v5743 = vmul.f32 %v5679, %v5343
        %v5744 = vmul.f32 %v5680, %v5344
        %v5745 = vmul.f32 %v5681, %v5345
        %v5746 = vmul.f32 %v5682, %v5346
        %v5747 = vmul.f32 %v5683, %v5347
        %v5748 = vmul.f32 %v5684, %v5348
        %v5749 = vmul.f32 %v5685, %v5349
        %v5750 = vmul.f32 %v5686, %v5350
        %v5751 = vmul.f32 %v5687, %v5351
        %v5752 = vmul.f32 %v5688, %v5352
        %v5753 = vmul.f32 %v5689, %v5353
        %v5754 = vmul.f32 %v5690, %v5354
        %v5755 = vmul.f32 %v5691, %v5355
        %v5756 = vmul.f32 %v5692, %v5356
        %v5757 = vlaneseq
        %v5758 = vshrl.u32 %v5757, 7
        %v5759 = vsub.s32 7, %v5758
        %v5760 = vrot.slane %v3869, %v5759
        %v5761 = vlaneseq
        %v5762 = vshrl.u32 %v5761, 7
        %v5763 = vsub.s32 7, %v5762
        %v5764 = vrot.slane %v3870, %v5763
        %v5765 = vsub.f32 %v5760, %v4261
        %v5766 = vsub.f32 %v5764, %v4261
        %v5767 = vsub.f32 %v5760, %v4262
        %v5768 = vsub.f32 %v5764, %v4262
        %v5769 = vsub.f32 %v5760, %v4263
        %v5770 = vsub.f32 %v5764, %v4263
        %v5771 = vsub.f32 %v5760, %v4264
        %v5772 = vsub.f32 %v5764, %v4264
        %v5773 = vsub.f32 %v5760, %v4265
        %v5774 = vsub.f32 %v5764, %v4265
        %v5775 = vsub.f32 %v5760, %v4266
        %v5776 = vsub.f32 %v5764, %v4266
        %v5777 = vsub.f32 %v5760, %v4267
        %v5778 = vsub.f32 %v5764, %v4267
        %v5779 = vsub.f32 %v5760, %v4268
        %v5780 = vsub.f32 %v5764, %v4268
        %v5781 = vsub.f32 %v5760, %v4269
        %v5782 = vsub.f32 %v5764, %v4269
        %v5783 = vsub.f32 %v5760, %v4270
        %v5784 = vsub.f32 %v5764, %v4270
        %v5785 = vsub.f32 %v5760, %v4271
        %v5786 = vsub.f32 %v5764, %v4271
        %v5787 = vsub.f32 %v5760, %v4272
        %v5788 = vsub.f32 %v5764, %v4272
        %v5789 = vsub.f32 %v5760, %v4273
        %v5790 = vsub.f32 %v5764, %v4273
        %v5791 = vsub.f32 %v5760, %v4274
        %v5792 = vsub.f32 %v5764, %v4274
        %v5793 = vsub.f32 %v5760, %v4275
        %v5794 = vsub.f32 %v5764, %v4275
        %v5795 = vsub.f32 %v5760, %v4276
        %v5796 = vsub.f32 %v5764, %v4276
        %v5797 = vsub.f32 %v5760, %v4277
        %v5798 = vsub.f32 %v5764, %v4277
        %v5799 = vsub.f32 %v5760, %v4278
        %v5800 = vsub.f32 %v5764, %v4278
        %v5801 = vsub.f32 %v5760, %v4279
        %v5802 = vsub.f32 %v5764, %v4279
        %v5803 = vsub.f32 %v5760, %v4280
        %v5804 = vsub.f32 %v5764, %v4280
        %v5805 = vsub.f32 %v5760, %v4281
        %v5806 = vsub.f32 %v5764, %v4281
        %v5807 = vsub.f32 %v5760, %v4282
        %v5808 = vsub.f32 %v5764, %v4282
        %v5809 = vsub.f32 %v5760, %v4283
        %v5810 = vsub.f32 %v5764, %v4283
        %v5811 = vsub.f32 %v5760, %v4284
        %v5812 = vsub.f32 %v5764, %v4284
        %v5813 = vsub.f32 %v5760, %v4285
        %v5814 = vsub.f32 %v5764, %v4285
        %v5815 = vsub.f32 %v5760, %v4286
        %v5816 = vsub.f32 %v5764, %v4286
        %v5817 = vsub.f32 %v5760, %v4287
        %v5818 = vsub.f32 %v5764, %v4287
        %v5819 = vsub.f32 %v5760, %v4288
        %v5820 = vsub.f32 %v5764, %v4288
        %v5821 = vsub.f32 %v5760, %v4289
        %v5822 = vsub.f32 %v5764, %v4289
        %v5823 = vsub.f32 %v5760, %v4290
        %v5824 = vsub.f32 %v5764, %v4290
        %v5825 = vsub.f32 %v5760, %v4291
        %v5826 = vsub.f32 %v5764, %v4291
        %v5827 = vsub.f32 %v5760, %v4292
        %v5828 = vsub.f32 %v5764, %v4292
        %v5829 = vlaneseq
        %v5830 = vshrl.u32 %v5829, 7
        %v5831 = vsub.s32 0, %v5830
        %v5832 = vrot.slane %v3871, %v5831
        %v5833 = vlaneseq
        %v5834 = vshrl.u32 %v5833, 7
        %v5835 = vsub.s32 0, %v5834
        %v5836 = vrot.slane %v3872, %v5835
        %v5837 = vmul.f32 %v5765, %v5832
        %v5838 = vmul.f32 %v5766, %v5836
        %v5839 = vmul.f32 %v5767, %v5832
        %v5840 = vmul.f32 %v5768, %v5836
        %v5841 = vmul.f32 %v5769, %v5832
        %v5842 = vmul.f32 %v5770, %v5836
        %v5843 = vmul.f32 %v5771, %v5832
        %v5844 = vmul.f32 %v5772, %v5836
        %v5845 = vmul.f32 %v5773, %v5832
        %v5846 = vmul.f32 %v5774, %v5836
        %v5847 = vmul.f32 %v5775, %v5832
        %v5848 = vmul.f32 %v5776, %v5836
        %v5849 = vmul.f32 %v5777, %v5832
        %v5850 = vmul.f32 %v5778, %v5836
        %v5851 = vmul.f32 %v5779, %v5832
        %v5852 = vmul.f32 %v5780, %v5836
        %v5853 = vmul.f32 %v5781, %v5832
        %v5854 = vmul.f32 %v5782, %v5836
        %v5855 = vmul.f32 %v5783, %v5832
        %v5856 = vmul.f32 %v5784, %v5836
        %v5857 = vmul.f32 %v5785, %v5832
        %v5858 = vmul.f32 %v5786, %v5836
        %v5859 = vmul.f32 %v5787, %v5832
        %v5860 = vmul.f32 %v5788, %v5836
        %v5861 = vmul.f32 %v5789, %v5832
        %v5862 = vmul.f32 %v5790, %v5836
        %v5863 = vmul.f32 %v5791, %v5832
        %v5864 = vmul.f32 %v5792, %v5836
        %v5865 = vmul.f32 %v5793, %v5832
        %v5866 = vmul.f32 %v5794, %v5836
        %v5867 = vmul.f32 %v5795, %v5832
        %v5868 = vmul.f32 %v5796, %v5836
        %v5869 = vmul.f32 %v5797, %v5832
        %v5870 = vmul.f32 %v5798, %v5836
        %v5871 = vmul.f32 %v5799, %v5832
        %v5872 = vmul.f32 %v5800, %v5836
        %v5873 = vmul.f32 %v5801, %v5832
        %v5874 = vmul.f32 %v5802, %v5836
        %v5875 = vmul.f32 %v5803, %v5832
        %v5876 = vmul.f32 %v5804, %v5836
        %v5877 = vmul.f32 %v5805, %v5832
        %v5878 = vmul.f32 %v5806, %v5836
        %v5879 = vmul.f32 %v5807, %v5832
        %v5880 = vmul.f32 %v5808, %v5836
        %v5881 = vmul.f32 %v5809, %v5832
        %v5882 = vmul.f32 %v5810, %v5836
        %v5883 = vmul.f32 %v5811, %v5832
        %v5884 = vmul.f32 %v5812, %v5836
        %v5885 = vmul.f32 %v5813, %v5832
        %v5886 = vmul.f32 %v5814, %v5836
        %v5887 = vmul.f32 %v5815, %v5832
        %v5888 = vmul.f32 %v5816, %v5836
        %v5889 = vmul.f32 %v5817, %v5832
        %v5890 = vmul.f32 %v5818, %v5836
        %v5891 = vmul.f32 %v5819, %v5832
        %v5892 = vmul.f32 %v5820, %v5836
        %v5893 = vmul.f32 %v5821, %v5832
        %v5894 = vmul.f32 %v5822, %v5836
        %v5895 = vmul.f32 %v5823, %v5832
        %v5896 = vmul.f32 %v5824, %v5836
        %v5897 = vmul.f32 %v5825, %v5832
        %v5898 = vmul.f32 %v5826, %v5836
        %v5899 = vmul.f32 %v5827, %v5832
        %v5900 = vmul.f32 %v5828, %v5836
        %v5901 = vmul.f32 %v5837, %v5357
        %v5902 = vmul.f32 %v5838, %v5358
        %v5903 = vmul.f32 %v5839, %v5359
        %v5904 = vmul.f32 %v5840, %v5360
        %v5905 = vmul.f32 %v5841, %v5361
        %v5906 = vmul.f32 %v5842, %v5362
        %v5907 = vmul.f32 %v5843, %v5363
        %v5908 = vmul.f32 %v5844, %v5364
        %v5909 = vmul.f32 %v5845, %v5365
        %v5910 = vmul.f32 %v5846, %v5366
        %v5911 = vmul.f32 %v5847, %v5367
        %v5912 = vmul.f32 %v5848, %v5368
        %v5913 = vmul.f32 %v5849, %v5369
        %v5914 = vmul.f32 %v5850, %v5370
        %v5915 = vmul.f32 %v5851, %v5371
        %v5916 = vmul.f32 %v5852, %v5372
        %v5917 = vmul.f32 %v5853, %v5373
        %v5918 = vmul.f32 %v5854, %v5374
        %v5919 = vmul.f32 %v5855, %v5375
        %v5920 = vmul.f32 %v5856, %v5376
        %v5921 = vmul.f32 %v5857, %v5377
        %v5922 = vmul.f32 %v5858, %v5378
        %v5923 = vmul.f32 %v5859, %v5379
        %v5924 = vmul.f32 %v5860, %v5380
        %v5925 = vmul.f32 %v5861, %v5381
        %v5926 = vmul.f32 %v5862, %v5382
        %v5927 = vmul.f32 %v5863, %v5383
        %v5928 = vmul.f32 %v5864, %v5384
        %v5929 = vmul.f32 %v5865, %v5385
        %v5930 = vmul.f32 %v5866, %v5386
        %v5931 = vmul.f32 %v5867, %v5387
        %v5932 = vmul.f32 %v5868, %v5388
        %v5933 = vmul.f32 %v5869, %v5389
        %v5934 = vmul.f32 %v5870, %v5390
        %v5935 = vmul.f32 %v5871, %v5391
        %v5936 = vmul.f32 %v5872, %v5392
        %v5937 = vmul.f32 %v5873, %v5393
        %v5938 = vmul.f32 %v5874, %v5394
        %v5939 = vmul.f32 %v5875, %v5395
        %v5940 = vmul.f32 %v5876, %v5396
        %v5941 = vmul.f32 %v5877, %v5397
        %v5942 = vmul.f32 %v5878, %v5398
        %v5943 = vmul.f32 %v5879, %v5399
        %v5944 = vmul.f32 %v5880, %v5400
        %v5945 = vmul.f32 %v5881, %v5401
        %v5946 = vmul.f32 %v5882, %v5402
        %v5947 = vmul.f32 %v5883, %v5403
        %v5948 = vmul.f32 %v5884, %v5404
        %v5949 = vmul.f32 %v5885, %v5405
        %v5950 = vmul.f32 %v5886, %v5406
        %v5951 = vmul.f32 %v5887, %v5407
        %v5952 = vmul.f32 %v5888, %v5408
        %v5953 = vmul.f32 %v5889, %v5409
        %v5954 = vmul.f32 %v5890, %v5410
        %v5955 = vmul.f32 %v5891, %v5411
        %v5956 = vmul.f32 %v5892, %v5412
        %v5957 = vmul.f32 %v5893, %v5413
        %v5958 = vmul.f32 %v5894, %v5414
        %v5959 = vmul.f32 %v5895, %v5415
        %v5960 = vmul.f32 %v5896, %v5416
        %v5961 = vmul.f32 %v5897, %v5417
        %v5962 = vmul.f32 %v5898, %v5418
        %v5963 = vmul.f32 %v5899, %v5419
        %v5964 = vmul.f32 %v5900, %v5420
        %v5965 = vadd.f32 %v5693, %v5901
        %v5966 = vadd.f32 %v5694, %v5902
        %v5967 = vadd.f32 %v5695, %v5903
        %v5968 = vadd.f32 %v5696, %v5904
        %v5969 = vadd.f32 %v5697, %v5905
        %v5970 = vadd.f32 %v5698, %v5906
        %v5971 = vadd.f32 %v5699, %v5907
        %v5972 = vadd.f32 %v5700, %v5908
        %v5973 = vadd.f32 %v5701, %v5909
        %v5974 = vadd.f32 %v5702, %v5910
        %v5975 = vadd.f32 %v5703, %v5911
        %v5976 = vadd.f32 %v5704, %v5912
        %v5977 = vadd.f32 %v5705, %v5913
        %v5978 = vadd.f32 %v5706, %v5914
        %v5979 = vadd.f32 %v5707, %v5915
        %v5980 = vadd.f32 %v5708, %v5916
        %v5981 = vadd.f32 %v5709, %v5917
        %v5982 = vadd.f32 %v5710, %v5918
        %v5983 = vadd.f32 %v5711, %v5919
        %v5984 = vadd.f32 %v5712, %v5920
        %v5985 = vadd.f32 %v5713, %v5921
        %v5986 = vadd.f32 %v5714, %v5922
        %v5987 = vadd.f32 %v5715, %v5923
        %v5988 = vadd.f32 %v5716, %v5924
        %v5989 = vadd.f32 %v5717, %v5925
        %v5990 = vadd.f32 %v5718, %v5926
        %v5991 = vadd.f32 %v5719, %v5927
        %v5992 = vadd.f32 %v5720, %v5928
        %v5993 = vadd.f32 %v5721, %v5929
        %v5994 = vadd.f32 %v5722, %v5930
        %v5995 = vadd.f32 %v5723, %v5931
        %v5996 = vadd.f32 %v5724, %v5932
        %v5997 = vadd.f32 %v5725, %v5933
        %v5998 = vadd.f32 %v5726, %v5934
        %v5999 = vadd.f32 %v5727, %v5935
        %v6000 = vadd.f32 %v5728, %v5936
        %v6001 = vadd.f32 %v5729, %v5937
        %v6002 = vadd.f32 %v5730, %v5938
        %v6003 = vadd.f32 %v5731, %v5939
        %v6004 = vadd.f32 %v5732, %v5940
        %v6005 = vadd.f32 %v5733, %v5941
        %v6006 = vadd.f32 %v5734, %v5942
        %v6007 = vadd.f32 %v5735, %v5943
        %v6008 = vadd.f32 %v5736, %v5944
        %v6009 = vadd.f32 %v5737, %v5945
        %v6010 = vadd.f32 %v5738, %v5946
        %v6011 = vadd.f32 %v5739, %v5947
        %v6012 = vadd.f32 %v5740, %v5948
        %v6013 = vadd.f32 %v5741, %v5949
        %v6014 = vadd.f32 %v5742, %v5950
        %v6015 = vadd.f32 %v5743, %v5951
        %v6016 = vadd.f32 %v5744, %v5952
        %v6017 = vadd.f32 %v5745, %v5953
        %v6018 = vadd.f32 %v5746, %v5954
        %v6019 = vadd.f32 %v5747, %v5955
        %v6020 = vadd.f32 %v5748, %v5956
        %v6021 = vadd.f32 %v5749, %v5957
        %v6022 = vadd.f32 %v5750, %v5958
        %v6023 = vadd.f32 %v5751, %v5959
        %v6024 = vadd.f32 %v5752, %v5960
        %v6025 = vadd.f32 %v5753, %v5961
        %v6026 = vadd.f32 %v5754, %v5962
        %v6027 = vadd.f32 %v5755, %v5963
        %v6028 = vadd.f32 %v5756, %v5964
        %v6029 = vlaneseq
        %v6030 = vshrl.u32 %v6029, 7
        %v6031 = vsub.s32 1, %v6030
        %v6032 = vrot.slane %v3871, %v6031
        %v6033 = vlaneseq
        %v6034 = vshrl.u32 %v6033, 7
        %v6035 = vsub.s32 1, %v6034
        %v6036 = vrot.slane %v3872, %v6035
        %v6037 = vsub.f32 %v4261, %v6032
        %v6038 = vsub.f32 %v4261, %v6036
        %v6039 = vsub.f32 %v4262, %v6032
        %v6040 = vsub.f32 %v4262, %v6036
        %v6041 = vsub.f32 %v4263, %v6032
        %v6042 = vsub.f32 %v4263, %v6036
        %v6043 = vsub.f32 %v4264, %v6032
        %v6044 = vsub.f32 %v4264, %v6036
        %v6045 = vsub.f32 %v4265, %v6032
        %v6046 = vsub.f32 %v4265, %v6036
        %v6047 = vsub.f32 %v4266, %v6032
        %v6048 = vsub.f32 %v4266, %v6036
        %v6049 = vsub.f32 %v4267, %v6032
        %v6050 = vsub.f32 %v4267, %v6036
        %v6051 = vsub.f32 %v4268, %v6032
        %v6052 = vsub.f32 %v4268, %v6036
        %v6053 = vsub.f32 %v4269, %v6032
        %v6054 = vsub.f32 %v4269, %v6036
        %v6055 = vsub.f32 %v4270, %v6032
        %v6056 = vsub.f32 %v4270, %v6036
        %v6057 = vsub.f32 %v4271, %v6032
        %v6058 = vsub.f32 %v4271, %v6036
        %v6059 = vsub.f32 %v4272, %v6032
        %v6060 = vsub.f32 %v4272, %v6036
        %v6061 = vsub.f32 %v4273, %v6032
        %v6062 = vsub.f32 %v4273, %v6036
        %v6063 = vsub.f32 %v4274, %v6032
        %v6064 = vsub.f32 %v4274, %v6036
        %v6065 = vsub.f32 %v4275, %v6032
        %v6066 = vsub.f32 %v4275, %v6036
        %v6067 = vsub.f32 %v4276, %v6032
        %v6068 = vsub.f32 %v4276, %v6036
        %v6069 = vsub.f32 %v4277, %v6032
        %v6070 = vsub.f32 %v4277, %v6036
        %v6071 = vsub.f32 %v4278, %v6032
        %v6072 = vsub.f32 %v4278, %v6036
        %v6073 = vsub.f32 %v4279, %v6032
        %v6074 = vsub.f32 %v4279, %v6036
        %v6075 = vsub.f32 %v4280, %v6032
        %v6076 = vsub.f32 %v4280, %v6036
        %v6077 = vsub.f32 %v4281, %v6032
        %v6078 = vsub.f32 %v4281, %v6036
        %v6079 = vsub.f32 %v4282, %v6032
        %v6080 = vsub.f32 %v4282, %v6036
        %v6081 = vsub.f32 %v4283, %v6032
        %v6082 = vsub.f32 %v4283, %v6036
        %v6083 = vsub.f32 %v4284, %v6032
        %v6084 = vsub.f32 %v4284, %v6036
        %v6085 = vsub.f32 %v4285, %v6032
        %v6086 = vsub.f32 %v4285, %v6036
        %v6087 = vsub.f32 %v4286, %v6032
        %v6088 = vsub.f32 %v4286, %v6036
        %v6089 = vsub.f32 %v4287, %v6032
        %v6090 = vsub.f32 %v4287, %v6036
        %v6091 = vsub.f32 %v4288, %v6032
        %v6092 = vsub.f32 %v4288, %v6036
        %v6093 = vsub.f32 %v4289, %v6032
        %v6094 = vsub.f32 %v4289, %v6036
        %v6095 = vsub.f32 %v4290, %v6032
        %v6096 = vsub.f32 %v4290, %v6036
        %v6097 = vsub.f32 %v4291, %v6032
        %v6098 = vsub.f32 %v4291, %v6036
        %v6099 = vsub.f32 %v4292, %v6032
        %v6100 = vsub.f32 %v4292, %v6036
        %v6101 = vlaneseq
        %v6102 = vshrl.u32 %v6101, 7
        %v6103 = vsub.s32 2, %v6102
        %v6104 = vrot.slane %v3871, %v6103
        %v6105 = vlaneseq
        %v6106 = vshrl.u32 %v6105, 7
        %v6107 = vsub.s32 2, %v6106
        %v6108 = vrot.slane %v3872, %v6107
        %v6109 = vmul.f32 %v6037, %v6104
        %v6110 = vmul.f32 %v6038, %v6108
        %v6111 = vmul.f32 %v6039, %v6104
        %v6112 = vmul.f32 %v6040, %v6108
        %v6113 = vmul.f32 %v6041, %v6104
        %v6114 = vmul.f32 %v6042, %v6108
        %v6115 = vmul.f32 %v6043, %v6104
        %v6116 = vmul.f32 %v6044, %v6108
        %v6117 = vmul.f32 %v6045, %v6104
        %v6118 = vmul.f32 %v6046, %v6108
        %v6119 = vmul.f32 %v6047, %v6104
        %v6120 = vmul.f32 %v6048, %v6108
        %v6121 = vmul.f32 %v6049, %v6104
        %v6122 = vmul.f32 %v6050, %v6108
        %v6123 = vmul.f32 %v6051, %v6104
        %v6124 = vmul.f32 %v6052, %v6108
        %v6125 = vmul.f32 %v6053, %v6104
        %v6126 = vmul.f32 %v6054, %v6108
        %v6127 = vmul.f32 %v6055, %v6104
        %v6128 = vmul.f32 %v6056, %v6108
        %v6129 = vmul.f32 %v6057, %v6104
        %v6130 = vmul.f32 %v6058, %v6108
        %v6131 = vmul.f32 %v6059, %v6104
        %v6132 = vmul.f32 %v6060, %v6108
        %v6133 = vmul.f32 %v6061, %v6104
        %v6134 = vmul.f32 %v6062, %v6108
        %v6135 = vmul.f32 %v6063, %v6104
        %v6136 = vmul.f32 %v6064, %v6108
        %v6137 = vmul.f32 %v6065, %v6104
        %v6138 = vmul.f32 %v6066, %v6108
        %v6139 = vmul.f32 %v6067, %v6104
        %v6140 = vmul.f32 %v6068, %v6108
        %v6141 = vmul.f32 %v6069, %v6104
        %v6142 = vmul.f32 %v6070, %v6108
        %v6143 = vmul.f32 %v6071, %v6104
        %v6144 = vmul.f32 %v6072, %v6108
        %v6145 = vmul.f32 %v6073, %v6104
        %v6146 = vmul.f32 %v6074, %v6108
        %v6147 = vmul.f32 %v6075, %v6104
        %v6148 = vmul.f32 %v6076, %v6108
        %v6149 = vmul.f32 %v6077, %v6104
        %v6150 = vmul.f32 %v6078, %v6108
        %v6151 = vmul.f32 %v6079, %v6104
        %v6152 = vmul.f32 %v6080, %v6108
        %v6153 = vmul.f32 %v6081, %v6104
        %v6154 = vmul.f32 %v6082, %v6108
        %v6155 = vmul.f32 %v6083, %v6104
        %v6156 = vmul.f32 %v6084, %v6108
        %v6157 = vmul.f32 %v6085, %v6104
        %v6158 = vmul.f32 %v6086, %v6108
        %v6159 = vmul.f32 %v6087, %v6104
        %v6160 = vmul.f32 %v6088, %v6108
        %v6161 = vmul.f32 %v6089, %v6104
        %v6162 = vmul.f32 %v6090, %v6108
        %v6163 = vmul.f32 %v6091, %v6104
        %v6164 = vmul.f32 %v6092, %v6108
        %v6165 = vmul.f32 %v6093, %v6104
        %v6166 = vmul.f32 %v6094, %v6108
        %v6167 = vmul.f32 %v6095, %v6104
        %v6168 = vmul.f32 %v6096, %v6108
        %v6169 = vmul.f32 %v6097, %v6104
        %v6170 = vmul.f32 %v6098, %v6108
        %v6171 = vmul.f32 %v6099, %v6104
        %v6172 = vmul.f32 %v6100, %v6108
        %v6173 = vmul.f32 %v6109, %v5357
        %v6174 = vmul.f32 %v6110, %v5358
        %v6175 = vmul.f32 %v6111, %v5359
        %v6176 = vmul.f32 %v6112, %v5360
        %v6177 = vmul.f32 %v6113, %v5361
        %v6178 = vmul.f32 %v6114, %v5362
        %v6179 = vmul.f32 %v6115, %v5363
        %v6180 = vmul.f32 %v6116, %v5364
        %v6181 = vmul.f32 %v6117, %v5365
        %v6182 = vmul.f32 %v6118, %v5366
        %v6183 = vmul.f32 %v6119, %v5367
        %v6184 = vmul.f32 %v6120, %v5368
        %v6185 = vmul.f32 %v6121, %v5369
        %v6186 = vmul.f32 %v6122, %v5370
        %v6187 = vmul.f32 %v6123, %v5371
        %v6188 = vmul.f32 %v6124, %v5372
        %v6189 = vmul.f32 %v6125, %v5373
        %v6190 = vmul.f32 %v6126, %v5374
        %v6191 = vmul.f32 %v6127, %v5375
        %v6192 = vmul.f32 %v6128, %v5376
        %v6193 = vmul.f32 %v6129, %v5377
        %v6194 = vmul.f32 %v6130, %v5378
        %v6195 = vmul.f32 %v6131, %v5379
        %v6196 = vmul.f32 %v6132, %v5380
        %v6197 = vmul.f32 %v6133, %v5381
        %v6198 = vmul.f32 %v6134, %v5382
        %v6199 = vmul.f32 %v6135, %v5383
        %v6200 = vmul.f32 %v6136, %v5384
        %v6201 = vmul.f32 %v6137, %v5385
        %v6202 = vmul.f32 %v6138, %v5386
        %v6203 = vmul.f32 %v6139, %v5387
        %v6204 = vmul.f32 %v6140, %v5388
        %v6205 = vmul.f32 %v6141, %v5389
        %v6206 = vmul.f32 %v6142, %v5390
        %v6207 = vmul.f32 %v6143, %v5391
        %v6208 = vmul.f32 %v6144, %v5392
        %v6209 = vmul.f32 %v6145, %v5393
        %v6210 = vmul.f32 %v6146, %v5394
        %v6211 = vmul.f32 %v6147, %v5395
        %v6212 = vmul.f32 %v6148, %v5396
        %v6213 = vmul.f32 %v6149, %v5397
        %v6214 = vmul.f32 %v6150, %v5398
        %v6215 = vmul.f32 %v6151, %v5399
        %v6216 = vmul.f32 %v6152, %v5400
        %v6217 = vmul.f32 %v6153, %v5401
        %v6218 = vmul.f32 %v6154, %v5402
        %v6219 = vmul.f32 %v6155, %v5403
        %v6220 = vmul.f32 %v6156, %v5404
        %v6221 = vmul.f32 %v6157, %v5405
        %v6222 = vmul.f32 %v6158, %v5406
        %v6223 = vmul.f32 %v6159, %v5407
        %v6224 = vmul.f32 %v6160, %v5408
        %v6225 = vmul.f32 %v6161, %v5409
        %v6226 = vmul.f32 %v6162, %v5410
        %v6227 = vmul.f32 %v6163, %v5411
        %v6228 = vmul.f32 %v6164, %v5412
        %v6229 = vmul.f32 %v6165, %v5413
        %v6230 = vmul.f32 %v6166, %v5414
        %v6231 = vmul.f32 %v6167, %v5415
        %v6232 = vmul.f32 %v6168, %v5416
        %v6233 = vmul.f32 %v6169, %v5417
        %v6234 = vmul.f32 %v6170, %v5418
        %v6235 = vmul.f32 %v6171, %v5419
        %v6236 = vmul.f32 %v6172, %v5420
        %v6237 = vlaneseq
        %v6238 = vshrl.u32 %v6237, 7
        %v6239 = vsub.s32 3, %v6238
        %v6240 = vrot.slane %v3871, %v6239
        %v6241 = vlaneseq
        %v6242 = vshrl.u32 %v6241, 7
        %v6243 = vsub.s32 3, %v6242
        %v6244 = vrot.slane %v3872, %v6243
        %v6245 = vsub.f32 %v6240, %v4261
        %v6246 = vsub.f32 %v6244, %v4261
        %v6247 = vsub.f32 %v6240, %v4262
        %v6248 = vsub.f32 %v6244, %v4262
        %v6249 = vsub.f32 %v6240, %v4263
        %v6250 = vsub.f32 %v6244, %v4263
        %v6251 = vsub.f32 %v6240, %v4264
        %v6252 = vsub.f32 %v6244, %v4264
        %v6253 = vsub.f32 %v6240, %v4265
        %v6254 = vsub.f32 %v6244, %v4265
        %v6255 = vsub.f32 %v6240, %v4266
        %v6256 = vsub.f32 %v6244, %v4266
        %v6257 = vsub.f32 %v6240, %v4267
        %v6258 = vsub.f32 %v6244, %v4267
        %v6259 = vsub.f32 %v6240, %v4268
        %v6260 = vsub.f32 %v6244, %v4268
        %v6261 = vsub.f32 %v6240, %v4269
        %v6262 = vsub.f32 %v6244, %v4269
        %v6263 = vsub.f32 %v6240, %v4270
        %v6264 = vsub.f32 %v6244, %v4270
        %v6265 = vsub.f32 %v6240, %v4271
        %v6266 = vsub.f32 %v6244, %v4271
        %v6267 = vsub.f32 %v6240, %v4272
        %v6268 = vsub.f32 %v6244, %v4272
        %v6269 = vsub.f32 %v6240, %v4273
        %v6270 = vsub.f32 %v6244, %v4273
        %v6271 = vsub.f32 %v6240, %v4274
        %v6272 = vsub.f32 %v6244, %v4274
        %v6273 = vsub.f32 %v6240, %v4275
        %v6274 = vsub.f32 %v6244, %v4275
        %v6275 = vsub.f32 %v6240, %v4276
        %v6276 = vsub.f32 %v6244, %v4276
        %v6277 = vsub.f32 %v6240, %v4277
        %v6278 = vsub.f32 %v6244, %v4277
        %v6279 = vsub.f32 %v6240, %v4278
        %v6280 = vsub.f32 %v6244, %v4278
        %v6281 = vsub.f32 %v6240, %v4279
        %v6282 = vsub.f32 %v6244, %v4279
        %v6283 = vsub.f32 %v6240, %v4280
        %v6284 = vsub.f32 %v6244, %v4280
        %v6285 = vsub.f32 %v6240, %v4281
        %v6286 = vsub.f32 %v6244, %v4281
        %v6287 = vsub.f32 %v6240, %v4282
        %v6288 = vsub.f32 %v6244, %v4282
        %v6289 = vsub.f32 %v6240, %v4283
        %v6290 = vsub.f32 %v6244, %v4283
        %v6291 = vsub.f32 %v6240, %v4284
        %v6292 = vsub.f32 %v6244, %v4284
        %v6293 = vsub.f32 %v6240, %v4285
        %v6294 = vsub.f32 %v6244, %v4285
        %v6295 = vsub.f32 %v6240, %v4286
        %v6296 = vsub.f32 %v6244, %v4286
        %v6297 = vsub.f32 %v6240, %v4287
        %v6298 = vsub.f32 %v6244, %v4287
        %v6299 = vsub.f32 %v6240, %v4288
        %v6300 = vsub.f32 %v6244, %v4288
        %v6301 = vsub.f32 %v6240, %v4289
        %v6302 = vsub.f32 %v6244, %v4289
        %v6303 = vsub.f32 %v6240, %v4290
        %v6304 = vsub.f32 %v6244, %v4290
        %v6305 = vsub.f32 %v6240, %v4291
        %v6306 = vsub.f32 %v6244, %v4291
        %v6307 = vsub.f32 %v6240, %v4292
        %v6308 = vsub.f32 %v6244, %v4292
        %v6309 = vlaneseq
        %v6310 = vshrl.u32 %v6309, 7
        %v6311 = vsub.s32 4, %v6310
        %v6312 = vrot.slane %v3871, %v6311
        %v6313 = vlaneseq
        %v6314 = vshrl.u32 %v6313, 7
        %v6315 = vsub.s32 4, %v6314
        %v6316 = vrot.slane %v3872, %v6315
        %v6317 = vmul.f32 %v6245, %v6312
        %v6318 = vmul.f32 %v6246, %v6316
        %v6319 = vmul.f32 %v6247, %v6312
        %v6320 = vmul.f32 %v6248, %v6316
        %v6321 = vmul.f32 %v6249, %v6312
        %v6322 = vmul.f32 %v6250, %v6316
        %v6323 = vmul.f32 %v6251, %v6312
        %v6324 = vmul.f32 %v6252, %v6316
        %v6325 = vmul.f32 %v6253, %v6312
        %v6326 = vmul.f32 %v6254, %v6316
        %v6327 = vmul.f32 %v6255, %v6312
        %v6328 = vmul.f32 %v6256, %v6316
        %v6329 = vmul.f32 %v6257, %v6312
        %v6330 = vmul.f32 %v6258, %v6316
        %v6331 = vmul.f32 %v6259, %v6312
        %v6332 = vmul.f32 %v6260, %v6316
        %v6333 = vmul.f32 %v6261, %v6312
        %v6334 = vmul.f32 %v6262, %v6316
        %v6335 = vmul.f32 %v6263, %v6312
        %v6336 = vmul.f32 %v6264, %v6316
        %v6337 = vmul.f32 %v6265, %v6312
        %v6338 = vmul.f32 %v6266, %v6316
        %v6339 = vmul.f32 %v6267, %v6312
        %v6340 = vmul.f32 %v6268, %v6316
        %v6341 = vmul.f32 %v6269, %v6312
        %v6342 = vmul.f32 %v6270, %v6316
        %v6343 = vmul.f32 %v6271, %v6312
        %v6344 = vmul.f32 %v6272, %v6316
        %v6345 = vmul.f32 %v6273, %v6312
        %v6346 = vmul.f32 %v6274, %v6316
        %v6347 = vmul.f32 %v6275, %v6312
        %v6348 = vmul.f32 %v6276, %v6316
        %v6349 = vmul.f32 %v6277, %v6312
        %v6350 = vmul.f32 %v6278, %v6316
        %v6351 = vmul.f32 %v6279, %v6312
        %v6352 = vmul.f32 %v6280, %v6316
        %v6353 = vmul.f32 %v6281, %v6312
        %v6354 = vmul.f32 %v6282, %v6316
        %v6355 = vmul.f32 %v6283, %v6312
        %v6356 = vmul.f32 %v6284, %v6316
        %v6357 = vmul.f32 %v6285, %v6312
        %v6358 = vmul.f32 %v6286, %v6316
        %v6359 = vmul.f32 %v6287, %v6312
        %v6360 = vmul.f32 %v6288, %v6316
        %v6361 = vmul.f32 %v6289, %v6312
        %v6362 = vmul.f32 %v6290, %v6316
        %v6363 = vmul.f32 %v6291, %v6312
        %v6364 = vmul.f32 %v6292, %v6316
        %v6365 = vmul.f32 %v6293, %v6312
        %v6366 = vmul.f32 %v6294, %v6316
        %v6367 = vmul.f32 %v6295, %v6312
        %v6368 = vmul.f32 %v6296, %v6316
        %v6369 = vmul.f32 %v6297, %v6312
        %v6370 = vmul.f32 %v6298, %v6316
        %v6371 = vmul.f32 %v6299, %v6312
        %v6372 = vmul.f32 %v6300, %v6316
        %v6373 = vmul.f32 %v6301, %v6312
        %v6374 = vmul.f32 %v6302, %v6316
        %v6375 = vmul.f32 %v6303, %v6312
        %v6376 = vmul.f32 %v6304, %v6316
        %v6377 = vmul.f32 %v6305, %v6312
        %v6378 = vmul.f32 %v6306, %v6316
        %v6379 = vmul.f32 %v6307, %v6312
        %v6380 = vmul.f32 %v6308, %v6316
        %v6381 = vmul.f32 %v6317, %v5421
        %v6382 = vmul.f32 %v6318, %v5422
        %v6383 = vmul.f32 %v6319, %v5423
        %v6384 = vmul.f32 %v6320, %v5424
        %v6385 = vmul.f32 %v6321, %v5425
        %v6386 = vmul.f32 %v6322, %v5426
        %v6387 = vmul.f32 %v6323, %v5427
        %v6388 = vmul.f32 %v6324, %v5428
        %v6389 = vmul.f32 %v6325, %v5429
        %v6390 = vmul.f32 %v6326, %v5430
        %v6391 = vmul.f32 %v6327, %v5431
        %v6392 = vmul.f32 %v6328, %v5432
        %v6393 = vmul.f32 %v6329, %v5433
        %v6394 = vmul.f32 %v6330, %v5434
        %v6395 = vmul.f32 %v6331, %v5435
        %v6396 = vmul.f32 %v6332, %v5436
        %v6397 = vmul.f32 %v6333, %v5437
        %v6398 = vmul.f32 %v6334, %v5438
        %v6399 = vmul.f32 %v6335, %v5439
        %v6400 = vmul.f32 %v6336, %v5440
        %v6401 = vmul.f32 %v6337, %v5441
        %v6402 = vmul.f32 %v6338, %v5442
        %v6403 = vmul.f32 %v6339, %v5443
        %v6404 = vmul.f32 %v6340, %v5444
        %v6405 = vmul.f32 %v6341, %v5445
        %v6406 = vmul.f32 %v6342, %v5446
        %v6407 = vmul.f32 %v6343, %v5447
        %v6408 = vmul.f32 %v6344, %v5448
        %v6409 = vmul.f32 %v6345, %v5449
        %v6410 = vmul.f32 %v6346, %v5450
        %v6411 = vmul.f32 %v6347, %v5451
        %v6412 = vmul.f32 %v6348, %v5452
        %v6413 = vmul.f32 %v6349, %v5453
        %v6414 = vmul.f32 %v6350, %v5454
        %v6415 = vmul.f32 %v6351, %v5455
        %v6416 = vmul.f32 %v6352, %v5456
        %v6417 = vmul.f32 %v6353, %v5457
        %v6418 = vmul.f32 %v6354, %v5458
        %v6419 = vmul.f32 %v6355, %v5459
        %v6420 = vmul.f32 %v6356, %v5460
        %v6421 = vmul.f32 %v6357, %v5461
        %v6422 = vmul.f32 %v6358, %v5462
        %v6423 = vmul.f32 %v6359, %v5463
        %v6424 = vmul.f32 %v6360, %v5464
        %v6425 = vmul.f32 %v6361, %v5465
        %v6426 = vmul.f32 %v6362, %v5466
        %v6427 = vmul.f32 %v6363, %v5467
        %v6428 = vmul.f32 %v6364, %v5468
        %v6429 = vmul.f32 %v6365, %v5469
        %v6430 = vmul.f32 %v6366, %v5470
        %v6431 = vmul.f32 %v6367, %v5471
        %v6432 = vmul.f32 %v6368, %v5472
        %v6433 = vmul.f32 %v6369, %v5473
        %v6434 = vmul.f32 %v6370, %v5474
        %v6435 = vmul.f32 %v6371, %v5475
        %v6436 = vmul.f32 %v6372, %v5476
        %v6437 = vmul.f32 %v6373, %v5477
        %v6438 = vmul.f32 %v6374, %v5478
        %v6439 = vmul.f32 %v6375, %v5479
        %v6440 = vmul.f32 %v6376, %v5480
        %v6441 = vmul.f32 %v6377, %v5481
        %v6442 = vmul.f32 %v6378, %v5482
        %v6443 = vmul.f32 %v6379, %v5483
        %v6444 = vmul.f32 %v6380, %v5484
        %v6445 = vadd.f32 %v6173, %v6381
        %v6446 = vadd.f32 %v6174, %v6382
        %v6447 = vadd.f32 %v6175, %v6383
        %v6448 = vadd.f32 %v6176, %v6384
        %v6449 = vadd.f32 %v6177, %v6385
        %v6450 = vadd.f32 %v6178, %v6386
        %v6451 = vadd.f32 %v6179, %v6387
        %v6452 = vadd.f32 %v6180, %v6388
        %v6453 = vadd.f32 %v6181, %v6389
        %v6454 = vadd.f32 %v6182, %v6390
        %v6455 = vadd.f32 %v6183, %v6391
        %v6456 = vadd.f32 %v6184, %v6392
        %v6457 = vadd.f32 %v6185, %v6393
        %v6458 = vadd.f32 %v6186, %v6394
        %v6459 = vadd.f32 %v6187, %v6395
        %v6460 = vadd.f32 %v6188, %v6396
        %v6461 = vadd.f32 %v6189, %v6397
        %v6462 = vadd.f32 %v6190, %v6398
        %v6463 = vadd.f32 %v6191, %v6399
        %v6464 = vadd.f32 %v6192, %v6400
        %v6465 = vadd.f32 %v6193, %v6401
        %v6466 = vadd.f32 %v6194, %v6402
        %v6467 = vadd.f32 %v6195, %v6403
        %v6468 = vadd.f32 %v6196, %v6404
        %v6469 = vadd.f32 %v6197, %v6405
        %v6470 = vadd.f32 %v6198, %v6406
        %v6471 = vadd.f32 %v6199, %v6407
        %v6472 = vadd.f32 %v6200, %v6408
        %v6473 = vadd.f32 %v6201, %v6409
        %v6474 = vadd.f32 %v6202, %v6410
        %v6475 = vadd.f32 %v6203, %v6411
        %v6476 = vadd.f32 %v6204, %v6412
        %v6477 = vadd.f32 %v6205, %v6413
        %v6478 = vadd.f32 %v6206, %v6414
        %v6479 = vadd.f32 %v6207, %v6415
        %v6480 = vadd.f32 %v6208, %v6416
        %v6481 = vadd.f32 %v6209, %v6417
        %v6482 = vadd.f32 %v6210, %v6418
        %v6483 = vadd.f32 %v6211, %v6419
        %v6484 = vadd.f32 %v6212, %v6420
        %v6485 = vadd.f32 %v6213, %v6421
        %v6486 = vadd.f32 %v6214, %v6422
        %v6487 = vadd.f32 %v6215, %v6423
        %v6488 = vadd.f32 %v6216, %v6424
        %v6489 = vadd.f32 %v6217, %v6425
        %v6490 = vadd.f32 %v6218, %v6426
        %v6491 = vadd.f32 %v6219, %v6427
        %v6492 = vadd.f32 %v6220, %v6428
        %v6493 = vadd.f32 %v6221, %v6429
        %v6494 = vadd.f32 %v6222, %v6430
        %v6495 = vadd.f32 %v6223, %v6431
        %v6496 = vadd.f32 %v6224, %v6432
        %v6497 = vadd.f32 %v6225, %v6433
        %v6498 = vadd.f32 %v6226, %v6434
        %v6499 = vadd.f32 %v6227, %v6435
        %v6500 = vadd.f32 %v6228, %v6436
        %v6501 = vadd.f32 %v6229, %v6437
        %v6502 = vadd.f32 %v6230, %v6438
        %v6503 = vadd.f32 %v6231, %v6439
        %v6504 = vadd.f32 %v6232, %v6440
        %v6505 = vadd.f32 %v6233, %v6441
        %v6506 = vadd.f32 %v6234, %v6442
        %v6507 = vadd.f32 %v6235, %v6443
        %v6508 = vadd.f32 %v6236, %v6444
        %v6509 = vlaneseq
        %v6510 = vshrl.u32 %v6509, 7
        %v6511 = vsub.s32 5, %v6510
        %v6512 = vrot.slane %v3871, %v6511
        %v6513 = vlaneseq
        %v6514 = vshrl.u32 %v6513, 7
        %v6515 = vsub.s32 5, %v6514
        %v6516 = vrot.slane %v3872, %v6515
        %v6517 = vsub.f32 %v4261, %v6512
        %v6518 = vsub.f32 %v4261, %v6516
        %v6519 = vsub.f32 %v4262, %v6512
        %v6520 = vsub.f32 %v4262, %v6516
        %v6521 = vsub.f32 %v4263, %v6512
        %v6522 = vsub.f32 %v4263, %v6516
        %v6523 = vsub.f32 %v4264, %v6512
        %v6524 = vsub.f32 %v4264, %v6516
        %v6525 = vsub.f32 %v4265, %v6512
        %v6526 = vsub.f32 %v4265, %v6516
        %v6527 = vsub.f32 %v4266, %v6512
        %v6528 = vsub.f32 %v4266, %v6516
        %v6529 = vsub.f32 %v4267, %v6512
        %v6530 = vsub.f32 %v4267, %v6516
        %v6531 = vsub.f32 %v4268, %v6512
        %v6532 = vsub.f32 %v4268, %v6516
        %v6533 = vsub.f32 %v4269, %v6512
        %v6534 = vsub.f32 %v4269, %v6516
        %v6535 = vsub.f32 %v4270, %v6512
        %v6536 = vsub.f32 %v4270, %v6516
        %v6537 = vsub.f32 %v4271, %v6512
        %v6538 = vsub.f32 %v4271, %v6516
        %v6539 = vsub.f32 %v4272, %v6512
        %v6540 = vsub.f32 %v4272, %v6516
        %v6541 = vsub.f32 %v4273, %v6512
        %v6542 = vsub.f32 %v4273, %v6516
        %v6543 = vsub.f32 %v4274, %v6512
        %v6544 = vsub.f32 %v4274, %v6516
        %v6545 = vsub.f32 %v4275, %v6512
        %v6546 = vsub.f32 %v4275, %v6516
        %v6547 = vsub.f32 %v4276, %v6512
        %v6548 = vsub.f32 %v4276, %v6516
        %v6549 = vsub.f32 %v4277, %v6512
        %v6550 = vsub.f32 %v4277, %v6516
        %v6551 = vsub.f32 %v4278, %v6512
        %v6552 = vsub.f32 %v4278, %v6516
        %v6553 = vsub.f32 %v4279, %v6512
        %v6554 = vsub.f32 %v4279, %v6516
        %v6555 = vsub.f32 %v4280, %v6512
        %v6556 = vsub.f32 %v4280, %v6516
        %v6557 = vsub.f32 %v4281, %v6512
        %v6558 = vsub.f32 %v4281, %v6516
        %v6559 = vsub.f32 %v4282, %v6512
        %v6560 = vsub.f32 %v4282, %v6516
        %v6561 = vsub.f32 %v4283, %v6512
        %v6562 = vsub.f32 %v4283, %v6516
        %v6563 = vsub.f32 %v4284, %v6512
        %v6564 = vsub.f32 %v4284, %v6516
        %v6565 = vsub.f32 %v4285, %v6512
        %v6566 = vsub.f32 %v4285, %v6516
        %v6567 = vsub.f32 %v4286, %v6512
        %v6568 = vsub.f32 %v4286, %v6516
        %v6569 = vsub.f32 %v4287, %v6512
        %v6570 = vsub.f32 %v4287, %v6516
        %v6571 = vsub.f32 %v4288, %v6512
        %v6572 = vsub.f32 %v4288, %v6516
        %v6573 = vsub.f32 %v4289, %v6512
        %v6574 = vsub.f32 %v4289, %v6516
        %v6575 = vsub.f32 %v4290, %v6512
        %v6576 = vsub.f32 %v4290, %v6516
        %v6577 = vsub.f32 %v4291, %v6512
        %v6578 = vsub.f32 %v4291, %v6516
        %v6579 = vsub.f32 %v4292, %v6512
        %v6580 = vsub.f32 %v4292, %v6516
        %v6581 = vlaneseq
        %v6582 = vshrl.u32 %v6581, 7
        %v6583 = vsub.s32 6, %v6582
        %v6584 = vrot.slane %v3871, %v6583
        %v6585 = vlaneseq
        %v6586 = vshrl.u32 %v6585, 7
        %v6587 = vsub.s32 6, %v6586
        %v6588 = vrot.slane %v3872, %v6587
        %v6589 = vmul.f32 %v6517, %v6584
        %v6590 = vmul.f32 %v6518, %v6588
        %v6591 = vmul.f32 %v6519, %v6584
        %v6592 = vmul.f32 %v6520, %v6588
        %v6593 = vmul.f32 %v6521, %v6584
        %v6594 = vmul.f32 %v6522, %v6588
        %v6595 = vmul.f32 %v6523, %v6584
        %v6596 = vmul.f32 %v6524, %v6588
        %v6597 = vmul.f32 %v6525, %v6584
        %v6598 = vmul.f32 %v6526, %v6588
        %v6599 = vmul.f32 %v6527, %v6584
        %v6600 = vmul.f32 %v6528, %v6588
        %v6601 = vmul.f32 %v6529, %v6584
        %v6602 = vmul.f32 %v6530, %v6588
        %v6603 = vmul.f32 %v6531, %v6584
        %v6604 = vmul.f32 %v6532, %v6588
        %v6605 = vmul.f32 %v6533, %v6584
        %v6606 = vmul.f32 %v6534, %v6588
        %v6607 = vmul.f32 %v6535, %v6584
        %v6608 = vmul.f32 %v6536, %v6588
        %v6609 = vmul.f32 %v6537, %v6584
        %v6610 = vmul.f32 %v6538, %v6588
        %v6611 = vmul.f32 %v6539, %v6584
        %v6612 = vmul.f32 %v6540, %v6588
        %v6613 = vmul.f32 %v6541, %v6584
        %v6614 = vmul.f32 %v6542, %v6588
        %v6615 = vmul.f32 %v6543, %v6584
        %v6616 = vmul.f32 %v6544, %v6588
        %v6617 = vmul.f32 %v6545, %v6584
        %v6618 = vmul.f32 %v6546, %v6588
        %v6619 = vmul.f32 %v6547, %v6584
        %v6620 = vmul.f32 %v6548, %v6588
        %v6621 = vmul.f32 %v6549, %v6584
        %v6622 = vmul.f32 %v6550, %v6588
        %v6623 = vmul.f32 %v6551, %v6584
        %v6624 = vmul.f32 %v6552, %v6588
        %v6625 = vmul.f32 %v6553, %v6584
        %v6626 = vmul.f32 %v6554, %v6588
        %v6627 = vmul.f32 %v6555, %v6584
        %v6628 = vmul.f32 %v6556, %v6588
        %v6629 = vmul.f32 %v6557, %v6584
        %v6630 = vmul.f32 %v6558, %v6588
        %v6631 = vmul.f32 %v6559, %v6584
        %v6632 = vmul.f32 %v6560, %v6588
        %v6633 = vmul.f32 %v6561, %v6584
        %v6634 = vmul.f32 %v6562, %v6588
        %v6635 = vmul.f32 %v6563, %v6584
        %v6636 = vmul.f32 %v6564, %v6588
        %v6637 = vmul.f32 %v6565, %v6584
        %v6638 = vmul.f32 %v6566, %v6588
        %v6639 = vmul.f32 %v6567, %v6584
        %v6640 = vmul.f32 %v6568, %v6588
        %v6641 = vmul.f32 %v6569, %v6584
        %v6642 = vmul.f32 %v6570, %v6588
        %v6643 = vmul.f32 %v6571, %v6584
        %v6644 = vmul.f32 %v6572, %v6588
        %v6645 = vmul.f32 %v6573, %v6584
        %v6646 = vmul.f32 %v6574, %v6588
        %v6647 = vmul.f32 %v6575, %v6584
        %v6648 = vmul.f32 %v6576, %v6588
        %v6649 = vmul.f32 %v6577, %v6584
        %v6650 = vmul.f32 %v6578, %v6588
        %v6651 = vmul.f32 %v6579, %v6584
        %v6652 = vmul.f32 %v6580, %v6588
        %v6653 = vmul.f32 %v6589, %v5421
        %v6654 = vmul.f32 %v6590, %v5422
        %v6655 = vmul.f32 %v6591, %v5423
        %v6656 = vmul.f32 %v6592, %v5424
        %v6657 = vmul.f32 %v6593, %v5425
        %v6658 = vmul.f32 %v6594, %v5426
        %v6659 = vmul.f32 %v6595, %v5427
        %v6660 = vmul.f32 %v6596, %v5428
        %v6661 = vmul.f32 %v6597, %v5429
        %v6662 = vmul.f32 %v6598, %v5430
        %v6663 = vmul.f32 %v6599, %v5431
        %v6664 = vmul.f32 %v6600, %v5432
        %v6665 = vmul.f32 %v6601, %v5433
        %v6666 = vmul.f32 %v6602, %v5434
        %v6667 = vmul.f32 %v6603, %v5435
        %v6668 = vmul.f32 %v6604, %v5436
        %v6669 = vmul.f32 %v6605, %v5437
        %v6670 = vmul.f32 %v6606, %v5438
        %v6671 = vmul.f32 %v6607, %v5439
        %v6672 = vmul.f32 %v6608, %v5440
        %v6673 = vmul.f32 %v6609, %v5441
        %v6674 = vmul.f32 %v6610, %v5442
        %v6675 = vmul.f32 %v6611, %v5443
        %v6676 = vmul.f32 %v6612, %v5444
        %v6677 = vmul.f32 %v6613, %v5445
        %v6678 = vmul.f32 %v6614, %v5446
        %v6679 = vmul.f32 %v6615, %v5447
        %v6680 = vmul.f32 %v6616, %v5448
        %v6681 = vmul.f32 %v6617, %v5449
        %v6682 = vmul.f32 %v6618, %v5450
        %v6683 = vmul.f32 %v6619, %v5451
        %v6684 = vmul.f32 %v6620, %v5452
        %v6685 = vmul.f32 %v6621, %v5453
        %v6686 = vmul.f32 %v6622, %v5454
        %v6687 = vmul.f32 %v6623, %v5455
        %v6688 = vmul.f32 %v6624, %v5456
        %v6689 = vmul.f32 %v6625, %v5457
        %v6690 = vmul.f32 %v6626, %v5458
        %v6691 = vmul.f32 %v6627, %v5459
        %v6692 = vmul.f32 %v6628, %v5460
        %v6693 = vmul.f32 %v6629, %v5461
        %v6694 = vmul.f32 %v6630, %v5462
        %v6695 = vmul.f32 %v6631, %v5463
        %v6696 = vmul.f32 %v6632, %v5464
        %v6697 = vmul.f32 %v6633, %v5465
        %v6698 = vmul.f32 %v6634, %v5466
        %v6699 = vmul.f32 %v6635, %v5467
        %v6700 = vmul.f32 %v6636, %v5468
        %v6701 = vmul.f32 %v6637, %v5469
        %v6702 = vmul.f32 %v6638, %v5470
        %v6703 = vmul.f32 %v6639, %v5471
        %v6704 = vmul.f32 %v6640, %v5472
        %v6705 = vmul.f32 %v6641, %v5473
        %v6706 = vmul.f32 %v6642, %v5474
        %v6707 = vmul.f32 %v6643, %v5475
        %v6708 = vmul.f32 %v6644, %v5476
        %v6709 = vmul.f32 %v6645, %v5477
        %v6710 = vmul.f32 %v6646, %v5478
        %v6711 = vmul.f32 %v6647, %v5479
        %v6712 = vmul.f32 %v6648, %v5480
        %v6713 = vmul.f32 %v6649, %v5481
        %v6714 = vmul.f32 %v6650, %v5482
        %v6715 = vmul.f32 %v6651, %v5483
        %v6716 = vmul.f32 %v6652, %v5484
        %v6717 = vlaneseq
        %v6718 = vshrl.u32 %v6717, 7
        %v6719 = vsub.s32 7, %v6718
        %v6720 = vrot.slane %v3871, %v6719
        %v6721 = vlaneseq
        %v6722 = vshrl.u32 %v6721, 7
        %v6723 = vsub.s32 7, %v6722
        %v6724 = vrot.slane %v3872, %v6723
        %v6725 = vsub.f32 %v6720, %v4261
        %v6726 = vsub.f32 %v6724, %v4261
        %v6727 = vsub.f32 %v6720, %v4262
        %v6728 = vsub.f32 %v6724, %v4262
        %v6729 = vsub.f32 %v6720, %v4263
        %v6730 = vsub.f32 %v6724, %v4263
        %v6731 = vsub.f32 %v6720, %v4264
        %v6732 = vsub.f32 %v6724, %v4264
        %v6733 = vsub.f32 %v6720, %v4265
        %v6734 = vsub.f32 %v6724, %v4265
        %v6735 = vsub.f32 %v6720, %v4266
        %v6736 = vsub.f32 %v6724, %v4266
        %v6737 = vsub.f32 %v6720, %v4267
        %v6738 = vsub.f32 %v6724, %v4267
        %v6739 = vsub.f32 %v6720, %v4268
        %v6740 = vsub.f32 %v6724, %v4268
        %v6741 = vsub.f32 %v6720, %v4269
        %v6742 = vsub.f32 %v6724, %v4269
        %v6743 = vsub.f32 %v6720, %v4270
        %v6744 = vsub.f32 %v6724, %v4270
        %v6745 = vsub.f32 %v6720, %v4271
        %v6746 = vsub.f32 %v6724, %v4271
        %v6747 = vsub.f32 %v6720, %v4272
        %v6748 = vsub.f32 %v6724, %v4272
        %v6749 = vsub.f32 %v6720, %v4273
        %v6750 = vsub.f32 %v6724, %v4273
        %v6751 = vsub.f32 %v6720, %v4274
        %v6752 = vsub.f32 %v6724, %v4274
        %v6753 = vsub.f32 %v6720, %v4275
        %v6754 = vsub.f32 %v6724, %v4275
        %v6755 = vsub.f32 %v6720, %v4276
        %v6756 = vsub.f32 %v6724, %v4276
        %v6757 = vsub.f32 %v6720, %v4277
        %v6758 = vsub.f32 %v6724, %v4277
        %v6759 = vsub.f32 %v6720, %v4278
        %v6760 = vsub.f32 %v6724, %v4278
        %v6761 = vsub.f32 %v6720, %v4279
        %v6762 = vsub.f32 %v6724, %v4279
        %v6763 = vsub.f32 %v6720, %v4280
        %v6764 = vsub.f32 %v6724, %v4280
        %v6765 = vsub.f32 %v6720, %v4281
        %v6766 = vsub.f32 %v6724, %v4281
        %v6767 = vsub.f32 %v6720, %v4282
        %v6768 = vsub.f32 %v6724, %v4282
        %v6769 = vsub.f32 %v6720, %v4283
        %v6770 = vsub.f32 %v6724, %v4283
        %v6771 = vsub.f32 %v6720, %v4284
        %v6772 = vsub.f32 %v6724, %v4284
        %v6773 = vsub.f32 %v6720, %v4285
        %v6774 = vsub.f32 %v6724, %v4285
        %v6775 = vsub.f32 %v6720, %v4286
        %v6776 = vsub.f32 %v6724, %v4286
        %v6777 = vsub.f32 %v6720, %v4287
        %v6778 = vsub.f32 %v6724, %v4287
        %v6779 = vsub.f32 %v6720, %v4288
        %v6780 = vsub.f32 %v6724, %v4288
        %v6781 = vsub.f32 %v6720, %v4289
        %v6782 = vsub.f32 %v6724, %v4289
        %v6783 = vsub.f32 %v6720, %v4290
        %v6784 = vsub.f32 %v6724, %v4290
        %v6785 = vsub.f32 %v6720, %v4291
        %v6786 = vsub.f32 %v6724, %v4291
        %v6787 = vsub.f32 %v6720, %v4292
        %v6788 = vsub.f32 %v6724, %v4292
        %v6789 = vlaneseq
        %v6790 = vshrl.u32 %v6789, 7
        %v6791 = vsub.s32 0, %v6790
        %v6792 = vrot.slane %v3873, %v6791
        %v6793 = vlaneseq
        %v6794 = vshrl.u32 %v6793, 7
        %v6795 = vsub.s32 0, %v6794
        %v6796 = vrot.slane %v3874, %v6795
        %v6797 = vmul.f32 %v6725, %v6792
        %v6798 = vmul.f32 %v6726, %v6796
        %v6799 = vmul.f32 %v6727, %v6792
        %v6800 = vmul.f32 %v6728, %v6796
        %v6801 = vmul.f32 %v6729, %v6792
        %v6802 = vmul.f32 %v6730, %v6796
        %v6803 = vmul.f32 %v6731, %v6792
        %v6804 = vmul.f32 %v6732, %v6796
        %v6805 = vmul.f32 %v6733, %v6792
        %v6806 = vmul.f32 %v6734, %v6796
        %v6807 = vmul.f32 %v6735, %v6792
        %v6808 = vmul.f32 %v6736, %v6796
        %v6809 = vmul.f32 %v6737, %v6792
        %v6810 = vmul.f32 %v6738, %v6796
        %v6811 = vmul.f32 %v6739, %v6792
        %v6812 = vmul.f32 %v6740, %v6796
        %v6813 = vmul.f32 %v6741, %v6792
        %v6814 = vmul.f32 %v6742, %v6796
        %v6815 = vmul.f32 %v6743, %v6792
        %v6816 = vmul.f32 %v6744, %v6796
        %v6817 = vmul.f32 %v6745, %v6792
        %v6818 = vmul.f32 %v6746, %v6796
        %v6819 = vmul.f32 %v6747, %v6792
        %v6820 = vmul.f32 %v6748, %v6796
        %v6821 = vmul.f32 %v6749, %v6792
        %v6822 = vmul.f32 %v6750, %v6796
        %v6823 = vmul.f32 %v6751, %v6792
        %v6824 = vmul.f32 %v6752, %v6796
        %v6825 = vmul.f32 %v6753, %v6792
        %v6826 = vmul.f32 %v6754, %v6796
        %v6827 = vmul.f32 %v6755, %v6792
        %v6828 = vmul.f32 %v6756, %v6796
        %v6829 = vmul.f32 %v6757, %v6792
        %v6830 = vmul.f32 %v6758, %v6796
        %v6831 = vmul.f32 %v6759, %v6792
        %v6832 = vmul.f32 %v6760, %v6796
        %v6833 = vmul.f32 %v6761, %v6792
        %v6834 = vmul.f32 %v6762, %v6796
        %v6835 = vmul.f32 %v6763, %v6792
        %v6836 = vmul.f32 %v6764, %v6796
        %v6837 = vmul.f32 %v6765, %v6792
        %v6838 = vmul.f32 %v6766, %v6796
        %v6839 = vmul.f32 %v6767, %v6792
        %v6840 = vmul.f32 %v6768, %v6796
        %v6841 = vmul.f32 %v6769, %v6792
        %v6842 = vmul.f32 %v6770, %v6796
        %v6843 = vmul.f32 %v6771, %v6792
        %v6844 = vmul.f32 %v6772, %v6796
        %v6845 = vmul.f32 %v6773, %v6792
        %v6846 = vmul.f32 %v6774, %v6796
        %v6847 = vmul.f32 %v6775, %v6792
        %v6848 = vmul.f32 %v6776, %v6796
        %v6849 = vmul.f32 %v6777, %v6792
        %v6850 = vmul.f32 %v6778, %v6796
        %v6851 = vmul.f32 %v6779, %v6792
        %v6852 = vmul.f32 %v6780, %v6796
        %v6853 = vmul.f32 %v6781, %v6792
        %v6854 = vmul.f32 %v6782, %v6796
        %v6855 = vmul.f32 %v6783, %v6792
        %v6856 = vmul.f32 %v6784, %v6796
        %v6857 = vmul.f32 %v6785, %v6792
        %v6858 = vmul.f32 %v6786, %v6796
        %v6859 = vmul.f32 %v6787, %v6792
        %v6860 = vmul.f32 %v6788, %v6796
        %v6861 = vmul.f32 %v6797, %v5485
        %v6862 = vmul.f32 %v6798, %v5486
        %v6863 = vmul.f32 %v6799, %v5487
        %v6864 = vmul.f32 %v6800, %v5488
        %v6865 = vmul.f32 %v6801, %v5489
        %v6866 = vmul.f32 %v6802, %v5490
        %v6867 = vmul.f32 %v6803, %v5491
        %v6868 = vmul.f32 %v6804, %v5492
        %v6869 = vmul.f32 %v6805, %v5493
        %v6870 = vmul.f32 %v6806, %v5494
        %v6871 = vmul.f32 %v6807, %v5495
        %v6872 = vmul.f32 %v6808, %v5496
        %v6873 = vmul.f32 %v6809, %v5497
        %v6874 = vmul.f32 %v6810, %v5498
        %v6875 = vmul.f32 %v6811, %v5499
        %v6876 = vmul.f32 %v6812, %v5500
        %v6877 = vmul.f32 %v6813, %v5501
        %v6878 = vmul.f32 %v6814, %v5502
        %v6879 = vmul.f32 %v6815, %v5503
        %v6880 = vmul.f32 %v6816, %v5504
        %v6881 = vmul.f32 %v6817, %v5505
        %v6882 = vmul.f32 %v6818, %v5506
        %v6883 = vmul.f32 %v6819, %v5507
        %v6884 = vmul.f32 %v6820, %v5508
        %v6885 = vmul.f32 %v6821, %v5509
        %v6886 = vmul.f32 %v6822, %v5510
        %v6887 = vmul.f32 %v6823, %v5511
        %v6888 = vmul.f32 %v6824, %v5512
        %v6889 = vmul.f32 %v6825, %v5513
        %v6890 = vmul.f32 %v6826, %v5514
        %v6891 = vmul.f32 %v6827, %v5515
        %v6892 = vmul.f32 %v6828, %v5516
        %v6893 = vmul.f32 %v6829, %v5517
        %v6894 = vmul.f32 %v6830, %v5518
        %v6895 = vmul.f32 %v6831, %v5519
        %v6896 = vmul.f32 %v6832, %v5520
        %v6897 = vmul.f32 %v6833, %v5521
        %v6898 = vmul.f32 %v6834, %v5522
        %v6899 = vmul.f32 %v6835, %v5523
        %v6900 = vmul.f32 %v6836, %v5524
        %v6901 = vmul.f32 %v6837, %v5525
        %v6902 = vmul.f32 %v6838, %v5526
        %v6903 = vmul.f32 %v6839, %v5527
        %v6904 = vmul.f32 %v6840, %v5528
        %v6905 = vmul.f32 %v6841, %v5529
        %v6906 = vmul.f32 %v6842, %v5530
        %v6907 = vmul.f32 %v6843, %v5531
        %v6908 = vmul.f32 %v6844, %v5532
        %v6909 = vmul.f32 %v6845, %v5533
        %v6910 = vmul.f32 %v6846, %v5534
        %v6911 = vmul.f32 %v6847, %v5535
        %v6912 = vmul.f32 %v6848, %v5536
        %v6913 = vmul.f32 %v6849, %v5537
        %v6914 = vmul.f32 %v6850, %v5538
        %v6915 = vmul.f32 %v6851, %v5539
        %v6916 = vmul.f32 %v6852, %v5540
        %v6917 = vmul.f32 %v6853, %v5541
        %v6918 = vmul.f32 %v6854, %v5542
        %v6919 = vmul.f32 %v6855, %v5543
        %v6920 = vmul.f32 %v6856, %v5544
        %v6921 = vmul.f32 %v6857, %v5545
        %v6922 = vmul.f32 %v6858, %v5546
        %v6923 = vmul.f32 %v6859, %v5547
        %v6924 = vmul.f32 %v6860, %v5548
        %v6925 = vadd.f32 %v6653, %v6861
        %v6926 = vadd.f32 %v6654, %v6862
        %v6927 = vadd.f32 %v6655, %v6863
        %v6928 = vadd.f32 %v6656, %v6864
        %v6929 = vadd.f32 %v6657, %v6865
        %v6930 = vadd.f32 %v6658, %v6866
        %v6931 = vadd.f32 %v6659, %v6867
        %v6932 = vadd.f32 %v6660, %v6868
        %v6933 = vadd.f32 %v6661, %v6869
        %v6934 = vadd.f32 %v6662, %v6870
        %v6935 = vadd.f32 %v6663, %v6871
        %v6936 = vadd.f32 %v6664, %v6872
        %v6937 = vadd.f32 %v6665, %v6873
        %v6938 = vadd.f32 %v6666, %v6874
        %v6939 = vadd.f32 %v6667, %v6875
        %v6940 = vadd.f32 %v6668, %v6876
        %v6941 = vadd.f32 %v6669, %v6877
        %v6942 = vadd.f32 %v6670, %v6878
        %v6943 = vadd.f32 %v6671, %v6879
        %v6944 = vadd.f32 %v6672, %v6880
        %v6945 = vadd.f32 %v6673, %v6881
        %v6946 = vadd.f32 %v6674, %v6882
        %v6947 = vadd.f32 %v6675, %v6883
        %v6948 = vadd.f32 %v6676, %v6884
        %v6949 = vadd.f32 %v6677, %v6885
        %v6950 = vadd.f32 %v6678, %v6886
        %v6951 = vadd.f32 %v6679, %v6887
        %v6952 = vadd.f32 %v6680, %v6888
        %v6953 = vadd.f32 %v6681, %v6889
        %v6954 = vadd.f32 %v6682, %v6890
        %v6955 = vadd.f32 %v6683, %v6891
        %v6956 = vadd.f32 %v6684, %v6892
        %v6957 = vadd.f32 %v6685, %v6893
        %v6958 = vadd.f32 %v6686, %v6894
        %v6959 = vadd.f32 %v6687, %v6895
        %v6960 = vadd.f32 %v6688, %v6896
        %v6961 = vadd.f32 %v6689, %v6897
        %v6962 = vadd.f32 %v6690, %v6898
        %v6963 = vadd.f32 %v6691, %v6899
        %v6964 = vadd.f32 %v6692, %v6900
        %v6965 = vadd.f32 %v6693, %v6901
        %v6966 = vadd.f32 %v6694, %v6902
        %v6967 = vadd.f32 %v6695, %v6903
        %v6968 = vadd.f32 %v6696, %v6904
        %v6969 = vadd.f32 %v6697, %v6905
        %v6970 = vadd.f32 %v6698, %v6906
        %v6971 = vadd.f32 %v6699, %v6907
        %v6972 = vadd.f32 %v6700, %v6908
        %v6973 = vadd.f32 %v6701, %v6909
        %v6974 = vadd.f32 %v6702, %v6910
        %v6975 = vadd.f32 %v6703, %v6911
        %v6976 = vadd.f32 %v6704, %v6912
        %v6977 = vadd.f32 %v6705, %v6913
        %v6978 = vadd.f32 %v6706, %v6914
        %v6979 = vadd.f32 %v6707, %v6915
        %v6980 = vadd.f32 %v6708, %v6916
        %v6981 = vadd.f32 %v6709, %v6917
        %v6982 = vadd.f32 %v6710, %v6918
        %v6983 = vadd.f32 %v6711, %v6919
        %v6984 = vadd.f32 %v6712, %v6920
        %v6985 = vadd.f32 %v6713, %v6921
        %v6986 = vadd.f32 %v6714, %v6922
        %v6987 = vadd.f32 %v6715, %v6923
        %v6988 = vadd.f32 %v6716, %v6924
        %v6989 = vlaneseq
        %v6990 = vshrl.u32 %v6989, 7
        %v6991 = vsub.s32 1, %v6990
        %v6992 = vrot.slane %v3873, %v6991
        %v6993 = vlaneseq
        %v6994 = vshrl.u32 %v6993, 7
        %v6995 = vsub.s32 1, %v6994
        %v6996 = vrot.slane %v3874, %v6995
        %v6997 = vsub.f32 %v4261, %v6992
        %v6998 = vsub.f32 %v4261, %v6996
        %v6999 = vsub.f32 %v4262, %v6992
        %v7000 = vsub.f32 %v4262, %v6996
        %v7001 = vsub.f32 %v4263, %v6992
        %v7002 = vsub.f32 %v4263, %v6996
        %v7003 = vsub.f32 %v4264, %v6992
        %v7004 = vsub.f32 %v4264, %v6996
        %v7005 = vsub.f32 %v4265, %v6992
        %v7006 = vsub.f32 %v4265, %v6996
        %v7007 = vsub.f32 %v4266, %v6992
        %v7008 = vsub.f32 %v4266, %v6996
        %v7009 = vsub.f32 %v4267, %v6992
        %v7010 = vsub.f32 %v4267, %v6996
        %v7011 = vsub.f32 %v4268, %v6992
        %v7012 = vsub.f32 %v4268, %v6996
        %v7013 = vsub.f32 %v4269, %v6992
        %v7014 = vsub.f32 %v4269, %v6996
        %v7015 = vsub.f32 %v4270, %v6992
        %v7016 = vsub.f32 %v4270, %v6996
        %v7017 = vsub.f32 %v4271, %v6992
        %v7018 = vsub.f32 %v4271, %v6996
        %v7019 = vsub.f32 %v4272, %v6992
        %v7020 = vsub.f32 %v4272, %v6996
        %v7021 = vsub.f32 %v4273, %v6992
        %v7022 = vsub.f32 %v4273, %v6996
        %v7023 = vsub.f32 %v4274, %v6992
        %v7024 = vsub.f32 %v4274, %v6996
        %v7025 = vsub.f32 %v4275, %v6992
        %v7026 = vsub.f32 %v4275, %v6996
        %v7027 = vsub.f32 %v4276, %v6992
        %v7028 = vsub.f32 %v4276, %v6996
        %v7029 = vsub.f32 %v4277, %v6992
        %v7030 = vsub.f32 %v4277, %v6996
        %v7031 = vsub.f32 %v4278, %v6992
        %v7032 = vsub.f32 %v4278, %v6996
        %v7033 = vsub.f32 %v4279, %v6992
        %v7034 = vsub.f32 %v4279, %v6996
        %v7035 = vsub.f32 %v4280, %v6992
        %v7036 = vsub.f32 %v4280, %v6996
        %v7037 = vsub.f32 %v4281, %v6992
        %v7038 = vsub.f32 %v4281, %v6996
        %v7039 = vsub.f32 %v4282, %v6992
        %v7040 = vsub.f32 %v4282, %v6996
        %v7041 = vsub.f32 %v4283, %v6992
        %v7042 = vsub.f32 %v4283, %v6996
        %v7043 = vsub.f32 %v4284, %v6992
        %v7044 = vsub.f32 %v4284, %v6996
        %v7045 = vsub.f32 %v4285, %v6992
        %v7046 = vsub.f32 %v4285, %v6996
        %v7047 = vsub.f32 %v4286, %v6992
        %v7048 = vsub.f32 %v4286, %v6996
        %v7049 = vsub.f32 %v4287, %v6992
        %v7050 = vsub.f32 %v4287, %v6996
        %v7051 = vsub.f32 %v4288, %v6992
        %v7052 = vsub.f32 %v4288, %v6996
        %v7053 = vsub.f32 %v4289, %v6992
        %v7054 = vsub.f32 %v4289, %v6996
        %v7055 = vsub.f32 %v4290, %v6992
        %v7056 = vsub.f32 %v4290, %v6996
        %v7057 = vsub.f32 %v4291, %v6992
        %v7058 = vsub.f32 %v4291, %v6996
        %v7059 = vsub.f32 %v4292, %v6992
        %v7060 = vsub.f32 %v4292, %v6996
        %v7061 = vlaneseq
        %v7062 = vshrl.u32 %v7061, 7
        %v7063 = vsub.s32 2, %v7062
        %v7064 = vrot.slane %v3873, %v7063
        %v7065 = vlaneseq
        %v7066 = vshrl.u32 %v7065, 7
        %v7067 = vsub.s32 2, %v7066
        %v7068 = vrot.slane %v3874, %v7067
        %v7069 = vmul.f32 %v6997, %v7064
        %v7070 = vmul.f32 %v6998, %v7068
        %v7071 = vmul.f32 %v6999, %v7064
        %v7072 = vmul.f32 %v7000, %v7068
        %v7073 = vmul.f32 %v7001, %v7064
        %v7074 = vmul.f32 %v7002, %v7068
        %v7075 = vmul.f32 %v7003, %v7064
        %v7076 = vmul.f32 %v7004, %v7068
        %v7077 = vmul.f32 %v7005, %v7064
        %v7078 = vmul.f32 %v7006, %v7068
        %v7079 = vmul.f32 %v7007, %v7064
        %v7080 = vmul.f32 %v7008, %v7068
        %v7081 = vmul.f32 %v7009, %v7064
        %v7082 = vmul.f32 %v7010, %v7068
        %v7083 = vmul.f32 %v7011, %v7064
        %v7084 = vmul.f32 %v7012, %v7068
        %v7085 = vmul.f32 %v7013, %v7064
        %v7086 = vmul.f32 %v7014, %v7068
        %v7087 = vmul.f32 %v7015, %v7064
        %v7088 = vmul.f32 %v7016, %v7068
        %v7089 = vmul.f32 %v7017, %v7064
        %v7090 = vmul.f32 %v7018, %v7068
        %v7091 = vmul.f32 %v7019, %v7064
        %v7092 = vmul.f32 %v7020, %v7068
        %v7093 = vmul.f32 %v7021, %v7064
        %v7094 = vmul.f32 %v7022, %v7068
        %v7095 = vmul.f32 %v7023, %v7064
        %v7096 = vmul.f32 %v7024, %v7068
        %v7097 = vmul.f32 %v7025, %v7064
        %v7098 = vmul.f32 %v7026, %v7068
        %v7099 = vmul.f32 %v7027, %v7064
        %v7100 = vmul.f32 %v7028, %v7068
        %v7101 = vmul.f32 %v7029, %v7064
        %v7102 = vmul.f32 %v7030, %v7068
        %v7103 = vmul.f32 %v7031, %v7064
        %v7104 = vmul.f32 %v7032, %v7068
        %v7105 = vmul.f32 %v7033, %v7064
        %v7106 = vmul.f32 %v7034, %v7068
        %v7107 = vmul.f32 %v7035, %v7064
        %v7108 = vmul.f32 %v7036, %v7068
        %v7109 = vmul.f32 %v7037, %v7064
        %v7110 = vmul.f32 %v7038, %v7068
        %v7111 = vmul.f32 %v7039, %v7064
        %v7112 = vmul.f32 %v7040, %v7068
        %v7113 = vmul.f32 %v7041, %v7064
        %v7114 = vmul.f32 %v7042, %v7068
        %v7115 = vmul.f32 %v7043, %v7064
        %v7116 = vmul.f32 %v7044, %v7068
        %v7117 = vmul.f32 %v7045, %v7064
        %v7118 = vmul.f32 %v7046, %v7068
        %v7119 = vmul.f32 %v7047, %v7064
        %v7120 = vmul.f32 %v7048, %v7068
        %v7121 = vmul.f32 %v7049, %v7064
        %v7122 = vmul.f32 %v7050, %v7068
        %v7123 = vmul.f32 %v7051, %v7064
        %v7124 = vmul.f32 %v7052, %v7068
        %v7125 = vmul.f32 %v7053, %v7064
        %v7126 = vmul.f32 %v7054, %v7068
        %v7127 = vmul.f32 %v7055, %v7064
        %v7128 = vmul.f32 %v7056, %v7068
        %v7129 = vmul.f32 %v7057, %v7064
        %v7130 = vmul.f32 %v7058, %v7068
        %v7131 = vmul.f32 %v7059, %v7064
        %v7132 = vmul.f32 %v7060, %v7068
        %v7133 = vmul.f32 %v7069, %v5965
        %v7134 = vmul.f32 %v7070, %v5966
        %v7135 = vmul.f32 %v7071, %v5967
        %v7136 = vmul.f32 %v7072, %v5968
        %v7137 = vmul.f32 %v7073, %v5969
        %v7138 = vmul.f32 %v7074, %v5970
        %v7139 = vmul.f32 %v7075, %v5971
        %v7140 = vmul.f32 %v7076, %v5972
        %v7141 = vmul.f32 %v7077, %v5973
        %v7142 = vmul.f32 %v7078, %v5974
        %v7143 = vmul.f32 %v7079, %v5975
        %v7144 = vmul.f32 %v7080, %v5976
        %v7145 = vmul.f32 %v7081, %v5977
        %v7146 = vmul.f32 %v7082, %v5978
        %v7147 = vmul.f32 %v7083, %v5979
        %v7148 = vmul.f32 %v7084, %v5980
        %v7149 = vmul.f32 %v7085, %v5981
        %v7150 = vmul.f32 %v7086, %v5982
        %v7151 = vmul.f32 %v7087, %v5983
        %v7152 = vmul.f32 %v7088, %v5984
        %v7153 = vmul.f32 %v7089, %v5985
        %v7154 = vmul.f32 %v7090, %v5986
        %v7155 = vmul.f32 %v7091, %v5987
        %v7156 = vmul.f32 %v7092, %v5988
        %v7157 = vmul.f32 %v7093, %v5989
        %v7158 = vmul.f32 %v7094, %v5990
        %v7159 = vmul.f32 %v7095, %v5991
        %v7160 = vmul.f32 %v7096, %v5992
        %v7161 = vmul.f32 %v7097, %v5993
        %v7162 = vmul.f32 %v7098, %v5994
        %v7163 = vmul.f32 %v7099, %v5995
        %v7164 = vmul.f32 %v7100, %v5996
        %v7165 = vmul.f32 %v7101, %v5997
        %v7166 = vmul.f32 %v7102, %v5998
        %v7167 = vmul.f32 %v7103, %v5999
        %v7168 = vmul.f32 %v7104, %v6000
        %v7169 = vmul.f32 %v7105, %v6001
        %v7170 = vmul.f32 %v7106, %v6002
        %v7171 = vmul.f32 %v7107, %v6003
        %v7172 = vmul.f32 %v7108, %v6004
        %v7173 = vmul.f32 %v7109, %v6005
        %v7174 = vmul.f32 %v7110, %v6006
        %v7175 = vmul.f32 %v7111, %v6007
        %v7176 = vmul.f32 %v7112, %v6008
        %v7177 = vmul.f32 %v7113, %v6009
        %v7178 = vmul.f32 %v7114, %v6010
        %v7179 = vmul.f32 %v7115, %v6011
        %v7180 = vmul.f32 %v7116, %v6012
        %v7181 = vmul.f32 %v7117, %v6013
        %v7182 = vmul.f32 %v7118, %v6014
        %v7183 = vmul.f32 %v7119, %v6015
        %v7184 = vmul.f32 %v7120, %v6016
        %v7185 = vmul.f32 %v7121, %v6017
        %v7186 = vmul.f32 %v7122, %v6018
        %v7187 = vmul.f32 %v7123, %v6019
        %v7188 = vmul.f32 %v7124, %v6020
        %v7189 = vmul.f32 %v7125, %v6021
        %v7190 = vmul.f32 %v7126, %v6022
        %v7191 = vmul.f32 %v7127, %v6023
        %v7192 = vmul.f32 %v7128, %v6024
        %v7193 = vmul.f32 %v7129, %v6025
        %v7194 = vmul.f32 %v7130, %v6026
        %v7195 = vmul.f32 %v7131, %v6027
        %v7196 = vmul.f32 %v7132, %v6028
        %v7197 = vlaneseq
        %v7198 = vshrl.u32 %v7197, 7
        %v7199 = vsub.s32 3, %v7198
        %v7200 = vrot.slane %v3873, %v7199
        %v7201 = vlaneseq
        %v7202 = vshrl.u32 %v7201, 7
        %v7203 = vsub.s32 3, %v7202
        %v7204 = vrot.slane %v3874, %v7203
        %v7205 = vsub.f32 %v7200, %v4261
        %v7206 = vsub.f32 %v7204, %v4261
        %v7207 = vsub.f32 %v7200, %v4262
        %v7208 = vsub.f32 %v7204, %v4262
        %v7209 = vsub.f32 %v7200, %v4263
        %v7210 = vsub.f32 %v7204, %v4263
        %v7211 = vsub.f32 %v7200, %v4264
        %v7212 = vsub.f32 %v7204, %v4264
        %v7213 = vsub.f32 %v7200, %v4265
        %v7214 = vsub.f32 %v7204, %v4265
        %v7215 = vsub.f32 %v7200, %v4266
        %v7216 = vsub.f32 %v7204, %v4266
        %v7217 = vsub.f32 %v7200, %v4267
        %v7218 = vsub.f32 %v7204, %v4267
        %v7219 = vsub.f32 %v7200, %v4268
        %v7220 = vsub.f32 %v7204, %v4268
        %v7221 = vsub.f32 %v7200, %v4269
        %v7222 = vsub.f32 %v7204, %v4269
        %v7223 = vsub.f32 %v7200, %v4270
        %v7224 = vsub.f32 %v7204, %v4270
        %v7225 = vsub.f32 %v7200, %v4271
        %v7226 = vsub.f32 %v7204, %v4271
        %v7227 = vsub.f32 %v7200, %v4272
        %v7228 = vsub.f32 %v7204, %v4272
        %v7229 = vsub.f32 %v7200, %v4273
        %v7230 = vsub.f32 %v7204, %v4273
        %v7231 = vsub.f32 %v7200, %v4274
        %v7232 = vsub.f32 %v7204, %v4274
        %v7233 = vsub.f32 %v7200, %v4275
        %v7234 = vsub.f32 %v7204, %v4275
        %v7235 = vsub.f32 %v7200, %v4276
        %v7236 = vsub.f32 %v7204, %v4276
        %v7237 = vsub.f32 %v7200, %v4277
        %v7238 = vsub.f32 %v7204, %v4277
        %v7239 = vsub.f32 %v7200, %v4278
        %v7240 = vsub.f32 %v7204, %v4278
        %v7241 = vsub.f32 %v7200, %v4279
        %v7242 = vsub.f32 %v7204, %v4279
        %v7243 = vsub.f32 %v7200, %v4280
        %v7244 = vsub.f32 %v7204, %v4280
        %v7245 = vsub.f32 %v7200, %v4281
        %v7246 = vsub.f32 %v7204, %v4281
        %v7247 = vsub.f32 %v7200, %v4282
        %v7248 = vsub.f32 %v7204, %v4282
        %v7249 = vsub.f32 %v7200, %v4283
        %v7250 = vsub.f32 %v7204, %v4283
        %v7251 = vsub.f32 %v7200, %v4284
        %v7252 = vsub.f32 %v7204, %v4284
        %v7253 = vsub.f32 %v7200, %v4285
        %v7254 = vsub.f32 %v7204, %v4285
        %v7255 = vsub.f32 %v7200, %v4286
        %v7256 = vsub.f32 %v7204, %v4286
        %v7257 = vsub.f32 %v7200, %v4287
        %v7258 = vsub.f32 %v7204, %v4287
        %v7259 = vsub.f32 %v7200, %v4288
        %v7260 = vsub.f32 %v7204, %v4288
        %v7261 = vsub.f32 %v7200, %v4289
        %v7262 = vsub.f32 %v7204, %v4289
        %v7263 = vsub.f32 %v7200, %v4290
        %v7264 = vsub.f32 %v7204, %v4290
        %v7265 = vsub.f32 %v7200, %v4291
        %v7266 = vsub.f32 %v7204, %v4291
        %v7267 = vsub.f32 %v7200, %v4292
        %v7268 = vsub.f32 %v7204, %v4292
        %v7269 = vlaneseq
        %v7270 = vshrl.u32 %v7269, 7
        %v7271 = vsub.s32 4, %v7270
        %v7272 = vrot.slane %v3873, %v7271
        %v7273 = vlaneseq
        %v7274 = vshrl.u32 %v7273, 7
        %v7275 = vsub.s32 4, %v7274
        %v7276 = vrot.slane %v3874, %v7275
        %v7277 = vmul.f32 %v7205, %v7272
        %v7278 = vmul.f32 %v7206, %v7276
        %v7279 = vmul.f32 %v7207, %v7272
        %v7280 = vmul.f32 %v7208, %v7276
        %v7281 = vmul.f32 %v7209, %v7272
        %v7282 = vmul.f32 %v7210, %v7276
        %v7283 = vmul.f32 %v7211, %v7272
        %v7284 = vmul.f32 %v7212, %v7276
        %v7285 = vmul.f32 %v7213, %v7272
        %v7286 = vmul.f32 %v7214, %v7276
        %v7287 = vmul.f32 %v7215, %v7272
        %v7288 = vmul.f32 %v7216, %v7276
        %v7289 = vmul.f32 %v7217, %v7272
        %v7290 = vmul.f32 %v7218, %v7276
        %v7291 = vmul.f32 %v7219, %v7272
        %v7292 = vmul.f32 %v7220, %v7276
        %v7293 = vmul.f32 %v7221, %v7272
        %v7294 = vmul.f32 %v7222, %v7276
        %v7295 = vmul.f32 %v7223, %v7272
        %v7296 = vmul.f32 %v7224, %v7276
        %v7297 = vmul.f32 %v7225, %v7272
        %v7298 = vmul.f32 %v7226, %v7276
        %v7299 = vmul.f32 %v7227, %v7272
        %v7300 = vmul.f32 %v7228, %v7276
        %v7301 = vmul.f32 %v7229, %v7272
        %v7302 = vmul.f32 %v7230, %v7276
        %v7303 = vmul.f32 %v7231, %v7272
        %v7304 = vmul.f32 %v7232, %v7276
        %v7305 = vmul.f32 %v7233, %v7272
        %v7306 = vmul.f32 %v7234, %v7276
        %v7307 = vmul.f32 %v7235, %v7272
        %v7308 = vmul.f32 %v7236, %v7276
        %v7309 = vmul.f32 %v7237, %v7272
        %v7310 = vmul.f32 %v7238, %v7276
        %v7311 = vmul.f32 %v7239, %v7272
        %v7312 = vmul.f32 %v7240, %v7276
        %v7313 = vmul.f32 %v7241, %v7272
        %v7314 = vmul.f32 %v7242, %v7276
        %v7315 = vmul.f32 %v7243, %v7272
        %v7316 = vmul.f32 %v7244, %v7276
        %v7317 = vmul.f32 %v7245, %v7272
        %v7318 = vmul.f32 %v7246, %v7276
        %v7319 = vmul.f32 %v7247, %v7272
        %v7320 = vmul.f32 %v7248, %v7276
        %v7321 = vmul.f32 %v7249, %v7272
        %v7322 = vmul.f32 %v7250, %v7276
        %v7323 = vmul.f32 %v7251, %v7272
        %v7324 = vmul.f32 %v7252, %v7276
        %v7325 = vmul.f32 %v7253, %v7272
        %v7326 = vmul.f32 %v7254, %v7276
        %v7327 = vmul.f32 %v7255, %v7272
        %v7328 = vmul.f32 %v7256, %v7276
        %v7329 = vmul.f32 %v7257, %v7272
        %v7330 = vmul.f32 %v7258, %v7276
        %v7331 = vmul.f32 %v7259, %v7272
        %v7332 = vmul.f32 %v7260, %v7276
        %v7333 = vmul.f32 %v7261, %v7272
        %v7334 = vmul.f32 %v7262, %v7276
        %v7335 = vmul.f32 %v7263, %v7272
        %v7336 = vmul.f32 %v7264, %v7276
        %v7337 = vmul.f32 %v7265, %v7272
        %v7338 = vmul.f32 %v7266, %v7276
        %v7339 = vmul.f32 %v7267, %v7272
        %v7340 = vmul.f32 %v7268, %v7276
        %v7341 = vmul.f32 %v7277, %v6445
        %v7342 = vmul.f32 %v7278, %v6446
        %v7343 = vmul.f32 %v7279, %v6447
        %v7344 = vmul.f32 %v7280, %v6448
        %v7345 = vmul.f32 %v7281, %v6449
        %v7346 = vmul.f32 %v7282, %v6450
        %v7347 = vmul.f32 %v7283, %v6451
        %v7348 = vmul.f32 %v7284, %v6452
        %v7349 = vmul.f32 %v7285, %v6453
        %v7350 = vmul.f32 %v7286, %v6454
        %v7351 = vmul.f32 %v7287, %v6455
        %v7352 = vmul.f32 %v7288, %v6456
        %v7353 = vmul.f32 %v7289, %v6457
        %v7354 = vmul.f32 %v7290, %v6458
        %v7355 = vmul.f32 %v7291, %v6459
        %v7356 = vmul.f32 %v7292, %v6460
        %v7357 = vmul.f32 %v7293, %v6461
        %v7358 = vmul.f32 %v7294, %v6462
        %v7359 = vmul.f32 %v7295, %v6463
        %v7360 = vmul.f32 %v7296, %v6464
        %v7361 = vmul.f32 %v7297, %v6465
        %v7362 = vmul.f32 %v7298, %v6466
        %v7363 = vmul.f32 %v7299, %v6467
        %v7364 = vmul.f32 %v7300, %v6468
        %v7365 = vmul.f32 %v7301, %v6469
        %v7366 = vmul.f32 %v7302, %v6470
        %v7367 = vmul.f32 %v7303, %v6471
        %v7368 = vmul.f32 %v7304, %v6472
        %v7369 = vmul.f32 %v7305, %v6473
        %v7370 = vmul.f32 %v7306, %v6474
        %v7371 = vmul.f32 %v7307, %v6475
        %v7372 = vmul.f32 %v7308, %v6476
        %v7373 = vmul.f32 %v7309, %v6477
        %v7374 = vmul.f32 %v7310, %v6478
        %v7375 = vmul.f32 %v7311, %v6479
        %v7376 = vmul.f32 %v7312, %v6480
        %v7377 = vmul.f32 %v7313, %v6481
        %v7378 = vmul.f32 %v7314, %v6482
        %v7379 = vmul.f32 %v7315, %v6483
        %v7380 = vmul.f32 %v7316, %v6484
        %v7381 = vmul.f32 %v7317, %v6485
        %v7382 = vmul.f32 %v7318, %v6486
        %v7383 = vmul.f32 %v7319, %v6487
        %v7384 = vmul.f32 %v7320, %v6488
        %v7385 = vmul.f32 %v7321, %v6489
        %v7386 = vmul.f32 %v7322, %v6490
        %v7387 = vmul.f32 %v7323, %v6491
        %v7388 = vmul.f32 %v7324, %v6492
        %v7389 = vmul.f32 %v7325, %v6493
        %v7390 = vmul.f32 %v7326, %v6494
        %v7391 = vmul.f32 %v7327, %v6495
        %v7392 = vmul.f32 %v7328, %v6496
        %v7393 = vmul.f32 %v7329, %v6497
        %v7394 = vmul.f32 %v7330, %v6498
        %v7395 = vmul.f32 %v7331, %v6499
        %v7396 = vmul.f32 %v7332, %v6500
        %v7397 = vmul.f32 %v7333, %v6501
        %v7398 = vmul.f32 %v7334, %v6502
        %v7399 = vmul.f32 %v7335, %v6503
        %v7400 = vmul.f32 %v7336, %v6504
        %v7401 = vmul.f32 %v7337, %v6505
        %v7402 = vmul.f32 %v7338, %v6506
        %v7403 = vmul.f32 %v7339, %v6507
        %v7404 = vmul.f32 %v7340, %v6508
        %v7405 = vadd.f32 %v7133, %v7341
        %v7406 = vadd.f32 %v7134, %v7342
        %v7407 = vadd.f32 %v7135, %v7343
        %v7408 = vadd.f32 %v7136, %v7344
        %v7409 = vadd.f32 %v7137, %v7345
        %v7410 = vadd.f32 %v7138, %v7346
        %v7411 = vadd.f32 %v7139, %v7347
        %v7412 = vadd.f32 %v7140, %v7348
        %v7413 = vadd.f32 %v7141, %v7349
        %v7414 = vadd.f32 %v7142, %v7350
        %v7415 = vadd.f32 %v7143, %v7351
        %v7416 = vadd.f32 %v7144, %v7352
        %v7417 = vadd.f32 %v7145, %v7353
        %v7418 = vadd.f32 %v7146, %v7354
        %v7419 = vadd.f32 %v7147, %v7355
        %v7420 = vadd.f32 %v7148, %v7356
        %v7421 = vadd.f32 %v7149, %v7357
        %v7422 = vadd.f32 %v7150, %v7358
        %v7423 = vadd.f32 %v7151, %v7359
        %v7424 = vadd.f32 %v7152, %v7360
        %v7425 = vadd.f32 %v7153, %v7361
        %v7426 = vadd.f32 %v7154, %v7362
        %v7427 = vadd.f32 %v7155, %v7363
        %v7428 = vadd.f32 %v7156, %v7364
        %v7429 = vadd.f32 %v7157, %v7365
        %v7430 = vadd.f32 %v7158, %v7366
        %v7431 = vadd.f32 %v7159, %v7367
        %v7432 = vadd.f32 %v7160, %v7368
        %v7433 = vadd.f32 %v7161, %v7369
        %v7434 = vadd.f32 %v7162, %v7370
        %v7435 = vadd.f32 %v7163, %v7371
        %v7436 = vadd.f32 %v7164, %v7372
        %v7437 = vadd.f32 %v7165, %v7373
        %v7438 = vadd.f32 %v7166, %v7374
        %v7439 = vadd.f32 %v7167, %v7375
        %v7440 = vadd.f32 %v7168, %v7376
        %v7441 = vadd.f32 %v7169, %v7377
        %v7442 = vadd.f32 %v7170, %v7378
        %v7443 = vadd.f32 %v7171, %v7379
        %v7444 = vadd.f32 %v7172, %v7380
        %v7445 = vadd.f32 %v7173, %v7381
        %v7446 = vadd.f32 %v7174, %v7382
        %v7447 = vadd.f32 %v7175, %v7383
        %v7448 = vadd.f32 %v7176, %v7384
        %v7449 = vadd.f32 %v7177, %v7385
        %v7450 = vadd.f32 %v7178, %v7386
        %v7451 = vadd.f32 %v7179, %v7387
        %v7452 = vadd.f32 %v7180, %v7388
        %v7453 = vadd.f32 %v7181, %v7389
        %v7454 = vadd.f32 %v7182, %v7390
        %v7455 = vadd.f32 %v7183, %v7391
        %v7456 = vadd.f32 %v7184, %v7392
        %v7457 = vadd.f32 %v7185, %v7393
        %v7458 = vadd.f32 %v7186, %v7394
        %v7459 = vadd.f32 %v7187, %v7395
        %v7460 = vadd.f32 %v7188, %v7396
        %v7461 = vadd.f32 %v7189, %v7397
        %v7462 = vadd.f32 %v7190, %v7398
        %v7463 = vadd.f32 %v7191, %v7399
        %v7464 = vadd.f32 %v7192, %v7400
        %v7465 = vadd.f32 %v7193, %v7401
        %v7466 = vadd.f32 %v7194, %v7402
        %v7467 = vadd.f32 %v7195, %v7403
        %v7468 = vadd.f32 %v7196, %v7404
        %v7469 = vlaneseq
        %v7470 = vshrl.u32 %v7469, 7
        %v7471 = vsub.s32 5, %v7470
        %v7472 = vrot.slane %v3873, %v7471
        %v7473 = vlaneseq
        %v7474 = vshrl.u32 %v7473, 7
        %v7475 = vsub.s32 5, %v7474
        %v7476 = vrot.slane %v3874, %v7475
        %v7477 = vsub.f32 %v4261, %v7472
        %v7478 = vsub.f32 %v4261, %v7476
        %v7479 = vsub.f32 %v4262, %v7472
        %v7480 = vsub.f32 %v4262, %v7476
        %v7481 = vsub.f32 %v4263, %v7472
        %v7482 = vsub.f32 %v4263, %v7476
        %v7483 = vsub.f32 %v4264, %v7472
        %v7484 = vsub.f32 %v4264, %v7476
        %v7485 = vsub.f32 %v4265, %v7472
        %v7486 = vsub.f32 %v4265, %v7476
        %v7487 = vsub.f32 %v4266, %v7472
        %v7488 = vsub.f32 %v4266, %v7476
        %v7489 = vsub.f32 %v4267, %v7472
        %v7490 = vsub.f32 %v4267, %v7476
        %v7491 = vsub.f32 %v4268, %v7472
        %v7492 = vsub.f32 %v4268, %v7476
        %v7493 = vsub.f32 %v4269, %v7472
        %v7494 = vsub.f32 %v4269, %v7476
        %v7495 = vsub.f32 %v4270, %v7472
        %v7496 = vsub.f32 %v4270, %v7476
        %v7497 = vsub.f32 %v4271, %v7472
        %v7498 = vsub.f32 %v4271, %v7476
        %v7499 = vsub.f32 %v4272, %v7472
        %v7500 = vsub.f32 %v4272, %v7476
        %v7501 = vsub.f32 %v4273, %v7472
        %v7502 = vsub.f32 %v4273, %v7476
        %v7503 = vsub.f32 %v4274, %v7472
        %v7504 = vsub.f32 %v4274, %v7476
        %v7505 = vsub.f32 %v4275, %v7472
        %v7506 = vsub.f32 %v4275, %v7476
        %v7507 = vsub.f32 %v4276, %v7472
        %v7508 = vsub.f32 %v4276, %v7476
        %v7509 = vsub.f32 %v4277, %v7472
        %v7510 = vsub.f32 %v4277, %v7476
        %v7511 = vsub.f32 %v4278, %v7472
        %v7512 = vsub.f32 %v4278, %v7476
        %v7513 = vsub.f32 %v4279, %v7472
        %v7514 = vsub.f32 %v4279, %v7476
        %v7515 = vsub.f32 %v4280, %v7472
        %v7516 = vsub.f32 %v4280, %v7476
        %v7517 = vsub.f32 %v4281, %v7472
        %v7518 = vsub.f32 %v4281, %v7476
        %v7519 = vsub.f32 %v4282, %v7472
        %v7520 = vsub.f32 %v4282, %v7476
        %v7521 = vsub.f32 %v4283, %v7472
        %v7522 = vsub.f32 %v4283, %v7476
        %v7523 = vsub.f32 %v4284, %v7472
        %v7524 = vsub.f32 %v4284, %v7476
        %v7525 = vsub.f32 %v4285, %v7472
        %v7526 = vsub.f32 %v4285, %v7476
        %v7527 = vsub.f32 %v4286, %v7472
        %v7528 = vsub.f32 %v4286, %v7476
        %v7529 = vsub.f32 %v4287, %v7472
        %v7530 = vsub.f32 %v4287, %v7476
        %v7531 = vsub.f32 %v4288, %v7472
        %v7532 = vsub.f32 %v4288, %v7476
        %v7533 = vsub.f32 %v4289, %v7472
        %v7534 = vsub.f32 %v4289, %v7476
        %v7535 = vsub.f32 %v4290, %v7472
        %v7536 = vsub.f32 %v4290, %v7476
        %v7537 = vsub.f32 %v4291, %v7472
        %v7538 = vsub.f32 %v4291, %v7476
        %v7539 = vsub.f32 %v4292, %v7472
        %v7540 = vsub.f32 %v4292, %v7476
        %v7541 = vlaneseq
        %v7542 = vshrl.u32 %v7541, 7
        %v7543 = vsub.s32 6, %v7542
        %v7544 = vrot.slane %v3873, %v7543
        %v7545 = vlaneseq
        %v7546 = vshrl.u32 %v7545, 7
        %v7547 = vsub.s32 6, %v7546
        %v7548 = vrot.slane %v3874, %v7547
        %v7549 = vmul.f32 %v7477, %v7544
        %v7550 = vmul.f32 %v7478, %v7548
        %v7551 = vmul.f32 %v7479, %v7544
        %v7552 = vmul.f32 %v7480, %v7548
        %v7553 = vmul.f32 %v7481, %v7544
        %v7554 = vmul.f32 %v7482, %v7548
        %v7555 = vmul.f32 %v7483, %v7544
        %v7556 = vmul.f32 %v7484, %v7548
        %v7557 = vmul.f32 %v7485, %v7544
        %v7558 = vmul.f32 %v7486, %v7548
        %v7559 = vmul.f32 %v7487, %v7544
        %v7560 = vmul.f32 %v7488, %v7548
        %v7561 = vmul.f32 %v7489, %v7544
        %v7562 = vmul.f32 %v7490, %v7548
        %v7563 = vmul.f32 %v7491, %v7544
        %v7564 = vmul.f32 %v7492, %v7548
        %v7565 = vmul.f32 %v7493, %v7544
        %v7566 = vmul.f32 %v7494, %v7548
        %v7567 = vmul.f32 %v7495, %v7544
        %v7568 = vmul.f32 %v7496, %v7548
        %v7569 = vmul.f32 %v7497, %v7544
        %v7570 = vmul.f32 %v7498, %v7548
        %v7571 = vmul.f32 %v7499, %v7544
        %v7572 = vmul.f32 %v7500, %v7548
        %v7573 = vmul.f32 %v7501, %v7544
        %v7574 = vmul.f32 %v7502, %v7548
        %v7575 = vmul.f32 %v7503, %v7544
        %v7576 = vmul.f32 %v7504, %v7548
        %v7577 = vmul.f32 %v7505, %v7544
        %v7578 = vmul.f32 %v7506, %v7548
        %v7579 = vmul.f32 %v7507, %v7544
        %v7580 = vmul.f32 %v7508, %v7548
        %v7581 = vmul.f32 %v7509, %v7544
        %v7582 = vmul.f32 %v7510, %v7548
        %v7583 = vmul.f32 %v7511, %v7544
        %v7584 = vmul.f32 %v7512, %v7548
        %v7585 = vmul.f32 %v7513, %v7544
        %v7586 = vmul.f32 %v7514, %v7548
        %v7587 = vmul.f32 %v7515, %v7544
        %v7588 = vmul.f32 %v7516, %v7548
        %v7589 = vmul.f32 %v7517, %v7544
        %v7590 = vmul.f32 %v7518, %v7548
        %v7591 = vmul.f32 %v7519, %v7544
        %v7592 = vmul.f32 %v7520, %v7548
        %v7593 = vmul.f32 %v7521, %v7544
        %v7594 = vmul.f32 %v7522, %v7548
        %v7595 = vmul.f32 %v7523, %v7544
        %v7596 = vmul.f32 %v7524, %v7548
        %v7597 = vmul.f32 %v7525, %v7544
        %v7598 = vmul.f32 %v7526, %v7548
        %v7599 = vmul.f32 %v7527, %v7544
        %v7600 = vmul.f32 %v7528, %v7548
        %v7601 = vmul.f32 %v7529, %v7544
        %v7602 = vmul.f32 %v7530, %v7548
        %v7603 = vmul.f32 %v7531, %v7544
        %v7604 = vmul.f32 %v7532, %v7548
        %v7605 = vmul.f32 %v7533, %v7544
        %v7606 = vmul.f32 %v7534, %v7548
        %v7607 = vmul.f32 %v7535, %v7544
        %v7608 = vmul.f32 %v7536, %v7548
        %v7609 = vmul.f32 %v7537, %v7544
        %v7610 = vmul.f32 %v7538, %v7548
        %v7611 = vmul.f32 %v7539, %v7544
        %v7612 = vmul.f32 %v7540, %v7548
        %v7613 = vmul.f32 %v7549, %v6445
        %v7614 = vmul.f32 %v7550, %v6446
        %v7615 = vmul.f32 %v7551, %v6447
        %v7616 = vmul.f32 %v7552, %v6448
        %v7617 = vmul.f32 %v7553, %v6449
        %v7618 = vmul.f32 %v7554, %v6450
        %v7619 = vmul.f32 %v7555, %v6451
        %v7620 = vmul.f32 %v7556, %v6452
        %v7621 = vmul.f32 %v7557, %v6453
        %v7622 = vmul.f32 %v7558, %v6454
        %v7623 = vmul.f32 %v7559, %v6455
        %v7624 = vmul.f32 %v7560, %v6456
        %v7625 = vmul.f32 %v7561, %v6457
        %v7626 = vmul.f32 %v7562, %v6458
        %v7627 = vmul.f32 %v7563, %v6459
        %v7628 = vmul.f32 %v7564, %v6460
        %v7629 = vmul.f32 %v7565, %v6461
        %v7630 = vmul.f32 %v7566, %v6462
        %v7631 = vmul.f32 %v7567, %v6463
        %v7632 = vmul.f32 %v7568, %v6464
        %v7633 = vmul.f32 %v7569, %v6465
        %v7634 = vmul.f32 %v7570, %v6466
        %v7635 = vmul.f32 %v7571, %v6467
        %v7636 = vmul.f32 %v7572, %v6468
        %v7637 = vmul.f32 %v7573, %v6469
        %v7638 = vmul.f32 %v7574, %v6470
        %v7639 = vmul.f32 %v7575, %v6471
        %v7640 = vmul.f32 %v7576, %v6472
        %v7641 = vmul.f32 %v7577, %v6473
        %v7642 = vmul.f32 %v7578, %v6474
        %v7643 = vmul.f32 %v7579, %v6475
        %v7644 = vmul.f32 %v7580, %v6476
        %v7645 = vmul.f32 %v7581, %v6477
        %v7646 = vmul.f32 %v7582, %v6478
        %v7647 = vmul.f32 %v7583, %v6479
        %v7648 = vmul.f32 %v7584, %v6480
        %v7649 = vmul.f32 %v7585, %v6481
        %v7650 = vmul.f32 %v7586, %v6482
        %v7651 = vmul.f32 %v7587, %v6483
        %v7652 = vmul.f32 %v7588, %v6484
        %v7653 = vmul.f32 %v7589, %v6485
        %v7654 = vmul.f32 %v7590, %v6486
        %v7655 = vmul.f32 %v7591, %v6487
        %v7656 = vmul.f32 %v7592, %v6488
        %v7657 = vmul.f32 %v7593, %v6489
        %v7658 = vmul.f32 %v7594, %v6490
        %v7659 = vmul.f32 %v7595, %v6491
        %v7660 = vmul.f32 %v7596, %v6492
        %v7661 = vmul.f32 %v7597, %v6493
        %v7662 = vmul.f32 %v7598, %v6494
        %v7663 = vmul.f32 %v7599, %v6495
        %v7664 = vmul.f32 %v7600, %v6496
        %v7665 = vmul.f32 %v7601, %v6497
        %v7666 = vmul.f32 %v7602, %v6498
        %v7667 = vmul.f32 %v7603, %v6499
        %v7668 = vmul.f32 %v7604, %v6500
        %v7669 = vmul.f32 %v7605, %v6501
        %v7670 = vmul.f32 %v7606, %v6502
        %v7671 = vmul.f32 %v7607, %v6503
        %v7672 = vmul.f32 %v7608, %v6504
        %v7673 = vmul.f32 %v7609, %v6505
        %v7674 = vmul.f32 %v7610, %v6506
        %v7675 = vmul.f32 %v7611, %v6507
        %v7676 = vmul.f32 %v7612, %v6508
        %v7677 = vlaneseq
        %v7678 = vshrl.u32 %v7677, 7
        %v7679 = vsub.s32 7, %v7678
        %v7680 = vrot.slane %v3873, %v7679
        %v7681 = vlaneseq
        %v7682 = vshrl.u32 %v7681, 7
        %v7683 = vsub.s32 7, %v7682
        %v7684 = vrot.slane %v3874, %v7683
        %v7685 = vsub.f32 %v7680, %v4261
        %v7686 = vsub.f32 %v7684, %v4261
        %v7687 = vsub.f32 %v7680, %v4262
        %v7688 = vsub.f32 %v7684, %v4262
        %v7689 = vsub.f32 %v7680, %v4263
        %v7690 = vsub.f32 %v7684, %v4263
        %v7691 = vsub.f32 %v7680, %v4264
        %v7692 = vsub.f32 %v7684, %v4264
        %v7693 = vsub.f32 %v7680, %v4265
        %v7694 = vsub.f32 %v7684, %v4265
        %v7695 = vsub.f32 %v7680, %v4266
        %v7696 = vsub.f32 %v7684, %v4266
        %v7697 = vsub.f32 %v7680, %v4267
        %v7698 = vsub.f32 %v7684, %v4267
        %v7699 = vsub.f32 %v7680, %v4268
        %v7700 = vsub.f32 %v7684, %v4268
        %v7701 = vsub.f32 %v7680, %v4269
        %v7702 = vsub.f32 %v7684, %v4269
        %v7703 = vsub.f32 %v7680, %v4270
        %v7704 = vsub.f32 %v7684, %v4270
        %v7705 = vsub.f32 %v7680, %v4271
        %v7706 = vsub.f32 %v7684, %v4271
        %v7707 = vsub.f32 %v7680, %v4272
        %v7708 = vsub.f32 %v7684, %v4272
        %v7709 = vsub.f32 %v7680, %v4273
        %v7710 = vsub.f32 %v7684, %v4273
        %v7711 = vsub.f32 %v7680, %v4274
        %v7712 = vsub.f32 %v7684, %v4274
        %v7713 = vsub.f32 %v7680, %v4275
        %v7714 = vsub.f32 %v7684, %v4275
        %v7715 = vsub.f32 %v7680, %v4276
        %v7716 = vsub.f32 %v7684, %v4276
        %v7717 = vsub.f32 %v7680, %v4277
        %v7718 = vsub.f32 %v7684, %v4277
        %v7719 = vsub.f32 %v7680, %v4278
        %v7720 = vsub.f32 %v7684, %v4278
        %v7721 = vsub.f32 %v7680, %v4279
        %v7722 = vsub.f32 %v7684, %v4279
        %v7723 = vsub.f32 %v7680, %v4280
        %v7724 = vsub.f32 %v7684, %v4280
        %v7725 = vsub.f32 %v7680, %v4281
        %v7726 = vsub.f32 %v7684, %v4281
        %v7727 = vsub.f32 %v7680, %v4282
        %v7728 = vsub.f32 %v7684, %v4282
        %v7729 = vsub.f32 %v7680, %v4283
        %v7730 = vsub.f32 %v7684, %v4283
        %v7731 = vsub.f32 %v7680, %v4284
        %v7732 = vsub.f32 %v7684, %v4284
        %v7733 = vsub.f32 %v7680, %v4285
        %v7734 = vsub.f32 %v7684, %v4285
        %v7735 = vsub.f32 %v7680, %v4286
        %v7736 = vsub.f32 %v7684, %v4286
        %v7737 = vsub.f32 %v7680, %v4287
        %v7738 = vsub.f32 %v7684, %v4287
        %v7739 = vsub.f32 %v7680, %v4288
        %v7740 = vsub.f32 %v7684, %v4288
        %v7741 = vsub.f32 %v7680, %v4289
        %v7742 = vsub.f32 %v7684, %v4289
        %v7743 = vsub.f32 %v7680, %v4290
        %v7744 = vsub.f32 %v7684, %v4290
        %v7745 = vsub.f32 %v7680, %v4291
        %v7746 = vsub.f32 %v7684, %v4291
        %v7747 = vsub.f32 %v7680, %v4292
        %v7748 = vsub.f32 %v7684, %v4292
        %v7749 = vlaneseq
        %v7750 = vshrl.u32 %v7749, 7
        %v7751 = vsub.s32 0, %v7750
        %v7752 = vrot.slane %v3875, %v7751
        %v7753 = vlaneseq
        %v7754 = vshrl.u32 %v7753, 7
        %v7755 = vsub.s32 0, %v7754
        %v7756 = vrot.slane %v3876, %v7755
        %v7757 = vmul.f32 %v7685, %v7752
        %v7758 = vmul.f32 %v7686, %v7756
        %v7759 = vmul.f32 %v7687, %v7752
        %v7760 = vmul.f32 %v7688, %v7756
        %v7761 = vmul.f32 %v7689, %v7752
        %v7762 = vmul.f32 %v7690, %v7756
        %v7763 = vmul.f32 %v7691, %v7752
        %v7764 = vmul.f32 %v7692, %v7756
        %v7765 = vmul.f32 %v7693, %v7752
        %v7766 = vmul.f32 %v7694, %v7756
        %v7767 = vmul.f32 %v7695, %v7752
        %v7768 = vmul.f32 %v7696, %v7756
        %v7769 = vmul.f32 %v7697, %v7752
        %v7770 = vmul.f32 %v7698, %v7756
        %v7771 = vmul.f32 %v7699, %v7752
        %v7772 = vmul.f32 %v7700, %v7756
        %v7773 = vmul.f32 %v7701, %v7752
        %v7774 = vmul.f32 %v7702, %v7756
        %v7775 = vmul.f32 %v7703, %v7752
        %v7776 = vmul.f32 %v7704, %v7756
        %v7777 = vmul.f32 %v7705, %v7752
        %v7778 = vmul.f32 %v7706, %v7756
        %v7779 = vmul.f32 %v7707, %v7752
        %v7780 = vmul.f32 %v7708, %v7756
        %v7781 = vmul.f32 %v7709, %v7752
        %v7782 = vmul.f32 %v7710, %v7756
        %v7783 = vmul.f32 %v7711, %v7752
        %v7784 = vmul.f32 %v7712, %v7756
        %v7785 = vmul.f32 %v7713, %v7752
        %v7786 = vmul.f32 %v7714, %v7756
        %v7787 = vmul.f32 %v7715, %v7752
        %v7788 = vmul.f32 %v7716, %v7756
        %v7789 = vmul.f32 %v7717, %v7752
        %v7790 = vmul.f32 %v7718, %v7756
        %v7791 = vmul.f32 %v7719, %v7752
        %v7792 = vmul.f32 %v7720, %v7756
        %v7793 = vmul.f32 %v7721, %v7752
        %v7794 = vmul.f32 %v7722, %v7756
        %v7795 = vmul.f32 %v7723, %v7752
        %v7796 = vmul.f32 %v7724, %v7756
        %v7797 = vmul.f32 %v7725, %v7752
        %v7798 = vmul.f32 %v7726, %v7756
        %v7799 = vmul.f32 %v7727, %v7752
        %v7800 = vmul.f32 %v7728, %v7756
        %v7801 = vmul.f32 %v7729, %v7752
        %v7802 = vmul.f32 %v7730, %v7756
        %v7803 = vmul.f32 %v7731, %v7752
        %v7804 = vmul.f32 %v7732, %v7756
        %v7805 = vmul.f32 %v7733, %v7752
        %v7806 = vmul.f32 %v7734, %v7756
        %v7807 = vmul.f32 %v7735, %v7752
        %v7808 = vmul.f32 %v7736, %v7756
        %v7809 = vmul.f32 %v7737, %v7752
        %v7810 = vmul.f32 %v7738, %v7756
        %v7811 = vmul.f32 %v7739, %v7752
        %v7812 = vmul.f32 %v7740, %v7756
        %v7813 = vmul.f32 %v7741, %v7752
        %v7814 = vmul.f32 %v7742, %v7756
        %v7815 = vmul.f32 %v7743, %v7752
        %v7816 = vmul.f32 %v7744, %v7756
        %v7817 = vmul.f32 %v7745, %v7752
        %v7818 = vmul.f32 %v7746, %v7756
        %v7819 = vmul.f32 %v7747, %v7752
        %v7820 = vmul.f32 %v7748, %v7756
        %v7821 = vmul.f32 %v7757, %v6925
        %v7822 = vmul.f32 %v7758, %v6926
        %v7823 = vmul.f32 %v7759, %v6927
        %v7824 = vmul.f32 %v7760, %v6928
        %v7825 = vmul.f32 %v7761, %v6929
        %v7826 = vmul.f32 %v7762, %v6930
        %v7827 = vmul.f32 %v7763, %v6931
        %v7828 = vmul.f32 %v7764, %v6932
        %v7829 = vmul.f32 %v7765, %v6933
        %v7830 = vmul.f32 %v7766, %v6934
        %v7831 = vmul.f32 %v7767, %v6935
        %v7832 = vmul.f32 %v7768, %v6936
        %v7833 = vmul.f32 %v7769, %v6937
        %v7834 = vmul.f32 %v7770, %v6938
        %v7835 = vmul.f32 %v7771, %v6939
        %v7836 = vmul.f32 %v7772, %v6940
        %v7837 = vmul.f32 %v7773, %v6941
        %v7838 = vmul.f32 %v7774, %v6942
        %v7839 = vmul.f32 %v7775, %v6943
        %v7840 = vmul.f32 %v7776, %v6944
        %v7841 = vmul.f32 %v7777, %v6945
        %v7842 = vmul.f32 %v7778, %v6946
        %v7843 = vmul.f32 %v7779, %v6947
        %v7844 = vmul.f32 %v7780, %v6948
        %v7845 = vmul.f32 %v7781, %v6949
        %v7846 = vmul.f32 %v7782, %v6950
        %v7847 = vmul.f32 %v7783, %v6951
        %v7848 = vmul.f32 %v7784, %v6952
        %v7849 = vmul.f32 %v7785, %v6953
        %v7850 = vmul.f32 %v7786, %v6954
        %v7851 = vmul.f32 %v7787, %v6955
        %v7852 = vmul.f32 %v7788, %v6956
        %v7853 = vmul.f32 %v7789, %v6957
        %v7854 = vmul.f32 %v7790, %v6958
        %v7855 = vmul.f32 %v7791, %v6959
        %v7856 = vmul.f32 %v7792, %v6960
        %v7857 = vmul.f32 %v7793, %v6961
        %v7858 = vmul.f32 %v7794, %v6962
        %v7859 = vmul.f32 %v7795, %v6963
        %v7860 = vmul.f32 %v7796, %v6964
        %v7861 = vmul.f32 %v7797, %v6965
        %v7862 = vmul.f32 %v7798, %v6966
        %v7863 = vmul.f32 %v7799, %v6967
        %v7864 = vmul.f32 %v7800, %v6968
        %v7865 = vmul.f32 %v7801, %v6969
        %v7866 = vmul.f32 %v7802, %v6970
        %v7867 = vmul.f32 %v7803, %v6971
        %v7868 = vmul.f32 %v7804, %v6972
        %v7869 = vmul.f32 %v7805, %v6973
        %v7870 = vmul.f32 %v7806, %v6974
        %v7871 = vmul.f32 %v7807, %v6975
        %v7872 = vmul.f32 %v7808, %v6976
        %v7873 = vmul.f32 %v7809, %v6977
        %v7874 = vmul.f32 %v7810, %v6978
        %v7875 = vmul.f32 %v7811, %v6979
        %v7876 = vmul.f32 %v7812, %v6980
        %v7877 = vmul.f32 %v7813, %v6981
        %v7878 = vmul.f32 %v7814, %v6982
        %v7879 = vmul.f32 %v7815, %v6983
        %v7880 = vmul.f32 %v7816, %v6984
        %v7881 = vmul.f32 %v7817, %v6985
        %v7882 = vmul.f32 %v7818, %v6986
        %v7883 = vmul.f32 %v7819, %v6987
        %v7884 = vmul.f32 %v7820, %v6988
        %v7885 = vadd.f32 %v7613, %v7821
        %v7886 = vadd.f32 %v7614, %v7822
        %v7887 = vadd.f32 %v7615, %v7823
        %v7888 = vadd.f32 %v7616, %v7824
        %v7889 = vadd.f32 %v7617, %v7825
        %v7890 = vadd.f32 %v7618, %v7826
        %v7891 = vadd.f32 %v7619, %v7827
        %v7892 = vadd.f32 %v7620, %v7828
        %v7893 = vadd.f32 %v7621, %v7829
        %v7894 = vadd.f32 %v7622, %v7830
        %v7895 = vadd.f32 %v7623, %v7831
        %v7896 = vadd.f32 %v7624, %v7832
        %v7897 = vadd.f32 %v7625, %v7833
        %v7898 = vadd.f32 %v7626, %v7834
        %v7899 = vadd.f32 %v7627, %v7835
        %v7900 = vadd.f32 %v7628, %v7836
        %v7901 = vadd.f32 %v7629, %v7837
        %v7902 = vadd.f32 %v7630, %v7838
        %v7903 = vadd.f32 %v7631, %v7839
        %v7904 = vadd.f32 %v7632, %v7840
        %v7905 = vadd.f32 %v7633, %v7841
        %v7906 = vadd.f32 %v7634, %v7842
        %v7907 = vadd.f32 %v7635, %v7843
        %v7908 = vadd.f32 %v7636, %v7844
        %v7909 = vadd.f32 %v7637, %v7845
        %v7910 = vadd.f32 %v7638, %v7846
        %v7911 = vadd.f32 %v7639, %v7847
        %v7912 = vadd.f32 %v7640, %v7848
        %v7913 = vadd.f32 %v7641, %v7849
        %v7914 = vadd.f32 %v7642, %v7850
        %v7915 = vadd.f32 %v7643, %v7851
        %v7916 = vadd.f32 %v7644, %v7852
        %v7917 = vadd.f32 %v7645, %v7853
        %v7918 = vadd.f32 %v7646, %v7854
        %v7919 = vadd.f32 %v7647, %v7855
        %v7920 = vadd.f32 %v7648, %v7856
        %v7921 = vadd.f32 %v7649, %v7857
        %v7922 = vadd.f32 %v7650, %v7858
        %v7923 = vadd.f32 %v7651, %v7859
        %v7924 = vadd.f32 %v7652, %v7860
        %v7925 = vadd.f32 %v7653, %v7861
        %v7926 = vadd.f32 %v7654, %v7862
        %v7927 = vadd.f32 %v7655, %v7863
        %v7928 = vadd.f32 %v7656, %v7864
        %v7929 = vadd.f32 %v7657, %v7865
        %v7930 = vadd.f32 %v7658, %v7866
        %v7931 = vadd.f32 %v7659, %v7867
        %v7932 = vadd.f32 %v7660, %v7868
        %v7933 = vadd.f32 %v7661, %v7869
        %v7934 = vadd.f32 %v7662, %v7870
        %v7935 = vadd.f32 %v7663, %v7871
        %v7936 = vadd.f32 %v7664, %v7872
        %v7937 = vadd.f32 %v7665, %v7873
        %v7938 = vadd.f32 %v7666, %v7874
        %v7939 = vadd.f32 %v7667, %v7875
        %v7940 = vadd.f32 %v7668, %v7876
        %v7941 = vadd.f32 %v7669, %v7877
        %v7942 = vadd.f32 %v7670, %v7878
        %v7943 = vadd.f32 %v7671, %v7879
        %v7944 = vadd.f32 %v7672, %v7880
        %v7945 = vadd.f32 %v7673, %v7881
        %v7946 = vadd.f32 %v7674, %v7882
        %v7947 = vadd.f32 %v7675, %v7883
        %v7948 = vadd.f32 %v7676, %v7884
        %v7949 = vlaneseq
        %v7950 = vshrl.u32 %v7949, 7
        %v7951 = vsub.s32 1, %v7950
        %v7952 = vrot.slane %v3875, %v7951
        %v7953 = vlaneseq
        %v7954 = vshrl.u32 %v7953, 7
        %v7955 = vsub.s32 1, %v7954
        %v7956 = vrot.slane %v3876, %v7955
        %v7957 = vsub.f32 %v4261, %v7952
        %v7958 = vsub.f32 %v4261, %v7956
        %v7959 = vsub.f32 %v4262, %v7952
        %v7960 = vsub.f32 %v4262, %v7956
        %v7961 = vsub.f32 %v4263, %v7952
        %v7962 = vsub.f32 %v4263, %v7956
        %v7963 = vsub.f32 %v4264, %v7952
        %v7964 = vsub.f32 %v4264, %v7956
        %v7965 = vsub.f32 %v4265, %v7952
        %v7966 = vsub.f32 %v4265, %v7956
        %v7967 = vsub.f32 %v4266, %v7952
        %v7968 = vsub.f32 %v4266, %v7956
        %v7969 = vsub.f32 %v4267, %v7952
        %v7970 = vsub.f32 %v4267, %v7956
        %v7971 = vsub.f32 %v4268, %v7952
        %v7972 = vsub.f32 %v4268, %v7956
        %v7973 = vsub.f32 %v4269, %v7952
        %v7974 = vsub.f32 %v4269, %v7956
        %v7975 = vsub.f32 %v4270, %v7952
        %v7976 = vsub.f32 %v4270, %v7956
        %v7977 = vsub.f32 %v4271, %v7952
        %v7978 = vsub.f32 %v4271, %v7956
        %v7979 = vsub.f32 %v4272, %v7952
        %v7980 = vsub.f32 %v4272, %v7956
        %v7981 = vsub.f32 %v4273, %v7952
        %v7982 = vsub.f32 %v4273, %v7956
        %v7983 = vsub.f32 %v4274, %v7952
        %v7984 = vsub.f32 %v4274, %v7956
        %v7985 = vsub.f32 %v4275, %v7952
        %v7986 = vsub.f32 %v4275, %v7956
        %v7987 = vsub.f32 %v4276, %v7952
        %v7988 = vsub.f32 %v4276, %v7956
        %v7989 = vsub.f32 %v4277, %v7952
        %v7990 = vsub.f32 %v4277, %v7956
        %v7991 = vsub.f32 %v4278, %v7952
        %v7992 = vsub.f32 %v4278, %v7956
        %v7993 = vsub.f32 %v4279, %v7952
        %v7994 = vsub.f32 %v4279, %v7956
        %v7995 = vsub.f32 %v4280, %v7952
        %v7996 = vsub.f32 %v4280, %v7956
        %v7997 = vsub.f32 %v4281, %v7952
        %v7998 = vsub.f32 %v4281, %v7956
        %v7999 = vsub.f32 %v4282, %v7952
        %v8000 = vsub.f32 %v4282, %v7956
        %v8001 = vsub.f32 %v4283, %v7952
        %v8002 = vsub.f32 %v4283, %v7956
        %v8003 = vsub.f32 %v4284, %v7952
        %v8004 = vsub.f32 %v4284, %v7956
        %v8005 = vsub.f32 %v4285, %v7952
        %v8006 = vsub.f32 %v4285, %v7956
        %v8007 = vsub.f32 %v4286, %v7952
        %v8008 = vsub.f32 %v4286, %v7956
        %v8009 = vsub.f32 %v4287, %v7952
        %v8010 = vsub.f32 %v4287, %v7956
        %v8011 = vsub.f32 %v4288, %v7952
        %v8012 = vsub.f32 %v4288, %v7956
        %v8013 = vsub.f32 %v4289, %v7952
        %v8014 = vsub.f32 %v4289, %v7956
        %v8015 = vsub.f32 %v4290, %v7952
        %v8016 = vsub.f32 %v4290, %v7956
        %v8017 = vsub.f32 %v4291, %v7952
        %v8018 = vsub.f32 %v4291, %v7956
        %v8019 = vsub.f32 %v4292, %v7952
        %v8020 = vsub.f32 %v4292, %v7956
        %v8021 = vlaneseq
        %v8022 = vshrl.u32 %v8021, 7
        %v8023 = vsub.s32 2, %v8022
        %v8024 = vrot.slane %v3875, %v8023
        %v8025 = vlaneseq
        %v8026 = vshrl.u32 %v8025, 7
        %v8027 = vsub.s32 2, %v8026
        %v8028 = vrot.slane %v3876, %v8027
        %v8029 = vmul.f32 %v7957, %v8024
        %v8030 = vmul.f32 %v7958, %v8028
        %v8031 = vmul.f32 %v7959, %v8024
        %v8032 = vmul.f32 %v7960, %v8028
        %v8033 = vmul.f32 %v7961, %v8024
        %v8034 = vmul.f32 %v7962, %v8028
        %v8035 = vmul.f32 %v7963, %v8024
        %v8036 = vmul.f32 %v7964, %v8028
        %v8037 = vmul.f32 %v7965, %v8024
        %v8038 = vmul.f32 %v7966, %v8028
        %v8039 = vmul.f32 %v7967, %v8024
        %v8040 = vmul.f32 %v7968, %v8028
        %v8041 = vmul.f32 %v7969, %v8024
        %v8042 = vmul.f32 %v7970, %v8028
        %v8043 = vmul.f32 %v7971, %v8024
        %v8044 = vmul.f32 %v7972, %v8028
        %v8045 = vmul.f32 %v7973, %v8024
        %v8046 = vmul.f32 %v7974, %v8028
        %v8047 = vmul.f32 %v7975, %v8024
        %v8048 = vmul.f32 %v7976, %v8028
        %v8049 = vmul.f32 %v7977, %v8024
        %v8050 = vmul.f32 %v7978, %v8028
        %v8051 = vmul.f32 %v7979, %v8024
        %v8052 = vmul.f32 %v7980, %v8028
        %v8053 = vmul.f32 %v7981, %v8024
        %v8054 = vmul.f32 %v7982, %v8028
        %v8055 = vmul.f32 %v7983, %v8024
        %v8056 = vmul.f32 %v7984, %v8028
        %v8057 = vmul.f32 %v7985, %v8024
        %v8058 = vmul.f32 %v7986, %v8028
        %v8059 = vmul.f32 %v7987, %v8024
        %v8060 = vmul.f32 %v7988, %v8028
        %v8061 = vmul.f32 %v7989, %v8024
        %v8062 = vmul.f32 %v7990, %v8028
        %v8063 = vmul.f32 %v7991, %v8024
        %v8064 = vmul.f32 %v7992, %v8028
        %v8065 = vmul.f32 %v7993, %v8024
        %v8066 = vmul.f32 %v7994, %v8028
        %v8067 = vmul.f32 %v7995, %v8024
        %v8068 = vmul.f32 %v7996, %v8028
        %v8069 = vmul.f32 %v7997, %v8024
        %v8070 = vmul.f32 %v7998, %v8028
        %v8071 = vmul.f32 %v7999, %v8024
        %v8072 = vmul.f32 %v8000, %v8028
        %v8073 = vmul.f32 %v8001, %v8024
        %v8074 = vmul.f32 %v8002, %v8028
        %v8075 = vmul.f32 %v8003, %v8024
        %v8076 = vmul.f32 %v8004, %v8028
        %v8077 = vmul.f32 %v8005, %v8024
        %v8078 = vmul.f32 %v8006, %v8028
        %v8079 = vmul.f32 %v8007, %v8024
        %v8080 = vmul.f32 %v8008, %v8028
        %v8081 = vmul.f32 %v8009, %v8024
        %v8082 = vmul.f32 %v8010, %v8028
        %v8083 = vmul.f32 %v8011, %v8024
        %v8084 = vmul.f32 %v8012, %v8028
        %v8085 = vmul.f32 %v8013, %v8024
        %v8086 = vmul.f32 %v8014, %v8028
        %v8087 = vmul.f32 %v8015, %v8024
        %v8088 = vmul.f32 %v8016, %v8028
        %v8089 = vmul.f32 %v8017, %v8024
        %v8090 = vmul.f32 %v8018, %v8028
        %v8091 = vmul.f32 %v8019, %v8024
        %v8092 = vmul.f32 %v8020, %v8028
        %v8093 = vmul.f32 %v8029, %v7405
        %v8094 = vmul.f32 %v8030, %v7406
        %v8095 = vmul.f32 %v8031, %v7407
        %v8096 = vmul.f32 %v8032, %v7408
        %v8097 = vmul.f32 %v8033, %v7409
        %v8098 = vmul.f32 %v8034, %v7410
        %v8099 = vmul.f32 %v8035, %v7411
        %v8100 = vmul.f32 %v8036, %v7412
        %v8101 = vmul.f32 %v8037, %v7413
        %v8102 = vmul.f32 %v8038, %v7414
        %v8103 = vmul.f32 %v8039, %v7415
        %v8104 = vmul.f32 %v8040, %v7416
        %v8105 = vmul.f32 %v8041, %v7417
        %v8106 = vmul.f32 %v8042, %v7418
        %v8107 = vmul.f32 %v8043, %v7419
        %v8108 = vmul.f32 %v8044, %v7420
        %v8109 = vmul.f32 %v8045, %v7421
        %v8110 = vmul.f32 %v8046, %v7422
        %v8111 = vmul.f32 %v8047, %v7423
        %v8112 = vmul.f32 %v8048, %v7424
        %v8113 = vmul.f32 %v8049, %v7425
        %v8114 = vmul.f32 %v8050, %v7426
        %v8115 = vmul.f32 %v8051, %v7427
        %v8116 = vmul.f32 %v8052, %v7428
        %v8117 = vmul.f32 %v8053, %v7429
        %v8118 = vmul.f32 %v8054, %v7430
        %v8119 = vmul.f32 %v8055, %v7431
        %v8120 = vmul.f32 %v8056, %v7432
        %v8121 = vmul.f32 %v8057, %v7433
        %v8122 = vmul.f32 %v8058, %v7434
        %v8123 = vmul.f32 %v8059, %v7435
        %v8124 = vmul.f32 %v8060, %v7436
        %v8125 = vmul.f32 %v8061, %v7437
        %v8126 = vmul.f32 %v8062, %v7438
        %v8127 = vmul.f32 %v8063, %v7439
        %v8128 = vmul.f32 %v8064, %v7440
        %v8129 = vmul.f32 %v8065, %v7441
        %v8130 = vmul.f32 %v8066, %v7442
        %v8131 = vmul.f32 %v8067, %v7443
        %v8132 = vmul.f32 %v8068, %v7444
        %v8133 = vmul.f32 %v8069, %v7445
        %v8134 = vmul.f32 %v8070, %v7446
        %v8135 = vmul.f32 %v8071, %v7447
        %v8136 = vmul.f32 %v8072, %v7448
        %v8137 = vmul.f32 %v8073, %v7449
        %v8138 = vmul.f32 %v8074, %v7450
        %v8139 = vmul.f32 %v8075, %v7451
        %v8140 = vmul.f32 %v8076, %v7452
        %v8141 = vmul.f32 %v8077, %v7453
        %v8142 = vmul.f32 %v8078, %v7454
        %v8143 = vmul.f32 %v8079, %v7455
        %v8144 = vmul.f32 %v8080, %v7456
        %v8145 = vmul.f32 %v8081, %v7457
        %v8146 = vmul.f32 %v8082, %v7458
        %v8147 = vmul.f32 %v8083, %v7459
        %v8148 = vmul.f32 %v8084, %v7460
        %v8149 = vmul.f32 %v8085, %v7461
        %v8150 = vmul.f32 %v8086, %v7462
        %v8151 = vmul.f32 %v8087, %v7463
        %v8152 = vmul.f32 %v8088, %v7464
        %v8153 = vmul.f32 %v8089, %v7465
        %v8154 = vmul.f32 %v8090, %v7466
        %v8155 = vmul.f32 %v8091, %v7467
        %v8156 = vmul.f32 %v8092, %v7468
        %v8157 = vlaneseq
        %v8158 = vshrl.u32 %v8157, 7
        %v8159 = vsub.s32 3, %v8158
        %v8160 = vrot.slane %v3875, %v8159
        %v8161 = vlaneseq
        %v8162 = vshrl.u32 %v8161, 7
        %v8163 = vsub.s32 3, %v8162
        %v8164 = vrot.slane %v3876, %v8163
        %v8165 = vsub.f32 %v8160, %v4261
        %v8166 = vsub.f32 %v8164, %v4261
        %v8167 = vsub.f32 %v8160, %v4262
        %v8168 = vsub.f32 %v8164, %v4262
        %v8169 = vsub.f32 %v8160, %v4263
        %v8170 = vsub.f32 %v8164, %v4263
        %v8171 = vsub.f32 %v8160, %v4264
        %v8172 = vsub.f32 %v8164, %v4264
        %v8173 = vsub.f32 %v8160, %v4265
        %v8174 = vsub.f32 %v8164, %v4265
        %v8175 = vsub.f32 %v8160, %v4266
        %v8176 = vsub.f32 %v8164, %v4266
        %v8177 = vsub.f32 %v8160, %v4267
        %v8178 = vsub.f32 %v8164, %v4267
        %v8179 = vsub.f32 %v8160, %v4268
        %v8180 = vsub.f32 %v8164, %v4268
        %v8181 = vsub.f32 %v8160, %v4269
        %v8182 = vsub.f32 %v8164, %v4269
        %v8183 = vsub.f32 %v8160, %v4270
        %v8184 = vsub.f32 %v8164, %v4270
        %v8185 = vsub.f32 %v8160, %v4271
        %v8186 = vsub.f32 %v8164, %v4271
        %v8187 = vsub.f32 %v8160, %v4272
        %v8188 = vsub.f32 %v8164, %v4272
        %v8189 = vsub.f32 %v8160, %v4273
        %v8190 = vsub.f32 %v8164, %v4273
        %v8191 = vsub.f32 %v8160, %v4274
        %v8192 = vsub.f32 %v8164, %v4274
        %v8193 = vsub.f32 %v8160, %v4275
        %v8194 = vsub.f32 %v8164, %v4275
        %v8195 = vsub.f32 %v8160, %v4276
        %v8196 = vsub.f32 %v8164, %v4276
        %v8197 = vsub.f32 %v8160, %v4277
        %v8198 = vsub.f32 %v8164, %v4277
        %v8199 = vsub.f32 %v8160, %v4278
        %v8200 = vsub.f32 %v8164, %v4278
        %v8201 = vsub.f32 %v8160, %v4279
        %v8202 = vsub.f32 %v8164, %v4279
        %v8203 = vsub.f32 %v8160, %v4280
        %v8204 = vsub.f32 %v8164, %v4280
        %v8205 = vsub.f32 %v8160, %v4281
        %v8206 = vsub.f32 %v8164, %v4281
        %v8207 = vsub.f32 %v8160, %v4282
        %v8208 = vsub.f32 %v8164, %v4282
        %v8209 = vsub.f32 %v8160, %v4283
        %v8210 = vsub.f32 %v8164, %v4283
        %v8211 = vsub.f32 %v8160, %v4284
        %v8212 = vsub.f32 %v8164, %v4284
        %v8213 = vsub.f32 %v8160, %v4285
        %v8214 = vsub.f32 %v8164, %v4285
        %v8215 = vsub.f32 %v8160, %v4286
        %v8216 = vsub.f32 %v8164, %v4286
        %v8217 = vsub.f32 %v8160, %v4287
        %v8218 = vsub.f32 %v8164, %v4287
        %v8219 = vsub.f32 %v8160, %v4288
        %v8220 = vsub.f32 %v8164, %v4288
        %v8221 = vsub.f32 %v8160, %v4289
        %v8222 = vsub.f32 %v8164, %v4289
        %v8223 = vsub.f32 %v8160, %v4290
        %v8224 = vsub.f32 %v8164, %v4290
        %v8225 = vsub.f32 %v8160, %v4291
        %v8226 = vsub.f32 %v8164, %v4291
        %v8227 = vsub.f32 %v8160, %v4292
        %v8228 = vsub.f32 %v8164, %v4292
        %v8229 = vlaneseq
        %v8230 = vshrl.u32 %v8229, 7
        %v8231 = vsub.s32 4, %v8230
        %v8232 = vrot.slane %v3875, %v8231
        %v8233 = vlaneseq
        %v8234 = vshrl.u32 %v8233, 7
        %v8235 = vsub.s32 4, %v8234
        %v8236 = vrot.slane %v3876, %v8235
        %v8237 = vmul.f32 %v8165, %v8232
        %v8238 = vmul.f32 %v8166, %v8236
        %v8239 = vmul.f32 %v8167, %v8232
        %v8240 = vmul.f32 %v8168, %v8236
        %v8241 = vmul.f32 %v8169, %v8232
        %v8242 = vmul.f32 %v8170, %v8236
        %v8243 = vmul.f32 %v8171, %v8232
        %v8244 = vmul.f32 %v8172, %v8236
        %v8245 = vmul.f32 %v8173, %v8232
        %v8246 = vmul.f32 %v8174, %v8236
        %v8247 = vmul.f32 %v8175, %v8232
        %v8248 = vmul.f32 %v8176, %v8236
        %v8249 = vmul.f32 %v8177, %v8232
        %v8250 = vmul.f32 %v8178, %v8236
        %v8251 = vmul.f32 %v8179, %v8232
        %v8252 = vmul.f32 %v8180, %v8236
        %v8253 = vmul.f32 %v8181, %v8232
        %v8254 = vmul.f32 %v8182, %v8236
        %v8255 = vmul.f32 %v8183, %v8232
        %v8256 = vmul.f32 %v8184, %v8236
        %v8257 = vmul.f32 %v8185, %v8232
        %v8258 = vmul.f32 %v8186, %v8236
        %v8259 = vmul.f32 %v8187, %v8232
        %v8260 = vmul.f32 %v8188, %v8236
        %v8261 = vmul.f32 %v8189, %v8232
        %v8262 = vmul.f32 %v8190, %v8236
        %v8263 = vmul.f32 %v8191, %v8232
        %v8264 = vmul.f32 %v8192, %v8236
        %v8265 = vmul.f32 %v8193, %v8232
        %v8266 = vmul.f32 %v8194, %v8236
        %v8267 = vmul.f32 %v8195, %v8232
        %v8268 = vmul.f32 %v8196, %v8236
        %v8269 = vmul.f32 %v8197, %v8232
        %v8270 = vmul.f32 %v8198, %v8236
        %v8271 = vmul.f32 %v8199, %v8232
        %v8272 = vmul.f32 %v8200, %v8236
        %v8273 = vmul.f32 %v8201, %v8232
        %v8274 = vmul.f32 %v8202, %v8236
        %v8275 = vmul.f32 %v8203, %v8232
        %v8276 = vmul.f32 %v8204, %v8236
        %v8277 = vmul.f32 %v8205, %v8232
        %v8278 = vmul.f32 %v8206, %v8236
        %v8279 = vmul.f32 %v8207, %v8232
        %v8280 = vmul.f32 %v8208, %v8236
        %v8281 = vmul.f32 %v8209, %v8232
        %v8282 = vmul.f32 %v8210, %v8236
        %v8283 = vmul.f32 %v8211, %v8232
        %v8284 = vmul.f32 %v8212, %v8236
        %v8285 = vmul.f32 %v8213, %v8232
        %v8286 = vmul.f32 %v8214, %v8236
        %v8287 = vmul.f32 %v8215, %v8232
        %v8288 = vmul.f32 %v8216, %v8236
        %v8289 = vmul.f32 %v8217, %v8232
        %v8290 = vmul.f32 %v8218, %v8236
        %v8291 = vmul.f32 %v8219, %v8232
        %v8292 = vmul.f32 %v8220, %v8236
        %v8293 = vmul.f32 %v8221, %v8232
        %v8294 = vmul.f32 %v8222, %v8236
        %v8295 = vmul.f32 %v8223, %v8232
        %v8296 = vmul.f32 %v8224, %v8236
        %v8297 = vmul.f32 %v8225, %v8232
        %v8298 = vmul.f32 %v8226, %v8236
        %v8299 = vmul.f32 %v8227, %v8232
        %v8300 = vmul.f32 %v8228, %v8236
        %v8301 = vmul.f32 %v8237, %v7885
        %v8302 = vmul.f32 %v8238, %v7886
        %v8303 = vmul.f32 %v8239, %v7887
        %v8304 = vmul.f32 %v8240, %v7888
        %v8305 = vmul.f32 %v8241, %v7889
        %v8306 = vmul.f32 %v8242, %v7890
        %v8307 = vmul.f32 %v8243, %v7891
        %v8308 = vmul.f32 %v8244, %v7892
        %v8309 = vmul.f32 %v8245, %v7893
        %v8310 = vmul.f32 %v8246, %v7894
        %v8311 = vmul.f32 %v8247, %v7895
        %v8312 = vmul.f32 %v8248, %v7896
        %v8313 = vmul.f32 %v8249, %v7897
        %v8314 = vmul.f32 %v8250, %v7898
        %v8315 = vmul.f32 %v8251, %v7899
        %v8316 = vmul.f32 %v8252, %v7900
        %v8317 = vmul.f32 %v8253, %v7901
        %v8318 = vmul.f32 %v8254, %v7902
        %v8319 = vmul.f32 %v8255, %v7903
        %v8320 = vmul.f32 %v8256, %v7904
        %v8321 = vmul.f32 %v8257, %v7905
        %v8322 = vmul.f32 %v8258, %v7906
        %v8323 = vmul.f32 %v8259, %v7907
        %v8324 = vmul.f32 %v8260, %v7908
        %v8325 = vmul.f32 %v8261, %v7909
        %v8326 = vmul.f32 %v8262, %v7910
        %v8327 = vmul.f32 %v8263, %v7911
        %v8328 = vmul.f32 %v8264, %v7912
        %v8329 = vmul.f32 %v8265, %v7913
        %v8330 = vmul.f32 %v8266, %v7914
        %v8331 = vmul.f32 %v8267, %v7915
        %v8332 = vmul.f32 %v8268, %v7916
        %v8333 = vmul.f32 %v8269, %v7917
        %v8334 = vmul.f32 %v8270, %v7918
        %v8335 = vmul.f32 %v8271, %v7919
        %v8336 = vmul.f32 %v8272, %v7920
        %v8337 = vmul.f32 %v8273, %v7921
        %v8338 = vmul.f32 %v8274, %v7922
        %v8339 = vmul.f32 %v8275, %v7923
        %v8340 = vmul.f32 %v8276, %v7924
        %v8341 = vmul.f32 %v8277, %v7925
        %v8342 = vmul.f32 %v8278, %v7926
        %v8343 = vmul.f32 %v8279, %v7927
        %v8344 = vmul.f32 %v8280, %v7928
        %v8345 = vmul.f32 %v8281, %v7929
        %v8346 = vmul.f32 %v8282, %v7930
        %v8347 = vmul.f32 %v8283, %v7931
        %v8348 = vmul.f32 %v8284, %v7932
        %v8349 = vmul.f32 %v8285, %v7933
        %v8350 = vmul.f32 %v8286, %v7934
        %v8351 = vmul.f32 %v8287, %v7935
        %v8352 = vmul.f32 %v8288, %v7936
        %v8353 = vmul.f32 %v8289, %v7937
        %v8354 = vmul.f32 %v8290, %v7938
        %v8355 = vmul.f32 %v8291, %v7939
        %v8356 = vmul.f32 %v8292, %v7940
        %v8357 = vmul.f32 %v8293, %v7941
        %v8358 = vmul.f32 %v8294, %v7942
        %v8359 = vmul.f32 %v8295, %v7943
        %v8360 = vmul.f32 %v8296, %v7944
        %v8361 = vmul.f32 %v8297, %v7945
        %v8362 = vmul.f32 %v8298, %v7946
        %v8363 = vmul.f32 %v8299, %v7947
        %v8364 = vmul.f32 %v8300, %v7948
        %v8365 = vadd.f32 %v8093, %v8301
        %v8366 = vadd.f32 %v8094, %v8302
        %v8367 = vadd.f32 %v8095, %v8303
        %v8368 = vadd.f32 %v8096, %v8304
        %v8369 = vadd.f32 %v8097, %v8305
        %v8370 = vadd.f32 %v8098, %v8306
        %v8371 = vadd.f32 %v8099, %v8307
        %v8372 = vadd.f32 %v8100, %v8308
        %v8373 = vadd.f32 %v8101, %v8309
        %v8374 = vadd.f32 %v8102, %v8310
        %v8375 = vadd.f32 %v8103, %v8311
        %v8376 = vadd.f32 %v8104, %v8312
        %v8377 = vadd.f32 %v8105, %v8313
        %v8378 = vadd.f32 %v8106, %v8314
        %v8379 = vadd.f32 %v8107, %v8315
        %v8380 = vadd.f32 %v8108, %v8316
        %v8381 = vadd.f32 %v8109, %v8317
        %v8382 = vadd.f32 %v8110, %v8318
        %v8383 = vadd.f32 %v8111, %v8319
        %v8384 = vadd.f32 %v8112, %v8320
        %v8385 = vadd.f32 %v8113, %v8321
        %v8386 = vadd.f32 %v8114, %v8322
        %v8387 = vadd.f32 %v8115, %v8323
        %v8388 = vadd.f32 %v8116, %v8324
        %v8389 = vadd.f32 %v8117, %v8325
        %v8390 = vadd.f32 %v8118, %v8326
        %v8391 = vadd.f32 %v8119, %v8327
        %v8392 = vadd.f32 %v8120, %v8328
        %v8393 = vadd.f32 %v8121, %v8329
        %v8394 = vadd.f32 %v8122, %v8330
        %v8395 = vadd.f32 %v8123, %v8331
        %v8396 = vadd.f32 %v8124, %v8332
        %v8397 = vadd.f32 %v8125, %v8333
        %v8398 = vadd.f32 %v8126, %v8334
        %v8399 = vadd.f32 %v8127, %v8335
        %v8400 = vadd.f32 %v8128, %v8336
        %v8401 = vadd.f32 %v8129, %v8337
        %v8402 = vadd.f32 %v8130, %v8338
        %v8403 = vadd.f32 %v8131, %v8339
        %v8404 = vadd.f32 %v8132, %v8340
        %v8405 = vadd.f32 %v8133, %v8341
        %v8406 = vadd.f32 %v8134, %v8342
        %v8407 = vadd.f32 %v8135, %v8343
        %v8408 = vadd.f32 %v8136, %v8344
        %v8409 = vadd.f32 %v8137, %v8345
        %v8410 = vadd.f32 %v8138, %v8346
        %v8411 = vadd.f32 %v8139, %v8347
        %v8412 = vadd.f32 %v8140, %v8348
        %v8413 = vadd.f32 %v8141, %v8349
        %v8414 = vadd.f32 %v8142, %v8350
        %v8415 = vadd.f32 %v8143, %v8351
        %v8416 = vadd.f32 %v8144, %v8352
        %v8417 = vadd.f32 %v8145, %v8353
        %v8418 = vadd.f32 %v8146, %v8354
        %v8419 = vadd.f32 %v8147, %v8355
        %v8420 = vadd.f32 %v8148, %v8356
        %v8421 = vadd.f32 %v8149, %v8357
        %v8422 = vadd.f32 %v8150, %v8358
        %v8423 = vadd.f32 %v8151, %v8359
        %v8424 = vadd.f32 %v8152, %v8360
        %v8425 = vadd.f32 %v8153, %v8361
        %v8426 = vadd.f32 %v8154, %v8362
        %v8427 = vadd.f32 %v8155, %v8363
        %v8428 = vadd.f32 %v8156, %v8364
        %v8429 = vsub.f32 0.0, %v3706
        %v8430 = vsub.f32 0.0, %v3709
        %v8431 = vsub.f32 0.0, %v3714
        %v8432 = vsub.f32 0.0, %v3717
        %v8433 = vsub.f32 0.0, %v3722
        %v8434 = vsub.f32 0.0, %v3725
        %v8435 = vsub.f32 0.0, %v3730
        %v8436 = vsub.f32 0.0, %v3733
        %v8437 = vsub.f32 0.0, %v3738
        %v8438 = vsub.f32 0.0, %v3741
        %v8439 = vsub.f32 0.0, %v3746
        %v8440 = vsub.f32 0.0, %v3749
        %v8441 = vsub.f32 0.0, %v3754
        %v8442 = vsub.f32 0.0, %v3757
        %v8443 = vsub.f32 0.0, %v3762
        %v8444 = vsub.f32 0.0, %v3765
        %v8445 = vsub.f32 0.0, %v3770
        %v8446 = vsub.f32 0.0, %v3773
        %v8447 = vsub.f32 0.0, %v3778
        %v8448 = vsub.f32 0.0, %v3781
        %v8449 = vsub.f32 0.0, %v3786
        %v8450 = vsub.f32 0.0, %v3789
        %v8451 = vsub.f32 0.0, %v3794
        %v8452 = vsub.f32 0.0, %v3797
        %v8453 = vsub.f32 0.0, %v3802
        %v8454 = vsub.f32 0.0, %v3805
        %v8455 = vsub.f32 0.0, %v3810
        %v8456 = vsub.f32 0.0, %v3813
        %v8457 = vsub.f32 0.0, %v3818
        %v8458 = vsub.f32 0.0, %v3821
        %v8459 = vsub.f32 0.0, %v3826
        %v8460 = vsub.f32 0.0, %v3829
        %v8461 = vmul.f32 %v8429, 1.442695
        %v8462 = vpow.pop %v8461
        %v8463 = vmul.f32 %v8430, 1.442695
        %v8464 = vpow.pop %v8463
        %v8465 = vmul.f32 %v8431, 1.442695
        %v8466 = vpow.pop %v8465
        %v8467 = vmul.f32 %v8432, 1.442695
        %v8468 = vpow.pop %v8467
        %v8469 = vmul.f32 %v8433, 1.442695
        %v8470 = vpow.pop %v8469
        %v8471 = vmul.f32 %v8434, 1.442695
        %v8472 = vpow.pop %v8471
        %v8473 = vmul.f32 %v8435, 1.442695
        %v8474 = vpow.pop %v8473
        %v8475 = vmul.f32 %v8436, 1.442695
        %v8476 = vpow.pop %v8475
        %v8477 = vmul.f32 %v8437, 1.442695
        %v8478 = vpow.pop %v8477
        %v8479 = vmul.f32 %v8438, 1.442695
        %v8480 = vpow.pop %v8479
        %v8481 = vmul.f32 %v8439, 1.442695
        %v8482 = vpow.pop %v8481
        %v8483 = vmul.f32 %v8440, 1.442695
        %v8484 = vpow.pop %v8483
        %v8485 = vmul.f32 %v8441, 1.442695
        %v8486 = vpow.pop %v8485
        %v8487 = vmul.f32 %v8442, 1.442695
        %v8488 = vpow.pop %v8487
        %v8489 = vmul.f32 %v8443, 1.442695
        %v8490 = vpow.pop %v8489
        %v8491 = vmul.f32 %v8444, 1.442695
        %v8492 = vpow.pop %v8491
        %v8493 = vmul.f32 %v8445, 1.442695
        %v8494 = vpow.pop %v8493
        %v8495 = vmul.f32 %v8446, 1.442695
        %v8496 = vpow.pop %v8495
        %v8497 = vmul.f32 %v8447, 1.442695
        %v8498 = vpow.pop %v8497
        %v8499 = vmul.f32 %v8448, 1.442695
        %v8500 = vpow.pop %v8499
        %v8501 = vmul.f32 %v8449, 1.442695
        %v8502 = vpow.pop %v8501
        %v8503 = vmul.f32 %v8450, 1.442695
        %v8504 = vpow.pop %v8503
        %v8505 = vmul.f32 %v8451, 1.442695
        %v8506 = vpow.pop %v8505
        %v8507 = vmul.f32 %v8452, 1.442695
        %v8508 = vpow.pop %v8507
        %v8509 = vmul.f32 %v8453, 1.442695
        %v8510 = vpow.pop %v8509
        %v8511 = vmul.f32 %v8454, 1.442695
        %v8512 = vpow.pop %v8511
        %v8513 = vmul.f32 %v8455, 1.442695
        %v8514 = vpow.pop %v8513
        %v8515 = vmul.f32 %v8456, 1.442695
        %v8516 = vpow.pop %v8515
        %v8517 = vmul.f32 %v8457, 1.442695
        %v8518 = vpow.pop %v8517
        %v8519 = vmul.f32 %v8458, 1.442695
        %v8520 = vpow.pop %v8519
        %v8521 = vmul.f32 %v8459, 1.442695
        %v8522 = vpow.pop %v8521
        %v8523 = vmul.f32 %v8460, 1.442695
        %v8524 = vpow.pop %v8523
        %v8525 = vadd.f32 %v8462, 1.0
        %v8526 = vadd.f32 %v8464, 1.0
        %v8527 = vadd.f32 %v8466, 1.0
        %v8528 = vadd.f32 %v8468, 1.0
        %v8529 = vadd.f32 %v8470, 1.0
        %v8530 = vadd.f32 %v8472, 1.0
        %v8531 = vadd.f32 %v8474, 1.0
        %v8532 = vadd.f32 %v8476, 1.0
        %v8533 = vadd.f32 %v8478, 1.0
        %v8534 = vadd.f32 %v8480, 1.0
        %v8535 = vadd.f32 %v8482, 1.0
        %v8536 = vadd.f32 %v8484, 1.0
        %v8537 = vadd.f32 %v8486, 1.0
        %v8538 = vadd.f32 %v8488, 1.0
        %v8539 = vadd.f32 %v8490, 1.0
        %v8540 = vadd.f32 %v8492, 1.0
        %v8541 = vadd.f32 %v8494, 1.0
        %v8542 = vadd.f32 %v8496, 1.0
        %v8543 = vadd.f32 %v8498, 1.0
        %v8544 = vadd.f32 %v8500, 1.0
        %v8545 = vadd.f32 %v8502, 1.0
        %v8546 = vadd.f32 %v8504, 1.0
        %v8547 = vadd.f32 %v8506, 1.0
        %v8548 = vadd.f32 %v8508, 1.0
        %v8549 = vadd.f32 %v8510, 1.0
        %v8550 = vadd.f32 %v8512, 1.0
        %v8551 = vadd.f32 %v8514, 1.0
        %v8552 = vadd.f32 %v8516, 1.0
        %v8553 = vadd.f32 %v8518, 1.0
        %v8554 = vadd.f32 %v8520, 1.0
        %v8555 = vadd.f32 %v8522, 1.0
        %v8556 = vadd.f32 %v8524, 1.0
        %v8557 = vrcp.pop %v8525
        %v8558 = vrcp.pop %v8526
        %v8559 = vrcp.pop %v8527
        %v8560 = vrcp.pop %v8528
        %v8561 = vrcp.pop %v8529
        %v8562 = vrcp.pop %v8530
        %v8563 = vrcp.pop %v8531
        %v8564 = vrcp.pop %v8532
        %v8565 = vrcp.pop %v8533
        %v8566 = vrcp.pop %v8534
        %v8567 = vrcp.pop %v8535
        %v8568 = vrcp.pop %v8536
        %v8569 = vrcp.pop %v8537
        %v8570 = vrcp.pop %v8538
        %v8571 = vrcp.pop %v8539
        %v8572 = vrcp.pop %v8540
        %v8573 = vrcp.pop %v8541
        %v8574 = vrcp.pop %v8542
        %v8575 = vrcp.pop %v8543
        %v8576 = vrcp.pop %v8544
        %v8577 = vrcp.pop %v8545
        %v8578 = vrcp.pop %v8546
        %v8579 = vrcp.pop %v8547
        %v8580 = vrcp.pop %v8548
        %v8581 = vrcp.pop %v8549
        %v8582 = vrcp.pop %v8550
        %v8583 = vrcp.pop %v8551
        %v8584 = vrcp.pop %v8552
        %v8585 = vrcp.pop %v8553
        %v8586 = vrcp.pop %v8554
        %v8587 = vrcp.pop %v8555
        %v8588 = vrcp.pop %v8556
        %v8589 = vmul.f32 %v3706, %v8557
        %v8590 = vmul.f32 %v3709, %v8558
        %v8591 = vmul.f32 %v3714, %v8559
        %v8592 = vmul.f32 %v3717, %v8560
        %v8593 = vmul.f32 %v3722, %v8561
        %v8594 = vmul.f32 %v3725, %v8562
        %v8595 = vmul.f32 %v3730, %v8563
        %v8596 = vmul.f32 %v3733, %v8564
        %v8597 = vmul.f32 %v3738, %v8565
        %v8598 = vmul.f32 %v3741, %v8566
        %v8599 = vmul.f32 %v3746, %v8567
        %v8600 = vmul.f32 %v3749, %v8568
        %v8601 = vmul.f32 %v3754, %v8569
        %v8602 = vmul.f32 %v3757, %v8570
        %v8603 = vmul.f32 %v3762, %v8571
        %v8604 = vmul.f32 %v3765, %v8572
        %v8605 = vmul.f32 %v3770, %v8573
        %v8606 = vmul.f32 %v3773, %v8574
        %v8607 = vmul.f32 %v3778, %v8575
        %v8608 = vmul.f32 %v3781, %v8576
        %v8609 = vmul.f32 %v3786, %v8577
        %v8610 = vmul.f32 %v3789, %v8578
        %v8611 = vmul.f32 %v3794, %v8579
        %v8612 = vmul.f32 %v3797, %v8580
        %v8613 = vmul.f32 %v3802, %v8581
        %v8614 = vmul.f32 %v3805, %v8582
        %v8615 = vmul.f32 %v3810, %v8583
        %v8616 = vmul.f32 %v3813, %v8584
        %v8617 = vmul.f32 %v3818, %v8585
        %v8618 = vmul.f32 %v3821, %v8586
        %v8619 = vmul.f32 %v3826, %v8587
        %v8620 = vmul.f32 %v3829, %v8588
        %v8621 = vpack.c.bf16 %v8367, %v8365
        %v8622 = vpack.c.bf16 %v8368, %v8366
        %v8623 = vpack.c.bf16 %v8590, %v8589
        %v8624 = vpack.c.bf16 %v8371, %v8369
        %v8625 = vpack.c.bf16 %v8372, %v8370
        %v8626 = vpack.c.bf16 %v8592, %v8591
        %v8627 = vpack.c.bf16 %v8375, %v8373
        %v8628 = vpack.c.bf16 %v8376, %v8374
        %v8629 = vpack.c.bf16 %v8594, %v8593
        %v8630 = vpack.c.bf16 %v8379, %v8377
        %v8631 = vpack.c.bf16 %v8380, %v8378
        %v8632 = vpack.c.bf16 %v8596, %v8595
        %v8633 = vpack.c.bf16 %v8383, %v8381
        %v8634 = vpack.c.bf16 %v8384, %v8382
        %v8635 = vpack.c.bf16 %v8598, %v8597
        %v8636 = vpack.c.bf16 %v8387, %v8385
        %v8637 = vpack.c.bf16 %v8388, %v8386
        %v8638 = vpack.c.bf16 %v8600, %v8599
        %v8639 = vpack.c.bf16 %v8391, %v8389
        %v8640 = vpack.c.bf16 %v8392, %v8390
        %v8641 = vpack.c.bf16 %v8602, %v8601
        %v8642 = vpack.c.bf16 %v8395, %v8393
        %v8643 = vpack.c.bf16 %v8396, %v8394
        %v8644 = vpack.c.bf16 %v8604, %v8603
        %v8645 = vpack.c.bf16 %v8399, %v8397
        %v8646 = vpack.c.bf16 %v8400, %v8398
        %v8647 = vpack.c.bf16 %v8606, %v8605
        %v8648 = vpack.c.bf16 %v8403, %v8401
        %v8649 = vpack.c.bf16 %v8404, %v8402
        %v8650 = vpack.c.bf16 %v8608, %v8607
        %v8651 = vpack.c.bf16 %v8407, %v8405
        %v8652 = vpack.c.bf16 %v8408, %v8406
        %v8653 = vpack.c.bf16 %v8610, %v8609
        %v8654 = vpack.c.bf16 %v8411, %v8409
        %v8655 = vpack.c.bf16 %v8412, %v8410
        %v8656 = vpack.c.bf16 %v8612, %v8611
        %v8657 = vpack.c.bf16 %v8415, %v8413
        %v8658 = vpack.c.bf16 %v8416, %v8414
        %v8659 = vpack.c.bf16 %v8614, %v8613
        %v8660 = vpack.c.bf16 %v8419, %v8417
        %v8661 = vpack.c.bf16 %v8420, %v8418
        %v8662 = vpack.c.bf16 %v8616, %v8615
        %v8663 = vpack.c.bf16 %v8423, %v8421
        %v8664 = vpack.c.bf16 %v8424, %v8422
        %v8665 = vpack.c.bf16 %v8618, %v8617
        %v8666 = vpack.c.bf16 %v8427, %v8425
        %v8667 = vpack.c.bf16 %v8428, %v8426
        %v8668 = vpack.c.bf16 %v8620, %v8619
        %v8670 = vlaneseq
        %v8671 = vshrl.u32 %v8670, 7
        %v8672 = vsub.s32 0, %v8671
        %v8673 = vrot.slane %v3868, %v8672
        %v8711 = vunpack.c.l.b16 %v3832
        %v8712 = vunpack.c.l.b16 %v3833
        %v8713 = vunpack.c.l.b16 %v3834
        %v8714 = vunpack.c.l.b16 %v3835
        %v8715 = vunpack.c.l.b16 %v3836
        %v8716 = vunpack.c.l.b16 %v3837
        %v8717 = vunpack.c.l.b16 %v3838
        %v8718 = vunpack.c.l.b16 %v3839
        %v8719 = vunpack.c.l.b16 %v3840
        %v8720 = vunpack.c.l.b16 %v3841
        %v8721 = vunpack.c.l.b16 %v3842
        %v8722 = vunpack.c.l.b16 %v3843
        %v8723 = vunpack.c.l.b16 %v3844
        %v8724 = vunpack.c.l.b16 %v3845
        %v8725 = vunpack.c.l.b16 %v3846
        %v8726 = vunpack.c.l.b16 %v3847
        %v8727 = vunpack.c.l.b16 %v3848
        %v8728 = vunpack.c.l.b16 %v3849
        %v8729 = vunpack.c.l.b16 %v3850
        %v8730 = vunpack.c.l.b16 %v3851
        %v8731 = vunpack.c.l.b16 %v3852
        %v8732 = vunpack.c.l.b16 %v3853
        %v8733 = vunpack.c.l.b16 %v3854
        %v8734 = vunpack.c.l.b16 %v3855
        %v8735 = vunpack.c.l.b16 %v3856
        %v8736 = vunpack.c.l.b16 %v3857
        %v8737 = vunpack.c.l.b16 %v3858
        %v8738 = vunpack.c.l.b16 %v3859
        %v8739 = vunpack.c.l.b16 %v3860
        %v8740 = vunpack.c.l.b16 %v3861
        %v8741 = vunpack.c.l.b16 %v3862
        %v8742 = vunpack.c.l.b16 %v3863
        %v8743 = vunpack.c.l.b16 %v3864
        %v8744 = vunpack.c.l.b16 %v3865
        %v8745 = vunpack.c.l.b16 %v3866
        %v8746 = vunpack.c.l.b16 %v3867
        %v8747 = vpack.c.b16 %v8712, %v8711
        %v8748 = vpack.c.b16 %v8714, %v8713
        %v8749 = vpack.c.b16 %v8716, %v8715
        %v8750 = vpack.c.b16 %v8718, %v8717
        %v8751 = vpack.c.b16 %v8720, %v8719
        %v8752 = vpack.c.b16 %v8722, %v8721
        %v8753 = vpack.c.b16 %v8724, %v8723
        %v8754 = vpack.c.b16 %v8726, %v8725
        %v8755 = vpack.c.b16 %v8728, %v8727
        %v8756 = vpack.c.b16 %v8730, %v8729
        %v8757 = vpack.c.b16 %v8732, %v8731
        %v8758 = vpack.c.b16 %v8734, %v8733
        %v8759 = vpack.c.b16 %v8736, %v8735
        %v8760 = vpack.c.b16 %v8738, %v8737
        %v8761 = vpack.c.b16 %v8740, %v8739
        %v8762 = vpack.c.b16 %v8742, %v8741
        %v8763 = vpack.c.b16 %v8744, %v8743
        %v8764 = vpack.c.b16 %v8746, %v8745
        %v8784 = vsel %vm1073, %v8623, 0
        %v8787 = vsel %vm1073, %v8626, 0
        %v8790 = vsel %vm1073, %v8629, 0
        %v8793 = vsel %vm1073, %v8632, 0
        %v8796 = vsel %vm1073, %v8635, 0
        %v8799 = vsel %vm1073, %v8638, 0
        %v8802 = vsel %vm1073, %v8641, 0
        %v8805 = vsel %vm1073, %v8644, 0
        %v8808 = vsel %vm1073, %v8647, 0
        %v8811 = vsel %vm1073, %v8650, 0
        %v8814 = vsel %vm1073, %v8653, 0
        %v8817 = vsel %vm1073, %v8656, 0
        %v8820 = vsel %vm1073, %v8659, 0
        %v8823 = vsel %vm1073, %v8662, 0
        %v8826 = vsel %vm1073, %v8665, 0
        %v8829 = vsel %vm1073, %v8668, 0
        %8831 = vmatprep.subr.bf16.mxu0 0
        %8832 = vmatpush1.bf16.msra.mxu0 %v8747
        %8833 = vmatprep.subr.bf16.mxu0 0
        %8834 = vmatpush1.bf16.msra.mxu0 %v8748
        %8835 = vmatprep.subr.bf16.mxu0 0
        %8836 = vmatpush1.bf16.msra.mxu0 %v8749
        %8837 = vmatprep.subr.bf16.mxu0 0
        %8838 = vmatpush1.bf16.msra.mxu0 %v8750
        %8839 = vmatprep.subr.bf16.mxu0 0
        %8840 = vmatpush1.bf16.msra.mxu0 %v8751
        %8841 = vmatprep.subr.bf16.mxu0 0
        %8842 = vmatpush1.bf16.msra.mxu0 %v8752
        %8843 = vmatprep.subr.bf16.mxu0 0
        %8844 = vmatpush1.bf16.msra.mxu0 %v8753
        %8845 = vmatprep.subr.bf16.mxu0 0
        %8846 = vmatpush1.bf16.msra.mxu0 %v8754
        %8847 = vmatprep.subr.bf16.mxu0 0
        %8848 = vmatpush1.bf16.msra.mxu0 %v8755
        %8849 = vmatprep.subr.bf16.mxu0 0
        %8850 = vmatpush1.bf16.msra.mxu0 %v8756
        %8851 = vmatprep.subr.bf16.mxu0 0
        %8852 = vmatpush1.bf16.msra.mxu0 %v8757
        %8853 = vmatprep.subr.bf16.mxu0 0
        %8854 = vmatpush1.bf16.msra.mxu0 %v8758
        %8855 = vmatprep.subr.bf16.mxu0 0
        %8856 = vmatpush1.bf16.msra.mxu0 %v8759
        %8857 = vmatprep.subr.bf16.mxu0 0
        %8858 = vmatpush1.bf16.msra.mxu0 %v8760
        %8859 = vmatprep.subr.bf16.mxu0 0
        %8860 = vmatpush1.bf16.msra.mxu0 %v8761
        %8861 = vmatprep.subr.bf16.mxu0 0
        %8862 = vmatpush1.bf16.msra.mxu0 %v8762
        %8863 = vmatprep.mubr.bf16.mxu0 %v8622
        %8864 = vmatmul.mubr.bf16.gmra.mrb[0].mxu0 %v8621
        %v8865 = vpop.f32.mrb[0].mxu0
        %v8866 = vadd.f32 %v8673, %v8865
        %v8867 = vpop.f32.mrb[0].mxu0
        %v8868 = vpop.f32.mrb[0].mxu0
        %v8869 = vadd.f32 %v8673, %v8868
        %v8870 = vpop.f32.mrb[0].mxu0
        %8871 = vmatprep.mubr.bf16.mxu0 %v8625
        %8872 = vmatmul.mubr.bf16.gmra.mrb[0].mxu0 %v8624
        %v8873 = vpop.f32.mrb[0].mxu0
        %v8874 = vadd.f32 %v8673, %v8873
        %v8875 = vpop.f32.mrb[0].mxu0
        %v8876 = vpop.f32.mrb[0].mxu0
        %v8877 = vadd.f32 %v8673, %v8876
        %v8878 = vpop.f32.mrb[0].mxu0
        %8879 = vmatprep.mubr.bf16.mxu0 %v8628
        %8880 = vmatmul.mubr.bf16.gmra.mrb[0].mxu0 %v8627
        %v8881 = vpop.f32.mrb[0].mxu0
        %v8882 = vadd.f32 %v8673, %v8881
        %v8883 = vpop.f32.mrb[0].mxu0
        %v8884 = vpop.f32.mrb[0].mxu0
        %v8885 = vadd.f32 %v8673, %v8884
        %v8886 = vpop.f32.mrb[0].mxu0
        %8887 = vmatprep.mubr.bf16.mxu0 %v8631
        %8888 = vmatmul.mubr.bf16.gmra.mrb[0].mxu0 %v8630
        %v8889 = vpop.f32.mrb[0].mxu0
        %v8890 = vadd.f32 %v8673, %v8889
        %v8891 = vpop.f32.mrb[0].mxu0
        %v8892 = vpop.f32.mrb[0].mxu0
        %v8893 = vadd.f32 %v8673, %v8892
        %v8894 = vpop.f32.mrb[0].mxu0
        %8895 = vmatprep.mubr.bf16.mxu0 %v8634
        %8896 = vmatmul.mubr.bf16.gmra.mrb[0].mxu0 %v8633
        %v8897 = vpop.f32.mrb[0].mxu0
        %v8898 = vadd.f32 %v8673, %v8897
        %v8899 = vpop.f32.mrb[0].mxu0
        %v8900 = vpop.f32.mrb[0].mxu0
        %v8901 = vadd.f32 %v8673, %v8900
        %v8902 = vpop.f32.mrb[0].mxu0
        %8903 = vmatprep.mubr.bf16.mxu0 %v8637
        %8904 = vmatmul.mubr.bf16.gmra.mrb[0].mxu0 %v8636
        %v8905 = vpop.f32.mrb[0].mxu0
        %v8906 = vadd.f32 %v8673, %v8905
        %v8907 = vpop.f32.mrb[0].mxu0
        %v8908 = vpop.f32.mrb[0].mxu0
        %v8909 = vadd.f32 %v8673, %v8908
        %v8910 = vpop.f32.mrb[0].mxu0
        %8911 = vmatprep.mubr.bf16.mxu0 %v8640
        %8912 = vmatmul.mubr.bf16.gmra.mrb[0].mxu0 %v8639
        %v8913 = vpop.f32.mrb[0].mxu0
        %v8914 = vadd.f32 %v8673, %v8913
        %v8915 = vpop.f32.mrb[0].mxu0
        %v8916 = vpop.f32.mrb[0].mxu0
        %v8917 = vadd.f32 %v8673, %v8916
        %v8918 = vpop.f32.mrb[0].mxu0
        %8919 = vmatprep.mubr.bf16.mxu0 %v8643
        %8920 = vmatmul.mubr.bf16.gmra.mrb[0].mxu0 %v8642
        %v8921 = vpop.f32.mrb[0].mxu0
        %v8922 = vadd.f32 %v8673, %v8921
        %v8923 = vpop.f32.mrb[0].mxu0
        %v8924 = vpop.f32.mrb[0].mxu0
        %v8925 = vadd.f32 %v8673, %v8924
        %v8926 = vpop.f32.mrb[0].mxu0
        %8927 = vmatprep.mubr.bf16.mxu0 %v8646
        %8928 = vmatmul.mubr.bf16.gmra.mrb[0].mxu0 %v8645
        %v8929 = vpop.f32.mrb[0].mxu0
        %v8930 = vadd.f32 %v8673, %v8929
        %v8931 = vpop.f32.mrb[0].mxu0
        %v8932 = vpop.f32.mrb[0].mxu0
        %v8933 = vadd.f32 %v8673, %v8932
        %v8934 = vpop.f32.mrb[0].mxu0
        %8935 = vmatprep.mubr.bf16.mxu0 %v8649
        %8936 = vmatmul.mubr.bf16.gmra.mrb[0].mxu0 %v8648
        %v8937 = vpop.f32.mrb[0].mxu0
        %v8938 = vadd.f32 %v8673, %v8937
        %v8939 = vpop.f32.mrb[0].mxu0
        %v8940 = vpop.f32.mrb[0].mxu0
        %v8941 = vadd.f32 %v8673, %v8940
        %v8942 = vpop.f32.mrb[0].mxu0
        %8943 = vmatprep.mubr.bf16.mxu0 %v8652
        %8944 = vmatmul.mubr.bf16.gmra.mrb[0].mxu0 %v8651
        %v8945 = vpop.f32.mrb[0].mxu0
        %v8946 = vadd.f32 %v8673, %v8945
        %v8947 = vpop.f32.mrb[0].mxu0
        %v8948 = vpop.f32.mrb[0].mxu0
        %v8949 = vadd.f32 %v8673, %v8948
        %v8950 = vpop.f32.mrb[0].mxu0
        %8951 = vmatprep.mubr.bf16.mxu0 %v8655
        %8952 = vmatmul.mubr.bf16.gmra.mrb[0].mxu0 %v8654
        %v8953 = vpop.f32.mrb[0].mxu0
        %v8954 = vadd.f32 %v8673, %v8953
        %v8955 = vpop.f32.mrb[0].mxu0
        %v8956 = vpop.f32.mrb[0].mxu0
        %v8957 = vadd.f32 %v8673, %v8956
        %v8958 = vpop.f32.mrb[0].mxu0
        %8959 = vmatprep.mubr.bf16.mxu0 %v8658
        %8960 = vmatmul.mubr.bf16.gmra.mrb[0].mxu0 %v8657
        %v8961 = vpop.f32.mrb[0].mxu0
        %v8962 = vadd.f32 %v8673, %v8961
        %v8963 = vpop.f32.mrb[0].mxu0
        %v8964 = vpop.f32.mrb[0].mxu0
        %v8965 = vadd.f32 %v8673, %v8964
        %v8966 = vpop.f32.mrb[0].mxu0
        %8967 = vmatprep.mubr.bf16.mxu0 %v8661
        %8968 = vmatmul.mubr.bf16.gmra.mrb[0].mxu0 %v8660
        %v8969 = vpop.f32.mrb[0].mxu0
        %v8970 = vadd.f32 %v8673, %v8969
        %v8971 = vpop.f32.mrb[0].mxu0
        %v8972 = vpop.f32.mrb[0].mxu0
        %v8973 = vadd.f32 %v8673, %v8972
        %v8974 = vpop.f32.mrb[0].mxu0
        %8975 = vmatprep.mubr.bf16.mxu0 %v8664
        %8976 = vmatmul.mubr.bf16.gmra.mrb[0].mxu0 %v8663
        %v8977 = vpop.f32.mrb[0].mxu0
        %v8978 = vadd.f32 %v8673, %v8977
        %v8979 = vpop.f32.mrb[0].mxu0
        %v8980 = vpop.f32.mrb[0].mxu0
        %v8981 = vadd.f32 %v8673, %v8980
        %v8982 = vpop.f32.mrb[0].mxu0
        %8983 = vmatprep.mubr.bf16.mxu0 %v8667
        %8984 = vmatmul.mubr.bf16.gmra.mrb[0].mxu0 %v8666
        %v8985 = vpop.f32.mrb[0].mxu0
        %v8986 = vadd.f32 %v8673, %v8985
        %v8987 = vpop.f32.mrb[0].mxu0
        %v8988 = vpop.f32.mrb[0].mxu0
        %v8989 = vadd.f32 %v8673, %v8988
        %v8990 = vpop.f32.mrb[0].mxu0
        %8991 = vdwg.mxu0
        %8992 = vmatprep.subr.bf16.mxu0 0
        %8993 = vmatpush1.bf16.msra.mxu0 %v8763
        %8994 = vmatprep.subr.bf16.mxu0 0
        %8995 = vmatpush1.bf16.msra.mxu0 %v8764
        %8996 = vmatprep.subr.bf16.mxu0 0
        %8997 = vmatpush1.bf16.msra.mxu0 0
        %8998 = vmatprep.subr.bf16.mxu0 0
        %8999 = vmatpush1.bf16.msra.mxu0 0
        %9000 = vmatprep.subr.bf16.mxu0 0
        %9001 = vmatpush1.bf16.msra.mxu0 0
        %9002 = vmatprep.subr.bf16.mxu0 0
        %9003 = vmatpush1.bf16.msra.mxu0 0
        %9004 = vmatprep.subr.bf16.mxu0 0
        %9005 = vmatpush1.bf16.msra.mxu0 0
        %9006 = vmatprep.subr.bf16.mxu0 0
        %9007 = vmatpush1.bf16.msra.mxu0 0
        %9008 = vmatprep.subr.bf16.mxu0 0
        %9009 = vmatpush1.bf16.msra.mxu0 0
        %9010 = vmatprep.subr.bf16.mxu0 0
        %9011 = vmatpush1.bf16.msra.mxu0 0
        %9012 = vmatprep.subr.bf16.mxu0 0
        %9013 = vmatpush1.bf16.msra.mxu0 0
        %9014 = vmatprep.subr.bf16.mxu0 0
        %9015 = vmatpush1.bf16.msra.mxu0 0
        %9016 = vmatprep.subr.bf16.mxu0 0
        %9017 = vmatpush1.bf16.msra.mxu0 0
        %9018 = vmatprep.subr.bf16.mxu0 0
        %9019 = vmatpush1.bf16.msra.mxu0 0
        %9020 = vmatprep.subr.bf16.mxu0 0
        %9021 = vmatpush1.bf16.msra.mxu0 0
        %9022 = vmatprep.subr.bf16.mxu0 0
        %9023 = vmatpush1.bf16.msra.mxu0 0
        %9024 = vmatprep.mubr.bf16.mxu0 0
        %9025 = vmatmul.mubr.bf16.gmra.mrb[0].mxu0 %v8784
        %v9026 = vpop.f32.mrb[0].mxu0
        %v9027 = vadd.f32 %v8866, %v9026
        %v9028 = vpop.f32.mrb[0].mxu0
        %v9029 = vpop.f32.mrb[0].mxu0
        %v9030 = vadd.f32 %v8869, %v9029
        %v9031 = vpop.f32.mrb[0].mxu0
        %9032 = vmatprep.mubr.bf16.mxu0 0
        %9033 = vmatmul.mubr.bf16.gmra.mrb[0].mxu0 %v8787
        %v9034 = vpop.f32.mrb[0].mxu0
        %v9035 = vadd.f32 %v8874, %v9034
        %v9036 = vpop.f32.mrb[0].mxu0
        %v9037 = vpop.f32.mrb[0].mxu0
        %v9038 = vadd.f32 %v8877, %v9037
        %v9039 = vpop.f32.mrb[0].mxu0
        %9040 = vmatprep.mubr.bf16.mxu0 0
        %9041 = vmatmul.mubr.bf16.gmra.mrb[0].mxu0 %v8790
        %v9042 = vpop.f32.mrb[0].mxu0
        %v9043 = vadd.f32 %v8882, %v9042
        %v9044 = vpop.f32.mrb[0].mxu0
        %v9045 = vpop.f32.mrb[0].mxu0
        %v9046 = vadd.f32 %v8885, %v9045
        %v9047 = vpop.f32.mrb[0].mxu0
        %9048 = vmatprep.mubr.bf16.mxu0 0
        %9049 = vmatmul.mubr.bf16.gmra.mrb[0].mxu0 %v8793
        %v9050 = vpop.f32.mrb[0].mxu0
        %v9051 = vadd.f32 %v8890, %v9050
        %v9052 = vpop.f32.mrb[0].mxu0
        %v9053 = vpop.f32.mrb[0].mxu0
        %v9054 = vadd.f32 %v8893, %v9053
        %v9055 = vpop.f32.mrb[0].mxu0
        %9056 = vmatprep.mubr.bf16.mxu0 0
        %9057 = vmatmul.mubr.bf16.gmra.mrb[0].mxu0 %v8796
        %v9058 = vpop.f32.mrb[0].mxu0
        %v9059 = vadd.f32 %v8898, %v9058
        %v9060 = vpop.f32.mrb[0].mxu0
        %v9061 = vpop.f32.mrb[0].mxu0
        %v9062 = vadd.f32 %v8901, %v9061
        %v9063 = vpop.f32.mrb[0].mxu0
        %9064 = vmatprep.mubr.bf16.mxu0 0
        %9065 = vmatmul.mubr.bf16.gmra.mrb[0].mxu0 %v8799
        %v9066 = vpop.f32.mrb[0].mxu0
        %v9067 = vadd.f32 %v8906, %v9066
        %v9068 = vpop.f32.mrb[0].mxu0
        %v9069 = vpop.f32.mrb[0].mxu0
        %v9070 = vadd.f32 %v8909, %v9069
        %v9071 = vpop.f32.mrb[0].mxu0
        %9072 = vmatprep.mubr.bf16.mxu0 0
        %9073 = vmatmul.mubr.bf16.gmra.mrb[0].mxu0 %v8802
        %v9074 = vpop.f32.mrb[0].mxu0
        %v9075 = vadd.f32 %v8914, %v9074
        %v9076 = vpop.f32.mrb[0].mxu0
        %v9077 = vpop.f32.mrb[0].mxu0
        %v9078 = vadd.f32 %v8917, %v9077
        %v9079 = vpop.f32.mrb[0].mxu0
        %9080 = vmatprep.mubr.bf16.mxu0 0
        %9081 = vmatmul.mubr.bf16.gmra.mrb[0].mxu0 %v8805
        %v9082 = vpop.f32.mrb[0].mxu0
        %v9083 = vadd.f32 %v8922, %v9082
        %v9084 = vpop.f32.mrb[0].mxu0
        %v9085 = vpop.f32.mrb[0].mxu0
        %v9086 = vadd.f32 %v8925, %v9085
        %v9087 = vpop.f32.mrb[0].mxu0
        %9088 = vmatprep.mubr.bf16.mxu0 0
        %9089 = vmatmul.mubr.bf16.gmra.mrb[0].mxu0 %v8808
        %v9090 = vpop.f32.mrb[0].mxu0
        %v9091 = vadd.f32 %v8930, %v9090
        %v9092 = vpop.f32.mrb[0].mxu0
        %v9093 = vpop.f32.mrb[0].mxu0
        %v9094 = vadd.f32 %v8933, %v9093
        %v9095 = vpop.f32.mrb[0].mxu0
        %9096 = vmatprep.mubr.bf16.mxu0 0
        %9097 = vmatmul.mubr.bf16.gmra.mrb[0].mxu0 %v8811
        %v9098 = vpop.f32.mrb[0].mxu0
        %v9099 = vadd.f32 %v8938, %v9098
        %v9100 = vpop.f32.mrb[0].mxu0
        %v9101 = vpop.f32.mrb[0].mxu0
        %v9102 = vadd.f32 %v8941, %v9101
        %v9103 = vpop.f32.mrb[0].mxu0
        %9104 = vmatprep.mubr.bf16.mxu0 0
        %9105 = vmatmul.mubr.bf16.gmra.mrb[0].mxu0 %v8814
        %v9106 = vpop.f32.mrb[0].mxu0
        %v9107 = vadd.f32 %v8946, %v9106
        %v9108 = vpop.f32.mrb[0].mxu0
        %v9109 = vpop.f32.mrb[0].mxu0
        %v9110 = vadd.f32 %v8949, %v9109
        %v9111 = vpop.f32.mrb[0].mxu0
        %9112 = vmatprep.mubr.bf16.mxu0 0
        %9113 = vmatmul.mubr.bf16.gmra.mrb[0].mxu0 %v8817
        %v9114 = vpop.f32.mrb[0].mxu0
        %v9115 = vadd.f32 %v8954, %v9114
        %v9116 = vpop.f32.mrb[0].mxu0
        %v9117 = vpop.f32.mrb[0].mxu0
        %v9118 = vadd.f32 %v8957, %v9117
        %v9119 = vpop.f32.mrb[0].mxu0
        %9120 = vmatprep.mubr.bf16.mxu0 0
        %9121 = vmatmul.mubr.bf16.gmra.mrb[0].mxu0 %v8820
        %v9122 = vpop.f32.mrb[0].mxu0
        %v9123 = vadd.f32 %v8962, %v9122
        %v9124 = vpop.f32.mrb[0].mxu0
        %v9125 = vpop.f32.mrb[0].mxu0
        %v9126 = vadd.f32 %v8965, %v9125
        %v9127 = vpop.f32.mrb[0].mxu0
        %9128 = vmatprep.mubr.bf16.mxu0 0
        %9129 = vmatmul.mubr.bf16.gmra.mrb[0].mxu0 %v8823
        %v9130 = vpop.f32.mrb[0].mxu0
        %v9131 = vadd.f32 %v8970, %v9130
        %v9132 = vpop.f32.mrb[0].mxu0
        %v9133 = vpop.f32.mrb[0].mxu0
        %v9134 = vadd.f32 %v8973, %v9133
        %v9135 = vpop.f32.mrb[0].mxu0
        %9136 = vmatprep.mubr.bf16.mxu0 0
        %9137 = vmatmul.mubr.bf16.gmra.mrb[0].mxu0 %v8826
        %v9138 = vpop.f32.mrb[0].mxu0
        %v9139 = vadd.f32 %v8978, %v9138
        %v9140 = vpop.f32.mrb[0].mxu0
        %v9141 = vpop.f32.mrb[0].mxu0
        %v9142 = vadd.f32 %v8981, %v9141
        %v9143 = vpop.f32.mrb[0].mxu0
        %9144 = vmatprep.mubr.bf16.mxu0 0
        %9145 = vmatmul.mubr.bf16.gmra.mrb[0].mxu0 %v8829
        %v9146 = vpop.f32.mrb[0].mxu0
        %v9147 = vadd.f32 %v8986, %v9146
        %v9148 = vpop.f32.mrb[0].mxu0
        %v9149 = vpop.f32.mrb[0].mxu0
        %v9150 = vadd.f32 %v8989, %v9149
        %v9151 = vpop.f32.mrb[0].mxu0
        %9152 = vdwg.mxu0
        %9153 = vst [vmem:[%s272] sm:$0xff] %v9027
        %9154 = vst [vmem:[%s272 + $0x8] sm:$0xff] %v9030
        %9155 = vst [vmem:[%s272 + $0x10] sm:$0xff] %v9035
        %9156 = vst [vmem:[%s272 + $0x18] sm:$0xff] %v9038
        %9157 = vst [vmem:[%s272 + $0x20] sm:$0xff] %v9043
        %9158 = vst [vmem:[%s272 + $0x28] sm:$0xff] %v9046
        %9159 = vst [vmem:[%s272 + $0x30] sm:$0xff] %v9051
        %9160 = vst [vmem:[%s272 + $0x38] sm:$0xff] %v9054
        %9161 = vst [vmem:[%s272 + $0x40] sm:$0xff] %v9059
        %9162 = vst [vmem:[%s272 + $0x48] sm:$0xff] %v9062
        %9163 = vst [vmem:[%s272 + $0x50] sm:$0xff] %v9067
        %9164 = vst [vmem:[%s272 + $0x58] sm:$0xff] %v9070
        %9165 = vst [vmem:[%s272 + $0x60] sm:$0xff] %v9075
        %9166 = vst [vmem:[%s272 + $0x68] sm:$0xff] %v9078
        %9167 = vst [vmem:[%s272 + $0x70] sm:$0xff] %v9083
        %9168 = vst [vmem:[%s272 + $0x78] sm:$0xff] %v9086
        %9169 = vst [vmem:[%s272 + $0x80] sm:$0xff] %v9091
        %9170 = vst [vmem:[%s272 + $0x88] sm:$0xff] %v9094
        %9171 = vst [vmem:[%s272 + $0x90] sm:$0xff] %v9099
        %9172 = vst [vmem:[%s272 + $0x98] sm:$0xff] %v9102
        %9173 = vst [vmem:[%s272 + $0xa0] sm:$0xff] %v9107
        %9174 = vst [vmem:[%s272 + $0xa8] sm:$0xff] %v9110
        %9175 = vst [vmem:[%s272 + $0xb0] sm:$0xff] %v9115
        %9176 = vst [vmem:[%s272 + $0xb8] sm:$0xff] %v9118
        %9177 = vst [vmem:[%s272 + $0xc0] sm:$0xff] %v9123
        %9178 = vst [vmem:[%s272 + $0xc8] sm:$0xff] %v9126
        %9179 = vst [vmem:[%s272 + $0xd0] sm:$0xff] %v9131
        %9180 = vst [vmem:[%s272 + $0xd8] sm:$0xff] %v9134
        %9181 = vst [vmem:[%s272 + $0xe0] sm:$0xff] %v9139
        %9182 = vst [vmem:[%s272 + $0xe8] sm:$0xff] %v9142
        %9183 = vst [vmem:[%s272 + $0xf0] sm:$0xff] %v9147
        %9184 = vst [vmem:[%s272 + $0xf8] sm:$0xff] %v9150
        %s9185 = sand.u32 %s181, 1
        %s9186 = scalar_lea.sflag [#allocation3], %s9185
        %s9187 = sand.u32 %s181, 1
        %s9188 = smul.addr %s9187, 256
        %s9189 = scalar_lea.vmem [#allocation2], %s9188
        // Predicated region
        $region49: #{tpu_custom_call.1} parent=47 // pred_check
          %p9190 = pneg %p191
        $region50: #{tpu_custom_call.1} parent=47 // pred_check_branch
          %9192 = sbr.rel (%p9190) target = $region52
        $region51: #{tpu_custom_call.1} parent=47 // pred_region
          %s9193 = smul.u32 32, %s21
          %s9195 = ssub.s32 4096, 4096
          %9196 = vsyncadd %s9186, %s9195
          %s9197 = smul.addr %s9193, 128
          %s9198 = scalar_lea.hbm %s7, %s9197
          %s9199 = sshll.u32 %s9189, 4
          %s9200 = int_to_ptr.vmem [resolvable:$true] %s9199
          %9205 = dma.vmem_to_hbm [thread:$0]  %s9200, 4096, %s9198, %s9186, 128, 128, 8
        $region52: #{tpu_custom_call.1} parent=47 // pred_fallthru
          _
      $region48: #{tpu_custom_call.1} parent=5 // pred_fallthru
        _
      %p9206 = scmp.le.s32.totalorder 2, %s16
      // Predicated region
      $region53: #{tpu_custom_call.1} parent=5 // pred_check
        %p9207 = pneg %p9206
      $region54: #{tpu_custom_call.1} parent=5 // pred_check_branch
        %9209 = sbr.rel (%p9207) target = $region56
      $region55: #{tpu_custom_call.1} parent=5 // pred_region
        %s9210 = ssub.s32 %s16, 2
        // Predicated region
        $region57: #{tpu_custom_call.1} parent=55 // pred_check
          %p9211 = pneg %p197
        $region58: #{tpu_custom_call.1} parent=55 // pred_check_branch
          %9213 = sbr.rel (%p9211) target = $region60
        $region59: #{tpu_custom_call.1} parent=55 // pred_region
          %s9214 = sand.u32 %s182, 1
          %s9215 = scalar_lea.sflag [#allocation3], %s9214
          %s9216 = sand.u32 %s182, 1
          %s9217 = smul.addr %s9216, 256
          %s9218 = scalar_lea.vmem [#allocation2], %s9217
          %9219 = dma.done %s9215, 4096
        $region60: #{tpu_custom_call.1} parent=55 // pred_fallthru
          _
      $region56: #{tpu_custom_call.1} parent=5 // pred_fallthru
        _
    $region6: #{tpu_custom_call.1} parent=1 // loop_footer
      %s20 = sadd.s32 1, %s16
    $region7: #{tpu_custom_call.1} parent=1 // loop_footer_branch
      %15 = sbr.rel target = $region3
    $region8: #{tpu_custom_call.1} parent=1 // loop_exit
      _
    %9220 = vsyncpa [#allocation3], 1
    %s9221 = scalar_lea.sflag [#allocation3], 1
    %9222 = vsyncpa %s9221, 1

</llo_original>
